<compile_context>
chip_gen: v6e
topology: v6e:2x2x1
jax: 0.10.0
libtpu: 0.0.40
codegen_flags: <defaults>
</compile_context>

<pallas_src>
import jax
import jax.numpy as jnp
from jax.experimental import pallas as pl
from jax.experimental.pallas import tpu as pltpu

# ---- model constants (from Spectrum_CLS.__init__) ----
K = 16                 # conv kernel size (all convs)
STRIDE = 2
C0, C1, C2, C3 = 1, 32, 64, 1
POOL = 16
LIN_IN, LIN_OUT = 10, 2
BN_EPS = 1e-5

# Input length implied by Linear(10, 2):
L_IN = 1378
L1 = (L_IN - K) // STRIDE + 1        # 682
L2 = (L1 - K) // STRIDE + 1          # 334
L3 = (L2 - K) // STRIDE + 1          # 160
L_POOL = (L3 - POOL) // POOL + 1     # 10
assert L_POOL == LIN_IN

NPH = 8                               # input polyphase components
PHLEN = -(-L_IN // NPH)               # 173
S1 = -(-L1 // 4)                      # 171, per-slab length of conv1 output (4 phases)
S2 = L2 // 2                          # 167, per-slab length of conv2 output (2 phases)
assert L2 % 2 == 0 and L3 % POOL == 0


def _phase_blocks(offset, p_in):
    """Static tap decomposition for a stride-2 conv whose input is held as `p_in`
    polyphase slabs.  For output-sample offset `offset` (in input-index units:
    0 => even outputs, 2 => odd outputs) returns blocks
    (shift, k_lo, k_hi, p_lo, p_hi): taps k_lo..k_hi read input phases p_lo..p_hi
    at slab column (s + shift).  All slices are contiguous."""
    blocks = []
    c_lo, c_hi = offset, offset + K - 1
    for i in range(c_lo // p_in, c_hi // p_in + 1):
        a = max(c_lo, i * p_in)
        b = min(c_hi, i * p_in + p_in - 1)
        blocks.append((i, a - offset, b - offset, a - i * p_in, b - i * p_in))
    return blocks


def spectrum_cls_kernel(xph_ref, w1_ref, w2_ref, w3e_ref, w3o_ref,
                        b1_ref, g1_ref, bt1_ref,
                        b2_ref, g2_ref, bt2_ref,
                        b3_ref, wl_ref, bl_ref, out_ref):
    B = xph_ref.shape[0]
    f32 = jnp.float32
    bf16 = jnp.bfloat16

    xph = xph_ref[...].astype(bf16)         # (B, 8, 173) polyphase input
    w1 = w1_ref[...]                        # (32, 16)   bf16
    w2 = w2_ref[...]                        # (64, 512)  bf16, column = 32*k + ci

    # ---------- Conv1d(1, 32, 16, stride=2) on the MXU, output as 4 phase slabs ----
    # y1[b, co, 4s+q] lands in Y[b, 32*q + co, s]
    y_phases = []
    for q in range(4):
        acc = jnp.zeros((B, C1, S1), f32)
        for (i, k_lo, k_hi, p_lo, p_hi) in _phase_blocks(2 * q, NPH):
            wblk = jnp.broadcast_to(w1[None, :, k_lo:k_hi + 1],
                                    (B, C1, k_hi - k_lo + 1))
            xblk = xph[:, p_lo:p_hi + 1, i:i + S1]
            acc = acc + jnp.einsum('boc,bcs->bos', wblk, xblk,
                                   preferred_element_type=f32)
        y_phases.append(acc)
    Y = jnp.concatenate(y_phases, axis=1)                       # (B, 128, 171)
    b1t = jnp.concatenate([b1_ref[...]] * 4, axis=1)            # (1, 128, 1)
    Y = jnp.maximum(Y + b1t, 0.0)                               # bias + ReLU

    # ---------- BatchNorm1d(32), training-mode batch statistics ----------
    # Phases 0,1 are valid for s in [0,171); phases 2,3 only for s in [0,170).
    # The last column of phases 2,3 is padding: excluded from the stats below and
    # never read by conv2 (its tap windows stop one column earlier on those rows).
    yA = Y[:, 0:2 * C1, :]
    yB = Y[:, 2 * C1:4 * C1, 0:S1 - 1]

    def _sum02(v):  # sum over batch and length, keep dims -> (1, C, 1)
        return jnp.sum(jnp.sum(v, axis=2, keepdims=True), axis=0, keepdims=True)

    sA, sB = _sum02(yA), _sum02(yB)
    ssA, ssB = _sum02(yA * yA), _sum02(yB * yB)
    s32 = sA[:, 0:C1] + sA[:, C1:2 * C1] + sB[:, 0:C1] + sB[:, C1:2 * C1]
    ss32 = ssA[:, 0:C1] + ssA[:, C1:2 * C1] + ssB[:, 0:C1] + ssB[:, C1:2 * C1]
    n1 = float(2 if B == 2 else B) * float(L1)  # B*L1 (biased variance, like PyTorch)
    mean1 = s32 / n1
    var1 = ss32 / n1 - mean1 * mean1
    scale1 = jax.lax.rsqrt(var1 + BN_EPS) * g1_ref[...]         # (1, 32, 1)
    shift1 = bt1_ref[...] - mean1 * scale1
    scale1t = jnp.concatenate([scale1] * 4, axis=1)             # (1, 128, 1)
    shift1t = jnp.concatenate([shift1] * 4, axis=1)
    Yn = (Y * scale1t + shift1t).astype(bf16)                   # (B, 128, 171) bf16

    # ---------- Conv1d(32, 64, 16, stride=2) on the MXU, even/odd output slabs ----
    def conv2_phase(offset):
        acc = jnp.zeros((B, C2, S2), f32)
        for (i, k_lo, k_hi, p_lo, p_hi) in _phase_blocks(offset, 4):
            wblk = jnp.broadcast_to(
                w2[None, :, C1 * k_lo:C1 * (k_hi + 1)],
                (B, C2, C1 * (k_hi - k_lo + 1)))
            yblk = Yn[:, C1 * p_lo:C1 * (p_hi + 1), i:i + S2]
            acc = acc + jnp.einsum('boc,bcs->bos', wblk, yblk,
                                   preferred_element_type=f32)
        return acc

    b2 = b2_ref[...]
    ze = jnp.maximum(conv2_phase(0) + b2, 0.0)                  # z[:, :, 2s]   (B,64,167)
    zo = jnp.maximum(conv2_phase(2) + b2, 0.0)                  # z[:, :, 2s+1] (B,64,167)

    # ---------- BatchNorm1d(64) ----------
    n2 = float(B * L2)
    s64 = _sum02(ze) + _sum02(zo)
    ss64 = _sum02(ze * ze) + _sum02(zo * zo)
    mean2 = s64 / n2
    var2 = ss64 / n2 - mean2 * mean2
    scale2 = jax.lax.rsqrt(var2 + BN_EPS) * g2_ref[...]
    shift2 = bt2_ref[...] - mean2 * scale2
    ze = ze * scale2 + shift2
    zo = zo * scale2 + shift2

    # ---------- Conv1d(64, 1, 16, stride=2) on the VPU (Cout == 1) ----------
    w3e = w3e_ref[...]                                          # (8, 64, 1)
    w3o = w3o_ref[...]                                          # (8, 64, 1)
    acc3 = jnp.zeros((B, C2, L3), f32)
    for i in range(K // 2):
        acc3 = acc3 + ze[:, :, i:i + L3] * w3e[i] + zo[:, :, i:i + L3] * w3o[i]
    u = jnp.sum(acc3, axis=1, keepdims=True) + b3_ref[...]      # (B, 1, 160)

    # ---------- MaxPool1d(16) -> abs -> Linear(10, 2) -> Sigmoid ----------
    wl = wl_ref[...]                                            # (10, 2)
    logits = jnp.zeros((B, 1, LIN_OUT), f32) + bl_ref[...]
    for m in range(LIN_IN):
        feat_m = jnp.abs(jnp.max(u[:, :, POOL * m:POOL * (m + 1)],
                                 axis=2, keepdims=True))        # (B, 1, 1)
        logits = logits + feat_m * wl[m:m + 1, :][None]
    # sigmoid: exp on the EUP, one lane-dense store for all batch rows
    out_ref[...] = 1.0 / (1.0 + jnp.exp(-logits))               # (B, 1, 2)


def init_params(key):
    ks = jax.random.split(key, 8)

    def conv_init(k, shape):                 # (Cout, Cin, K)
        fan_in = shape[1] * shape[2]
        return jax.random.normal(k, shape, jnp.float32) / jnp.sqrt(float(fan_in))

    return dict(
        w1=conv_init(ks[0], (C1, C0, K)),
        b1=0.01 * jax.random.normal(ks[1], (C1,), jnp.float32),
        g1=jnp.ones((C1,), jnp.float32), bt1=jnp.zeros((C1,), jnp.float32),
        w2=conv_init(ks[2], (C2, C1, K)),
        b2=0.01 * jax.random.normal(ks[3], (C2,), jnp.float32),
        g2=jnp.ones((C2,), jnp.float32), bt2=jnp.zeros((C2,), jnp.float32),
        w3=conv_init(ks[4], (C3, C2, K)),
        b3=0.01 * jax.random.normal(ks[5], (C3,), jnp.float32),
        wl=jax.random.normal(ks[6], (LIN_OUT, LIN_IN), jnp.float32) / jnp.sqrt(float(LIN_IN)),
        bl=0.01 * jax.random.normal(ks[7], (LIN_OUT,), jnp.float32),
    )


@jax.jit
def spectrum_cls_forward(x, params):
    """x: (B, 1, 1378) float32 in PyTorch NCL layout. Returns (B, 2).
    Note: torch.squeeze semantics assumed with B > 1 (squeezes only the channel dim).
    BatchNorm uses training-mode batch statistics (biased variance)."""
    B = x.shape[0]

    # ---- layout glue: split the input signal into 8 polyphase slabs ----
    xs = x[:, 0, :]                                                  # (B, 1378)
    xp = jnp.pad(xs, ((0, 0), (0, NPH * PHLEN - L_IN)))              # zero pad to 8*173
    xph = jnp.transpose(xp.reshape(B, PHLEN, NPH), (0, 2, 1))        # (B, 8, 173)

    # ---- weight re-layouts (glue); MXU operands pre-cast to bf16 ----
    w1m = params['w1'][:, 0, :].astype(jnp.bfloat16)                 # (32, 16)
    w2f = jnp.transpose(params['w2'], (0, 2, 1)).reshape(C2, C1 * K) # (64, 512), col=32k+ci
    w2f = w2f.astype(jnp.bfloat16)
    w3 = params['w3'][0]                                             # (64, 16)
    w3e = jnp.transpose(w3[:, 0::2], (1, 0)).reshape(K // 2, C2, 1)  # (8, 64, 1)
    w3o = jnp.transpose(w3[:, 1::2], (1, 0)).reshape(K // 2, C2, 1)  # (8, 64, 1)
    b1r = params['b1'].reshape(1, C1, 1)
    g1r = params['g1'].reshape(1, C1, 1)
    bt1r = params['bt1'].reshape(1, C1, 1)
    b2r = params['b2'].reshape(1, C2, 1)
    g2r = params['g2'].reshape(1, C2, 1)
    bt2r = params['bt2'].reshape(1, C2, 1)
    b3r = params['b3'].reshape(1, 1, 1)
    wlt = params['wl'].T                                             # (10, 2)
    blr = params['bl'].reshape(1, 1, LIN_OUT)

    flops = 2 * B * (C1 * K * L1 + C2 * C1 * K * L2 + C2 * K * L3 + LIN_IN * LIN_OUT)
    bytes_accessed = 4 * (x.size + C1 * K + C2 * C1 * K + C2 * K
                          + 3 * C1 + 3 * C2 + 1 + LIN_IN * LIN_OUT + LIN_OUT
                          + B * LIN_OUT)

    vmem = pl.BlockSpec(memory_space=pltpu.MemorySpace.VMEM)
    out3 = pl.pallas_call(
        spectrum_cls_kernel,
        out_shape=jax.ShapeDtypeStruct((B, 1, LIN_OUT), jnp.float32),
        in_specs=[vmem] * 14,
        out_specs=vmem,
        compiler_params=pltpu.CompilerParams(vmem_limit_bytes=32 * 1024 * 1024),
        cost_estimate=pl.CostEstimate(flops=flops, transcendentals=C1 + C2 + 2 * B,
                                      bytes_accessed=bytes_accessed),
    )(xph, w1m, w2f, w3e, w3o, b1r, g1r, bt1r, b2r, g2r, bt2r, b3r, wlt, blr)
    return out3.reshape(B, LIN_OUT)


def reference_forward(x, params):
    """Pure-JAX reference for the PyTorch module (training-mode BN).  conv1/conv2
    operands are rounded to bf16 to match the kernel's MXU inputs, so the check
    tolerance only has to cover accumulation-order differences."""
    def rnd(a):
        return a.astype(jnp.bfloat16).astype(jnp.float32)

    def conv1d(h, w, b, stride):
        out = jax.lax.conv_general_dilated(
            h, w, window_strides=(stride,), padding='VALID',
            dimension_numbers=('NCH', 'OIH', 'NCH'))
        return out + b[None, :, None]

    def bn(h, g, bt):
        mean = jnp.mean(h, axis=(0, 2), keepdims=True)
        var = jnp.var(h, axis=(0, 2), keepdims=True)      # biased, like PyTorch training
        return ((h - mean) * jax.lax.rsqrt(var + BN_EPS) * g[None, :, None]
                + bt[None, :, None])

    h = jnp.maximum(conv1d(rnd(x), rnd(params['w1']), params['b1'], STRIDE), 0.0)
    h = bn(h, params['g1'], params['bt1'])
    h = jnp.maximum(conv1d(rnd(h), rnd(params['w2']), params['b2'], STRIDE), 0.0)
    h = bn(h, params['g2'], params['bt2'])
    h = conv1d(h, params['w3'], params['b3'], STRIDE)      # (B, 1, 160)
    h = jnp.max(h.reshape(h.shape[0], 1, LIN_IN, POOL), axis=-1)  # MaxPool1d(16)
    h = jnp.abs(h)[:, 0, :]                                # abs + squeeze (B > 1)
    h = h @ params['wl'].T + params['bl']
    return 1.0 / (1.0 + jnp.exp(-h))


if __name__ == "__main__":
    key = jax.random.PRNGKey(0)
    pkey, xkey = jax.random.split(key)
    params = init_params(pkey)
    # batch=2, 1 channel, length 1378 (length forced by Linear(10, 2))
    x = jax.random.normal(xkey, (2, 1, L_IN), jnp.float32)
    out = spectrum_cls_forward(x, params)
    out = jax.block_until_ready(out)
    ref = reference_forward(x, params)
    assert out.shape == (2, LIN_OUT)
    assert bool(jnp.all(jnp.isfinite(out)))
    assert bool(jnp.allclose(out, ref, atol=2e-3, rtol=2e-3))
    print("KERNEL_OK")
</pallas_src>

<mosaic_0001>
module attributes {stable_mosaic.version = 11 : i64} {
  func.func @spectrum_cls_kernel(%arg0: memref<2x8x173xf32, #tpu.memory_space<vmem>>, %arg1: memref<32x16xbf16, #tpu.memory_space<vmem>>, %arg2: memref<64x512xbf16, #tpu.memory_space<vmem>>, %arg3: memref<8x64x1xf32, #tpu.memory_space<vmem>>, %arg4: memref<8x64x1xf32, #tpu.memory_space<vmem>>, %arg5: memref<1x32x1xf32, #tpu.memory_space<vmem>>, %arg6: memref<1x32x1xf32, #tpu.memory_space<vmem>>, %arg7: memref<1x32x1xf32, #tpu.memory_space<vmem>>, %arg8: memref<1x64x1xf32, #tpu.memory_space<vmem>>, %arg9: memref<1x64x1xf32, #tpu.memory_space<vmem>>, %arg10: memref<1x64x1xf32, #tpu.memory_space<vmem>>, %arg11: memref<1x1x1xf32, #tpu.memory_space<vmem>>, %arg12: memref<10x2xf32, #tpu.memory_space<vmem>>, %arg13: memref<1x1x2xf32, #tpu.memory_space<vmem>>, %arg14: memref<2x1x2xf32, #tpu.memory_space<vmem>>) attributes {dimension_semantics = [], scalar_prefetch = 0 : i64, scratch_operands = 0 : i64, tpu.core_type = #tpu.core_type<tc>} {
    %c0 = arith.constant 0 : index
    %c0_0 = arith.constant 0 : index
    %c0_1 = arith.constant 0 : index
    %0 = vector.load %arg0[%c0, %c0_0, %c0_1] : memref<2x8x173xf32, #tpu.memory_space<vmem>>, vector<2x8x173xf32>
    %1 = arith.truncf %0 : vector<2x8x173xf32> to vector<2x8x173xbf16>
    %c0_2 = arith.constant 0 : index
    %c0_3 = arith.constant 0 : index
    %2 = vector.load %arg1[%c0_2, %c0_3] : memref<32x16xbf16, #tpu.memory_space<vmem>>, vector<32x16xbf16>
    %c0_4 = arith.constant 0 : index
    %c0_5 = arith.constant 0 : index
    %3 = vector.load %arg2[%c0_4, %c0_5] : memref<64x512xbf16, #tpu.memory_space<vmem>>, vector<64x512xbf16>
    %cst = arith.constant 0.000000e+00 : f32
    %4 = vector.broadcast %cst : f32 to vector<2x32x171xf32>
    %5 = vector.extract_strided_slice %2 {offsets = [0, 0], sizes = [32, 8], strides = [1, 1]} : vector<32x16xbf16> to vector<32x8xbf16>
    %6 = vector.shape_cast %5 : vector<32x8xbf16> to vector<1x32x8xbf16>
    %7 = vector.shape_cast %6 : vector<1x32x8xbf16> to vector<1x32x8xbf16>
    %8 = vector.broadcast %7 : vector<1x32x8xbf16> to vector<2x32x8xbf16>
    %9 = vector.extract_strided_slice %1 {offsets = [0, 0, 0], sizes = [2, 8, 171], strides = [1, 1, 1]} : vector<2x8x173xbf16> to vector<2x8x171xbf16>
    "tpu.trace_start"() <{level = 10 : i32, message = "boc,bcs->bos"}> : () -> ()
    %cst_6 = arith.constant dense<0.000000e+00> : vector<2x32x171xf32>
    %10 = tpu.matmul %8, %9, %cst_6 {dimension_numbers = #tpu.dot_dimension_numbers<[2], [1], [1], [2], [0, 0, 0, 1, 1, 2], [0], [0]>} : vector<2x32x8xbf16>, vector<2x8x171xbf16>, vector<2x32x171xf32> -> vector<2x32x171xf32>
    "tpu.trace_stop"() : () -> ()
    %11 = arith.addf %4, %10 : vector<2x32x171xf32>
    %12 = vector.extract_strided_slice %2 {offsets = [0, 8], sizes = [32, 8], strides = [1, 1]} : vector<32x16xbf16> to vector<32x8xbf16>
    %13 = vector.shape_cast %12 : vector<32x8xbf16> to vector<1x32x8xbf16>
    %14 = vector.shape_cast %13 : vector<1x32x8xbf16> to vector<1x32x8xbf16>
    %15 = vector.broadcast %14 : vector<1x32x8xbf16> to vector<2x32x8xbf16>
    %16 = vector.extract_strided_slice %1 {offsets = [0, 0, 1], sizes = [2, 8, 171], strides = [1, 1, 1]} : vector<2x8x173xbf16> to vector<2x8x171xbf16>
    "tpu.trace_start"() <{level = 10 : i32, message = "boc,bcs->bos"}> : () -> ()
    %cst_7 = arith.constant dense<0.000000e+00> : vector<2x32x171xf32>
    %17 = tpu.matmul %15, %16, %cst_7 {dimension_numbers = #tpu.dot_dimension_numbers<[2], [1], [1], [2], [0, 0, 0, 1, 1, 2], [0], [0]>} : vector<2x32x8xbf16>, vector<2x8x171xbf16>, vector<2x32x171xf32> -> vector<2x32x171xf32>
    "tpu.trace_stop"() : () -> ()
    %18 = arith.addf %11, %17 : vector<2x32x171xf32>
    %cst_8 = arith.constant 0.000000e+00 : f32
    %19 = vector.broadcast %cst_8 : f32 to vector<2x32x171xf32>
    %20 = vector.extract_strided_slice %2 {offsets = [0, 0], sizes = [32, 6], strides = [1, 1]} : vector<32x16xbf16> to vector<32x6xbf16>
    %21 = vector.shape_cast %20 : vector<32x6xbf16> to vector<1x32x6xbf16>
    %22 = vector.shape_cast %21 : vector<1x32x6xbf16> to vector<1x32x6xbf16>
    %23 = vector.broadcast %22 : vector<1x32x6xbf16> to vector<2x32x6xbf16>
    %24 = vector.extract_strided_slice %1 {offsets = [0, 2, 0], sizes = [2, 6, 171], strides = [1, 1, 1]} : vector<2x8x173xbf16> to vector<2x6x171xbf16>
    "tpu.trace_start"() <{level = 10 : i32, message = "boc,bcs->bos"}> : () -> ()
    %cst_9 = arith.constant dense<0.000000e+00> : vector<2x32x171xf32>
    %25 = tpu.matmul %23, %24, %cst_9 {dimension_numbers = #tpu.dot_dimension_numbers<[2], [1], [1], [2], [0, 0, 0, 1, 1, 2], [0], [0]>} : vector<2x32x6xbf16>, vector<2x6x171xbf16>, vector<2x32x171xf32> -> vector<2x32x171xf32>
    "tpu.trace_stop"() : () -> ()
    %26 = arith.addf %19, %25 : vector<2x32x171xf32>
    %27 = vector.extract_strided_slice %2 {offsets = [0, 6], sizes = [32, 8], strides = [1, 1]} : vector<32x16xbf16> to vector<32x8xbf16>
    %28 = vector.shape_cast %27 : vector<32x8xbf16> to vector<1x32x8xbf16>
    %29 = vector.shape_cast %28 : vector<1x32x8xbf16> to vector<1x32x8xbf16>
    %30 = vector.broadcast %29 : vector<1x32x8xbf16> to vector<2x32x8xbf16>
    %31 = vector.extract_strided_slice %1 {offsets = [0, 0, 1], sizes = [2, 8, 171], strides = [1, 1, 1]} : vector<2x8x173xbf16> to vector<2x8x171xbf16>
    "tpu.trace_start"() <{level = 10 : i32, message = "boc,bcs->bos"}> : () -> ()
    %cst_10 = arith.constant dense<0.000000e+00> : vector<2x32x171xf32>
    %32 = tpu.matmul %30, %31, %cst_10 {dimension_numbers = #tpu.dot_dimension_numbers<[2], [1], [1], [2], [0, 0, 0, 1, 1, 2], [0], [0]>} : vector<2x32x8xbf16>, vector<2x8x171xbf16>, vector<2x32x171xf32> -> vector<2x32x171xf32>
    "tpu.trace_stop"() : () -> ()
    %33 = arith.addf %26, %32 : vector<2x32x171xf32>
    %34 = vector.extract_strided_slice %2 {offsets = [0, 14], sizes = [32, 2], strides = [1, 1]} : vector<32x16xbf16> to vector<32x2xbf16>
    %35 = vector.shape_cast %34 : vector<32x2xbf16> to vector<1x32x2xbf16>
    %36 = vector.shape_cast %35 : vector<1x32x2xbf16> to vector<1x32x2xbf16>
    %37 = vector.broadcast %36 : vector<1x32x2xbf16> to vector<2x32x2xbf16>
    %38 = vector.extract_strided_slice %1 {offsets = [0, 0, 2], sizes = [2, 2, 171], strides = [1, 1, 1]} : vector<2x8x173xbf16> to vector<2x2x171xbf16>
    "tpu.trace_start"() <{level = 10 : i32, message = "boc,bcs->bos"}> : () -> ()
    %cst_11 = arith.constant dense<0.000000e+00> : vector<2x32x171xf32>
    %39 = tpu.matmul %37, %38, %cst_11 {dimension_numbers = #tpu.dot_dimension_numbers<[2], [1], [1], [2], [0, 0, 0, 1, 1, 2], [0], [0]>} : vector<2x32x2xbf16>, vector<2x2x171xbf16>, vector<2x32x171xf32> -> vector<2x32x171xf32>
    "tpu.trace_stop"() : () -> ()
    %40 = arith.addf %33, %39 : vector<2x32x171xf32>
    %cst_12 = arith.constant 0.000000e+00 : f32
    %41 = vector.broadcast %cst_12 : f32 to vector<2x32x171xf32>
    %42 = vector.extract_strided_slice %2 {offsets = [0, 0], sizes = [32, 4], strides = [1, 1]} : vector<32x16xbf16> to vector<32x4xbf16>
    %43 = vector.shape_cast %42 : vector<32x4xbf16> to vector<1x32x4xbf16>
    %44 = vector.shape_cast %43 : vector<1x32x4xbf16> to vector<1x32x4xbf16>
    %45 = vector.broadcast %44 : vector<1x32x4xbf16> to vector<2x32x4xbf16>
    %46 = vector.extract_strided_slice %1 {offsets = [0, 4, 0], sizes = [2, 4, 171], strides = [1, 1, 1]} : vector<2x8x173xbf16> to vector<2x4x171xbf16>
    "tpu.trace_start"() <{level = 10 : i32, message = "boc,bcs->bos"}> : () -> ()
    %cst_13 = arith.constant dense<0.000000e+00> : vector<2x32x171xf32>
    %47 = tpu.matmul %45, %46, %cst_13 {dimension_numbers = #tpu.dot_dimension_numbers<[2], [1], [1], [2], [0, 0, 0, 1, 1, 2], [0], [0]>} : vector<2x32x4xbf16>, vector<2x4x171xbf16>, vector<2x32x171xf32> -> vector<2x32x171xf32>
    "tpu.trace_stop"() : () -> ()
    %48 = arith.addf %41, %47 : vector<2x32x171xf32>
    %49 = vector.extract_strided_slice %2 {offsets = [0, 4], sizes = [32, 8], strides = [1, 1]} : vector<32x16xbf16> to vector<32x8xbf16>
    %50 = vector.shape_cast %49 : vector<32x8xbf16> to vector<1x32x8xbf16>
    %51 = vector.shape_cast %50 : vector<1x32x8xbf16> to vector<1x32x8xbf16>
    %52 = vector.broadcast %51 : vector<1x32x8xbf16> to vector<2x32x8xbf16>
    %53 = vector.extract_strided_slice %1 {offsets = [0, 0, 1], sizes = [2, 8, 171], strides = [1, 1, 1]} : vector<2x8x173xbf16> to vector<2x8x171xbf16>
    "tpu.trace_start"() <{level = 10 : i32, message = "boc,bcs->bos"}> : () -> ()
    %cst_14 = arith.constant dense<0.000000e+00> : vector<2x32x171xf32>
    %54 = tpu.matmul %52, %53, %cst_14 {dimension_numbers = #tpu.dot_dimension_numbers<[2], [1], [1], [2], [0, 0, 0, 1, 1, 2], [0], [0]>} : vector<2x32x8xbf16>, vector<2x8x171xbf16>, vector<2x32x171xf32> -> vector<2x32x171xf32>
    "tpu.trace_stop"() : () -> ()
    %55 = arith.addf %48, %54 : vector<2x32x171xf32>
    %56 = vector.extract_strided_slice %2 {offsets = [0, 12], sizes = [32, 4], strides = [1, 1]} : vector<32x16xbf16> to vector<32x4xbf16>
    %57 = vector.shape_cast %56 : vector<32x4xbf16> to vector<1x32x4xbf16>
    %58 = vector.shape_cast %57 : vector<1x32x4xbf16> to vector<1x32x4xbf16>
    %59 = vector.broadcast %58 : vector<1x32x4xbf16> to vector<2x32x4xbf16>
    %60 = vector.extract_strided_slice %1 {offsets = [0, 0, 2], sizes = [2, 4, 171], strides = [1, 1, 1]} : vector<2x8x173xbf16> to vector<2x4x171xbf16>
    "tpu.trace_start"() <{level = 10 : i32, message = "boc,bcs->bos"}> : () -> ()
    %cst_15 = arith.constant dense<0.000000e+00> : vector<2x32x171xf32>
    %61 = tpu.matmul %59, %60, %cst_15 {dimension_numbers = #tpu.dot_dimension_numbers<[2], [1], [1], [2], [0, 0, 0, 1, 1, 2], [0], [0]>} : vector<2x32x4xbf16>, vector<2x4x171xbf16>, vector<2x32x171xf32> -> vector<2x32x171xf32>
    "tpu.trace_stop"() : () -> ()
    %62 = arith.addf %55, %61 : vector<2x32x171xf32>
    %cst_16 = arith.constant 0.000000e+00 : f32
    %63 = vector.broadcast %cst_16 : f32 to vector<2x32x171xf32>
    %64 = vector.extract_strided_slice %2 {offsets = [0, 0], sizes = [32, 2], strides = [1, 1]} : vector<32x16xbf16> to vector<32x2xbf16>
    %65 = vector.shape_cast %64 : vector<32x2xbf16> to vector<1x32x2xbf16>
    %66 = vector.shape_cast %65 : vector<1x32x2xbf16> to vector<1x32x2xbf16>
    %67 = vector.broadcast %66 : vector<1x32x2xbf16> to vector<2x32x2xbf16>
    %68 = vector.extract_strided_slice %1 {offsets = [0, 6, 0], sizes = [2, 2, 171], strides = [1, 1, 1]} : vector<2x8x173xbf16> to vector<2x2x171xbf16>
    "tpu.trace_start"() <{level = 10 : i32, message = "boc,bcs->bos"}> : () -> ()
    %cst_17 = arith.constant dense<0.000000e+00> : vector<2x32x171xf32>
    %69 = tpu.matmul %67, %68, %cst_17 {dimension_numbers = #tpu.dot_dimension_numbers<[2], [1], [1], [2], [0, 0, 0, 1, 1, 2], [0], [0]>} : vector<2x32x2xbf16>, vector<2x2x171xbf16>, vector<2x32x171xf32> -> vector<2x32x171xf32>
    "tpu.trace_stop"() : () -> ()
    %70 = arith.addf %63, %69 : vector<2x32x171xf32>
    %71 = vector.extract_strided_slice %2 {offsets = [0, 2], sizes = [32, 8], strides = [1, 1]} : vector<32x16xbf16> to vector<32x8xbf16>
    %72 = vector.shape_cast %71 : vector<32x8xbf16> to vector<1x32x8xbf16>
    %73 = vector.shape_cast %72 : vector<1x32x8xbf16> to vector<1x32x8xbf16>
    %74 = vector.broadcast %73 : vector<1x32x8xbf16> to vector<2x32x8xbf16>
    %75 = vector.extract_strided_slice %1 {offsets = [0, 0, 1], sizes = [2, 8, 171], strides = [1, 1, 1]} : vector<2x8x173xbf16> to vector<2x8x171xbf16>
    "tpu.trace_start"() <{level = 10 : i32, message = "boc,bcs->bos"}> : () -> ()
    %cst_18 = arith.constant dense<0.000000e+00> : vector<2x32x171xf32>
    %76 = tpu.matmul %74, %75, %cst_18 {dimension_numbers = #tpu.dot_dimension_numbers<[2], [1], [1], [2], [0, 0, 0, 1, 1, 2], [0], [0]>} : vector<2x32x8xbf16>, vector<2x8x171xbf16>, vector<2x32x171xf32> -> vector<2x32x171xf32>
    "tpu.trace_stop"() : () -> ()
    %77 = arith.addf %70, %76 : vector<2x32x171xf32>
    %78 = vector.extract_strided_slice %2 {offsets = [0, 10], sizes = [32, 6], strides = [1, 1]} : vector<32x16xbf16> to vector<32x6xbf16>
    %79 = vector.shape_cast %78 : vector<32x6xbf16> to vector<1x32x6xbf16>
    %80 = vector.shape_cast %79 : vector<1x32x6xbf16> to vector<1x32x6xbf16>
    %81 = vector.broadcast %80 : vector<1x32x6xbf16> to vector<2x32x6xbf16>
    %82 = vector.extract_strided_slice %1 {offsets = [0, 0, 2], sizes = [2, 6, 171], strides = [1, 1, 1]} : vector<2x8x173xbf16> to vector<2x6x171xbf16>
    "tpu.trace_start"() <{level = 10 : i32, message = "boc,bcs->bos"}> : () -> ()
    %cst_19 = arith.constant dense<0.000000e+00> : vector<2x32x171xf32>
    %83 = tpu.matmul %81, %82, %cst_19 {dimension_numbers = #tpu.dot_dimension_numbers<[2], [1], [1], [2], [0, 0, 0, 1, 1, 2], [0], [0]>} : vector<2x32x6xbf16>, vector<2x6x171xbf16>, vector<2x32x171xf32> -> vector<2x32x171xf32>
    "tpu.trace_stop"() : () -> ()
    %84 = arith.addf %77, %83 : vector<2x32x171xf32>
    %85 = tpu.concatenate %18, %40, %62, %84 in 1 : vector<2x32x171xf32>, vector<2x32x171xf32>, vector<2x32x171xf32>, vector<2x32x171xf32> -> vector<2x128x171xf32>
    %c0_20 = arith.constant 0 : index
    %c0_21 = arith.constant 0 : index
    %c0_22 = arith.constant 0 : index
    %86 = vector.load %arg5[%c0_20, %c0_21, %c0_22] : memref<1x32x1xf32, #tpu.memory_space<vmem>>, vector<1x32x1xf32>
    %87 = tpu.concatenate %86, %86, %86, %86 in 1 : vector<1x32x1xf32>, vector<1x32x1xf32>, vector<1x32x1xf32>, vector<1x32x1xf32> -> vector<1x128x1xf32>
    %88 = vector.broadcast %87 : vector<1x128x1xf32> to vector<2x128x171xf32>
    %89 = arith.addf %85, %88 : vector<2x128x171xf32>
    %cst_23 = arith.constant 0.000000e+00 : f32
    %90 = vector.broadcast %cst_23 : f32 to vector<2x128x171xf32>
    %91 = arith.maximumf %89, %90 : vector<2x128x171xf32>
    %92 = vector.extract_strided_slice %91 {offsets = [0, 0, 0], sizes = [2, 64, 171], strides = [1, 1, 1]} : vector<2x128x171xf32> to vector<2x64x171xf32>
    %93 = vector.extract_strided_slice %91 {offsets = [0, 64, 0], sizes = [2, 64, 170], strides = [1, 1, 1]} : vector<2x128x171xf32> to vector<2x64x170xf32>
    %cst_24 = arith.constant dense<0.000000e+00> : vector<2x64xf32>
    %94 = vector.multi_reduction <add>, %92, %cst_24 [2] : vector<2x64x171xf32> to vector<2x64xf32>
    %95 = vector.shape_cast %94 : vector<2x64xf32> to vector<2x64x1xf32>
    %cst_25 = arith.constant dense<0.000000e+00> : vector<64x1xf32>
    %96 = vector.multi_reduction <add>, %95, %cst_25 [0] : vector<2x64x1xf32> to vector<64x1xf32>
    %97 = vector.shape_cast %96 : vector<64x1xf32> to vector<1x64x1xf32>
    %cst_26 = arith.constant dense<0.000000e+00> : vector<2x64xf32>
    %98 = vector.multi_reduction <add>, %93, %cst_26 [2] : vector<2x64x170xf32> to vector<2x64xf32>
    %99 = vector.shape_cast %98 : vector<2x64xf32> to vector<2x64x1xf32>
    %cst_27 = arith.constant dense<0.000000e+00> : vector<64x1xf32>
    %100 = vector.multi_reduction <add>, %99, %cst_27 [0] : vector<2x64x1xf32> to vector<64x1xf32>
    %101 = vector.shape_cast %100 : vector<64x1xf32> to vector<1x64x1xf32>
    %102 = arith.mulf %92, %92 : vector<2x64x171xf32>
    %cst_28 = arith.constant dense<0.000000e+00> : vector<2x64xf32>
    %103 = vector.multi_reduction <add>, %102, %cst_28 [2] : vector<2x64x171xf32> to vector<2x64xf32>
    %104 = vector.shape_cast %103 : vector<2x64xf32> to vector<2x64x1xf32>
    %cst_29 = arith.constant dense<0.000000e+00> : vector<64x1xf32>
    %105 = vector.multi_reduction <add>, %104, %cst_29 [0] : vector<2x64x1xf32> to vector<64x1xf32>
    %106 = vector.shape_cast %105 : vector<64x1xf32> to vector<1x64x1xf32>
    %107 = arith.mulf %93, %93 : vector<2x64x170xf32>
    %cst_30 = arith.constant dense<0.000000e+00> : vector<2x64xf32>
    %108 = vector.multi_reduction <add>, %107, %cst_30 [2] : vector<2x64x170xf32> to vector<2x64xf32>
    %109 = vector.shape_cast %108 : vector<2x64xf32> to vector<2x64x1xf32>
    %cst_31 = arith.constant dense<0.000000e+00> : vector<64x1xf32>
    %110 = vector.multi_reduction <add>, %109, %cst_31 [0] : vector<2x64x1xf32> to vector<64x1xf32>
    %111 = vector.shape_cast %110 : vector<64x1xf32> to vector<1x64x1xf32>
    %112 = vector.extract_strided_slice %97 {offsets = [0, 0, 0], sizes = [1, 32, 1], strides = [1, 1, 1]} : vector<1x64x1xf32> to vector<1x32x1xf32>
    %113 = vector.extract_strided_slice %97 {offsets = [0, 32, 0], sizes = [1, 32, 1], strides = [1, 1, 1]} : vector<1x64x1xf32> to vector<1x32x1xf32>
    %114 = arith.addf %112, %113 : vector<1x32x1xf32>
    %115 = vector.extract_strided_slice %101 {offsets = [0, 0, 0], sizes = [1, 32, 1], strides = [1, 1, 1]} : vector<1x64x1xf32> to vector<1x32x1xf32>
    %116 = arith.addf %114, %115 : vector<1x32x1xf32>
    %117 = vector.extract_strided_slice %101 {offsets = [0, 32, 0], sizes = [1, 32, 1], strides = [1, 1, 1]} : vector<1x64x1xf32> to vector<1x32x1xf32>
    %118 = arith.addf %116, %117 : vector<1x32x1xf32>
    %119 = vector.extract_strided_slice %106 {offsets = [0, 0, 0], sizes = [1, 32, 1], strides = [1, 1, 1]} : vector<1x64x1xf32> to vector<1x32x1xf32>
    %120 = vector.extract_strided_slice %106 {offsets = [0, 32, 0], sizes = [1, 32, 1], strides = [1, 1, 1]} : vector<1x64x1xf32> to vector<1x32x1xf32>
    %121 = arith.addf %119, %120 : vector<1x32x1xf32>
    %122 = vector.extract_strided_slice %111 {offsets = [0, 0, 0], sizes = [1, 32, 1], strides = [1, 1, 1]} : vector<1x64x1xf32> to vector<1x32x1xf32>
    %123 = arith.addf %121, %122 : vector<1x32x1xf32>
    %124 = vector.extract_strided_slice %111 {offsets = [0, 32, 0], sizes = [1, 32, 1], strides = [1, 1, 1]} : vector<1x64x1xf32> to vector<1x32x1xf32>
    %125 = arith.addf %123, %124 : vector<1x32x1xf32>
    %cst_32 = arith.constant 1.364000e+03 : f32
    %126 = vector.broadcast %cst_32 : f32 to vector<1x32x1xf32>
    %127 = arith.divf %118, %126 : vector<1x32x1xf32>
    %cst_33 = arith.constant 1.364000e+03 : f32
    %128 = vector.broadcast %cst_33 : f32 to vector<1x32x1xf32>
    %129 = arith.divf %125, %128 : vector<1x32x1xf32>
    %130 = arith.mulf %127, %127 : vector<1x32x1xf32>
    %131 = arith.subf %129, %130 : vector<1x32x1xf32>
    %cst_34 = arith.constant 9.99999974E-6 : f32
    %132 = vector.broadcast %cst_34 : f32 to vector<1x32x1xf32>
    %133 = arith.addf %131, %132 : vector<1x32x1xf32>
    %134 = math.rsqrt %133 : vector<1x32x1xf32>
    %c0_35 = arith.constant 0 : index
    %c0_36 = arith.constant 0 : index
    %c0_37 = arith.constant 0 : index
    %135 = vector.load %arg6[%c0_35, %c0_36, %c0_37] : memref<1x32x1xf32, #tpu.memory_space<vmem>>, vector<1x32x1xf32>
    %136 = arith.mulf %134, %135 : vector<1x32x1xf32>
    %c0_38 = arith.constant 0 : index
    %c0_39 = arith.constant 0 : index
    %c0_40 = arith.constant 0 : index
    %137 = vector.load %arg7[%c0_38, %c0_39, %c0_40] : memref<1x32x1xf32, #tpu.memory_space<vmem>>, vector<1x32x1xf32>
    %138 = arith.mulf %127, %136 : vector<1x32x1xf32>
    %139 = arith.subf %137, %138 : vector<1x32x1xf32>
    %140 = tpu.concatenate %136, %136, %136, %136 in 1 : vector<1x32x1xf32>, vector<1x32x1xf32>, vector<1x32x1xf32>, vector<1x32x1xf32> -> vector<1x128x1xf32>
    %141 = tpu.concatenate %139, %139, %139, %139 in 1 : vector<1x32x1xf32>, vector<1x32x1xf32>, vector<1x32x1xf32>, vector<1x32x1xf32> -> vector<1x128x1xf32>
    %142 = vector.broadcast %140 : vector<1x128x1xf32> to vector<2x128x171xf32>
    %143 = arith.mulf %91, %142 : vector<2x128x171xf32>
    %144 = vector.broadcast %141 : vector<1x128x1xf32> to vector<2x128x171xf32>
    %145 = arith.addf %143, %144 : vector<2x128x171xf32>
    %146 = arith.truncf %145 : vector<2x128x171xf32> to vector<2x128x171xbf16>
    %c0_41 = arith.constant 0 : index
    %c0_42 = arith.constant 0 : index
    %c0_43 = arith.constant 0 : index
    %147 = vector.load %arg8[%c0_41, %c0_42, %c0_43] : memref<1x64x1xf32, #tpu.memory_space<vmem>>, vector<1x64x1xf32>
    %cst_44 = arith.constant 0.000000e+00 : f32
    %148 = vector.broadcast %cst_44 : f32 to vector<2x64x167xf32>
    %149 = vector.extract_strided_slice %3 {offsets = [0, 0], sizes = [64, 128], strides = [1, 1]} : vector<64x512xbf16> to vector<64x128xbf16>
    %150 = vector.shape_cast %149 : vector<64x128xbf16> to vector<1x64x128xbf16>
    %151 = vector.shape_cast %150 : vector<1x64x128xbf16> to vector<1x64x128xbf16>
    %152 = vector.broadcast %151 : vector<1x64x128xbf16> to vector<2x64x128xbf16>
    %153 = vector.extract_strided_slice %146 {offsets = [0, 0, 0], sizes = [2, 128, 167], strides = [1, 1, 1]} : vector<2x128x171xbf16> to vector<2x128x167xbf16>
    "tpu.trace_start"() <{level = 10 : i32, message = "boc,bcs->bos"}> : () -> ()
    %cst_45 = arith.constant dense<0.000000e+00> : vector<2x64x167xf32>
    %154 = tpu.matmul %152, %153, %cst_45 {dimension_numbers = #tpu.dot_dimension_numbers<[2], [1], [1], [2], [0, 0, 0, 1, 1, 2], [0], [0]>} : vector<2x64x128xbf16>, vector<2x128x167xbf16>, vector<2x64x167xf32> -> vector<2x64x167xf32>
    "tpu.trace_stop"() : () -> ()
    %155 = arith.addf %148, %154 : vector<2x64x167xf32>
    %156 = vector.extract_strided_slice %3 {offsets = [0, 128], sizes = [64, 128], strides = [1, 1]} : vector<64x512xbf16> to vector<64x128xbf16>
    %157 = vector.shape_cast %156 : vector<64x128xbf16> to vector<1x64x128xbf16>
    %158 = vector.shape_cast %157 : vector<1x64x128xbf16> to vector<1x64x128xbf16>
    %159 = vector.broadcast %158 : vector<1x64x128xbf16> to vector<2x64x128xbf16>
    %160 = vector.extract_strided_slice %146 {offsets = [0, 0, 1], sizes = [2, 128, 167], strides = [1, 1, 1]} : vector<2x128x171xbf16> to vector<2x128x167xbf16>
    "tpu.trace_start"() <{level = 10 : i32, message = "boc,bcs->bos"}> : () -> ()
    %cst_46 = arith.constant dense<0.000000e+00> : vector<2x64x167xf32>
    %161 = tpu.matmul %159, %160, %cst_46 {dimension_numbers = #tpu.dot_dimension_numbers<[2], [1], [1], [2], [0, 0, 0, 1, 1, 2], [0], [0]>} : vector<2x64x128xbf16>, vector<2x128x167xbf16>, vector<2x64x167xf32> -> vector<2x64x167xf32>
    "tpu.trace_stop"() : () -> ()
    %162 = arith.addf %155, %161 : vector<2x64x167xf32>
    %163 = vector.extract_strided_slice %3 {offsets = [0, 256], sizes = [64, 128], strides = [1, 1]} : vector<64x512xbf16> to vector<64x128xbf16>
    %164 = vector.shape_cast %163 : vector<64x128xbf16> to vector<1x64x128xbf16>
    %165 = vector.shape_cast %164 : vector<1x64x128xbf16> to vector<1x64x128xbf16>
    %166 = vector.broadcast %165 : vector<1x64x128xbf16> to vector<2x64x128xbf16>
    %167 = vector.extract_strided_slice %146 {offsets = [0, 0, 2], sizes = [2, 128, 167], strides = [1, 1, 1]} : vector<2x128x171xbf16> to vector<2x128x167xbf16>
    "tpu.trace_start"() <{level = 10 : i32, message = "boc,bcs->bos"}> : () -> ()
    %cst_47 = arith.constant dense<0.000000e+00> : vector<2x64x167xf32>
    %168 = tpu.matmul %166, %167, %cst_47 {dimension_numbers = #tpu.dot_dimension_numbers<[2], [1], [1], [2], [0, 0, 0, 1, 1, 2], [0], [0]>} : vector<2x64x128xbf16>, vector<2x128x167xbf16>, vector<2x64x167xf32> -> vector<2x64x167xf32>
    "tpu.trace_stop"() : () -> ()
    %169 = arith.addf %162, %168 : vector<2x64x167xf32>
    %170 = vector.extract_strided_slice %3 {offsets = [0, 384], sizes = [64, 128], strides = [1, 1]} : vector<64x512xbf16> to vector<64x128xbf16>
    %171 = vector.shape_cast %170 : vector<64x128xbf16> to vector<1x64x128xbf16>
    %172 = vector.shape_cast %171 : vector<1x64x128xbf16> to vector<1x64x128xbf16>
    %173 = vector.broadcast %172 : vector<1x64x128xbf16> to vector<2x64x128xbf16>
    %174 = vector.extract_strided_slice %146 {offsets = [0, 0, 3], sizes = [2, 128, 167], strides = [1, 1, 1]} : vector<2x128x171xbf16> to vector<2x128x167xbf16>
    "tpu.trace_start"() <{level = 10 : i32, message = "boc,bcs->bos"}> : () -> ()
    %cst_48 = arith.constant dense<0.000000e+00> : vector<2x64x167xf32>
    %175 = tpu.matmul %173, %174, %cst_48 {dimension_numbers = #tpu.dot_dimension_numbers<[2], [1], [1], [2], [0, 0, 0, 1, 1, 2], [0], [0]>} : vector<2x64x128xbf16>, vector<2x128x167xbf16>, vector<2x64x167xf32> -> vector<2x64x167xf32>
    "tpu.trace_stop"() : () -> ()
    %176 = arith.addf %169, %175 : vector<2x64x167xf32>
    %177 = vector.broadcast %147 : vector<1x64x1xf32> to vector<2x64x167xf32>
    %178 = arith.addf %176, %177 : vector<2x64x167xf32>
    %cst_49 = arith.constant 0.000000e+00 : f32
    %179 = vector.broadcast %cst_49 : f32 to vector<2x64x167xf32>
    %180 = arith.maximumf %178, %179 : vector<2x64x167xf32>
    %cst_50 = arith.constant 0.000000e+00 : f32
    %181 = vector.broadcast %cst_50 : f32 to vector<2x64x167xf32>
    %182 = vector.extract_strided_slice %3 {offsets = [0, 0], sizes = [64, 64], strides = [1, 1]} : vector<64x512xbf16> to vector<64x64xbf16>
    %183 = vector.shape_cast %182 : vector<64x64xbf16> to vector<1x64x64xbf16>
    %184 = vector.shape_cast %183 : vector<1x64x64xbf16> to vector<1x64x64xbf16>
    %185 = vector.broadcast %184 : vector<1x64x64xbf16> to vector<2x64x64xbf16>
    %186 = vector.extract_strided_slice %146 {offsets = [0, 64, 0], sizes = [2, 64, 167], strides = [1, 1, 1]} : vector<2x128x171xbf16> to vector<2x64x167xbf16>
    "tpu.trace_start"() <{level = 10 : i32, message = "boc,bcs->bos"}> : () -> ()
    %cst_51 = arith.constant dense<0.000000e+00> : vector<2x64x167xf32>
    %187 = tpu.matmul %185, %186, %cst_51 {dimension_numbers = #tpu.dot_dimension_numbers<[2], [1], [1], [2], [0, 0, 0, 1, 1, 2], [0], [0]>} : vector<2x64x64xbf16>, vector<2x64x167xbf16>, vector<2x64x167xf32> -> vector<2x64x167xf32>
    "tpu.trace_stop"() : () -> ()
    %188 = arith.addf %181, %187 : vector<2x64x167xf32>
    %189 = vector.extract_strided_slice %3 {offsets = [0, 64], sizes = [64, 128], strides = [1, 1]} : vector<64x512xbf16> to vector<64x128xbf16>
    %190 = vector.shape_cast %189 : vector<64x128xbf16> to vector<1x64x128xbf16>
    %191 = vector.shape_cast %190 : vector<1x64x128xbf16> to vector<1x64x128xbf16>
    %192 = vector.broadcast %191 : vector<1x64x128xbf16> to vector<2x64x128xbf16>
    %193 = vector.extract_strided_slice %146 {offsets = [0, 0, 1], sizes = [2, 128, 167], strides = [1, 1, 1]} : vector<2x128x171xbf16> to vector<2x128x167xbf16>
    "tpu.trace_start"() <{level = 10 : i32, message = "boc,bcs->bos"}> : () -> ()
    %cst_52 = arith.constant dense<0.000000e+00> : vector<2x64x167xf32>
    %194 = tpu.matmul %192, %193, %cst_52 {dimension_numbers = #tpu.dot_dimension_numbers<[2], [1], [1], [2], [0, 0, 0, 1, 1, 2], [0], [0]>} : vector<2x64x128xbf16>, vector<2x128x167xbf16>, vector<2x64x167xf32> -> vector<2x64x167xf32>
    "tpu.trace_stop"() : () -> ()
    %195 = arith.addf %188, %194 : vector<2x64x167xf32>
    %196 = vector.extract_strided_slice %3 {offsets = [0, 192], sizes = [64, 128], strides = [1, 1]} : vector<64x512xbf16> to vector<64x128xbf16>
    %197 = vector.shape_cast %196 : vector<64x128xbf16> to vector<1x64x128xbf16>
    %198 = vector.shape_cast %197 : vector<1x64x128xbf16> to vector<1x64x128xbf16>
    %199 = vector.broadcast %198 : vector<1x64x128xbf16> to vector<2x64x128xbf16>
    %200 = vector.extract_strided_slice %146 {offsets = [0, 0, 2], sizes = [2, 128, 167], strides = [1, 1, 1]} : vector<2x128x171xbf16> to vector<2x128x167xbf16>
    "tpu.trace_start"() <{level = 10 : i32, message = "boc,bcs->bos"}> : () -> ()
    %cst_53 = arith.constant dense<0.000000e+00> : vector<2x64x167xf32>
    %201 = tpu.matmul %199, %200, %cst_53 {dimension_numbers = #tpu.dot_dimension_numbers<[2], [1], [1], [2], [0, 0, 0, 1, 1, 2], [0], [0]>} : vector<2x64x128xbf16>, vector<2x128x167xbf16>, vector<2x64x167xf32> -> vector<2x64x167xf32>
    "tpu.trace_stop"() : () -> ()
    %202 = arith.addf %195, %201 : vector<2x64x167xf32>
    %203 = vector.extract_strided_slice %3 {offsets = [0, 320], sizes = [64, 128], strides = [1, 1]} : vector<64x512xbf16> to vector<64x128xbf16>
    %204 = vector.shape_cast %203 : vector<64x128xbf16> to vector<1x64x128xbf16>
    %205 = vector.shape_cast %204 : vector<1x64x128xbf16> to vector<1x64x128xbf16>
    %206 = vector.broadcast %205 : vector<1x64x128xbf16> to vector<2x64x128xbf16>
    %207 = vector.extract_strided_slice %146 {offsets = [0, 0, 3], sizes = [2, 128, 167], strides = [1, 1, 1]} : vector<2x128x171xbf16> to vector<2x128x167xbf16>
    "tpu.trace_start"() <{level = 10 : i32, message = "boc,bcs->bos"}> : () -> ()
    %cst_54 = arith.constant dense<0.000000e+00> : vector<2x64x167xf32>
    %208 = tpu.matmul %206, %207, %cst_54 {dimension_numbers = #tpu.dot_dimension_numbers<[2], [1], [1], [2], [0, 0, 0, 1, 1, 2], [0], [0]>} : vector<2x64x128xbf16>, vector<2x128x167xbf16>, vector<2x64x167xf32> -> vector<2x64x167xf32>
    "tpu.trace_stop"() : () -> ()
    %209 = arith.addf %202, %208 : vector<2x64x167xf32>
    %210 = vector.extract_strided_slice %3 {offsets = [0, 448], sizes = [64, 64], strides = [1, 1]} : vector<64x512xbf16> to vector<64x64xbf16>
    %211 = vector.shape_cast %210 : vector<64x64xbf16> to vector<1x64x64xbf16>
    %212 = vector.shape_cast %211 : vector<1x64x64xbf16> to vector<1x64x64xbf16>
    %213 = vector.broadcast %212 : vector<1x64x64xbf16> to vector<2x64x64xbf16>
    %214 = vector.extract_strided_slice %146 {offsets = [0, 0, 4], sizes = [2, 64, 167], strides = [1, 1, 1]} : vector<2x128x171xbf16> to vector<2x64x167xbf16>
    "tpu.trace_start"() <{level = 10 : i32, message = "boc,bcs->bos"}> : () -> ()
    %cst_55 = arith.constant dense<0.000000e+00> : vector<2x64x167xf32>
    %215 = tpu.matmul %213, %214, %cst_55 {dimension_numbers = #tpu.dot_dimension_numbers<[2], [1], [1], [2], [0, 0, 0, 1, 1, 2], [0], [0]>} : vector<2x64x64xbf16>, vector<2x64x167xbf16>, vector<2x64x167xf32> -> vector<2x64x167xf32>
    "tpu.trace_stop"() : () -> ()
    %216 = arith.addf %209, %215 : vector<2x64x167xf32>
    %217 = vector.broadcast %147 : vector<1x64x1xf32> to vector<2x64x167xf32>
    %218 = arith.addf %216, %217 : vector<2x64x167xf32>
    %cst_56 = arith.constant 0.000000e+00 : f32
    %219 = vector.broadcast %cst_56 : f32 to vector<2x64x167xf32>
    %220 = arith.maximumf %218, %219 : vector<2x64x167xf32>
    %cst_57 = arith.constant dense<0.000000e+00> : vector<2x64xf32>
    %221 = vector.multi_reduction <add>, %180, %cst_57 [2] : vector<2x64x167xf32> to vector<2x64xf32>
    %222 = vector.shape_cast %221 : vector<2x64xf32> to vector<2x64x1xf32>
    %cst_58 = arith.constant dense<0.000000e+00> : vector<64x1xf32>
    %223 = vector.multi_reduction <add>, %222, %cst_58 [0] : vector<2x64x1xf32> to vector<64x1xf32>
    %224 = vector.shape_cast %223 : vector<64x1xf32> to vector<1x64x1xf32>
    %cst_59 = arith.constant dense<0.000000e+00> : vector<2x64xf32>
    %225 = vector.multi_reduction <add>, %220, %cst_59 [2] : vector<2x64x167xf32> to vector<2x64xf32>
    %226 = vector.shape_cast %225 : vector<2x64xf32> to vector<2x64x1xf32>
    %cst_60 = arith.constant dense<0.000000e+00> : vector<64x1xf32>
    %227 = vector.multi_reduction <add>, %226, %cst_60 [0] : vector<2x64x1xf32> to vector<64x1xf32>
    %228 = vector.shape_cast %227 : vector<64x1xf32> to vector<1x64x1xf32>
    %229 = arith.addf %224, %228 : vector<1x64x1xf32>
    %230 = arith.mulf %180, %180 : vector<2x64x167xf32>
    %cst_61 = arith.constant dense<0.000000e+00> : vector<2x64xf32>
    %231 = vector.multi_reduction <add>, %230, %cst_61 [2] : vector<2x64x167xf32> to vector<2x64xf32>
    %232 = vector.shape_cast %231 : vector<2x64xf32> to vector<2x64x1xf32>
    %cst_62 = arith.constant dense<0.000000e+00> : vector<64x1xf32>
    %233 = vector.multi_reduction <add>, %232, %cst_62 [0] : vector<2x64x1xf32> to vector<64x1xf32>
    %234 = vector.shape_cast %233 : vector<64x1xf32> to vector<1x64x1xf32>
    %235 = arith.mulf %220, %220 : vector<2x64x167xf32>
    %cst_63 = arith.constant dense<0.000000e+00> : vector<2x64xf32>
    %236 = vector.multi_reduction <add>, %235, %cst_63 [2] : vector<2x64x167xf32> to vector<2x64xf32>
    %237 = vector.shape_cast %236 : vector<2x64xf32> to vector<2x64x1xf32>
    %cst_64 = arith.constant dense<0.000000e+00> : vector<64x1xf32>
    %238 = vector.multi_reduction <add>, %237, %cst_64 [0] : vector<2x64x1xf32> to vector<64x1xf32>
    %239 = vector.shape_cast %238 : vector<64x1xf32> to vector<1x64x1xf32>
    %240 = arith.addf %234, %239 : vector<1x64x1xf32>
    %cst_65 = arith.constant 6.680000e+02 : f32
    %241 = vector.broadcast %cst_65 : f32 to vector<1x64x1xf32>
    %242 = arith.divf %229, %241 : vector<1x64x1xf32>
    %cst_66 = arith.constant 6.680000e+02 : f32
    %243 = vector.broadcast %cst_66 : f32 to vector<1x64x1xf32>
    %244 = arith.divf %240, %243 : vector<1x64x1xf32>
    %245 = arith.mulf %242, %242 : vector<1x64x1xf32>
    %246 = arith.subf %244, %245 : vector<1x64x1xf32>
    %cst_67 = arith.constant 9.99999974E-6 : f32
    %247 = vector.broadcast %cst_67 : f32 to vector<1x64x1xf32>
    %248 = arith.addf %246, %247 : vector<1x64x1xf32>
    %249 = math.rsqrt %248 : vector<1x64x1xf32>
    %c0_68 = arith.constant 0 : index
    %c0_69 = arith.constant 0 : index
    %c0_70 = arith.constant 0 : index
    %250 = vector.load %arg9[%c0_68, %c0_69, %c0_70] : memref<1x64x1xf32, #tpu.memory_space<vmem>>, vector<1x64x1xf32>
    %251 = arith.mulf %249, %250 : vector<1x64x1xf32>
    %c0_71 = arith.constant 0 : index
    %c0_72 = arith.constant 0 : index
    %c0_73 = arith.constant 0 : index
    %252 = vector.load %arg10[%c0_71, %c0_72, %c0_73] : memref<1x64x1xf32, #tpu.memory_space<vmem>>, vector<1x64x1xf32>
    %253 = arith.mulf %242, %251 : vector<1x64x1xf32>
    %254 = arith.subf %252, %253 : vector<1x64x1xf32>
    %255 = vector.broadcast %251 : vector<1x64x1xf32> to vector<2x64x167xf32>
    %256 = arith.mulf %180, %255 : vector<2x64x167xf32>
    %257 = vector.broadcast %254 : vector<1x64x1xf32> to vector<2x64x167xf32>
    %258 = arith.addf %256, %257 : vector<2x64x167xf32>
    %259 = vector.broadcast %251 : vector<1x64x1xf32> to vector<2x64x167xf32>
    %260 = arith.mulf %220, %259 : vector<2x64x167xf32>
    %261 = vector.broadcast %254 : vector<1x64x1xf32> to vector<2x64x167xf32>
    %262 = arith.addf %260, %261 : vector<2x64x167xf32>
    %c0_74 = arith.constant 0 : index
    %c0_75 = arith.constant 0 : index
    %c0_76 = arith.constant 0 : index
    %263 = vector.load %arg3[%c0_74, %c0_75, %c0_76] : memref<8x64x1xf32, #tpu.memory_space<vmem>>, vector<8x64x1xf32>
    %c0_77 = arith.constant 0 : index
    %c0_78 = arith.constant 0 : index
    %c0_79 = arith.constant 0 : index
    %264 = vector.load %arg4[%c0_77, %c0_78, %c0_79] : memref<8x64x1xf32, #tpu.memory_space<vmem>>, vector<8x64x1xf32>
    %cst_80 = arith.constant 0.000000e+00 : f32
    %265 = vector.broadcast %cst_80 : f32 to vector<2x64x160xf32>
    %266 = vector.extract_strided_slice %258 {offsets = [0, 0, 0], sizes = [2, 64, 160], strides = [1, 1, 1]} : vector<2x64x167xf32> to vector<2x64x160xf32>
    %267 = vector.extract_strided_slice %263 {offsets = [0, 0, 0], sizes = [1, 64, 1], strides = [1, 1, 1]} : vector<8x64x1xf32> to vector<1x64x1xf32>
    %268 = vector.shape_cast %267 : vector<1x64x1xf32> to vector<64x1xf32>
    %269 = vector.shape_cast %268 : vector<64x1xf32> to vector<1x64x1xf32>
    %270 = vector.broadcast %269 : vector<1x64x1xf32> to vector<2x64x160xf32>
    %271 = arith.mulf %266, %270 : vector<2x64x160xf32>
    %272 = arith.addf %265, %271 : vector<2x64x160xf32>
    %273 = vector.extract_strided_slice %262 {offsets = [0, 0, 0], sizes = [2, 64, 160], strides = [1, 1, 1]} : vector<2x64x167xf32> to vector<2x64x160xf32>
    %274 = vector.extract_strided_slice %264 {offsets = [0, 0, 0], sizes = [1, 64, 1], strides = [1, 1, 1]} : vector<8x64x1xf32> to vector<1x64x1xf32>
    %275 = vector.shape_cast %274 : vector<1x64x1xf32> to vector<64x1xf32>
    %276 = vector.shape_cast %275 : vector<64x1xf32> to vector<1x64x1xf32>
    %277 = vector.broadcast %276 : vector<1x64x1xf32> to vector<2x64x160xf32>
    %278 = arith.mulf %273, %277 : vector<2x64x160xf32>
    %279 = arith.addf %272, %278 : vector<2x64x160xf32>
    %280 = vector.extract_strided_slice %258 {offsets = [0, 0, 1], sizes = [2, 64, 160], strides = [1, 1, 1]} : vector<2x64x167xf32> to vector<2x64x160xf32>
    %281 = vector.extract_strided_slice %263 {offsets = [1, 0, 0], sizes = [1, 64, 1], strides = [1, 1, 1]} : vector<8x64x1xf32> to vector<1x64x1xf32>
    %282 = vector.shape_cast %281 : vector<1x64x1xf32> to vector<64x1xf32>
    %283 = vector.shape_cast %282 : vector<64x1xf32> to vector<1x64x1xf32>
    %284 = vector.broadcast %283 : vector<1x64x1xf32> to vector<2x64x160xf32>
    %285 = arith.mulf %280, %284 : vector<2x64x160xf32>
    %286 = arith.addf %279, %285 : vector<2x64x160xf32>
    %287 = vector.extract_strided_slice %262 {offsets = [0, 0, 1], sizes = [2, 64, 160], strides = [1, 1, 1]} : vector<2x64x167xf32> to vector<2x64x160xf32>
    %288 = vector.extract_strided_slice %264 {offsets = [1, 0, 0], sizes = [1, 64, 1], strides = [1, 1, 1]} : vector<8x64x1xf32> to vector<1x64x1xf32>
    %289 = vector.shape_cast %288 : vector<1x64x1xf32> to vector<64x1xf32>
    %290 = vector.shape_cast %289 : vector<64x1xf32> to vector<1x64x1xf32>
    %291 = vector.broadcast %290 : vector<1x64x1xf32> to vector<2x64x160xf32>
    %292 = arith.mulf %287, %291 : vector<2x64x160xf32>
    %293 = arith.addf %286, %292 : vector<2x64x160xf32>
    %294 = vector.extract_strided_slice %258 {offsets = [0, 0, 2], sizes = [2, 64, 160], strides = [1, 1, 1]} : vector<2x64x167xf32> to vector<2x64x160xf32>
    %295 = vector.extract_strided_slice %263 {offsets = [2, 0, 0], sizes = [1, 64, 1], strides = [1, 1, 1]} : vector<8x64x1xf32> to vector<1x64x1xf32>
    %296 = vector.shape_cast %295 : vector<1x64x1xf32> to vector<64x1xf32>
    %297 = vector.shape_cast %296 : vector<64x1xf32> to vector<1x64x1xf32>
    %298 = vector.broadcast %297 : vector<1x64x1xf32> to vector<2x64x160xf32>
    %299 = arith.mulf %294, %298 : vector<2x64x160xf32>
    %300 = arith.addf %293, %299 : vector<2x64x160xf32>
    %301 = vector.extract_strided_slice %262 {offsets = [0, 0, 2], sizes = [2, 64, 160], strides = [1, 1, 1]} : vector<2x64x167xf32> to vector<2x64x160xf32>
    %302 = vector.extract_strided_slice %264 {offsets = [2, 0, 0], sizes = [1, 64, 1], strides = [1, 1, 1]} : vector<8x64x1xf32> to vector<1x64x1xf32>
    %303 = vector.shape_cast %302 : vector<1x64x1xf32> to vector<64x1xf32>
    %304 = vector.shape_cast %303 : vector<64x1xf32> to vector<1x64x1xf32>
    %305 = vector.broadcast %304 : vector<1x64x1xf32> to vector<2x64x160xf32>
    %306 = arith.mulf %301, %305 : vector<2x64x160xf32>
    %307 = arith.addf %300, %306 : vector<2x64x160xf32>
    %308 = vector.extract_strided_slice %258 {offsets = [0, 0, 3], sizes = [2, 64, 160], strides = [1, 1, 1]} : vector<2x64x167xf32> to vector<2x64x160xf32>
    %309 = vector.extract_strided_slice %263 {offsets = [3, 0, 0], sizes = [1, 64, 1], strides = [1, 1, 1]} : vector<8x64x1xf32> to vector<1x64x1xf32>
    %310 = vector.shape_cast %309 : vector<1x64x1xf32> to vector<64x1xf32>
    %311 = vector.shape_cast %310 : vector<64x1xf32> to vector<1x64x1xf32>
    %312 = vector.broadcast %311 : vector<1x64x1xf32> to vector<2x64x160xf32>
    %313 = arith.mulf %308, %312 : vector<2x64x160xf32>
    %314 = arith.addf %307, %313 : vector<2x64x160xf32>
    %315 = vector.extract_strided_slice %262 {offsets = [0, 0, 3], sizes = [2, 64, 160], strides = [1, 1, 1]} : vector<2x64x167xf32> to vector<2x64x160xf32>
    %316 = vector.extract_strided_slice %264 {offsets = [3, 0, 0], sizes = [1, 64, 1], strides = [1, 1, 1]} : vector<8x64x1xf32> to vector<1x64x1xf32>
    %317 = vector.shape_cast %316 : vector<1x64x1xf32> to vector<64x1xf32>
    %318 = vector.shape_cast %317 : vector<64x1xf32> to vector<1x64x1xf32>
    %319 = vector.broadcast %318 : vector<1x64x1xf32> to vector<2x64x160xf32>
    %320 = arith.mulf %315, %319 : vector<2x64x160xf32>
    %321 = arith.addf %314, %320 : vector<2x64x160xf32>
    %322 = vector.extract_strided_slice %258 {offsets = [0, 0, 4], sizes = [2, 64, 160], strides = [1, 1, 1]} : vector<2x64x167xf32> to vector<2x64x160xf32>
    %323 = vector.extract_strided_slice %263 {offsets = [4, 0, 0], sizes = [1, 64, 1], strides = [1, 1, 1]} : vector<8x64x1xf32> to vector<1x64x1xf32>
    %324 = vector.shape_cast %323 : vector<1x64x1xf32> to vector<64x1xf32>
    %325 = vector.shape_cast %324 : vector<64x1xf32> to vector<1x64x1xf32>
    %326 = vector.broadcast %325 : vector<1x64x1xf32> to vector<2x64x160xf32>
    %327 = arith.mulf %322, %326 : vector<2x64x160xf32>
    %328 = arith.addf %321, %327 : vector<2x64x160xf32>
    %329 = vector.extract_strided_slice %262 {offsets = [0, 0, 4], sizes = [2, 64, 160], strides = [1, 1, 1]} : vector<2x64x167xf32> to vector<2x64x160xf32>
    %330 = vector.extract_strided_slice %264 {offsets = [4, 0, 0], sizes = [1, 64, 1], strides = [1, 1, 1]} : vector<8x64x1xf32> to vector<1x64x1xf32>
    %331 = vector.shape_cast %330 : vector<1x64x1xf32> to vector<64x1xf32>
    %332 = vector.shape_cast %331 : vector<64x1xf32> to vector<1x64x1xf32>
    %333 = vector.broadcast %332 : vector<1x64x1xf32> to vector<2x64x160xf32>
    %334 = arith.mulf %329, %333 : vector<2x64x160xf32>
    %335 = arith.addf %328, %334 : vector<2x64x160xf32>
    %336 = vector.extract_strided_slice %258 {offsets = [0, 0, 5], sizes = [2, 64, 160], strides = [1, 1, 1]} : vector<2x64x167xf32> to vector<2x64x160xf32>
    %337 = vector.extract_strided_slice %263 {offsets = [5, 0, 0], sizes = [1, 64, 1], strides = [1, 1, 1]} : vector<8x64x1xf32> to vector<1x64x1xf32>
    %338 = vector.shape_cast %337 : vector<1x64x1xf32> to vector<64x1xf32>
    %339 = vector.shape_cast %338 : vector<64x1xf32> to vector<1x64x1xf32>
    %340 = vector.broadcast %339 : vector<1x64x1xf32> to vector<2x64x160xf32>
    %341 = arith.mulf %336, %340 : vector<2x64x160xf32>
    %342 = arith.addf %335, %341 : vector<2x64x160xf32>
    %343 = vector.extract_strided_slice %262 {offsets = [0, 0, 5], sizes = [2, 64, 160], strides = [1, 1, 1]} : vector<2x64x167xf32> to vector<2x64x160xf32>
    %344 = vector.extract_strided_slice %264 {offsets = [5, 0, 0], sizes = [1, 64, 1], strides = [1, 1, 1]} : vector<8x64x1xf32> to vector<1x64x1xf32>
    %345 = vector.shape_cast %344 : vector<1x64x1xf32> to vector<64x1xf32>
    %346 = vector.shape_cast %345 : vector<64x1xf32> to vector<1x64x1xf32>
    %347 = vector.broadcast %346 : vector<1x64x1xf32> to vector<2x64x160xf32>
    %348 = arith.mulf %343, %347 : vector<2x64x160xf32>
    %349 = arith.addf %342, %348 : vector<2x64x160xf32>
    %350 = vector.extract_strided_slice %258 {offsets = [0, 0, 6], sizes = [2, 64, 160], strides = [1, 1, 1]} : vector<2x64x167xf32> to vector<2x64x160xf32>
    %351 = vector.extract_strided_slice %263 {offsets = [6, 0, 0], sizes = [1, 64, 1], strides = [1, 1, 1]} : vector<8x64x1xf32> to vector<1x64x1xf32>
    %352 = vector.shape_cast %351 : vector<1x64x1xf32> to vector<64x1xf32>
    %353 = vector.shape_cast %352 : vector<64x1xf32> to vector<1x64x1xf32>
    %354 = vector.broadcast %353 : vector<1x64x1xf32> to vector<2x64x160xf32>
    %355 = arith.mulf %350, %354 : vector<2x64x160xf32>
    %356 = arith.addf %349, %355 : vector<2x64x160xf32>
    %357 = vector.extract_strided_slice %262 {offsets = [0, 0, 6], sizes = [2, 64, 160], strides = [1, 1, 1]} : vector<2x64x167xf32> to vector<2x64x160xf32>
    %358 = vector.extract_strided_slice %264 {offsets = [6, 0, 0], sizes = [1, 64, 1], strides = [1, 1, 1]} : vector<8x64x1xf32> to vector<1x64x1xf32>
    %359 = vector.shape_cast %358 : vector<1x64x1xf32> to vector<64x1xf32>
    %360 = vector.shape_cast %359 : vector<64x1xf32> to vector<1x64x1xf32>
    %361 = vector.broadcast %360 : vector<1x64x1xf32> to vector<2x64x160xf32>
    %362 = arith.mulf %357, %361 : vector<2x64x160xf32>
    %363 = arith.addf %356, %362 : vector<2x64x160xf32>
    %364 = vector.extract_strided_slice %258 {offsets = [0, 0, 7], sizes = [2, 64, 160], strides = [1, 1, 1]} : vector<2x64x167xf32> to vector<2x64x160xf32>
    %365 = vector.extract_strided_slice %263 {offsets = [7, 0, 0], sizes = [1, 64, 1], strides = [1, 1, 1]} : vector<8x64x1xf32> to vector<1x64x1xf32>
    %366 = vector.shape_cast %365 : vector<1x64x1xf32> to vector<64x1xf32>
    %367 = vector.shape_cast %366 : vector<64x1xf32> to vector<1x64x1xf32>
    %368 = vector.broadcast %367 : vector<1x64x1xf32> to vector<2x64x160xf32>
    %369 = arith.mulf %364, %368 : vector<2x64x160xf32>
    %370 = arith.addf %363, %369 : vector<2x64x160xf32>
    %371 = vector.extract_strided_slice %262 {offsets = [0, 0, 7], sizes = [2, 64, 160], strides = [1, 1, 1]} : vector<2x64x167xf32> to vector<2x64x160xf32>
    %372 = vector.extract_strided_slice %264 {offsets = [7, 0, 0], sizes = [1, 64, 1], strides = [1, 1, 1]} : vector<8x64x1xf32> to vector<1x64x1xf32>
    %373 = vector.shape_cast %372 : vector<1x64x1xf32> to vector<64x1xf32>
    %374 = vector.shape_cast %373 : vector<64x1xf32> to vector<1x64x1xf32>
    %375 = vector.broadcast %374 : vector<1x64x1xf32> to vector<2x64x160xf32>
    %376 = arith.mulf %371, %375 : vector<2x64x160xf32>
    %377 = arith.addf %370, %376 : vector<2x64x160xf32>
    %cst_81 = arith.constant dense<0.000000e+00> : vector<2x160xf32>
    %378 = vector.multi_reduction <add>, %377, %cst_81 [1] : vector<2x64x160xf32> to vector<2x160xf32>
    %379 = vector.shape_cast %378 : vector<2x160xf32> to vector<2x1x160xf32>
    %c0_82 = arith.constant 0 : index
    %c0_83 = arith.constant 0 : index
    %c0_84 = arith.constant 0 : index
    %380 = vector.load %arg11[%c0_82, %c0_83, %c0_84] : memref<1x1x1xf32, #tpu.memory_space<vmem>>, vector<1x1x1xf32>
    %381 = vector.broadcast %380 : vector<1x1x1xf32> to vector<2x1x160xf32>
    %382 = arith.addf %379, %381 : vector<2x1x160xf32>
    %c0_85 = arith.constant 0 : index
    %c0_86 = arith.constant 0 : index
    %383 = vector.load %arg12[%c0_85, %c0_86] : memref<10x2xf32, #tpu.memory_space<vmem>>, vector<10x2xf32>
    %cst_87 = arith.constant 0.000000e+00 : f32
    %384 = vector.broadcast %cst_87 : f32 to vector<2x1x2xf32>
    %c0_88 = arith.constant 0 : index
    %c0_89 = arith.constant 0 : index
    %c0_90 = arith.constant 0 : index
    %385 = vector.load %arg13[%c0_88, %c0_89, %c0_90] : memref<1x1x2xf32, #tpu.memory_space<vmem>>, vector<1x1x2xf32>
    %386 = vector.broadcast %385 : vector<1x1x2xf32> to vector<2x1x2xf32>
    %387 = arith.addf %384, %386 : vector<2x1x2xf32>
    %388 = vector.extract_strided_slice %382 {offsets = [0, 0, 0], sizes = [2, 1, 16], strides = [1, 1, 1]} : vector<2x1x160xf32> to vector<2x1x16xf32>
    %cst_91 = arith.constant dense<0xFF800000> : vector<2x1xf32>
    %389 = vector.multi_reduction <maximumf>, %388, %cst_91 [2] : vector<2x1x16xf32> to vector<2x1xf32>
    %390 = vector.shape_cast %389 : vector<2x1xf32> to vector<2x1x1xf32>
    %391 = math.absf %390 : vector<2x1x1xf32>
    %392 = vector.extract_strided_slice %383 {offsets = [0, 0], sizes = [1, 2], strides = [1, 1]} : vector<10x2xf32> to vector<1x2xf32>
    %393 = vector.shape_cast %392 : vector<1x2xf32> to vector<1x1x2xf32>
    %394 = vector.broadcast %391 : vector<2x1x1xf32> to vector<2x1x2xf32>
    %395 = vector.broadcast %393 : vector<1x1x2xf32> to vector<2x1x2xf32>
    %396 = arith.mulf %394, %395 : vector<2x1x2xf32>
    %397 = arith.addf %387, %396 : vector<2x1x2xf32>
    %398 = vector.extract_strided_slice %382 {offsets = [0, 0, 16], sizes = [2, 1, 16], strides = [1, 1, 1]} : vector<2x1x160xf32> to vector<2x1x16xf32>
    %cst_92 = arith.constant dense<0xFF800000> : vector<2x1xf32>
    %399 = vector.multi_reduction <maximumf>, %398, %cst_92 [2] : vector<2x1x16xf32> to vector<2x1xf32>
    %400 = vector.shape_cast %399 : vector<2x1xf32> to vector<2x1x1xf32>
    %401 = math.absf %400 : vector<2x1x1xf32>
    %402 = vector.extract_strided_slice %383 {offsets = [1, 0], sizes = [1, 2], strides = [1, 1]} : vector<10x2xf32> to vector<1x2xf32>
    %403 = vector.shape_cast %402 : vector<1x2xf32> to vector<1x1x2xf32>
    %404 = vector.broadcast %401 : vector<2x1x1xf32> to vector<2x1x2xf32>
    %405 = vector.broadcast %403 : vector<1x1x2xf32> to vector<2x1x2xf32>
    %406 = arith.mulf %404, %405 : vector<2x1x2xf32>
    %407 = arith.addf %397, %406 : vector<2x1x2xf32>
    %408 = vector.extract_strided_slice %382 {offsets = [0, 0, 32], sizes = [2, 1, 16], strides = [1, 1, 1]} : vector<2x1x160xf32> to vector<2x1x16xf32>
    %cst_93 = arith.constant dense<0xFF800000> : vector<2x1xf32>
    %409 = vector.multi_reduction <maximumf>, %408, %cst_93 [2] : vector<2x1x16xf32> to vector<2x1xf32>
    %410 = vector.shape_cast %409 : vector<2x1xf32> to vector<2x1x1xf32>
    %411 = math.absf %410 : vector<2x1x1xf32>
    %412 = vector.extract_strided_slice %383 {offsets = [2, 0], sizes = [1, 2], strides = [1, 1]} : vector<10x2xf32> to vector<1x2xf32>
    %413 = vector.shape_cast %412 : vector<1x2xf32> to vector<1x1x2xf32>
    %414 = vector.broadcast %411 : vector<2x1x1xf32> to vector<2x1x2xf32>
    %415 = vector.broadcast %413 : vector<1x1x2xf32> to vector<2x1x2xf32>
    %416 = arith.mulf %414, %415 : vector<2x1x2xf32>
    %417 = arith.addf %407, %416 : vector<2x1x2xf32>
    %418 = vector.extract_strided_slice %382 {offsets = [0, 0, 48], sizes = [2, 1, 16], strides = [1, 1, 1]} : vector<2x1x160xf32> to vector<2x1x16xf32>
    %cst_94 = arith.constant dense<0xFF800000> : vector<2x1xf32>
    %419 = vector.multi_reduction <maximumf>, %418, %cst_94 [2] : vector<2x1x16xf32> to vector<2x1xf32>
    %420 = vector.shape_cast %419 : vector<2x1xf32> to vector<2x1x1xf32>
    %421 = math.absf %420 : vector<2x1x1xf32>
    %422 = vector.extract_strided_slice %383 {offsets = [3, 0], sizes = [1, 2], strides = [1, 1]} : vector<10x2xf32> to vector<1x2xf32>
    %423 = vector.shape_cast %422 : vector<1x2xf32> to vector<1x1x2xf32>
    %424 = vector.broadcast %421 : vector<2x1x1xf32> to vector<2x1x2xf32>
    %425 = vector.broadcast %423 : vector<1x1x2xf32> to vector<2x1x2xf32>
    %426 = arith.mulf %424, %425 : vector<2x1x2xf32>
    %427 = arith.addf %417, %426 : vector<2x1x2xf32>
    %428 = vector.extract_strided_slice %382 {offsets = [0, 0, 64], sizes = [2, 1, 16], strides = [1, 1, 1]} : vector<2x1x160xf32> to vector<2x1x16xf32>
    %cst_95 = arith.constant dense<0xFF800000> : vector<2x1xf32>
    %429 = vector.multi_reduction <maximumf>, %428, %cst_95 [2] : vector<2x1x16xf32> to vector<2x1xf32>
    %430 = vector.shape_cast %429 : vector<2x1xf32> to vector<2x1x1xf32>
    %431 = math.absf %430 : vector<2x1x1xf32>
    %432 = vector.extract_strided_slice %383 {offsets = [4, 0], sizes = [1, 2], strides = [1, 1]} : vector<10x2xf32> to vector<1x2xf32>
    %433 = vector.shape_cast %432 : vector<1x2xf32> to vector<1x1x2xf32>
    %434 = vector.broadcast %431 : vector<2x1x1xf32> to vector<2x1x2xf32>
    %435 = vector.broadcast %433 : vector<1x1x2xf32> to vector<2x1x2xf32>
    %436 = arith.mulf %434, %435 : vector<2x1x2xf32>
    %437 = arith.addf %427, %436 : vector<2x1x2xf32>
    %438 = vector.extract_strided_slice %382 {offsets = [0, 0, 80], sizes = [2, 1, 16], strides = [1, 1, 1]} : vector<2x1x160xf32> to vector<2x1x16xf32>
    %cst_96 = arith.constant dense<0xFF800000> : vector<2x1xf32>
    %439 = vector.multi_reduction <maximumf>, %438, %cst_96 [2] : vector<2x1x16xf32> to vector<2x1xf32>
    %440 = vector.shape_cast %439 : vector<2x1xf32> to vector<2x1x1xf32>
    %441 = math.absf %440 : vector<2x1x1xf32>
    %442 = vector.extract_strided_slice %383 {offsets = [5, 0], sizes = [1, 2], strides = [1, 1]} : vector<10x2xf32> to vector<1x2xf32>
    %443 = vector.shape_cast %442 : vector<1x2xf32> to vector<1x1x2xf32>
    %444 = vector.broadcast %441 : vector<2x1x1xf32> to vector<2x1x2xf32>
    %445 = vector.broadcast %443 : vector<1x1x2xf32> to vector<2x1x2xf32>
    %446 = arith.mulf %444, %445 : vector<2x1x2xf32>
    %447 = arith.addf %437, %446 : vector<2x1x2xf32>
    %448 = vector.extract_strided_slice %382 {offsets = [0, 0, 96], sizes = [2, 1, 16], strides = [1, 1, 1]} : vector<2x1x160xf32> to vector<2x1x16xf32>
    %cst_97 = arith.constant dense<0xFF800000> : vector<2x1xf32>
    %449 = vector.multi_reduction <maximumf>, %448, %cst_97 [2] : vector<2x1x16xf32> to vector<2x1xf32>
    %450 = vector.shape_cast %449 : vector<2x1xf32> to vector<2x1x1xf32>
    %451 = math.absf %450 : vector<2x1x1xf32>
    %452 = vector.extract_strided_slice %383 {offsets = [6, 0], sizes = [1, 2], strides = [1, 1]} : vector<10x2xf32> to vector<1x2xf32>
    %453 = vector.shape_cast %452 : vector<1x2xf32> to vector<1x1x2xf32>
    %454 = vector.broadcast %451 : vector<2x1x1xf32> to vector<2x1x2xf32>
    %455 = vector.broadcast %453 : vector<1x1x2xf32> to vector<2x1x2xf32>
    %456 = arith.mulf %454, %455 : vector<2x1x2xf32>
    %457 = arith.addf %447, %456 : vector<2x1x2xf32>
    %458 = vector.extract_strided_slice %382 {offsets = [0, 0, 112], sizes = [2, 1, 16], strides = [1, 1, 1]} : vector<2x1x160xf32> to vector<2x1x16xf32>
    %cst_98 = arith.constant dense<0xFF800000> : vector<2x1xf32>
    %459 = vector.multi_reduction <maximumf>, %458, %cst_98 [2] : vector<2x1x16xf32> to vector<2x1xf32>
    %460 = vector.shape_cast %459 : vector<2x1xf32> to vector<2x1x1xf32>
    %461 = math.absf %460 : vector<2x1x1xf32>
    %462 = vector.extract_strided_slice %383 {offsets = [7, 0], sizes = [1, 2], strides = [1, 1]} : vector<10x2xf32> to vector<1x2xf32>
    %463 = vector.shape_cast %462 : vector<1x2xf32> to vector<1x1x2xf32>
    %464 = vector.broadcast %461 : vector<2x1x1xf32> to vector<2x1x2xf32>
    %465 = vector.broadcast %463 : vector<1x1x2xf32> to vector<2x1x2xf32>
    %466 = arith.mulf %464, %465 : vector<2x1x2xf32>
    %467 = arith.addf %457, %466 : vector<2x1x2xf32>
    %468 = vector.extract_strided_slice %382 {offsets = [0, 0, 128], sizes = [2, 1, 16], strides = [1, 1, 1]} : vector<2x1x160xf32> to vector<2x1x16xf32>
    %cst_99 = arith.constant dense<0xFF800000> : vector<2x1xf32>
    %469 = vector.multi_reduction <maximumf>, %468, %cst_99 [2] : vector<2x1x16xf32> to vector<2x1xf32>
    %470 = vector.shape_cast %469 : vector<2x1xf32> to vector<2x1x1xf32>
    %471 = math.absf %470 : vector<2x1x1xf32>
    %472 = vector.extract_strided_slice %383 {offsets = [8, 0], sizes = [1, 2], strides = [1, 1]} : vector<10x2xf32> to vector<1x2xf32>
    %473 = vector.shape_cast %472 : vector<1x2xf32> to vector<1x1x2xf32>
    %474 = vector.broadcast %471 : vector<2x1x1xf32> to vector<2x1x2xf32>
    %475 = vector.broadcast %473 : vector<1x1x2xf32> to vector<2x1x2xf32>
    %476 = arith.mulf %474, %475 : vector<2x1x2xf32>
    %477 = arith.addf %467, %476 : vector<2x1x2xf32>
    %478 = vector.extract_strided_slice %382 {offsets = [0, 0, 144], sizes = [2, 1, 16], strides = [1, 1, 1]} : vector<2x1x160xf32> to vector<2x1x16xf32>
    %cst_100 = arith.constant dense<0xFF800000> : vector<2x1xf32>
    %479 = vector.multi_reduction <maximumf>, %478, %cst_100 [2] : vector<2x1x16xf32> to vector<2x1xf32>
    %480 = vector.shape_cast %479 : vector<2x1xf32> to vector<2x1x1xf32>
    %481 = math.absf %480 : vector<2x1x1xf32>
    %482 = vector.extract_strided_slice %383 {offsets = [9, 0], sizes = [1, 2], strides = [1, 1]} : vector<10x2xf32> to vector<1x2xf32>
    %483 = vector.shape_cast %482 : vector<1x2xf32> to vector<1x1x2xf32>
    %484 = vector.broadcast %481 : vector<2x1x1xf32> to vector<2x1x2xf32>
    %485 = vector.broadcast %483 : vector<1x1x2xf32> to vector<2x1x2xf32>
    %486 = arith.mulf %484, %485 : vector<2x1x2xf32>
    %487 = arith.addf %477, %486 : vector<2x1x2xf32>
    %cst_101 = arith.constant 0.000000e+00 : f32
    %488 = vector.broadcast %cst_101 : f32 to vector<2x1x2xf32>
    %489 = arith.subf %488, %487 : vector<2x1x2xf32>
    %490 = math.exp %489 : vector<2x1x2xf32>
    %cst_102 = arith.constant 1.000000e+00 : f32
    %491 = vector.broadcast %cst_102 : f32 to vector<2x1x2xf32>
    %492 = arith.addf %491, %490 : vector<2x1x2xf32>
    %cst_103 = arith.constant 1.000000e+00 : f32
    %493 = vector.broadcast %cst_103 : f32 to vector<2x1x2xf32>
    %494 = arith.divf %493, %492 : vector<2x1x2xf32>
    %c0_104 = arith.constant 0 : index
    %c0_105 = arith.constant 0 : index
    %c0_106 = arith.constant 0 : index
    %495 = vector.load %arg14[%c0_104, %c0_105, %c0_106] : memref<2x1x2xf32, #tpu.memory_space<vmem>>, vector<2x1x2xf32>
    tpu.vector_store %arg14[%c0_104, %c0_105, %c0_106], %494 {strides = array<i32>} : memref<2x1x2xf32, #tpu.memory_space<vmem>>, vector<2x1x2xf32>,
    return
  }
}

</mosaic_0001>

<llo_original>
// kernel: spectrum_cls_forward.1
$region0: #{spectrum_cls_forward.1}
  #allocation0 [shape = 'u32[]', space=smem, size = 0x4, offset = 0x4, fixed_abs, tag = 'smem constant byte address 0x4 - core index']
  #allocation1 [shape = 'u32[144,128]{1,0:T(1,128)}', space=vmem, size = 0x12000, scoped, tag = 'internal scratch']
  #allocation2 [shape = 'f32[1,1,1]{2,1,0:T(1,128)S(1)}', space=vmem, size = 0x200, scoped, tag = 'scoped memory for spectrum_cls_forward.1']
  %s0 = inlined_call_operand.vmem [shape: f32[2,8,173], index: 0, kind: input, shape index: {}]
  %s1 = inlined_call_operand.vmem [shape: bf16[32,16], index: 1, kind: input, shape index: {}]
  %s2 = inlined_call_operand.vmem [shape: bf16[64,512], index: 2, kind: input, shape index: {}]
  %s3 = inlined_call_operand.vmem [shape: f32[8,64,1], index: 3, kind: input, shape index: {}]
  %s4 = inlined_call_operand.vmem [shape: f32[8,64,1], index: 4, kind: input, shape index: {}]
  %s5 = inlined_call_operand.vmem [shape: f32[1,32,1], index: 5, kind: input, shape index: {}]
  %s6 = inlined_call_operand.vmem [shape: f32[1,32,1], index: 6, kind: input, shape index: {}]
  %s7 = inlined_call_operand.vmem [shape: f32[1,32,1], index: 7, kind: input, shape index: {}]
  %s8 = inlined_call_operand.vmem [shape: f32[1,64,1], index: 8, kind: input, shape index: {}]
  %s9 = inlined_call_operand.vmem [shape: f32[1,64,1], index: 9, kind: input, shape index: {}]
  %s10 = inlined_call_operand.vmem [shape: f32[1,64,1], index: 10, kind: input, shape index: {}]
  %s11 = inlined_call_operand.<no memory space> [shape: f32[1,1,1], index: 11, kind: input, shape index: {}]
  %s12 = inlined_call_operand.vmem [shape: f32[10,2], index: 12, kind: input, shape index: {}]
  %s13 = inlined_call_operand.vmem [shape: f32[1,1,2], index: 13, kind: input, shape index: {}]
  %s14 = inlined_call_operand.hbm [shape: f32[2,1,2], index: 14, kind: output, shape index: {}]
  %s15 = sld [smem:[#allocation0]]
  $region66: #{spectrum_cls_forward.1} parent=0
    _
  %s17 = ssub.s32 1, %s15
  %s18 = scalar_select 0, %s17, %s15
  %v19 = vstv %s11
  %20 = vst [vmem:[#allocation2] sm:$0x1] %v19
  $region1: #{spectrum_cls_forward.1} parent=0
    #allocation3 [shape = 'u8[1024]{0}', space=vmem, size = 0x400, scoped, tag = 'output window, operand 0, single buffered']
    #allocation4 [shape = 's32[1]{0}', space=sflag, size = 0x4, scoped, tag = 'scoped memory for spectrum_cls_forward.1']
    %21 = vsyncpa [#allocation4], 0
    // Predicated region
    $region2: #{spectrum_cls_forward.1} parent=1 // pred_check
      _
    $region3: #{spectrum_cls_forward.1} parent=1 // pred_check_branch
      %23 = sbr.rel (0) target = $region5
    $region4: #{spectrum_cls_forward.1} parent=1 // pred_region
      _
    $region5: #{spectrum_cls_forward.1} parent=1 // pred_fallthru
      _
    // Predicated region
    $region6: #{spectrum_cls_forward.1} parent=1 // pred_check
      _
    $region7: #{spectrum_cls_forward.1} parent=1 // pred_check_branch
      %25 = sbr.rel (0) target = $region9
    $region8: #{spectrum_cls_forward.1} parent=1 // pred_region
      _
    $region9: #{spectrum_cls_forward.1} parent=1 // pred_fallthru
      _
    // Predicated region
    $region10: #{spectrum_cls_forward.1} parent=1 // pred_check
      _
    $region11: #{spectrum_cls_forward.1} parent=1 // pred_check_branch
      %27 = sbr.rel (0) target = $region13
    $region12: #{spectrum_cls_forward.1} parent=1 // pred_region
      _
    $region13: #{spectrum_cls_forward.1} parent=1 // pred_fallthru
      _
    // Predicated region
    $region14: #{spectrum_cls_forward.1} parent=1 // pred_check
      _
    $region15: #{spectrum_cls_forward.1} parent=1 // pred_check_branch
      %29 = sbr.rel (0) target = $region17
    $region16: #{spectrum_cls_forward.1} parent=1 // pred_region
      _
    $region17: #{spectrum_cls_forward.1} parent=1 // pred_fallthru
      _
    // Predicated region
    $region18: #{spectrum_cls_forward.1} parent=1 // pred_check
      _
    $region19: #{spectrum_cls_forward.1} parent=1 // pred_check_branch
      %31 = sbr.rel (0) target = $region21
    $region20: #{spectrum_cls_forward.1} parent=1 // pred_region
      _
    $region21: #{spectrum_cls_forward.1} parent=1 // pred_fallthru
      _
    // Predicated region
    $region22: #{spectrum_cls_forward.1} parent=1 // pred_check
      _
    $region23: #{spectrum_cls_forward.1} parent=1 // pred_check_branch
      %33 = sbr.rel (0) target = $region25
    $region24: #{spectrum_cls_forward.1} parent=1 // pred_region
      _
    $region25: #{spectrum_cls_forward.1} parent=1 // pred_fallthru
      _
    // Predicated region
    $region26: #{spectrum_cls_forward.1} parent=1 // pred_check
      _
    $region27: #{spectrum_cls_forward.1} parent=1 // pred_check_branch
      %35 = sbr.rel (0) target = $region29
    $region28: #{spectrum_cls_forward.1} parent=1 // pred_region
      _
    $region29: #{spectrum_cls_forward.1} parent=1 // pred_fallthru
      _
    // Predicated region
    $region30: #{spectrum_cls_forward.1} parent=1 // pred_check
      _
    $region31: #{spectrum_cls_forward.1} parent=1 // pred_check_branch
      %37 = sbr.rel (0) target = $region33
    $region32: #{spectrum_cls_forward.1} parent=1 // pred_region
      _
    $region33: #{spectrum_cls_forward.1} parent=1 // pred_fallthru
      _
    // Predicated region
    $region34: #{spectrum_cls_forward.1} parent=1 // pred_check
      _
    $region35: #{spectrum_cls_forward.1} parent=1 // pred_check_branch
      %39 = sbr.rel (0) target = $region37
    $region36: #{spectrum_cls_forward.1} parent=1 // pred_region
      _
    $region37: #{spectrum_cls_forward.1} parent=1 // pred_fallthru
      _
    // Predicated region
    $region38: #{spectrum_cls_forward.1} parent=1 // pred_check
      _
    $region39: #{spectrum_cls_forward.1} parent=1 // pred_check_branch
      %41 = sbr.rel (0) target = $region41
    $region40: #{spectrum_cls_forward.1} parent=1 // pred_region
      _
    $region41: #{spectrum_cls_forward.1} parent=1 // pred_fallthru
      _
    // Predicated region
    $region42: #{spectrum_cls_forward.1} parent=1 // pred_check
      _
    $region43: #{spectrum_cls_forward.1} parent=1 // pred_check_branch
      %43 = sbr.rel (0) target = $region45
    $region44: #{spectrum_cls_forward.1} parent=1 // pred_region
      _
    $region45: #{spectrum_cls_forward.1} parent=1 // pred_fallthru
      _
    // Predicated region
    $region46: #{spectrum_cls_forward.1} parent=1 // pred_check
      _
    $region47: #{spectrum_cls_forward.1} parent=1 // pred_check_branch
      %45 = sbr.rel (0) target = $region49
    $region48: #{spectrum_cls_forward.1} parent=1 // pred_region
      _
    $region49: #{spectrum_cls_forward.1} parent=1 // pred_fallthru
      _
    // Predicated region
    $region50: #{spectrum_cls_forward.1} parent=1 // pred_check
      _
    $region51: #{spectrum_cls_forward.1} parent=1 // pred_check_branch
      %47 = sbr.rel (0) target = $region53
    $region52: #{spectrum_cls_forward.1} parent=1 // pred_region
      _
    $region53: #{spectrum_cls_forward.1} parent=1 // pred_fallthru
      _
    // Predicated region
    $region54: #{spectrum_cls_forward.1} parent=1 // pred_check
      _
    $region55: #{spectrum_cls_forward.1} parent=1 // pred_check_branch
      %49 = sbr.rel (0) target = $region57
    $region56: #{spectrum_cls_forward.1} parent=1 // pred_region
      _
    $region57: #{spectrum_cls_forward.1} parent=1 // pred_fallthru
      _
    %v51 = vld [vmem:[%s0] sm:$0xff]
    %v52 = vld [vmem:[%s0 + $0x8] sm:$0xff]
    %v53 = vld [vmem:[%s0 + $0x10] sm:$0xff]
    %v54 = vld [vmem:[%s0 + $0x18] sm:$0xff]
    %v55 = vpack.c.bf16 %v51, %v51
    %v56 = vpack.c.bf16 %v52, %v52
    %v57 = vpack.c.bf16 %v53, %v53
    %v58 = vpack.c.bf16 %v54, %v54
    %v59 = vld [vmem:[%s1] sm:$0xf]
    %v60 = vld [vmem:[%s1 + $0x4] sm:$0xf]
    %v61 = vld [vmem:[%s1 + $0x8] sm:$0xf]
    %v62 = vld [vmem:[%s1 + $0xc] sm:$0xf]
    %v63 = vld [vmem:[%s2] sm:$0xff]
    %v64 = vld [vmem:[%s2 + $0x8] sm:$0xff]
    %v65 = vld [vmem:[%s2 + $0x10] sm:$0xff]
    %v66 = vld [vmem:[%s2 + $0x18] sm:$0xff]
    %v67 = vld [vmem:[%s2 + $0x20] sm:$0xff]
    %v68 = vld [vmem:[%s2 + $0x28] sm:$0xff]
    %v69 = vld [vmem:[%s2 + $0x30] sm:$0xff]
    %v70 = vld [vmem:[%s2 + $0x38] sm:$0xff]
    %v71 = vld [vmem:[%s2 + $0x40] sm:$0xff]
    %v72 = vld [vmem:[%s2 + $0x48] sm:$0xff]
    %v73 = vld [vmem:[%s2 + $0x50] sm:$0xff]
    %v74 = vld [vmem:[%s2 + $0x58] sm:$0xff]
    %v75 = vld [vmem:[%s2 + $0x60] sm:$0xff]
    %v76 = vld [vmem:[%s2 + $0x68] sm:$0xff]
    %v77 = vld [vmem:[%s2 + $0x70] sm:$0xff]
    %v78 = vld [vmem:[%s2 + $0x78] sm:$0xff]
    %v83 = vunpack.c.l.b16 %v59
    %v84 = vunpack.c.l.b16 %v60
    %v85 = vunpack.c.l.b16 %v61
    %v86 = vunpack.c.l.b16 %v62
    %v87 = vpack.c.b16 %v84, %v83
    %v88 = vpack.c.b16 %v86, %v85
    %89 = vrot.lane.b32.xlu0 %v87, 120
    %v90 = vpop.permute.xlu0 %89
    %91 = vrot.lane.b32.xlu0 %v88, 120
    %v92 = vpop.permute.xlu0 %91
    %95 = vrot.lane.b32.xlu0 %v55, 127
    %v96 = vpop.permute.xlu0 %95
    %97 = vrot.lane.b32.xlu0 %v56, 127
    %v98 = vpop.permute.xlu0 %97
    %vm99 = vcmask 1039360
    %v100 = vsel %vm99, %v96, %v98
    %vm101 = vcmask 64512
    %v103 = vsel %vm101, %v90, 0
    %v106 = vsel %vm101, %v92, 0
    %vm108 = vcmask 1043456
    %v110 = vsel %vm108, %v100, 0
    %v113 = vsel %vm108, %v98, 0
    %115 = vmatprep.subr.bf16.mxu0 0
    %116 = vmatpush1.bf16.msra.mxu0 0
    %117 = vmatprep.subr.bf16.mxu0 0
    %118 = vmatpush1.bf16.msra.mxu0 0
    %119 = vmatprep.subr.bf16.mxu0 0
    %120 = vmatpush1.bf16.msra.mxu0 0
    %121 = vmatprep.subr.bf16.mxu0 0
    %122 = vmatpush1.bf16.msra.mxu0 0
    %123 = vmatprep.subr.bf16.mxu0 0
    %124 = vmatpush1.bf16.msra.mxu0 0
    %125 = vmatprep.subr.bf16.mxu0 0
    %126 = vmatpush1.bf16.msra.mxu0 0
    %127 = vmatprep.subr.bf16.mxu0 0
    %128 = vmatpush1.bf16.msra.mxu0 0
    %129 = vmatprep.subr.bf16.mxu0 %v113
    %130 = vmatpush1.bf16.msra.mxu0 %v110
    %131 = vmatprep.subr.bf16.mxu0 0
    %132 = vmatpush2.bf16.msra.mxu0 0
    %133 = vmatprep.subr.bf16.mxu0 0
    %134 = vmatpush2.bf16.msra.mxu0 0
    %135 = vmatprep.subr.bf16.mxu0 0
    %136 = vmatpush2.bf16.msra.mxu0 0
    %137 = vmatprep.subr.bf16.mxu0 0
    %138 = vmatpush2.bf16.msra.mxu0 0
    %139 = vmatprep.subr.bf16.mxu0 0
    %140 = vmatpush2.bf16.msra.mxu0 0
    %141 = vmatprep.subr.bf16.mxu0 0
    %142 = vmatpush2.bf16.msra.mxu0 0
    %143 = vmatprep.subr.bf16.mxu0 0
    %144 = vmatpush2.bf16.msra.mxu0 0
    %145 = vmatprep.subr.bf16.mxu0 0
    %146 = vmatpush2.bf16.msra.mxu0 0
    %147 = vmatprep.mubr.bf16.mxu0 0
    %148 = vmatmul.mubr.bf16.gmra.mxu0 %v103
    %v149 = vpop.f32.mrf.mxu0
    %v150 = vadd.f32 0.0, %v149
    %v151 = vpop.f32.mrf.mxu0
    %v152 = vadd.f32 0.0, %v151
    %v153 = vpop.f32.mrf.mxu0
    %v154 = vadd.f32 0.0, %v153
    %v155 = vpop.f32.mrf.mxu0
    %v156 = vadd.f32 0.0, %v155
    %157 = vmatprep.mubr.bf16.mxu0 0
    %158 = vmatmul.mubr.bf16.gmra.mxu0 %v106
    %v159 = vpop.f32.mrf.mxu0
    %v160 = vadd.f32 0.0, %v159
    %v161 = vpop.f32.mrf.mxu0
    %v162 = vadd.f32 0.0, %v161
    %v163 = vpop.f32.mrf.mxu0
    %v164 = vadd.f32 0.0, %v163
    %v165 = vpop.f32.mrf.mxu0
    %v166 = vadd.f32 0.0, %v165
    %167 = vdwg.mxu0
    %170 = vrot.lane.b32.xlu0 %v57, 127
    %v171 = vpop.permute.xlu0 %170
    %172 = vrot.lane.b32.xlu0 %v58, 127
    %v173 = vpop.permute.xlu0 %172
    %v174 = vsel %vm99, %v171, %v173
    %v176 = vsel %vm108, %v174, 0
    %v179 = vsel %vm108, %v173, 0
    %181 = vmatprep.subr.bf16.mxu0 0
    %182 = vmatpush1.bf16.msra.mxu0 0
    %183 = vmatprep.subr.bf16.mxu0 0
    %184 = vmatpush1.bf16.msra.mxu0 0
    %185 = vmatprep.subr.bf16.mxu0 0
    %186 = vmatpush1.bf16.msra.mxu0 0
    %187 = vmatprep.subr.bf16.mxu0 0
    %188 = vmatpush1.bf16.msra.mxu0 0
    %189 = vmatprep.subr.bf16.mxu0 0
    %190 = vmatpush1.bf16.msra.mxu0 0
    %191 = vmatprep.subr.bf16.mxu0 0
    %192 = vmatpush1.bf16.msra.mxu0 0
    %193 = vmatprep.subr.bf16.mxu0 0
    %194 = vmatpush1.bf16.msra.mxu0 0
    %195 = vmatprep.subr.bf16.mxu0 %v179
    %196 = vmatpush1.bf16.msra.mxu0 %v176
    %197 = vmatprep.subr.bf16.mxu0 0
    %198 = vmatpush2.bf16.msra.mxu0 0
    %199 = vmatprep.subr.bf16.mxu0 0
    %200 = vmatpush2.bf16.msra.mxu0 0
    %201 = vmatprep.subr.bf16.mxu0 0
    %202 = vmatpush2.bf16.msra.mxu0 0
    %203 = vmatprep.subr.bf16.mxu0 0
    %204 = vmatpush2.bf16.msra.mxu0 0
    %205 = vmatprep.subr.bf16.mxu0 0
    %206 = vmatpush2.bf16.msra.mxu0 0
    %207 = vmatprep.subr.bf16.mxu0 0
    %208 = vmatpush2.bf16.msra.mxu0 0
    %209 = vmatprep.subr.bf16.mxu0 0
    %210 = vmatpush2.bf16.msra.mxu0 0
    %211 = vmatprep.subr.bf16.mxu0 0
    %212 = vmatpush2.bf16.msra.mxu0 0
    %213 = vmatprep.mubr.bf16.mxu0 0
    %214 = vmatmul.mubr.bf16.gmra.mxu0 %v103
    %v215 = vpop.f32.mrf.mxu0
    %v216 = vadd.f32 0.0, %v215
    %v217 = vpop.f32.mrf.mxu0
    %v218 = vadd.f32 0.0, %v217
    %v219 = vpop.f32.mrf.mxu0
    %v220 = vadd.f32 0.0, %v219
    %v221 = vpop.f32.mrf.mxu0
    %v222 = vadd.f32 0.0, %v221
    %223 = vmatprep.mubr.bf16.mxu0 0
    %224 = vmatmul.mubr.bf16.gmra.mxu0 %v106
    %v225 = vpop.f32.mrf.mxu0
    %v226 = vadd.f32 0.0, %v225
    %v227 = vpop.f32.mrf.mxu0
    %v228 = vadd.f32 0.0, %v227
    %v229 = vpop.f32.mrf.mxu0
    %v230 = vadd.f32 0.0, %v229
    %v231 = vpop.f32.mrf.mxu0
    %v232 = vadd.f32 0.0, %v231
    %233 = vdwg.mxu0
    %v235 = vsel %vm101, %v87, 0
    %v238 = vsel %vm101, %v88, 0
    %v241 = vsel %vm108, %v55, 0
    %v244 = vsel %vm108, %v56, 0
    %246 = vmatprep.subr.bf16.mxu0 0
    %247 = vmatpush1.bf16.msra.mxu0 0
    %248 = vmatprep.subr.bf16.mxu0 0
    %249 = vmatpush1.bf16.msra.mxu0 0
    %250 = vmatprep.subr.bf16.mxu0 0
    %251 = vmatpush1.bf16.msra.mxu0 0
    %252 = vmatprep.subr.bf16.mxu0 0
    %253 = vmatpush1.bf16.msra.mxu0 0
    %254 = vmatprep.subr.bf16.mxu0 0
    %255 = vmatpush1.bf16.msra.mxu0 0
    %256 = vmatprep.subr.bf16.mxu0 0
    %257 = vmatpush1.bf16.msra.mxu0 0
    %258 = vmatprep.subr.bf16.mxu0 0
    %259 = vmatpush1.bf16.msra.mxu0 0
    %260 = vmatprep.subr.bf16.mxu0 %v244
    %261 = vmatpush1.bf16.msra.mxu0 %v241
    %262 = vmatprep.subr.bf16.mxu0 0
    %263 = vmatpush2.bf16.msra.mxu0 0
    %264 = vmatprep.subr.bf16.mxu0 0
    %265 = vmatpush2.bf16.msra.mxu0 0
    %266 = vmatprep.subr.bf16.mxu0 0
    %267 = vmatpush2.bf16.msra.mxu0 0
    %268 = vmatprep.subr.bf16.mxu0 0
    %269 = vmatpush2.bf16.msra.mxu0 0
    %270 = vmatprep.subr.bf16.mxu0 0
    %271 = vmatpush2.bf16.msra.mxu0 0
    %272 = vmatprep.subr.bf16.mxu0 0
    %273 = vmatpush2.bf16.msra.mxu0 0
    %274 = vmatprep.subr.bf16.mxu0 0
    %275 = vmatpush2.bf16.msra.mxu0 0
    %276 = vmatprep.subr.bf16.mxu0 0
    %277 = vmatpush2.bf16.msra.mxu0 0
    %278 = vmatprep.mubr.bf16.mxu0 0
    %279 = vmatmul.mubr.bf16.gmra.mxu0 %v235
    %v280 = vpop.f32.mrf.mxu0
    %v281 = vadd.f32 %v150, %v280
    %v282 = vpop.f32.mrf.mxu0
    %v283 = vadd.f32 %v152, %v282
    %v284 = vpop.f32.mrf.mxu0
    %v285 = vadd.f32 %v154, %v284
    %v286 = vpop.f32.mrf.mxu0
    %v287 = vadd.f32 %v156, %v286
    %288 = vmatprep.mubr.bf16.mxu0 0
    %289 = vmatmul.mubr.bf16.gmra.mxu0 %v238
    %v290 = vpop.f32.mrf.mxu0
    %v291 = vadd.f32 %v160, %v290
    %v292 = vpop.f32.mrf.mxu0
    %v293 = vadd.f32 %v162, %v292
    %v294 = vpop.f32.mrf.mxu0
    %v295 = vadd.f32 %v164, %v294
    %v296 = vpop.f32.mrf.mxu0
    %v297 = vadd.f32 %v166, %v296
    %298 = vdwg.mxu0
    %v300 = vsel %vm108, %v57, 0
    %v303 = vsel %vm108, %v58, 0
    %305 = vmatprep.subr.bf16.mxu0 0
    %306 = vmatpush1.bf16.msra.mxu0 0
    %307 = vmatprep.subr.bf16.mxu0 0
    %308 = vmatpush1.bf16.msra.mxu0 0
    %309 = vmatprep.subr.bf16.mxu0 0
    %310 = vmatpush1.bf16.msra.mxu0 0
    %311 = vmatprep.subr.bf16.mxu0 0
    %312 = vmatpush1.bf16.msra.mxu0 0
    %313 = vmatprep.subr.bf16.mxu0 0
    %314 = vmatpush1.bf16.msra.mxu0 0
    %315 = vmatprep.subr.bf16.mxu0 0
    %316 = vmatpush1.bf16.msra.mxu0 0
    %317 = vmatprep.subr.bf16.mxu0 0
    %318 = vmatpush1.bf16.msra.mxu0 0
    %319 = vmatprep.subr.bf16.mxu0 %v303
    %320 = vmatpush1.bf16.msra.mxu0 %v300
    %321 = vmatprep.subr.bf16.mxu0 0
    %322 = vmatpush2.bf16.msra.mxu0 0
    %323 = vmatprep.subr.bf16.mxu0 0
    %324 = vmatpush2.bf16.msra.mxu0 0
    %325 = vmatprep.subr.bf16.mxu0 0
    %326 = vmatpush2.bf16.msra.mxu0 0
    %327 = vmatprep.subr.bf16.mxu0 0
    %328 = vmatpush2.bf16.msra.mxu0 0
    %329 = vmatprep.subr.bf16.mxu0 0
    %330 = vmatpush2.bf16.msra.mxu0 0
    %331 = vmatprep.subr.bf16.mxu0 0
    %332 = vmatpush2.bf16.msra.mxu0 0
    %333 = vmatprep.subr.bf16.mxu0 0
    %334 = vmatpush2.bf16.msra.mxu0 0
    %335 = vmatprep.subr.bf16.mxu0 0
    %336 = vmatpush2.bf16.msra.mxu0 0
    %337 = vmatprep.mubr.bf16.mxu0 0
    %338 = vmatmul.mubr.bf16.gmra.mxu0 %v235
    %v339 = vpop.f32.mrf.mxu0
    %v340 = vadd.f32 %v216, %v339
    %v341 = vpop.f32.mrf.mxu0
    %v342 = vadd.f32 %v218, %v341
    %v343 = vpop.f32.mrf.mxu0
    %v344 = vadd.f32 %v220, %v343
    %v345 = vpop.f32.mrf.mxu0
    %v346 = vadd.f32 %v222, %v345
    %347 = vmatprep.mubr.bf16.mxu0 0
    %348 = vmatmul.mubr.bf16.gmra.mxu0 %v238
    %v349 = vpop.f32.mrf.mxu0
    %v350 = vadd.f32 %v226, %v349
    %v351 = vpop.f32.mrf.mxu0
    %v352 = vadd.f32 %v228, %v351
    %v353 = vpop.f32.mrf.mxu0
    %v354 = vadd.f32 %v230, %v353
    %v355 = vpop.f32.mrf.mxu0
    %v356 = vadd.f32 %v232, %v355
    %357 = vdwg.mxu0
    %358 = vrot.lane.b32.xlu0 %v87, 122
    %v359 = vpop.permute.xlu0 %358
    %360 = vrot.lane.b32.xlu0 %v88, 122
    %v361 = vpop.permute.xlu0 %360
    %v363 = vsel %vm101, %v359, 0
    %v366 = vsel %vm101, %v361, 0
    %368 = vmatprep.subr.bf16.mxu0 0
    %369 = vmatpush1.bf16.msra.mxu0 0
    %370 = vmatprep.subr.bf16.mxu0 0
    %371 = vmatpush1.bf16.msra.mxu0 0
    %372 = vmatprep.subr.bf16.mxu0 0
    %373 = vmatpush1.bf16.msra.mxu0 0
    %374 = vmatprep.subr.bf16.mxu0 0
    %375 = vmatpush1.bf16.msra.mxu0 0
    %376 = vmatprep.subr.bf16.mxu0 0
    %377 = vmatpush1.bf16.msra.mxu0 0
    %378 = vmatprep.subr.bf16.mxu0 0
    %379 = vmatpush1.bf16.msra.mxu0 0
    %380 = vmatprep.subr.bf16.mxu0 0
    %381 = vmatpush1.bf16.msra.mxu0 0
    %382 = vmatprep.subr.bf16.mxu0 %v113
    %383 = vmatpush1.bf16.msra.mxu0 %v110
    %384 = vmatprep.subr.bf16.mxu0 0
    %385 = vmatpush2.bf16.msra.mxu0 0
    %386 = vmatprep.subr.bf16.mxu0 0
    %387 = vmatpush2.bf16.msra.mxu0 0
    %388 = vmatprep.subr.bf16.mxu0 0
    %389 = vmatpush2.bf16.msra.mxu0 0
    %390 = vmatprep.subr.bf16.mxu0 0
    %391 = vmatpush2.bf16.msra.mxu0 0
    %392 = vmatprep.subr.bf16.mxu0 0
    %393 = vmatpush2.bf16.msra.mxu0 0
    %394 = vmatprep.subr.bf16.mxu0 0
    %395 = vmatpush2.bf16.msra.mxu0 0
    %396 = vmatprep.subr.bf16.mxu0 0
    %397 = vmatpush2.bf16.msra.mxu0 0
    %398 = vmatprep.subr.bf16.mxu0 0
    %399 = vmatpush2.bf16.msra.mxu0 0
    %400 = vmatprep.mubr.bf16.mxu0 0
    %401 = vmatmul.mubr.bf16.gmra.mxu0 %v363
    %v402 = vpop.f32.mrf.mxu0
    %v403 = vadd.f32 0.0, %v402
    %v404 = vpop.f32.mrf.mxu0
    %v405 = vadd.f32 0.0, %v404
    %v406 = vpop.f32.mrf.mxu0
    %v407 = vadd.f32 0.0, %v406
    %v408 = vpop.f32.mrf.mxu0
    %v409 = vadd.f32 0.0, %v408
    %410 = vmatprep.mubr.bf16.mxu0 0
    %411 = vmatmul.mubr.bf16.gmra.mxu0 %v366
    %v412 = vpop.f32.mrf.mxu0
    %v413 = vadd.f32 0.0, %v412
    %v414 = vpop.f32.mrf.mxu0
    %v415 = vadd.f32 0.0, %v414
    %v416 = vpop.f32.mrf.mxu0
    %v417 = vadd.f32 0.0, %v416
    %v418 = vpop.f32.mrf.mxu0
    %v419 = vadd.f32 0.0, %v418
    %420 = vdwg.mxu0
    %421 = vmatprep.subr.bf16.mxu0 0
    %422 = vmatpush1.bf16.msra.mxu0 0
    %423 = vmatprep.subr.bf16.mxu0 0
    %424 = vmatpush1.bf16.msra.mxu0 0
    %425 = vmatprep.subr.bf16.mxu0 0
    %426 = vmatpush1.bf16.msra.mxu0 0
    %427 = vmatprep.subr.bf16.mxu0 0
    %428 = vmatpush1.bf16.msra.mxu0 0
    %429 = vmatprep.subr.bf16.mxu0 0
    %430 = vmatpush1.bf16.msra.mxu0 0
    %431 = vmatprep.subr.bf16.mxu0 0
    %432 = vmatpush1.bf16.msra.mxu0 0
    %433 = vmatprep.subr.bf16.mxu0 0
    %434 = vmatpush1.bf16.msra.mxu0 0
    %435 = vmatprep.subr.bf16.mxu0 %v179
    %436 = vmatpush1.bf16.msra.mxu0 %v176
    %437 = vmatprep.subr.bf16.mxu0 0
    %438 = vmatpush2.bf16.msra.mxu0 0
    %439 = vmatprep.subr.bf16.mxu0 0
    %440 = vmatpush2.bf16.msra.mxu0 0
    %441 = vmatprep.subr.bf16.mxu0 0
    %442 = vmatpush2.bf16.msra.mxu0 0
    %443 = vmatprep.subr.bf16.mxu0 0
    %444 = vmatpush2.bf16.msra.mxu0 0
    %445 = vmatprep.subr.bf16.mxu0 0
    %446 = vmatpush2.bf16.msra.mxu0 0
    %447 = vmatprep.subr.bf16.mxu0 0
    %448 = vmatpush2.bf16.msra.mxu0 0
    %449 = vmatprep.subr.bf16.mxu0 0
    %450 = vmatpush2.bf16.msra.mxu0 0
    %451 = vmatprep.subr.bf16.mxu0 0
    %452 = vmatpush2.bf16.msra.mxu0 0
    %453 = vmatprep.mubr.bf16.mxu0 0
    %454 = vmatmul.mubr.bf16.gmra.mxu0 %v363
    %v455 = vpop.f32.mrf.mxu0
    %v456 = vadd.f32 0.0, %v455
    %v457 = vpop.f32.mrf.mxu0
    %v458 = vadd.f32 0.0, %v457
    %v459 = vpop.f32.mrf.mxu0
    %v460 = vadd.f32 0.0, %v459
    %v461 = vpop.f32.mrf.mxu0
    %v462 = vadd.f32 0.0, %v461
    %463 = vmatprep.mubr.bf16.mxu0 0
    %464 = vmatmul.mubr.bf16.gmra.mxu0 %v366
    %v465 = vpop.f32.mrf.mxu0
    %v466 = vadd.f32 0.0, %v465
    %v467 = vpop.f32.mrf.mxu0
    %v468 = vadd.f32 0.0, %v467
    %v469 = vpop.f32.mrf.mxu0
    %v470 = vadd.f32 0.0, %v469
    %v471 = vpop.f32.mrf.mxu0
    %v472 = vadd.f32 0.0, %v471
    %473 = vdwg.mxu0
    %v474 = vrot.slane %v55, 1
    %v475 = vrot.slane %v56, 1
    %vm476 = vcmask 48128
    %v477 = vsel %vm476, %v87, 0
    %v479 = vsel %vm476, %v88, 0
    %vm481 = vcmask 1042432
    %v483 = vsel %vm481, %v474, 0
    %v486 = vsel %vm481, %v475, 0
    %488 = vmatprep.subr.bf16.mxu0 0
    %489 = vmatpush1.bf16.msra.mxu0 0
    %490 = vmatprep.subr.bf16.mxu0 0
    %491 = vmatpush1.bf16.msra.mxu0 0
    %492 = vmatprep.subr.bf16.mxu0 0
    %493 = vmatpush1.bf16.msra.mxu0 0
    %494 = vmatprep.subr.bf16.mxu0 0
    %495 = vmatpush1.bf16.msra.mxu0 0
    %496 = vmatprep.subr.bf16.mxu0 0
    %497 = vmatpush1.bf16.msra.mxu0 0
    %498 = vmatprep.subr.bf16.mxu0 0
    %499 = vmatpush1.bf16.msra.mxu0 0
    %500 = vmatprep.subr.bf16.mxu0 0
    %501 = vmatpush1.bf16.msra.mxu0 0
    %502 = vmatprep.subr.bf16.mxu0 %v486
    %503 = vmatpush1.bf16.msra.mxu0 %v483
    %504 = vmatprep.subr.bf16.mxu0 0
    %505 = vmatpush2.bf16.msra.mxu0 0
    %506 = vmatprep.subr.bf16.mxu0 0
    %507 = vmatpush2.bf16.msra.mxu0 0
    %508 = vmatprep.subr.bf16.mxu0 0
    %509 = vmatpush2.bf16.msra.mxu0 0
    %510 = vmatprep.subr.bf16.mxu0 0
    %511 = vmatpush2.bf16.msra.mxu0 0
    %512 = vmatprep.subr.bf16.mxu0 0
    %513 = vmatpush2.bf16.msra.mxu0 0
    %514 = vmatprep.subr.bf16.mxu0 0
    %515 = vmatpush2.bf16.msra.mxu0 0
    %516 = vmatprep.subr.bf16.mxu0 0
    %517 = vmatpush2.bf16.msra.mxu0 0
    %518 = vmatprep.subr.bf16.mxu0 0
    %519 = vmatpush2.bf16.msra.mxu0 0
    %520 = vmatprep.mubr.bf16.mxu0 0
    %521 = vmatmul.mubr.bf16.gmra.mxu0 %v477
    %v522 = vpop.f32.mrf.mxu0
    %v523 = vadd.f32 %v403, %v522
    %v524 = vpop.f32.mrf.mxu0
    %v525 = vadd.f32 %v405, %v524
    %v526 = vpop.f32.mrf.mxu0
    %v527 = vadd.f32 %v407, %v526
    %v528 = vpop.f32.mrf.mxu0
    %v529 = vadd.f32 %v409, %v528
    %530 = vmatprep.mubr.bf16.mxu0 0
    %531 = vmatmul.mubr.bf16.gmra.mxu0 %v479
    %v532 = vpop.f32.mrf.mxu0
    %v533 = vadd.f32 %v413, %v532
    %v534 = vpop.f32.mrf.mxu0
    %v535 = vadd.f32 %v415, %v534
    %v536 = vpop.f32.mrf.mxu0
    %v537 = vadd.f32 %v417, %v536
    %v538 = vpop.f32.mrf.mxu0
    %v539 = vadd.f32 %v419, %v538
    %540 = vdwg.mxu0
    %v541 = vrot.slane %v57, 1
    %v542 = vrot.slane %v58, 1
    %v544 = vsel %vm481, %v541, 0
    %v547 = vsel %vm481, %v542, 0
    %549 = vmatprep.subr.bf16.mxu0 0
    %550 = vmatpush1.bf16.msra.mxu0 0
    %551 = vmatprep.subr.bf16.mxu0 0
    %552 = vmatpush1.bf16.msra.mxu0 0
    %553 = vmatprep.subr.bf16.mxu0 0
    %554 = vmatpush1.bf16.msra.mxu0 0
    %555 = vmatprep.subr.bf16.mxu0 0
    %556 = vmatpush1.bf16.msra.mxu0 0
    %557 = vmatprep.subr.bf16.mxu0 0
    %558 = vmatpush1.bf16.msra.mxu0 0
    %559 = vmatprep.subr.bf16.mxu0 0
    %560 = vmatpush1.bf16.msra.mxu0 0
    %561 = vmatprep.subr.bf16.mxu0 0
    %562 = vmatpush1.bf16.msra.mxu0 0
    %563 = vmatprep.subr.bf16.mxu0 %v547
    %564 = vmatpush1.bf16.msra.mxu0 %v544
    %565 = vmatprep.subr.bf16.mxu0 0
    %566 = vmatpush2.bf16.msra.mxu0 0
    %567 = vmatprep.subr.bf16.mxu0 0
    %568 = vmatpush2.bf16.msra.mxu0 0
    %569 = vmatprep.subr.bf16.mxu0 0
    %570 = vmatpush2.bf16.msra.mxu0 0
    %571 = vmatprep.subr.bf16.mxu0 0
    %572 = vmatpush2.bf16.msra.mxu0 0
    %573 = vmatprep.subr.bf16.mxu0 0
    %574 = vmatpush2.bf16.msra.mxu0 0
    %575 = vmatprep.subr.bf16.mxu0 0
    %576 = vmatpush2.bf16.msra.mxu0 0
    %577 = vmatprep.subr.bf16.mxu0 0
    %578 = vmatpush2.bf16.msra.mxu0 0
    %579 = vmatprep.subr.bf16.mxu0 0
    %580 = vmatpush2.bf16.msra.mxu0 0
    %581 = vmatprep.mubr.bf16.mxu0 0
    %582 = vmatmul.mubr.bf16.gmra.mxu0 %v477
    %v583 = vpop.f32.mrf.mxu0
    %v584 = vadd.f32 %v456, %v583
    %v585 = vpop.f32.mrf.mxu0
    %v586 = vadd.f32 %v458, %v585
    %v587 = vpop.f32.mrf.mxu0
    %v588 = vadd.f32 %v460, %v587
    %v589 = vpop.f32.mrf.mxu0
    %v590 = vadd.f32 %v462, %v589
    %591 = vmatprep.mubr.bf16.mxu0 0
    %592 = vmatmul.mubr.bf16.gmra.mxu0 %v479
    %v593 = vpop.f32.mrf.mxu0
    %v594 = vadd.f32 %v466, %v593
    %v595 = vpop.f32.mrf.mxu0
    %v596 = vadd.f32 %v468, %v595
    %v597 = vpop.f32.mrf.mxu0
    %v598 = vadd.f32 %v470, %v597
    %v599 = vpop.f32.mrf.mxu0
    %v600 = vadd.f32 %v472, %v599
    %601 = vdwg.mxu0
    %602 = vrot.lane.b32.xlu0 %v87, 114
    %v603 = vpop.permute.xlu0 %602
    %604 = vrot.lane.b32.xlu0 %v88, 114
    %v605 = vpop.permute.xlu0 %604
    %606 = vrot.lane.b32.xlu0 %v55, 126
    %v607 = vpop.permute.xlu0 %606
    %608 = vrot.lane.b32.xlu0 %v56, 126
    %v609 = vpop.permute.xlu0 %608
    %vm610 = vcmask 1031168
    %v611 = vsel %vm610, %v607, %v609
    %vm612 = vcmask 15360
    %v614 = vsel %vm612, %v603, 0
    %v617 = vsel %vm612, %v605, 0
    %vm619 = vcmask 1040384
    %v621 = vsel %vm619, %v611, 0
    %v624 = vsel %vm619, %v609, 0
    %626 = vmatprep.subr.bf16.mxu0 0
    %627 = vmatpush1.bf16.msra.mxu0 0
    %628 = vmatprep.subr.bf16.mxu0 0
    %629 = vmatpush1.bf16.msra.mxu0 0
    %630 = vmatprep.subr.bf16.mxu0 0
    %631 = vmatpush1.bf16.msra.mxu0 0
    %632 = vmatprep.subr.bf16.mxu0 0
    %633 = vmatpush1.bf16.msra.mxu0 0
    %634 = vmatprep.subr.bf16.mxu0 0
    %635 = vmatpush1.bf16.msra.mxu0 0
    %636 = vmatprep.subr.bf16.mxu0 0
    %637 = vmatpush1.bf16.msra.mxu0 0
    %638 = vmatprep.subr.bf16.mxu0 0
    %639 = vmatpush1.bf16.msra.mxu0 0
    %640 = vmatprep.subr.bf16.mxu0 %v624
    %641 = vmatpush1.bf16.msra.mxu0 %v621
    %642 = vmatprep.subr.bf16.mxu0 0
    %643 = vmatpush2.bf16.msra.mxu0 0
    %644 = vmatprep.subr.bf16.mxu0 0
    %645 = vmatpush2.bf16.msra.mxu0 0
    %646 = vmatprep.subr.bf16.mxu0 0
    %647 = vmatpush2.bf16.msra.mxu0 0
    %648 = vmatprep.subr.bf16.mxu0 0
    %649 = vmatpush2.bf16.msra.mxu0 0
    %650 = vmatprep.subr.bf16.mxu0 0
    %651 = vmatpush2.bf16.msra.mxu0 0
    %652 = vmatprep.subr.bf16.mxu0 0
    %653 = vmatpush2.bf16.msra.mxu0 0
    %654 = vmatprep.subr.bf16.mxu0 0
    %655 = vmatpush2.bf16.msra.mxu0 0
    %656 = vmatprep.subr.bf16.mxu0 0
    %657 = vmatpush2.bf16.msra.mxu0 0
    %658 = vmatprep.mubr.bf16.mxu0 0
    %659 = vmatmul.mubr.bf16.gmra.mxu0 %v614
    %v660 = vpop.f32.mrf.mxu0
    %v661 = vadd.f32 0.0, %v660
    %v662 = vpop.f32.mrf.mxu0
    %v663 = vadd.f32 0.0, %v662
    %v664 = vpop.f32.mrf.mxu0
    %v665 = vadd.f32 0.0, %v664
    %v666 = vpop.f32.mrf.mxu0
    %v667 = vadd.f32 0.0, %v666
    %668 = vmatprep.mubr.bf16.mxu0 0
    %669 = vmatmul.mubr.bf16.gmra.mxu0 %v617
    %v670 = vpop.f32.mrf.mxu0
    %v671 = vadd.f32 0.0, %v670
    %v672 = vpop.f32.mrf.mxu0
    %v673 = vadd.f32 0.0, %v672
    %v674 = vpop.f32.mrf.mxu0
    %v675 = vadd.f32 0.0, %v674
    %v676 = vpop.f32.mrf.mxu0
    %v677 = vadd.f32 0.0, %v676
    %678 = vdwg.mxu0
    %679 = vrot.lane.b32.xlu0 %v57, 126
    %v680 = vpop.permute.xlu0 %679
    %681 = vrot.lane.b32.xlu0 %v58, 126
    %v682 = vpop.permute.xlu0 %681
    %v683 = vsel %vm610, %v680, %v682
    %v685 = vsel %vm619, %v683, 0
    %v688 = vsel %vm619, %v682, 0
    %690 = vmatprep.subr.bf16.mxu0 0
    %691 = vmatpush1.bf16.msra.mxu0 0
    %692 = vmatprep.subr.bf16.mxu0 0
    %693 = vmatpush1.bf16.msra.mxu0 0
    %694 = vmatprep.subr.bf16.mxu0 0
    %695 = vmatpush1.bf16.msra.mxu0 0
    %696 = vmatprep.subr.bf16.mxu0 0
    %697 = vmatpush1.bf16.msra.mxu0 0
    %698 = vmatprep.subr.bf16.mxu0 0
    %699 = vmatpush1.bf16.msra.mxu0 0
    %700 = vmatprep.subr.bf16.mxu0 0
    %701 = vmatpush1.bf16.msra.mxu0 0
    %702 = vmatprep.subr.bf16.mxu0 0
    %703 = vmatpush1.bf16.msra.mxu0 0
    %704 = vmatprep.subr.bf16.mxu0 %v688
    %705 = vmatpush1.bf16.msra.mxu0 %v685
    %706 = vmatprep.subr.bf16.mxu0 0
    %707 = vmatpush2.bf16.msra.mxu0 0
    %708 = vmatprep.subr.bf16.mxu0 0
    %709 = vmatpush2.bf16.msra.mxu0 0
    %710 = vmatprep.subr.bf16.mxu0 0
    %711 = vmatpush2.bf16.msra.mxu0 0
    %712 = vmatprep.subr.bf16.mxu0 0
    %713 = vmatpush2.bf16.msra.mxu0 0
    %714 = vmatprep.subr.bf16.mxu0 0
    %715 = vmatpush2.bf16.msra.mxu0 0
    %716 = vmatprep.subr.bf16.mxu0 0
    %717 = vmatpush2.bf16.msra.mxu0 0
    %718 = vmatprep.subr.bf16.mxu0 0
    %719 = vmatpush2.bf16.msra.mxu0 0
    %720 = vmatprep.subr.bf16.mxu0 0
    %721 = vmatpush2.bf16.msra.mxu0 0
    %722 = vmatprep.mubr.bf16.mxu0 0
    %723 = vmatmul.mubr.bf16.gmra.mxu0 %v614
    %v724 = vpop.f32.mrf.mxu0
    %v725 = vadd.f32 0.0, %v724
    %v726 = vpop.f32.mrf.mxu0
    %v727 = vadd.f32 0.0, %v726
    %v728 = vpop.f32.mrf.mxu0
    %v729 = vadd.f32 0.0, %v728
    %v730 = vpop.f32.mrf.mxu0
    %v731 = vadd.f32 0.0, %v730
    %732 = vmatprep.mubr.bf16.mxu0 0
    %733 = vmatmul.mubr.bf16.gmra.mxu0 %v617
    %v734 = vpop.f32.mrf.mxu0
    %v735 = vadd.f32 0.0, %v734
    %v736 = vpop.f32.mrf.mxu0
    %v737 = vadd.f32 0.0, %v736
    %v738 = vpop.f32.mrf.mxu0
    %v739 = vadd.f32 0.0, %v738
    %v740 = vpop.f32.mrf.mxu0
    %v741 = vadd.f32 0.0, %v740
    %742 = vdwg.mxu0
    %v743 = vadd.f32 %v523, %v661
    %v744 = vadd.f32 %v525, %v663
    %v745 = vadd.f32 %v527, %v665
    %v746 = vadd.f32 %v529, %v667
    %v747 = vadd.f32 %v533, %v671
    %v748 = vadd.f32 %v535, %v673
    %v749 = vadd.f32 %v537, %v675
    %v750 = vadd.f32 %v539, %v677
    %v751 = vadd.f32 %v584, %v725
    %v752 = vadd.f32 %v586, %v727
    %v753 = vadd.f32 %v588, %v729
    %v754 = vadd.f32 %v590, %v731
    %v755 = vadd.f32 %v594, %v735
    %v756 = vadd.f32 %v596, %v737
    %v757 = vadd.f32 %v598, %v739
    %v758 = vadd.f32 %v600, %v741
    %759 = vrot.lane.b32.xlu0 %v87, 124
    %v760 = vpop.permute.xlu0 %759
    %761 = vrot.lane.b32.xlu0 %v88, 124
    %v762 = vpop.permute.xlu0 %761
    %v764 = vsel %vm101, %v760, 0
    %v767 = vsel %vm101, %v762, 0
    %769 = vmatprep.subr.bf16.mxu0 0
    %770 = vmatpush1.bf16.msra.mxu0 0
    %771 = vmatprep.subr.bf16.mxu0 0
    %772 = vmatpush1.bf16.msra.mxu0 0
    %773 = vmatprep.subr.bf16.mxu0 0
    %774 = vmatpush1.bf16.msra.mxu0 0
    %775 = vmatprep.subr.bf16.mxu0 0
    %776 = vmatpush1.bf16.msra.mxu0 0
    %777 = vmatprep.subr.bf16.mxu0 0
    %778 = vmatpush1.bf16.msra.mxu0 0
    %779 = vmatprep.subr.bf16.mxu0 0
    %780 = vmatpush1.bf16.msra.mxu0 0
    %781 = vmatprep.subr.bf16.mxu0 0
    %782 = vmatpush1.bf16.msra.mxu0 0
    %783 = vmatprep.subr.bf16.mxu0 %v113
    %784 = vmatpush1.bf16.msra.mxu0 %v110
    %785 = vmatprep.subr.bf16.mxu0 0
    %786 = vmatpush2.bf16.msra.mxu0 0
    %787 = vmatprep.subr.bf16.mxu0 0
    %788 = vmatpush2.bf16.msra.mxu0 0
    %789 = vmatprep.subr.bf16.mxu0 0
    %790 = vmatpush2.bf16.msra.mxu0 0
    %791 = vmatprep.subr.bf16.mxu0 0
    %792 = vmatpush2.bf16.msra.mxu0 0
    %793 = vmatprep.subr.bf16.mxu0 0
    %794 = vmatpush2.bf16.msra.mxu0 0
    %795 = vmatprep.subr.bf16.mxu0 0
    %796 = vmatpush2.bf16.msra.mxu0 0
    %797 = vmatprep.subr.bf16.mxu0 0
    %798 = vmatpush2.bf16.msra.mxu0 0
    %799 = vmatprep.subr.bf16.mxu0 0
    %800 = vmatpush2.bf16.msra.mxu0 0
    %801 = vmatprep.mubr.bf16.mxu0 0
    %802 = vmatmul.mubr.bf16.gmra.mxu0 %v764
    %v803 = vpop.f32.mrf.mxu0
    %v804 = vadd.f32 0.0, %v803
    %v805 = vpop.f32.mrf.mxu0
    %v806 = vadd.f32 0.0, %v805
    %v807 = vpop.f32.mrf.mxu0
    %v808 = vadd.f32 0.0, %v807
    %v809 = vpop.f32.mrf.mxu0
    %v810 = vadd.f32 0.0, %v809
    %811 = vmatprep.mubr.bf16.mxu0 0
    %812 = vmatmul.mubr.bf16.gmra.mxu0 %v767
    %v813 = vpop.f32.mrf.mxu0
    %v814 = vadd.f32 0.0, %v813
    %v815 = vpop.f32.mrf.mxu0
    %v816 = vadd.f32 0.0, %v815
    %v817 = vpop.f32.mrf.mxu0
    %v818 = vadd.f32 0.0, %v817
    %v819 = vpop.f32.mrf.mxu0
    %v820 = vadd.f32 0.0, %v819
    %821 = vdwg.mxu0
    %822 = vmatprep.subr.bf16.mxu0 0
    %823 = vmatpush1.bf16.msra.mxu0 0
    %824 = vmatprep.subr.bf16.mxu0 0
    %825 = vmatpush1.bf16.msra.mxu0 0
    %826 = vmatprep.subr.bf16.mxu0 0
    %827 = vmatpush1.bf16.msra.mxu0 0
    %828 = vmatprep.subr.bf16.mxu0 0
    %829 = vmatpush1.bf16.msra.mxu0 0
    %830 = vmatprep.subr.bf16.mxu0 0
    %831 = vmatpush1.bf16.msra.mxu0 0
    %832 = vmatprep.subr.bf16.mxu0 0
    %833 = vmatpush1.bf16.msra.mxu0 0
    %834 = vmatprep.subr.bf16.mxu0 0
    %835 = vmatpush1.bf16.msra.mxu0 0
    %836 = vmatprep.subr.bf16.mxu0 %v179
    %837 = vmatpush1.bf16.msra.mxu0 %v176
    %838 = vmatprep.subr.bf16.mxu0 0
    %839 = vmatpush2.bf16.msra.mxu0 0
    %840 = vmatprep.subr.bf16.mxu0 0
    %841 = vmatpush2.bf16.msra.mxu0 0
    %842 = vmatprep.subr.bf16.mxu0 0
    %843 = vmatpush2.bf16.msra.mxu0 0
    %844 = vmatprep.subr.bf16.mxu0 0
    %845 = vmatpush2.bf16.msra.mxu0 0
    %846 = vmatprep.subr.bf16.mxu0 0
    %847 = vmatpush2.bf16.msra.mxu0 0
    %848 = vmatprep.subr.bf16.mxu0 0
    %849 = vmatpush2.bf16.msra.mxu0 0
    %850 = vmatprep.subr.bf16.mxu0 0
    %851 = vmatpush2.bf16.msra.mxu0 0
    %852 = vmatprep.subr.bf16.mxu0 0
    %853 = vmatpush2.bf16.msra.mxu0 0
    %854 = vmatprep.mubr.bf16.mxu0 0
    %855 = vmatmul.mubr.bf16.gmra.mxu0 %v764
    %v856 = vpop.f32.mrf.mxu0
    %v857 = vadd.f32 0.0, %v856
    %v858 = vpop.f32.mrf.mxu0
    %v859 = vadd.f32 0.0, %v858
    %v860 = vpop.f32.mrf.mxu0
    %v861 = vadd.f32 0.0, %v860
    %v862 = vpop.f32.mrf.mxu0
    %v863 = vadd.f32 0.0, %v862
    %864 = vmatprep.mubr.bf16.mxu0 0
    %865 = vmatmul.mubr.bf16.gmra.mxu0 %v767
    %v866 = vpop.f32.mrf.mxu0
    %v867 = vadd.f32 0.0, %v866
    %v868 = vpop.f32.mrf.mxu0
    %v869 = vadd.f32 0.0, %v868
    %v870 = vpop.f32.mrf.mxu0
    %v871 = vadd.f32 0.0, %v870
    %v872 = vpop.f32.mrf.mxu0
    %v873 = vadd.f32 0.0, %v872
    %874 = vdwg.mxu0
    %v875 = vrot.slane %v55, 2
    %v876 = vrot.slane %v56, 2
    %vm877 = vcmask 31744
    %v878 = vsel %vm877, %v87, 0
    %v880 = vsel %vm877, %v88, 0
    %vm882 = vcmask 1041408
    %v884 = vsel %vm882, %v875, 0
    %v887 = vsel %vm882, %v876, 0
    %889 = vmatprep.subr.bf16.mxu0 0
    %890 = vmatpush1.bf16.msra.mxu0 0
    %891 = vmatprep.subr.bf16.mxu0 0
    %892 = vmatpush1.bf16.msra.mxu0 0
    %893 = vmatprep.subr.bf16.mxu0 0
    %894 = vmatpush1.bf16.msra.mxu0 0
    %895 = vmatprep.subr.bf16.mxu0 0
    %896 = vmatpush1.bf16.msra.mxu0 0
    %897 = vmatprep.subr.bf16.mxu0 0
    %898 = vmatpush1.bf16.msra.mxu0 0
    %899 = vmatprep.subr.bf16.mxu0 0
    %900 = vmatpush1.bf16.msra.mxu0 0
    %901 = vmatprep.subr.bf16.mxu0 0
    %902 = vmatpush1.bf16.msra.mxu0 0
    %903 = vmatprep.subr.bf16.mxu0 %v887
    %904 = vmatpush1.bf16.msra.mxu0 %v884
    %905 = vmatprep.subr.bf16.mxu0 0
    %906 = vmatpush2.bf16.msra.mxu0 0
    %907 = vmatprep.subr.bf16.mxu0 0
    %908 = vmatpush2.bf16.msra.mxu0 0
    %909 = vmatprep.subr.bf16.mxu0 0
    %910 = vmatpush2.bf16.msra.mxu0 0
    %911 = vmatprep.subr.bf16.mxu0 0
    %912 = vmatpush2.bf16.msra.mxu0 0
    %913 = vmatprep.subr.bf16.mxu0 0
    %914 = vmatpush2.bf16.msra.mxu0 0
    %915 = vmatprep.subr.bf16.mxu0 0
    %916 = vmatpush2.bf16.msra.mxu0 0
    %917 = vmatprep.subr.bf16.mxu0 0
    %918 = vmatpush2.bf16.msra.mxu0 0
    %919 = vmatprep.subr.bf16.mxu0 0
    %920 = vmatpush2.bf16.msra.mxu0 0
    %921 = vmatprep.mubr.bf16.mxu0 0
    %922 = vmatmul.mubr.bf16.gmra.mxu0 %v878
    %v923 = vpop.f32.mrf.mxu0
    %v924 = vadd.f32 %v804, %v923
    %v925 = vpop.f32.mrf.mxu0
    %v926 = vadd.f32 %v806, %v925
    %v927 = vpop.f32.mrf.mxu0
    %v928 = vadd.f32 %v808, %v927
    %v929 = vpop.f32.mrf.mxu0
    %v930 = vadd.f32 %v810, %v929
    %931 = vmatprep.mubr.bf16.mxu0 0
    %932 = vmatmul.mubr.bf16.gmra.mxu0 %v880
    %v933 = vpop.f32.mrf.mxu0
    %v934 = vadd.f32 %v814, %v933
    %v935 = vpop.f32.mrf.mxu0
    %v936 = vadd.f32 %v816, %v935
    %v937 = vpop.f32.mrf.mxu0
    %v938 = vadd.f32 %v818, %v937
    %v939 = vpop.f32.mrf.mxu0
    %v940 = vadd.f32 %v820, %v939
    %941 = vdwg.mxu0
    %v942 = vrot.slane %v57, 2
    %v943 = vrot.slane %v58, 2
    %v945 = vsel %vm882, %v942, 0
    %v948 = vsel %vm882, %v943, 0
    %950 = vmatprep.subr.bf16.mxu0 0
    %951 = vmatpush1.bf16.msra.mxu0 0
    %952 = vmatprep.subr.bf16.mxu0 0
    %953 = vmatpush1.bf16.msra.mxu0 0
    %954 = vmatprep.subr.bf16.mxu0 0
    %955 = vmatpush1.bf16.msra.mxu0 0
    %956 = vmatprep.subr.bf16.mxu0 0
    %957 = vmatpush1.bf16.msra.mxu0 0
    %958 = vmatprep.subr.bf16.mxu0 0
    %959 = vmatpush1.bf16.msra.mxu0 0
    %960 = vmatprep.subr.bf16.mxu0 0
    %961 = vmatpush1.bf16.msra.mxu0 0
    %962 = vmatprep.subr.bf16.mxu0 0
    %963 = vmatpush1.bf16.msra.mxu0 0
    %964 = vmatprep.subr.bf16.mxu0 %v948
    %965 = vmatpush1.bf16.msra.mxu0 %v945
    %966 = vmatprep.subr.bf16.mxu0 0
    %967 = vmatpush2.bf16.msra.mxu0 0
    %968 = vmatprep.subr.bf16.mxu0 0
    %969 = vmatpush2.bf16.msra.mxu0 0
    %970 = vmatprep.subr.bf16.mxu0 0
    %971 = vmatpush2.bf16.msra.mxu0 0
    %972 = vmatprep.subr.bf16.mxu0 0
    %973 = vmatpush2.bf16.msra.mxu0 0
    %974 = vmatprep.subr.bf16.mxu0 0
    %975 = vmatpush2.bf16.msra.mxu0 0
    %976 = vmatprep.subr.bf16.mxu0 0
    %977 = vmatpush2.bf16.msra.mxu0 0
    %978 = vmatprep.subr.bf16.mxu0 0
    %979 = vmatpush2.bf16.msra.mxu0 0
    %980 = vmatprep.subr.bf16.mxu0 0
    %981 = vmatpush2.bf16.msra.mxu0 0
    %982 = vmatprep.mubr.bf16.mxu0 0
    %983 = vmatmul.mubr.bf16.gmra.mxu0 %v878
    %v984 = vpop.f32.mrf.mxu0
    %v985 = vadd.f32 %v857, %v984
    %v986 = vpop.f32.mrf.mxu0
    %v987 = vadd.f32 %v859, %v986
    %v988 = vpop.f32.mrf.mxu0
    %v989 = vadd.f32 %v861, %v988
    %v990 = vpop.f32.mrf.mxu0
    %v991 = vadd.f32 %v863, %v990
    %992 = vmatprep.mubr.bf16.mxu0 0
    %993 = vmatmul.mubr.bf16.gmra.mxu0 %v880
    %v994 = vpop.f32.mrf.mxu0
    %v995 = vadd.f32 %v867, %v994
    %v996 = vpop.f32.mrf.mxu0
    %v997 = vadd.f32 %v869, %v996
    %v998 = vpop.f32.mrf.mxu0
    %v999 = vadd.f32 %v871, %v998
    %v1000 = vpop.f32.mrf.mxu0
    %v1001 = vadd.f32 %v873, %v1000
    %1002 = vdwg.mxu0
    %1003 = vrot.lane.b32.xlu0 %v87, 116
    %v1004 = vpop.permute.xlu0 %1003
    %1005 = vrot.lane.b32.xlu0 %v88, 116
    %v1006 = vpop.permute.xlu0 %1005
    %v1008 = vsel %vm877, %v1004, 0
    %v1011 = vsel %vm877, %v1006, 0
    %v1013 = vsel %vm882, %v611, 0
    %v1015 = vsel %vm882, %v609, 0
    %1017 = vmatprep.subr.bf16.mxu0 0
    %1018 = vmatpush1.bf16.msra.mxu0 0
    %1019 = vmatprep.subr.bf16.mxu0 0
    %1020 = vmatpush1.bf16.msra.mxu0 0
    %1021 = vmatprep.subr.bf16.mxu0 0
    %1022 = vmatpush1.bf16.msra.mxu0 0
    %1023 = vmatprep.subr.bf16.mxu0 0
    %1024 = vmatpush1.bf16.msra.mxu0 0
    %1025 = vmatprep.subr.bf16.mxu0 0
    %1026 = vmatpush1.bf16.msra.mxu0 0
    %1027 = vmatprep.subr.bf16.mxu0 0
    %1028 = vmatpush1.bf16.msra.mxu0 0
    %1029 = vmatprep.subr.bf16.mxu0 0
    %1030 = vmatpush1.bf16.msra.mxu0 0
    %1031 = vmatprep.subr.bf16.mxu0 %v1015
    %1032 = vmatpush1.bf16.msra.mxu0 %v1013
    %1033 = vmatprep.subr.bf16.mxu0 0
    %1034 = vmatpush2.bf16.msra.mxu0 0
    %1035 = vmatprep.subr.bf16.mxu0 0
    %1036 = vmatpush2.bf16.msra.mxu0 0
    %1037 = vmatprep.subr.bf16.mxu0 0
    %1038 = vmatpush2.bf16.msra.mxu0 0
    %1039 = vmatprep.subr.bf16.mxu0 0
    %1040 = vmatpush2.bf16.msra.mxu0 0
    %1041 = vmatprep.subr.bf16.mxu0 0
    %1042 = vmatpush2.bf16.msra.mxu0 0
    %1043 = vmatprep.subr.bf16.mxu0 0
    %1044 = vmatpush2.bf16.msra.mxu0 0
    %1045 = vmatprep.subr.bf16.mxu0 0
    %1046 = vmatpush2.bf16.msra.mxu0 0
    %1047 = vmatprep.subr.bf16.mxu0 0
    %1048 = vmatpush2.bf16.msra.mxu0 0
    %1049 = vmatprep.mubr.bf16.mxu0 0
    %1050 = vmatmul.mubr.bf16.gmra.mxu0 %v1008
    %v1051 = vpop.f32.mrf.mxu0
    %v1052 = vadd.f32 0.0, %v1051
    %v1053 = vpop.f32.mrf.mxu0
    %v1054 = vadd.f32 0.0, %v1053
    %v1055 = vpop.f32.mrf.mxu0
    %v1056 = vadd.f32 0.0, %v1055
    %v1057 = vpop.f32.mrf.mxu0
    %v1058 = vadd.f32 0.0, %v1057
    %1059 = vmatprep.mubr.bf16.mxu0 0
    %1060 = vmatmul.mubr.bf16.gmra.mxu0 %v1011
    %v1061 = vpop.f32.mrf.mxu0
    %v1062 = vadd.f32 0.0, %v1061
    %v1063 = vpop.f32.mrf.mxu0
    %v1064 = vadd.f32 0.0, %v1063
    %v1065 = vpop.f32.mrf.mxu0
    %v1066 = vadd.f32 0.0, %v1065
    %v1067 = vpop.f32.mrf.mxu0
    %v1068 = vadd.f32 0.0, %v1067
    %1069 = vdwg.mxu0
    %v1070 = vsel %vm882, %v683, 0
    %v1072 = vsel %vm882, %v682, 0
    %1074 = vmatprep.subr.bf16.mxu0 0
    %1075 = vmatpush1.bf16.msra.mxu0 0
    %1076 = vmatprep.subr.bf16.mxu0 0
    %1077 = vmatpush1.bf16.msra.mxu0 0
    %1078 = vmatprep.subr.bf16.mxu0 0
    %1079 = vmatpush1.bf16.msra.mxu0 0
    %1080 = vmatprep.subr.bf16.mxu0 0
    %1081 = vmatpush1.bf16.msra.mxu0 0
    %1082 = vmatprep.subr.bf16.mxu0 0
    %1083 = vmatpush1.bf16.msra.mxu0 0
    %1084 = vmatprep.subr.bf16.mxu0 0
    %1085 = vmatpush1.bf16.msra.mxu0 0
    %1086 = vmatprep.subr.bf16.mxu0 0
    %1087 = vmatpush1.bf16.msra.mxu0 0
    %1088 = vmatprep.subr.bf16.mxu0 %v1072
    %1089 = vmatpush1.bf16.msra.mxu0 %v1070
    %1090 = vmatprep.subr.bf16.mxu0 0
    %1091 = vmatpush2.bf16.msra.mxu0 0
    %1092 = vmatprep.subr.bf16.mxu0 0
    %1093 = vmatpush2.bf16.msra.mxu0 0
    %1094 = vmatprep.subr.bf16.mxu0 0
    %1095 = vmatpush2.bf16.msra.mxu0 0
    %1096 = vmatprep.subr.bf16.mxu0 0
    %1097 = vmatpush2.bf16.msra.mxu0 0
    %1098 = vmatprep.subr.bf16.mxu0 0
    %1099 = vmatpush2.bf16.msra.mxu0 0
    %1100 = vmatprep.subr.bf16.mxu0 0
    %1101 = vmatpush2.bf16.msra.mxu0 0
    %1102 = vmatprep.subr.bf16.mxu0 0
    %1103 = vmatpush2.bf16.msra.mxu0 0
    %1104 = vmatprep.subr.bf16.mxu0 0
    %1105 = vmatpush2.bf16.msra.mxu0 0
    %1106 = vmatprep.mubr.bf16.mxu0 0
    %1107 = vmatmul.mubr.bf16.gmra.mxu0 %v1008
    %v1108 = vpop.f32.mrf.mxu0
    %v1109 = vadd.f32 0.0, %v1108
    %v1110 = vpop.f32.mrf.mxu0
    %v1111 = vadd.f32 0.0, %v1110
    %v1112 = vpop.f32.mrf.mxu0
    %v1113 = vadd.f32 0.0, %v1112
    %v1114 = vpop.f32.mrf.mxu0
    %v1115 = vadd.f32 0.0, %v1114
    %1116 = vmatprep.mubr.bf16.mxu0 0
    %1117 = vmatmul.mubr.bf16.gmra.mxu0 %v1011
    %v1118 = vpop.f32.mrf.mxu0
    %v1119 = vadd.f32 0.0, %v1118
    %v1120 = vpop.f32.mrf.mxu0
    %v1121 = vadd.f32 0.0, %v1120
    %v1122 = vpop.f32.mrf.mxu0
    %v1123 = vadd.f32 0.0, %v1122
    %v1124 = vpop.f32.mrf.mxu0
    %v1125 = vadd.f32 0.0, %v1124
    %1126 = vdwg.mxu0
    %v1127 = vadd.f32 %v924, %v1052
    %v1128 = vadd.f32 %v926, %v1054
    %v1129 = vadd.f32 %v928, %v1056
    %v1130 = vadd.f32 %v930, %v1058
    %v1131 = vadd.f32 %v934, %v1062
    %v1132 = vadd.f32 %v936, %v1064
    %v1133 = vadd.f32 %v938, %v1066
    %v1134 = vadd.f32 %v940, %v1068
    %v1135 = vadd.f32 %v985, %v1109
    %v1136 = vadd.f32 %v987, %v1111
    %v1137 = vadd.f32 %v989, %v1113
    %v1138 = vadd.f32 %v991, %v1115
    %v1139 = vadd.f32 %v995, %v1119
    %v1140 = vadd.f32 %v997, %v1121
    %v1141 = vadd.f32 %v999, %v1123
    %v1142 = vadd.f32 %v1001, %v1125
    %1143 = vrot.lane.b32.xlu0 %v87, 126
    %v1144 = vpop.permute.xlu0 %1143
    %1145 = vrot.lane.b32.xlu0 %v88, 126
    %v1146 = vpop.permute.xlu0 %1145
    %v1148 = vsel %vm101, %v1144, 0
    %v1151 = vsel %vm101, %v1146, 0
    %1153 = vmatprep.subr.bf16.mxu0 0
    %1154 = vmatpush1.bf16.msra.mxu0 0
    %1155 = vmatprep.subr.bf16.mxu0 0
    %1156 = vmatpush1.bf16.msra.mxu0 0
    %1157 = vmatprep.subr.bf16.mxu0 0
    %1158 = vmatpush1.bf16.msra.mxu0 0
    %1159 = vmatprep.subr.bf16.mxu0 0
    %1160 = vmatpush1.bf16.msra.mxu0 0
    %1161 = vmatprep.subr.bf16.mxu0 0
    %1162 = vmatpush1.bf16.msra.mxu0 0
    %1163 = vmatprep.subr.bf16.mxu0 0
    %1164 = vmatpush1.bf16.msra.mxu0 0
    %1165 = vmatprep.subr.bf16.mxu0 0
    %1166 = vmatpush1.bf16.msra.mxu0 0
    %1167 = vmatprep.subr.bf16.mxu0 %v113
    %1168 = vmatpush1.bf16.msra.mxu0 %v110
    %1169 = vmatprep.subr.bf16.mxu0 0
    %1170 = vmatpush2.bf16.msra.mxu0 0
    %1171 = vmatprep.subr.bf16.mxu0 0
    %1172 = vmatpush2.bf16.msra.mxu0 0
    %1173 = vmatprep.subr.bf16.mxu0 0
    %1174 = vmatpush2.bf16.msra.mxu0 0
    %1175 = vmatprep.subr.bf16.mxu0 0
    %1176 = vmatpush2.bf16.msra.mxu0 0
    %1177 = vmatprep.subr.bf16.mxu0 0
    %1178 = vmatpush2.bf16.msra.mxu0 0
    %1179 = vmatprep.subr.bf16.mxu0 0
    %1180 = vmatpush2.bf16.msra.mxu0 0
    %1181 = vmatprep.subr.bf16.mxu0 0
    %1182 = vmatpush2.bf16.msra.mxu0 0
    %1183 = vmatprep.subr.bf16.mxu0 0
    %1184 = vmatpush2.bf16.msra.mxu0 0
    %1185 = vmatprep.mubr.bf16.mxu0 0
    %1186 = vmatmul.mubr.bf16.gmra.mxu0 %v1148
    %v1187 = vpop.f32.mrf.mxu0
    %v1188 = vadd.f32 0.0, %v1187
    %v1189 = vpop.f32.mrf.mxu0
    %v1190 = vadd.f32 0.0, %v1189
    %v1191 = vpop.f32.mrf.mxu0
    %v1192 = vadd.f32 0.0, %v1191
    %v1193 = vpop.f32.mrf.mxu0
    %v1194 = vadd.f32 0.0, %v1193
    %1195 = vmatprep.mubr.bf16.mxu0 0
    %1196 = vmatmul.mubr.bf16.gmra.mxu0 %v1151
    %v1197 = vpop.f32.mrf.mxu0
    %v1198 = vadd.f32 0.0, %v1197
    %v1199 = vpop.f32.mrf.mxu0
    %v1200 = vadd.f32 0.0, %v1199
    %v1201 = vpop.f32.mrf.mxu0
    %v1202 = vadd.f32 0.0, %v1201
    %v1203 = vpop.f32.mrf.mxu0
    %v1204 = vadd.f32 0.0, %v1203
    %1205 = vdwg.mxu0
    %1206 = vmatprep.subr.bf16.mxu0 0
    %1207 = vmatpush1.bf16.msra.mxu0 0
    %1208 = vmatprep.subr.bf16.mxu0 0
    %1209 = vmatpush1.bf16.msra.mxu0 0
    %1210 = vmatprep.subr.bf16.mxu0 0
    %1211 = vmatpush1.bf16.msra.mxu0 0
    %1212 = vmatprep.subr.bf16.mxu0 0
    %1213 = vmatpush1.bf16.msra.mxu0 0
    %1214 = vmatprep.subr.bf16.mxu0 0
    %1215 = vmatpush1.bf16.msra.mxu0 0
    %1216 = vmatprep.subr.bf16.mxu0 0
    %1217 = vmatpush1.bf16.msra.mxu0 0
    %1218 = vmatprep.subr.bf16.mxu0 0
    %1219 = vmatpush1.bf16.msra.mxu0 0
    %1220 = vmatprep.subr.bf16.mxu0 %v179
    %1221 = vmatpush1.bf16.msra.mxu0 %v176
    %1222 = vmatprep.subr.bf16.mxu0 0
    %1223 = vmatpush2.bf16.msra.mxu0 0
    %1224 = vmatprep.subr.bf16.mxu0 0
    %1225 = vmatpush2.bf16.msra.mxu0 0
    %1226 = vmatprep.subr.bf16.mxu0 0
    %1227 = vmatpush2.bf16.msra.mxu0 0
    %1228 = vmatprep.subr.bf16.mxu0 0
    %1229 = vmatpush2.bf16.msra.mxu0 0
    %1230 = vmatprep.subr.bf16.mxu0 0
    %1231 = vmatpush2.bf16.msra.mxu0 0
    %1232 = vmatprep.subr.bf16.mxu0 0
    %1233 = vmatpush2.bf16.msra.mxu0 0
    %1234 = vmatprep.subr.bf16.mxu0 0
    %1235 = vmatpush2.bf16.msra.mxu0 0
    %1236 = vmatprep.subr.bf16.mxu0 0
    %1237 = vmatpush2.bf16.msra.mxu0 0
    %1238 = vmatprep.mubr.bf16.mxu0 0
    %1239 = vmatmul.mubr.bf16.gmra.mxu0 %v1148
    %v1240 = vpop.f32.mrf.mxu0
    %v1241 = vadd.f32 0.0, %v1240
    %v1242 = vpop.f32.mrf.mxu0
    %v1243 = vadd.f32 0.0, %v1242
    %v1244 = vpop.f32.mrf.mxu0
    %v1245 = vadd.f32 0.0, %v1244
    %v1246 = vpop.f32.mrf.mxu0
    %v1247 = vadd.f32 0.0, %v1246
    %1248 = vmatprep.mubr.bf16.mxu0 0
    %1249 = vmatmul.mubr.bf16.gmra.mxu0 %v1151
    %v1250 = vpop.f32.mrf.mxu0
    %v1251 = vadd.f32 0.0, %v1250
    %v1252 = vpop.f32.mrf.mxu0
    %v1253 = vadd.f32 0.0, %v1252
    %v1254 = vpop.f32.mrf.mxu0
    %v1255 = vadd.f32 0.0, %v1254
    %v1256 = vpop.f32.mrf.mxu0
    %v1257 = vadd.f32 0.0, %v1256
    %1258 = vdwg.mxu0
    %v1259 = vrot.slane %v55, 3
    %v1260 = vrot.slane %v56, 3
    %v1261 = vsel %vm612, %v87, 0
    %v1263 = vsel %vm612, %v88, 0
    %v1266 = vsel %vm619, %v1259, 0
    %v1269 = vsel %vm619, %v1260, 0
    %1271 = vmatprep.subr.bf16.mxu0 0
    %1272 = vmatpush1.bf16.msra.mxu0 0
    %1273 = vmatprep.subr.bf16.mxu0 0
    %1274 = vmatpush1.bf16.msra.mxu0 0
    %1275 = vmatprep.subr.bf16.mxu0 0
    %1276 = vmatpush1.bf16.msra.mxu0 0
    %1277 = vmatprep.subr.bf16.mxu0 0
    %1278 = vmatpush1.bf16.msra.mxu0 0
    %1279 = vmatprep.subr.bf16.mxu0 0
    %1280 = vmatpush1.bf16.msra.mxu0 0
    %1281 = vmatprep.subr.bf16.mxu0 0
    %1282 = vmatpush1.bf16.msra.mxu0 0
    %1283 = vmatprep.subr.bf16.mxu0 0
    %1284 = vmatpush1.bf16.msra.mxu0 0
    %1285 = vmatprep.subr.bf16.mxu0 %v1269
    %1286 = vmatpush1.bf16.msra.mxu0 %v1266
    %1287 = vmatprep.subr.bf16.mxu0 0
    %1288 = vmatpush2.bf16.msra.mxu0 0
    %1289 = vmatprep.subr.bf16.mxu0 0
    %1290 = vmatpush2.bf16.msra.mxu0 0
    %1291 = vmatprep.subr.bf16.mxu0 0
    %1292 = vmatpush2.bf16.msra.mxu0 0
    %1293 = vmatprep.subr.bf16.mxu0 0
    %1294 = vmatpush2.bf16.msra.mxu0 0
    %1295 = vmatprep.subr.bf16.mxu0 0
    %1296 = vmatpush2.bf16.msra.mxu0 0
    %1297 = vmatprep.subr.bf16.mxu0 0
    %1298 = vmatpush2.bf16.msra.mxu0 0
    %1299 = vmatprep.subr.bf16.mxu0 0
    %1300 = vmatpush2.bf16.msra.mxu0 0
    %1301 = vmatprep.subr.bf16.mxu0 0
    %1302 = vmatpush2.bf16.msra.mxu0 0
    %1303 = vmatprep.mubr.bf16.mxu0 0
    %1304 = vmatmul.mubr.bf16.gmra.mxu0 %v1261
    %v1305 = vpop.f32.mrf.mxu0
    %v1306 = vadd.f32 %v1188, %v1305
    %v1307 = vpop.f32.mrf.mxu0
    %v1308 = vadd.f32 %v1190, %v1307
    %v1309 = vpop.f32.mrf.mxu0
    %v1310 = vadd.f32 %v1192, %v1309
    %v1311 = vpop.f32.mrf.mxu0
    %v1312 = vadd.f32 %v1194, %v1311
    %1313 = vmatprep.mubr.bf16.mxu0 0
    %1314 = vmatmul.mubr.bf16.gmra.mxu0 %v1263
    %v1315 = vpop.f32.mrf.mxu0
    %v1316 = vadd.f32 %v1198, %v1315
    %v1317 = vpop.f32.mrf.mxu0
    %v1318 = vadd.f32 %v1200, %v1317
    %v1319 = vpop.f32.mrf.mxu0
    %v1320 = vadd.f32 %v1202, %v1319
    %v1321 = vpop.f32.mrf.mxu0
    %v1322 = vadd.f32 %v1204, %v1321
    %1323 = vdwg.mxu0
    %v1324 = vrot.slane %v57, 3
    %v1325 = vrot.slane %v58, 3
    %v1327 = vsel %vm619, %v1324, 0
    %v1330 = vsel %vm619, %v1325, 0
    %1332 = vmatprep.subr.bf16.mxu0 0
    %1333 = vmatpush1.bf16.msra.mxu0 0
    %1334 = vmatprep.subr.bf16.mxu0 0
    %1335 = vmatpush1.bf16.msra.mxu0 0
    %1336 = vmatprep.subr.bf16.mxu0 0
    %1337 = vmatpush1.bf16.msra.mxu0 0
    %1338 = vmatprep.subr.bf16.mxu0 0
    %1339 = vmatpush1.bf16.msra.mxu0 0
    %1340 = vmatprep.subr.bf16.mxu0 0
    %1341 = vmatpush1.bf16.msra.mxu0 0
    %1342 = vmatprep.subr.bf16.mxu0 0
    %1343 = vmatpush1.bf16.msra.mxu0 0
    %1344 = vmatprep.subr.bf16.mxu0 0
    %1345 = vmatpush1.bf16.msra.mxu0 0
    %1346 = vmatprep.subr.bf16.mxu0 %v1330
    %1347 = vmatpush1.bf16.msra.mxu0 %v1327
    %1348 = vmatprep.subr.bf16.mxu0 0
    %1349 = vmatpush2.bf16.msra.mxu0 0
    %1350 = vmatprep.subr.bf16.mxu0 0
    %1351 = vmatpush2.bf16.msra.mxu0 0
    %1352 = vmatprep.subr.bf16.mxu0 0
    %1353 = vmatpush2.bf16.msra.mxu0 0
    %1354 = vmatprep.subr.bf16.mxu0 0
    %1355 = vmatpush2.bf16.msra.mxu0 0
    %1356 = vmatprep.subr.bf16.mxu0 0
    %1357 = vmatpush2.bf16.msra.mxu0 0
    %1358 = vmatprep.subr.bf16.mxu0 0
    %1359 = vmatpush2.bf16.msra.mxu0 0
    %1360 = vmatprep.subr.bf16.mxu0 0
    %1361 = vmatpush2.bf16.msra.mxu0 0
    %1362 = vmatprep.subr.bf16.mxu0 0
    %1363 = vmatpush2.bf16.msra.mxu0 0
    %1364 = vmatprep.mubr.bf16.mxu0 0
    %1365 = vmatmul.mubr.bf16.gmra.mxu0 %v1261
    %v1366 = vpop.f32.mrf.mxu0
    %v1367 = vadd.f32 %v1241, %v1366
    %v1368 = vpop.f32.mrf.mxu0
    %v1369 = vadd.f32 %v1243, %v1368
    %v1370 = vpop.f32.mrf.mxu0
    %v1371 = vadd.f32 %v1245, %v1370
    %v1372 = vpop.f32.mrf.mxu0
    %v1373 = vadd.f32 %v1247, %v1372
    %1374 = vmatprep.mubr.bf16.mxu0 0
    %1375 = vmatmul.mubr.bf16.gmra.mxu0 %v1263
    %v1376 = vpop.f32.mrf.mxu0
    %v1377 = vadd.f32 %v1251, %v1376
    %v1378 = vpop.f32.mrf.mxu0
    %v1379 = vadd.f32 %v1253, %v1378
    %v1380 = vpop.f32.mrf.mxu0
    %v1381 = vadd.f32 %v1255, %v1380
    %v1382 = vpop.f32.mrf.mxu0
    %v1383 = vadd.f32 %v1257, %v1382
    %1384 = vdwg.mxu0
    %1385 = vrot.lane.b32.xlu0 %v87, 118
    %v1386 = vpop.permute.xlu0 %1385
    %1387 = vrot.lane.b32.xlu0 %v88, 118
    %v1388 = vpop.permute.xlu0 %1387
    %v1390 = vsel %vm476, %v1386, 0
    %v1393 = vsel %vm476, %v1388, 0
    %v1395 = vsel %vm481, %v611, 0
    %v1397 = vsel %vm481, %v609, 0
    %1399 = vmatprep.subr.bf16.mxu0 0
    %1400 = vmatpush1.bf16.msra.mxu0 0
    %1401 = vmatprep.subr.bf16.mxu0 0
    %1402 = vmatpush1.bf16.msra.mxu0 0
    %1403 = vmatprep.subr.bf16.mxu0 0
    %1404 = vmatpush1.bf16.msra.mxu0 0
    %1405 = vmatprep.subr.bf16.mxu0 0
    %1406 = vmatpush1.bf16.msra.mxu0 0
    %1407 = vmatprep.subr.bf16.mxu0 0
    %1408 = vmatpush1.bf16.msra.mxu0 0
    %1409 = vmatprep.subr.bf16.mxu0 0
    %1410 = vmatpush1.bf16.msra.mxu0 0
    %1411 = vmatprep.subr.bf16.mxu0 0
    %1412 = vmatpush1.bf16.msra.mxu0 0
    %1413 = vmatprep.subr.bf16.mxu0 %v1397
    %1414 = vmatpush1.bf16.msra.mxu0 %v1395
    %1415 = vmatprep.subr.bf16.mxu0 0
    %1416 = vmatpush2.bf16.msra.mxu0 0
    %1417 = vmatprep.subr.bf16.mxu0 0
    %1418 = vmatpush2.bf16.msra.mxu0 0
    %1419 = vmatprep.subr.bf16.mxu0 0
    %1420 = vmatpush2.bf16.msra.mxu0 0
    %1421 = vmatprep.subr.bf16.mxu0 0
    %1422 = vmatpush2.bf16.msra.mxu0 0
    %1423 = vmatprep.subr.bf16.mxu0 0
    %1424 = vmatpush2.bf16.msra.mxu0 0
    %1425 = vmatprep.subr.bf16.mxu0 0
    %1426 = vmatpush2.bf16.msra.mxu0 0
    %1427 = vmatprep.subr.bf16.mxu0 0
    %1428 = vmatpush2.bf16.msra.mxu0 0
    %1429 = vmatprep.subr.bf16.mxu0 0
    %1430 = vmatpush2.bf16.msra.mxu0 0
    %1431 = vmatprep.mubr.bf16.mxu0 0
    %1432 = vmatmul.mubr.bf16.gmra.mxu0 %v1390
    %v1433 = vpop.f32.mrf.mxu0
    %v1434 = vadd.f32 0.0, %v1433
    %v1435 = vpop.f32.mrf.mxu0
    %v1436 = vadd.f32 0.0, %v1435
    %v1437 = vpop.f32.mrf.mxu0
    %v1438 = vadd.f32 0.0, %v1437
    %v1439 = vpop.f32.mrf.mxu0
    %v1440 = vadd.f32 0.0, %v1439
    %1441 = vmatprep.mubr.bf16.mxu0 0
    %1442 = vmatmul.mubr.bf16.gmra.mxu0 %v1393
    %v1443 = vpop.f32.mrf.mxu0
    %v1444 = vadd.f32 0.0, %v1443
    %v1445 = vpop.f32.mrf.mxu0
    %v1446 = vadd.f32 0.0, %v1445
    %v1447 = vpop.f32.mrf.mxu0
    %v1448 = vadd.f32 0.0, %v1447
    %v1449 = vpop.f32.mrf.mxu0
    %v1450 = vadd.f32 0.0, %v1449
    %1451 = vdwg.mxu0
    %v1452 = vsel %vm481, %v683, 0
    %v1454 = vsel %vm481, %v682, 0
    %1456 = vmatprep.subr.bf16.mxu0 0
    %1457 = vmatpush1.bf16.msra.mxu0 0
    %1458 = vmatprep.subr.bf16.mxu0 0
    %1459 = vmatpush1.bf16.msra.mxu0 0
    %1460 = vmatprep.subr.bf16.mxu0 0
    %1461 = vmatpush1.bf16.msra.mxu0 0
    %1462 = vmatprep.subr.bf16.mxu0 0
    %1463 = vmatpush1.bf16.msra.mxu0 0
    %1464 = vmatprep.subr.bf16.mxu0 0
    %1465 = vmatpush1.bf16.msra.mxu0 0
    %1466 = vmatprep.subr.bf16.mxu0 0
    %1467 = vmatpush1.bf16.msra.mxu0 0
    %1468 = vmatprep.subr.bf16.mxu0 0
    %1469 = vmatpush1.bf16.msra.mxu0 0
    %1470 = vmatprep.subr.bf16.mxu0 %v1454
    %1471 = vmatpush1.bf16.msra.mxu0 %v1452
    %1472 = vmatprep.subr.bf16.mxu0 0
    %1473 = vmatpush2.bf16.msra.mxu0 0
    %1474 = vmatprep.subr.bf16.mxu0 0
    %1475 = vmatpush2.bf16.msra.mxu0 0
    %1476 = vmatprep.subr.bf16.mxu0 0
    %1477 = vmatpush2.bf16.msra.mxu0 0
    %1478 = vmatprep.subr.bf16.mxu0 0
    %1479 = vmatpush2.bf16.msra.mxu0 0
    %1480 = vmatprep.subr.bf16.mxu0 0
    %1481 = vmatpush2.bf16.msra.mxu0 0
    %1482 = vmatprep.subr.bf16.mxu0 0
    %1483 = vmatpush2.bf16.msra.mxu0 0
    %1484 = vmatprep.subr.bf16.mxu0 0
    %1485 = vmatpush2.bf16.msra.mxu0 0
    %1486 = vmatprep.subr.bf16.mxu0 0
    %1487 = vmatpush2.bf16.msra.mxu0 0
    %1488 = vmatprep.mubr.bf16.mxu0 0
    %1489 = vmatmul.mubr.bf16.gmra.mxu0 %v1390
    %v1490 = vpop.f32.mrf.mxu0
    %v1491 = vadd.f32 0.0, %v1490
    %v1492 = vpop.f32.mrf.mxu0
    %v1493 = vadd.f32 0.0, %v1492
    %v1494 = vpop.f32.mrf.mxu0
    %v1495 = vadd.f32 0.0, %v1494
    %v1496 = vpop.f32.mrf.mxu0
    %v1497 = vadd.f32 0.0, %v1496
    %1498 = vmatprep.mubr.bf16.mxu0 0
    %1499 = vmatmul.mubr.bf16.gmra.mxu0 %v1393
    %v1500 = vpop.f32.mrf.mxu0
    %v1501 = vadd.f32 0.0, %v1500
    %v1502 = vpop.f32.mrf.mxu0
    %v1503 = vadd.f32 0.0, %v1502
    %v1504 = vpop.f32.mrf.mxu0
    %v1505 = vadd.f32 0.0, %v1504
    %v1506 = vpop.f32.mrf.mxu0
    %v1507 = vadd.f32 0.0, %v1506
    %1508 = vdwg.mxu0
    %v1509 = vadd.f32 %v1306, %v1434
    %v1510 = vadd.f32 %v1308, %v1436
    %v1511 = vadd.f32 %v1310, %v1438
    %v1512 = vadd.f32 %v1312, %v1440
    %v1513 = vadd.f32 %v1316, %v1444
    %v1514 = vadd.f32 %v1318, %v1446
    %v1515 = vadd.f32 %v1320, %v1448
    %v1516 = vadd.f32 %v1322, %v1450
    %v1517 = vadd.f32 %v1367, %v1491
    %v1518 = vadd.f32 %v1369, %v1493
    %v1519 = vadd.f32 %v1371, %v1495
    %v1520 = vadd.f32 %v1373, %v1497
    %v1521 = vadd.f32 %v1377, %v1501
    %v1522 = vadd.f32 %v1379, %v1503
    %v1523 = vadd.f32 %v1381, %v1505
    %v1524 = vadd.f32 %v1383, %v1507
    %v1525 = vld [vmem:[%s5] sm:$0xff]
    %v1526 = vld [vmem:[%s5 + $0x8] sm:$0xff]
    %v1527 = vld [vmem:[%s5 + $0x10] sm:$0xff]
    %v1528 = vld [vmem:[%s5 + $0x18] sm:$0xff]
    %1530 = vset.pattern.permute.xlu0 0
    %1531 = vperm.xlu0 %1530, %v1525
    %v1532 = vpop.permute.xlu0 %1531
    %1535 = vset.pattern.permute.xlu0 0
    %1536 = vperm.xlu0 %1535, %v1526
    %v1537 = vpop.permute.xlu0 %1536
    %1540 = vset.pattern.permute.xlu0 0
    %1541 = vperm.xlu0 %1540, %v1527
    %v1542 = vpop.permute.xlu0 %1541
    %1545 = vset.pattern.permute.xlu0 0
    %1546 = vperm.xlu0 %1545, %v1528
    %v1547 = vpop.permute.xlu0 %1546
    %v1549 = vadd.f32 %v281, %v1532
    %v1550 = vadd.f32 %v283, %v1532
    %v1551 = vadd.f32 %v285, %v1537
    %v1552 = vadd.f32 %v287, %v1537
    %v1553 = vadd.f32 %v291, %v1542
    %v1554 = vadd.f32 %v293, %v1542
    %v1555 = vadd.f32 %v295, %v1547
    %v1556 = vadd.f32 %v297, %v1547
    %v1557 = vadd.f32 %v743, %v1532
    %v1558 = vadd.f32 %v744, %v1532
    %v1559 = vadd.f32 %v745, %v1537
    %v1560 = vadd.f32 %v746, %v1537
    %v1561 = vadd.f32 %v747, %v1542
    %v1562 = vadd.f32 %v748, %v1542
    %v1563 = vadd.f32 %v749, %v1547
    %v1564 = vadd.f32 %v750, %v1547
    %v1565 = vadd.f32 %v1127, %v1532
    %v1566 = vadd.f32 %v1128, %v1532
    %v1567 = vadd.f32 %v1129, %v1537
    %v1568 = vadd.f32 %v1130, %v1537
    %v1569 = vadd.f32 %v1131, %v1542
    %v1570 = vadd.f32 %v1132, %v1542
    %v1571 = vadd.f32 %v1133, %v1547
    %v1572 = vadd.f32 %v1134, %v1547
    %v1573 = vadd.f32 %v1509, %v1532
    %v1574 = vadd.f32 %v1510, %v1532
    %v1575 = vadd.f32 %v1511, %v1537
    %v1576 = vadd.f32 %v1512, %v1537
    %v1577 = vadd.f32 %v1513, %v1542
    %v1578 = vadd.f32 %v1514, %v1542
    %v1579 = vadd.f32 %v1515, %v1547
    %v1580 = vadd.f32 %v1516, %v1547
    %v1581 = vadd.f32 %v340, %v1532
    %v1582 = vadd.f32 %v342, %v1532
    %v1583 = vadd.f32 %v344, %v1537
    %v1584 = vadd.f32 %v346, %v1537
    %v1585 = vadd.f32 %v350, %v1542
    %v1586 = vadd.f32 %v352, %v1542
    %v1587 = vadd.f32 %v354, %v1547
    %v1588 = vadd.f32 %v356, %v1547
    %v1589 = vadd.f32 %v751, %v1532
    %v1590 = vadd.f32 %v752, %v1532
    %v1591 = vadd.f32 %v753, %v1537
    %v1592 = vadd.f32 %v754, %v1537
    %v1593 = vadd.f32 %v755, %v1542
    %v1594 = vadd.f32 %v756, %v1542
    %v1595 = vadd.f32 %v757, %v1547
    %v1596 = vadd.f32 %v758, %v1547
    %v1597 = vadd.f32 %v1135, %v1532
    %v1598 = vadd.f32 %v1136, %v1532
    %v1599 = vadd.f32 %v1137, %v1537
    %v1600 = vadd.f32 %v1138, %v1537
    %v1601 = vadd.f32 %v1139, %v1542
    %v1602 = vadd.f32 %v1140, %v1542
    %v1603 = vadd.f32 %v1141, %v1547
    %v1604 = vadd.f32 %v1142, %v1547
    %v1605 = vadd.f32 %v1517, %v1532
    %v1606 = vadd.f32 %v1518, %v1532
    %v1607 = vadd.f32 %v1519, %v1537
    %v1608 = vadd.f32 %v1520, %v1537
    %v1609 = vadd.f32 %v1521, %v1542
    %v1610 = vadd.f32 %v1522, %v1542
    %v1611 = vadd.f32 %v1523, %v1547
    %v1612 = vadd.f32 %v1524, %v1547
    %v1613 = vmax.f32 %v1549, 0.0
    %v1614 = vmax.f32 %v1550, 0.0
    %v1615 = vmax.f32 %v1551, 0.0
    %v1616 = vmax.f32 %v1552, 0.0
    %v1617 = vmax.f32 %v1553, 0.0
    %v1618 = vmax.f32 %v1554, 0.0
    %v1619 = vmax.f32 %v1555, 0.0
    %v1620 = vmax.f32 %v1556, 0.0
    %v1621 = vmax.f32 %v1557, 0.0
    %v1622 = vmax.f32 %v1558, 0.0
    %v1623 = vmax.f32 %v1559, 0.0
    %v1624 = vmax.f32 %v1560, 0.0
    %v1625 = vmax.f32 %v1561, 0.0
    %v1626 = vmax.f32 %v1562, 0.0
    %v1627 = vmax.f32 %v1563, 0.0
    %v1628 = vmax.f32 %v1564, 0.0
    %v1629 = vmax.f32 %v1565, 0.0
    %v1630 = vmax.f32 %v1566, 0.0
    %v1631 = vmax.f32 %v1567, 0.0
    %v1632 = vmax.f32 %v1568, 0.0
    %v1633 = vmax.f32 %v1569, 0.0
    %v1634 = vmax.f32 %v1570, 0.0
    %v1635 = vmax.f32 %v1571, 0.0
    %v1636 = vmax.f32 %v1572, 0.0
    %v1637 = vmax.f32 %v1573, 0.0
    %v1638 = vmax.f32 %v1574, 0.0
    %v1639 = vmax.f32 %v1575, 0.0
    %v1640 = vmax.f32 %v1576, 0.0
    %v1641 = vmax.f32 %v1577, 0.0
    %v1642 = vmax.f32 %v1578, 0.0
    %v1643 = vmax.f32 %v1579, 0.0
    %v1644 = vmax.f32 %v1580, 0.0
    %v1645 = vmax.f32 %v1581, 0.0
    %v1646 = vmax.f32 %v1582, 0.0
    %v1647 = vmax.f32 %v1583, 0.0
    %v1648 = vmax.f32 %v1584, 0.0
    %v1649 = vmax.f32 %v1585, 0.0
    %v1650 = vmax.f32 %v1586, 0.0
    %v1651 = vmax.f32 %v1587, 0.0
    %v1652 = vmax.f32 %v1588, 0.0
    %v1653 = vmax.f32 %v1589, 0.0
    %v1654 = vmax.f32 %v1590, 0.0
    %v1655 = vmax.f32 %v1591, 0.0
    %v1656 = vmax.f32 %v1592, 0.0
    %v1657 = vmax.f32 %v1593, 0.0
    %v1658 = vmax.f32 %v1594, 0.0
    %v1659 = vmax.f32 %v1595, 0.0
    %v1660 = vmax.f32 %v1596, 0.0
    %v1661 = vmax.f32 %v1597, 0.0
    %v1662 = vmax.f32 %v1598, 0.0
    %v1663 = vmax.f32 %v1599, 0.0
    %v1664 = vmax.f32 %v1600, 0.0
    %v1665 = vmax.f32 %v1601, 0.0
    %v1666 = vmax.f32 %v1602, 0.0
    %v1667 = vmax.f32 %v1603, 0.0
    %v1668 = vmax.f32 %v1604, 0.0
    %v1669 = vmax.f32 %v1605, 0.0
    %v1670 = vmax.f32 %v1606, 0.0
    %v1671 = vmax.f32 %v1607, 0.0
    %v1672 = vmax.f32 %v1608, 0.0
    %v1673 = vmax.f32 %v1609, 0.0
    %v1674 = vmax.f32 %v1610, 0.0
    %v1675 = vmax.f32 %v1611, 0.0
    %v1676 = vmax.f32 %v1612, 0.0
    %vm1677 = vcmask 351232
    %v1678 = vsel %vm1677, %v1614, 0.0
    %v1679 = vadd.f32 %v1613, %v1678
    %1680 = vadd.xlane.f32.xlu0 %v1679
    %v1681 = vpop.xlane.xlu0 %1680
    %v1682 = vsel %vm1677, %v1616, 0.0
    %v1683 = vadd.f32 %v1615, %v1682
    %1684 = vadd.xlane.f32.xlu0 %v1683
    %v1685 = vpop.xlane.xlu0 %1684
    %v1686 = vsel %vm1677, %v1618, 0.0
    %v1687 = vadd.f32 %v1617, %v1686
    %1688 = vadd.xlane.f32.xlu0 %v1687
    %v1689 = vpop.xlane.xlu0 %1688
    %v1690 = vsel %vm1677, %v1620, 0.0
    %v1691 = vadd.f32 %v1619, %v1690
    %1692 = vadd.xlane.f32.xlu0 %v1691
    %v1693 = vpop.xlane.xlu0 %1692
    %v1694 = vsel %vm1677, %v1622, 0.0
    %v1695 = vadd.f32 %v1621, %v1694
    %1696 = vadd.xlane.f32.xlu0 %v1695
    %v1697 = vpop.xlane.xlu0 %1696
    %v1698 = vsel %vm1677, %v1624, 0.0
    %v1699 = vadd.f32 %v1623, %v1698
    %1700 = vadd.xlane.f32.xlu0 %v1699
    %v1701 = vpop.xlane.xlu0 %1700
    %v1702 = vsel %vm1677, %v1626, 0.0
    %v1703 = vadd.f32 %v1625, %v1702
    %1704 = vadd.xlane.f32.xlu0 %v1703
    %v1705 = vpop.xlane.xlu0 %1704
    %v1706 = vsel %vm1677, %v1628, 0.0
    %v1707 = vadd.f32 %v1627, %v1706
    %1708 = vadd.xlane.f32.xlu0 %v1707
    %v1709 = vpop.xlane.xlu0 %1708
    %v1710 = vsel %vm1677, %v1646, 0.0
    %v1711 = vadd.f32 %v1645, %v1710
    %1712 = vadd.xlane.f32.xlu0 %v1711
    %v1713 = vpop.xlane.xlu0 %1712
    %v1714 = vsel %vm1677, %v1648, 0.0
    %v1715 = vadd.f32 %v1647, %v1714
    %1716 = vadd.xlane.f32.xlu0 %v1715
    %v1717 = vpop.xlane.xlu0 %1716
    %v1718 = vsel %vm1677, %v1650, 0.0
    %v1719 = vadd.f32 %v1649, %v1718
    %1720 = vadd.xlane.f32.xlu0 %v1719
    %v1721 = vpop.xlane.xlu0 %1720
    %v1722 = vsel %vm1677, %v1652, 0.0
    %v1723 = vadd.f32 %v1651, %v1722
    %1724 = vadd.xlane.f32.xlu0 %v1723
    %v1725 = vpop.xlane.xlu0 %1724
    %v1726 = vsel %vm1677, %v1654, 0.0
    %v1727 = vadd.f32 %v1653, %v1726
    %1728 = vadd.xlane.f32.xlu0 %v1727
    %v1729 = vpop.xlane.xlu0 %1728
    %v1730 = vsel %vm1677, %v1656, 0.0
    %v1731 = vadd.f32 %v1655, %v1730
    %1732 = vadd.xlane.f32.xlu0 %v1731
    %v1733 = vpop.xlane.xlu0 %1732
    %v1734 = vsel %vm1677, %v1658, 0.0
    %v1735 = vadd.f32 %v1657, %v1734
    %1736 = vadd.xlane.f32.xlu0 %v1735
    %v1737 = vpop.xlane.xlu0 %1736
    %v1738 = vsel %vm1677, %v1660, 0.0
    %v1739 = vadd.f32 %v1659, %v1738
    %1740 = vadd.xlane.f32.xlu0 %v1739
    %v1741 = vpop.xlane.xlu0 %1740
    %v1742 = vadd.f32 %v1681, %v1713
    %v1743 = vadd.f32 %v1685, %v1717
    %v1744 = vadd.f32 %v1689, %v1721
    %v1745 = vadd.f32 %v1693, %v1725
    %v1746 = vadd.f32 %v1697, %v1729
    %v1747 = vadd.f32 %v1701, %v1733
    %v1748 = vadd.f32 %v1705, %v1737
    %v1749 = vadd.f32 %v1709, %v1741
    %vm1750 = vcmask 343040
    %v1751 = vsel %vm1750, %v1630, 0.0
    %v1752 = vadd.f32 %v1629, %v1751
    %1753 = vadd.xlane.f32.xlu0 %v1752
    %v1754 = vpop.xlane.xlu0 %1753
    %v1755 = vsel %vm1750, %v1632, 0.0
    %v1756 = vadd.f32 %v1631, %v1755
    %1757 = vadd.xlane.f32.xlu0 %v1756
    %v1758 = vpop.xlane.xlu0 %1757
    %v1759 = vsel %vm1750, %v1634, 0.0
    %v1760 = vadd.f32 %v1633, %v1759
    %1761 = vadd.xlane.f32.xlu0 %v1760
    %v1762 = vpop.xlane.xlu0 %1761
    %v1763 = vsel %vm1750, %v1636, 0.0
    %v1764 = vadd.f32 %v1635, %v1763
    %1765 = vadd.xlane.f32.xlu0 %v1764
    %v1766 = vpop.xlane.xlu0 %1765
    %v1767 = vsel %vm1750, %v1638, 0.0
    %v1768 = vadd.f32 %v1637, %v1767
    %1769 = vadd.xlane.f32.xlu0 %v1768
    %v1770 = vpop.xlane.xlu0 %1769
    %v1771 = vsel %vm1750, %v1640, 0.0
    %v1772 = vadd.f32 %v1639, %v1771
    %1773 = vadd.xlane.f32.xlu0 %v1772
    %v1774 = vpop.xlane.xlu0 %1773
    %v1775 = vsel %vm1750, %v1642, 0.0
    %v1776 = vadd.f32 %v1641, %v1775
    %1777 = vadd.xlane.f32.xlu0 %v1776
    %v1778 = vpop.xlane.xlu0 %1777
    %v1779 = vsel %vm1750, %v1644, 0.0
    %v1780 = vadd.f32 %v1643, %v1779
    %1781 = vadd.xlane.f32.xlu0 %v1780
    %v1782 = vpop.xlane.xlu0 %1781
    %v1783 = vsel %vm1750, %v1662, 0.0
    %v1784 = vadd.f32 %v1661, %v1783
    %1785 = vadd.xlane.f32.xlu0 %v1784
    %v1786 = vpop.xlane.xlu0 %1785
    %v1787 = vsel %vm1750, %v1664, 0.0
    %v1788 = vadd.f32 %v1663, %v1787
    %1789 = vadd.xlane.f32.xlu0 %v1788
    %v1790 = vpop.xlane.xlu0 %1789
    %v1791 = vsel %vm1750, %v1666, 0.0
    %v1792 = vadd.f32 %v1665, %v1791
    %1793 = vadd.xlane.f32.xlu0 %v1792
    %v1794 = vpop.xlane.xlu0 %1793
    %v1795 = vsel %vm1750, %v1668, 0.0
    %v1796 = vadd.f32 %v1667, %v1795
    %1797 = vadd.xlane.f32.xlu0 %v1796
    %v1798 = vpop.xlane.xlu0 %1797
    %v1799 = vsel %vm1750, %v1670, 0.0
    %v1800 = vadd.f32 %v1669, %v1799
    %1801 = vadd.xlane.f32.xlu0 %v1800
    %v1802 = vpop.xlane.xlu0 %1801
    %v1803 = vsel %vm1750, %v1672, 0.0
    %v1804 = vadd.f32 %v1671, %v1803
    %1805 = vadd.xlane.f32.xlu0 %v1804
    %v1806 = vpop.xlane.xlu0 %1805
    %v1807 = vsel %vm1750, %v1674, 0.0
    %v1808 = vadd.f32 %v1673, %v1807
    %1809 = vadd.xlane.f32.xlu0 %v1808
    %v1810 = vpop.xlane.xlu0 %1809
    %v1811 = vsel %vm1750, %v1676, 0.0
    %v1812 = vadd.f32 %v1675, %v1811
    %1813 = vadd.xlane.f32.xlu0 %v1812
    %v1814 = vpop.xlane.xlu0 %1813
    %v1815 = vadd.f32 %v1754, %v1786
    %v1816 = vadd.f32 %v1758, %v1790
    %v1817 = vadd.f32 %v1762, %v1794
    %v1818 = vadd.f32 %v1766, %v1798
    %v1819 = vadd.f32 %v1770, %v1802
    %v1820 = vadd.f32 %v1774, %v1806
    %v1821 = vadd.f32 %v1778, %v1810
    %v1822 = vadd.f32 %v1782, %v1814
    %v1823 = vmul.f32 %v1613, %v1613
    %v1824 = vmul.f32 %v1614, %v1614
    %v1825 = vmul.f32 %v1615, %v1615
    %v1826 = vmul.f32 %v1616, %v1616
    %v1827 = vmul.f32 %v1617, %v1617
    %v1828 = vmul.f32 %v1618, %v1618
    %v1829 = vmul.f32 %v1619, %v1619
    %v1830 = vmul.f32 %v1620, %v1620
    %v1831 = vmul.f32 %v1621, %v1621
    %v1832 = vmul.f32 %v1622, %v1622
    %v1833 = vmul.f32 %v1623, %v1623
    %v1834 = vmul.f32 %v1624, %v1624
    %v1835 = vmul.f32 %v1625, %v1625
    %v1836 = vmul.f32 %v1626, %v1626
    %v1837 = vmul.f32 %v1627, %v1627
    %v1838 = vmul.f32 %v1628, %v1628
    %v1839 = vmul.f32 %v1645, %v1645
    %v1840 = vmul.f32 %v1646, %v1646
    %v1841 = vmul.f32 %v1647, %v1647
    %v1842 = vmul.f32 %v1648, %v1648
    %v1843 = vmul.f32 %v1649, %v1649
    %v1844 = vmul.f32 %v1650, %v1650
    %v1845 = vmul.f32 %v1651, %v1651
    %v1846 = vmul.f32 %v1652, %v1652
    %v1847 = vmul.f32 %v1653, %v1653
    %v1848 = vmul.f32 %v1654, %v1654
    %v1849 = vmul.f32 %v1655, %v1655
    %v1850 = vmul.f32 %v1656, %v1656
    %v1851 = vmul.f32 %v1657, %v1657
    %v1852 = vmul.f32 %v1658, %v1658
    %v1853 = vmul.f32 %v1659, %v1659
    %v1854 = vmul.f32 %v1660, %v1660
    %v1855 = vsel %vm1677, %v1824, 0.0
    %v1856 = vadd.f32 %v1823, %v1855
    %1857 = vadd.xlane.f32.xlu0 %v1856
    %v1858 = vpop.xlane.xlu0 %1857
    %v1859 = vsel %vm1677, %v1826, 0.0
    %v1860 = vadd.f32 %v1825, %v1859
    %1861 = vadd.xlane.f32.xlu0 %v1860
    %v1862 = vpop.xlane.xlu0 %1861
    %v1863 = vsel %vm1677, %v1828, 0.0
    %v1864 = vadd.f32 %v1827, %v1863
    %1865 = vadd.xlane.f32.xlu0 %v1864
    %v1866 = vpop.xlane.xlu0 %1865
    %v1867 = vsel %vm1677, %v1830, 0.0
    %v1868 = vadd.f32 %v1829, %v1867
    %1869 = vadd.xlane.f32.xlu0 %v1868
    %v1870 = vpop.xlane.xlu0 %1869
    %v1871 = vsel %vm1677, %v1832, 0.0
    %v1872 = vadd.f32 %v1831, %v1871
    %1873 = vadd.xlane.f32.xlu0 %v1872
    %v1874 = vpop.xlane.xlu0 %1873
    %v1875 = vsel %vm1677, %v1834, 0.0
    %v1876 = vadd.f32 %v1833, %v1875
    %1877 = vadd.xlane.f32.xlu0 %v1876
    %v1878 = vpop.xlane.xlu0 %1877
    %v1879 = vsel %vm1677, %v1836, 0.0
    %v1880 = vadd.f32 %v1835, %v1879
    %1881 = vadd.xlane.f32.xlu0 %v1880
    %v1882 = vpop.xlane.xlu0 %1881
    %v1883 = vsel %vm1677, %v1838, 0.0
    %v1884 = vadd.f32 %v1837, %v1883
    %1885 = vadd.xlane.f32.xlu0 %v1884
    %v1886 = vpop.xlane.xlu0 %1885
    %v1887 = vsel %vm1677, %v1840, 0.0
    %v1888 = vadd.f32 %v1839, %v1887
    %1889 = vadd.xlane.f32.xlu0 %v1888
    %v1890 = vpop.xlane.xlu0 %1889
    %v1891 = vsel %vm1677, %v1842, 0.0
    %v1892 = vadd.f32 %v1841, %v1891
    %1893 = vadd.xlane.f32.xlu0 %v1892
    %v1894 = vpop.xlane.xlu0 %1893
    %v1895 = vsel %vm1677, %v1844, 0.0
    %v1896 = vadd.f32 %v1843, %v1895
    %1897 = vadd.xlane.f32.xlu0 %v1896
    %v1898 = vpop.xlane.xlu0 %1897
    %v1899 = vsel %vm1677, %v1846, 0.0
    %v1900 = vadd.f32 %v1845, %v1899
    %1901 = vadd.xlane.f32.xlu0 %v1900
    %v1902 = vpop.xlane.xlu0 %1901
    %v1903 = vsel %vm1677, %v1848, 0.0
    %v1904 = vadd.f32 %v1847, %v1903
    %1905 = vadd.xlane.f32.xlu0 %v1904
    %v1906 = vpop.xlane.xlu0 %1905
    %v1907 = vsel %vm1677, %v1850, 0.0
    %v1908 = vadd.f32 %v1849, %v1907
    %1909 = vadd.xlane.f32.xlu0 %v1908
    %v1910 = vpop.xlane.xlu0 %1909
    %v1911 = vsel %vm1677, %v1852, 0.0
    %v1912 = vadd.f32 %v1851, %v1911
    %1913 = vadd.xlane.f32.xlu0 %v1912
    %v1914 = vpop.xlane.xlu0 %1913
    %v1915 = vsel %vm1677, %v1854, 0.0
    %v1916 = vadd.f32 %v1853, %v1915
    %1917 = vadd.xlane.f32.xlu0 %v1916
    %v1918 = vpop.xlane.xlu0 %1917
    %v1919 = vadd.f32 %v1858, %v1890
    %v1920 = vadd.f32 %v1862, %v1894
    %v1921 = vadd.f32 %v1866, %v1898
    %v1922 = vadd.f32 %v1870, %v1902
    %v1923 = vadd.f32 %v1874, %v1906
    %v1924 = vadd.f32 %v1878, %v1910
    %v1925 = vadd.f32 %v1882, %v1914
    %v1926 = vadd.f32 %v1886, %v1918
    %v1927 = vmul.f32 %v1629, %v1629
    %v1928 = vmul.f32 %v1630, %v1630
    %v1929 = vmul.f32 %v1631, %v1631
    %v1930 = vmul.f32 %v1632, %v1632
    %v1931 = vmul.f32 %v1633, %v1633
    %v1932 = vmul.f32 %v1634, %v1634
    %v1933 = vmul.f32 %v1635, %v1635
    %v1934 = vmul.f32 %v1636, %v1636
    %v1935 = vmul.f32 %v1637, %v1637
    %v1936 = vmul.f32 %v1638, %v1638
    %v1937 = vmul.f32 %v1639, %v1639
    %v1938 = vmul.f32 %v1640, %v1640
    %v1939 = vmul.f32 %v1641, %v1641
    %v1940 = vmul.f32 %v1642, %v1642
    %v1941 = vmul.f32 %v1643, %v1643
    %v1942 = vmul.f32 %v1644, %v1644
    %v1943 = vmul.f32 %v1661, %v1661
    %v1944 = vmul.f32 %v1662, %v1662
    %v1945 = vmul.f32 %v1663, %v1663
    %v1946 = vmul.f32 %v1664, %v1664
    %v1947 = vmul.f32 %v1665, %v1665
    %v1948 = vmul.f32 %v1666, %v1666
    %v1949 = vmul.f32 %v1667, %v1667
    %v1950 = vmul.f32 %v1668, %v1668
    %v1951 = vmul.f32 %v1669, %v1669
    %v1952 = vmul.f32 %v1670, %v1670
    %v1953 = vmul.f32 %v1671, %v1671
    %v1954 = vmul.f32 %v1672, %v1672
    %v1955 = vmul.f32 %v1673, %v1673
    %v1956 = vmul.f32 %v1674, %v1674
    %v1957 = vmul.f32 %v1675, %v1675
    %v1958 = vmul.f32 %v1676, %v1676
    %v1959 = vsel %vm1750, %v1928, 0.0
    %v1960 = vadd.f32 %v1927, %v1959
    %1961 = vadd.xlane.f32.xlu0 %v1960
    %v1962 = vpop.xlane.xlu0 %1961
    %v1963 = vsel %vm1750, %v1930, 0.0
    %v1964 = vadd.f32 %v1929, %v1963
    %1965 = vadd.xlane.f32.xlu0 %v1964
    %v1966 = vpop.xlane.xlu0 %1965
    %v1967 = vsel %vm1750, %v1932, 0.0
    %v1968 = vadd.f32 %v1931, %v1967
    %1969 = vadd.xlane.f32.xlu0 %v1968
    %v1970 = vpop.xlane.xlu0 %1969
    %v1971 = vsel %vm1750, %v1934, 0.0
    %v1972 = vadd.f32 %v1933, %v1971
    %1973 = vadd.xlane.f32.xlu0 %v1972
    %v1974 = vpop.xlane.xlu0 %1973
    %v1975 = vsel %vm1750, %v1936, 0.0
    %v1976 = vadd.f32 %v1935, %v1975
    %1977 = vadd.xlane.f32.xlu0 %v1976
    %v1978 = vpop.xlane.xlu0 %1977
    %v1979 = vsel %vm1750, %v1938, 0.0
    %v1980 = vadd.f32 %v1937, %v1979
    %1981 = vadd.xlane.f32.xlu0 %v1980
    %v1982 = vpop.xlane.xlu0 %1981
    %v1983 = vsel %vm1750, %v1940, 0.0
    %v1984 = vadd.f32 %v1939, %v1983
    %1985 = vadd.xlane.f32.xlu0 %v1984
    %v1986 = vpop.xlane.xlu0 %1985
    %v1987 = vsel %vm1750, %v1942, 0.0
    %v1988 = vadd.f32 %v1941, %v1987
    %1989 = vadd.xlane.f32.xlu0 %v1988
    %v1990 = vpop.xlane.xlu0 %1989
    %v1991 = vsel %vm1750, %v1944, 0.0
    %v1992 = vadd.f32 %v1943, %v1991
    %1993 = vadd.xlane.f32.xlu0 %v1992
    %v1994 = vpop.xlane.xlu0 %1993
    %v1995 = vsel %vm1750, %v1946, 0.0
    %v1996 = vadd.f32 %v1945, %v1995
    %1997 = vadd.xlane.f32.xlu0 %v1996
    %v1998 = vpop.xlane.xlu0 %1997
    %v1999 = vsel %vm1750, %v1948, 0.0
    %v2000 = vadd.f32 %v1947, %v1999
    %2001 = vadd.xlane.f32.xlu0 %v2000
    %v2002 = vpop.xlane.xlu0 %2001
    %v2003 = vsel %vm1750, %v1950, 0.0
    %v2004 = vadd.f32 %v1949, %v2003
    %2005 = vadd.xlane.f32.xlu0 %v2004
    %v2006 = vpop.xlane.xlu0 %2005
    %v2007 = vsel %vm1750, %v1952, 0.0
    %v2008 = vadd.f32 %v1951, %v2007
    %2009 = vadd.xlane.f32.xlu0 %v2008
    %v2010 = vpop.xlane.xlu0 %2009
    %v2011 = vsel %vm1750, %v1954, 0.0
    %v2012 = vadd.f32 %v1953, %v2011
    %2013 = vadd.xlane.f32.xlu0 %v2012
    %v2014 = vpop.xlane.xlu0 %2013
    %v2015 = vsel %vm1750, %v1956, 0.0
    %v2016 = vadd.f32 %v1955, %v2015
    %2017 = vadd.xlane.f32.xlu0 %v2016
    %v2018 = vpop.xlane.xlu0 %2017
    %v2019 = vsel %vm1750, %v1958, 0.0
    %v2020 = vadd.f32 %v1957, %v2019
    %2021 = vadd.xlane.f32.xlu0 %v2020
    %v2022 = vpop.xlane.xlu0 %2021
    %v2023 = vadd.f32 %v1962, %v1994
    %v2024 = vadd.f32 %v1966, %v1998
    %v2025 = vadd.f32 %v1970, %v2002
    %v2026 = vadd.f32 %v1974, %v2006
    %v2027 = vadd.f32 %v1978, %v2010
    %v2028 = vadd.f32 %v1982, %v2014
    %v2029 = vadd.f32 %v1986, %v2018
    %v2030 = vadd.f32 %v1990, %v2022
    %v2031 = vadd.f32 %v1742, %v1746
    %v2032 = vadd.f32 %v1743, %v1747
    %v2033 = vadd.f32 %v1744, %v1748
    %v2034 = vadd.f32 %v1745, %v1749
    %v2035 = vadd.f32 %v2031, %v1815
    %v2036 = vadd.f32 %v2032, %v1816
    %v2037 = vadd.f32 %v2033, %v1817
    %v2038 = vadd.f32 %v2034, %v1818
    %v2039 = vadd.f32 %v2035, %v1819
    %v2040 = vadd.f32 %v2036, %v1820
    %v2041 = vadd.f32 %v2037, %v1821
    %v2042 = vadd.f32 %v2038, %v1822
    %v2043 = vadd.f32 %v1919, %v1923
    %v2044 = vadd.f32 %v1920, %v1924
    %v2045 = vadd.f32 %v1921, %v1925
    %v2046 = vadd.f32 %v1922, %v1926
    %v2047 = vadd.f32 %v2043, %v2023
    %v2048 = vadd.f32 %v2044, %v2024
    %v2049 = vadd.f32 %v2045, %v2025
    %v2050 = vadd.f32 %v2046, %v2026
    %v2051 = vadd.f32 %v2047, %v2027
    %v2052 = vadd.f32 %v2048, %v2028
    %v2053 = vadd.f32 %v2049, %v2029
    %v2054 = vadd.f32 %v2050, %v2030
    %v2055 = vrcp.pop 1364.0
    %v2056 = vmul.f32 %v2039, %v2055
    %v2057 = vmul.f32 %v2040, %v2055
    %v2058 = vmul.f32 %v2041, %v2055
    %v2059 = vmul.f32 %v2042, %v2055
    %v2060 = vmul.f32 %v2051, %v2055
    %v2061 = vmul.f32 %v2052, %v2055
    %v2062 = vmul.f32 %v2053, %v2055
    %v2063 = vmul.f32 %v2054, %v2055
    %v2064 = vmul.f32 %v2056, %v2056
    %v2065 = vmul.f32 %v2057, %v2057
    %v2066 = vmul.f32 %v2058, %v2058
    %v2067 = vmul.f32 %v2059, %v2059
    %v2068 = vsub.f32 %v2060, %v2064
    %v2069 = vsub.f32 %v2061, %v2065
    %v2070 = vsub.f32 %v2062, %v2066
    %v2071 = vsub.f32 %v2063, %v2067
    %v2072 = vadd.f32 %v2068, 1e-05
    %v2073 = vadd.f32 %v2069, 1e-05
    %v2074 = vadd.f32 %v2070, 1e-05
    %v2075 = vadd.f32 %v2071, 1e-05
    %v2076 = vrsqrt.pop %v2072
    %v2077 = vrsqrt.pop %v2073
    %v2078 = vrsqrt.pop %v2074
    %v2079 = vrsqrt.pop %v2075
    %v2080 = vld [vmem:[%s6] sm:$0xff]
    %v2081 = vld [vmem:[%s6 + $0x8] sm:$0xff]
    %v2082 = vld [vmem:[%s6 + $0x10] sm:$0xff]
    %v2083 = vld [vmem:[%s6 + $0x18] sm:$0xff]
    %v2084 = vmul.f32 %v2076, %v2080
    %v2085 = vmul.f32 %v2077, %v2081
    %v2086 = vmul.f32 %v2078, %v2082
    %v2087 = vmul.f32 %v2079, %v2083
    %v2088 = vld [vmem:[%s7] sm:$0xff]
    %v2089 = vld [vmem:[%s7 + $0x8] sm:$0xff]
    %v2090 = vld [vmem:[%s7 + $0x10] sm:$0xff]
    %v2091 = vld [vmem:[%s7 + $0x18] sm:$0xff]
    %v2092 = vmul.f32 %v2056, %v2084
    %v2093 = vmul.f32 %v2057, %v2085
    %v2094 = vmul.f32 %v2058, %v2086
    %v2095 = vmul.f32 %v2059, %v2087
    %v2096 = vsub.f32 %v2088, %v2092
    %v2097 = vsub.f32 %v2089, %v2093
    %v2098 = vsub.f32 %v2090, %v2094
    %v2099 = vsub.f32 %v2091, %v2095
    %2101 = vset.pattern.permute.xlu0 0
    %2102 = vperm.xlu0 %2101, %v2084
    %v2103 = vpop.permute.xlu0 %2102
    %2106 = vset.pattern.permute.xlu0 0
    %2107 = vperm.xlu0 %2106, %v2085
    %v2108 = vpop.permute.xlu0 %2107
    %2111 = vset.pattern.permute.xlu0 0
    %2112 = vperm.xlu0 %2111, %v2086
    %v2113 = vpop.permute.xlu0 %2112
    %2116 = vset.pattern.permute.xlu0 0
    %2117 = vperm.xlu0 %2116, %v2087
    %v2118 = vpop.permute.xlu0 %2117
    %v2120 = vmul.f32 %v1613, %v2103
    %v2121 = vmul.f32 %v1614, %v2103
    %v2122 = vmul.f32 %v1615, %v2108
    %v2123 = vmul.f32 %v1616, %v2108
    %v2124 = vmul.f32 %v1617, %v2113
    %v2125 = vmul.f32 %v1618, %v2113
    %v2126 = vmul.f32 %v1619, %v2118
    %v2127 = vmul.f32 %v1620, %v2118
    %v2128 = vmul.f32 %v1621, %v2103
    %v2129 = vmul.f32 %v1622, %v2103
    %v2130 = vmul.f32 %v1623, %v2108
    %v2131 = vmul.f32 %v1624, %v2108
    %v2132 = vmul.f32 %v1625, %v2113
    %v2133 = vmul.f32 %v1626, %v2113
    %v2134 = vmul.f32 %v1627, %v2118
    %v2135 = vmul.f32 %v1628, %v2118
    %v2136 = vmul.f32 %v1629, %v2103
    %v2137 = vmul.f32 %v1630, %v2103
    %v2138 = vmul.f32 %v1631, %v2108
    %v2139 = vmul.f32 %v1632, %v2108
    %v2140 = vmul.f32 %v1633, %v2113
    %v2141 = vmul.f32 %v1634, %v2113
    %v2142 = vmul.f32 %v1635, %v2118
    %v2143 = vmul.f32 %v1636, %v2118
    %v2144 = vmul.f32 %v1637, %v2103
    %v2145 = vmul.f32 %v1638, %v2103
    %v2146 = vmul.f32 %v1639, %v2108
    %v2147 = vmul.f32 %v1640, %v2108
    %v2148 = vmul.f32 %v1641, %v2113
    %v2149 = vmul.f32 %v1642, %v2113
    %v2150 = vmul.f32 %v1643, %v2118
    %v2151 = vmul.f32 %v1644, %v2118
    %v2152 = vmul.f32 %v1645, %v2103
    %v2153 = vmul.f32 %v1646, %v2103
    %v2154 = vmul.f32 %v1647, %v2108
    %v2155 = vmul.f32 %v1648, %v2108
    %v2156 = vmul.f32 %v1649, %v2113
    %v2157 = vmul.f32 %v1650, %v2113
    %v2158 = vmul.f32 %v1651, %v2118
    %v2159 = vmul.f32 %v1652, %v2118
    %v2160 = vmul.f32 %v1653, %v2103
    %v2161 = vmul.f32 %v1654, %v2103
    %v2162 = vmul.f32 %v1655, %v2108
    %v2163 = vmul.f32 %v1656, %v2108
    %v2164 = vmul.f32 %v1657, %v2113
    %v2165 = vmul.f32 %v1658, %v2113
    %v2166 = vmul.f32 %v1659, %v2118
    %v2167 = vmul.f32 %v1660, %v2118
    %v2168 = vmul.f32 %v1661, %v2103
    %v2169 = vmul.f32 %v1662, %v2103
    %v2170 = vmul.f32 %v1663, %v2108
    %v2171 = vmul.f32 %v1664, %v2108
    %v2172 = vmul.f32 %v1665, %v2113
    %v2173 = vmul.f32 %v1666, %v2113
    %v2174 = vmul.f32 %v1667, %v2118
    %v2175 = vmul.f32 %v1668, %v2118
    %v2176 = vmul.f32 %v1669, %v2103
    %v2177 = vmul.f32 %v1670, %v2103
    %v2178 = vmul.f32 %v1671, %v2108
    %v2179 = vmul.f32 %v1672, %v2108
    %v2180 = vmul.f32 %v1673, %v2113
    %v2181 = vmul.f32 %v1674, %v2113
    %v2182 = vmul.f32 %v1675, %v2118
    %v2183 = vmul.f32 %v1676, %v2118
    %2185 = vset.pattern.permute.xlu0 0
    %2186 = vperm.xlu0 %2185, %v2096
    %v2187 = vpop.permute.xlu0 %2186
    %2190 = vset.pattern.permute.xlu0 0
    %2191 = vperm.xlu0 %2190, %v2097
    %v2192 = vpop.permute.xlu0 %2191
    %2195 = vset.pattern.permute.xlu0 0
    %2196 = vperm.xlu0 %2195, %v2098
    %v2197 = vpop.permute.xlu0 %2196
    %2200 = vset.pattern.permute.xlu0 0
    %2201 = vperm.xlu0 %2200, %v2099
    %v2202 = vpop.permute.xlu0 %2201
    %v2204 = vadd.f32 %v2120, %v2187
    %v2205 = vadd.f32 %v2121, %v2187
    %v2206 = vadd.f32 %v2122, %v2192
    %v2207 = vadd.f32 %v2123, %v2192
    %v2208 = vadd.f32 %v2124, %v2197
    %v2209 = vadd.f32 %v2125, %v2197
    %v2210 = vadd.f32 %v2126, %v2202
    %v2211 = vadd.f32 %v2127, %v2202
    %v2212 = vadd.f32 %v2128, %v2187
    %v2213 = vadd.f32 %v2129, %v2187
    %v2214 = vadd.f32 %v2130, %v2192
    %v2215 = vadd.f32 %v2131, %v2192
    %v2216 = vadd.f32 %v2132, %v2197
    %v2217 = vadd.f32 %v2133, %v2197
    %v2218 = vadd.f32 %v2134, %v2202
    %v2219 = vadd.f32 %v2135, %v2202
    %v2220 = vadd.f32 %v2136, %v2187
    %v2221 = vadd.f32 %v2137, %v2187
    %v2222 = vadd.f32 %v2138, %v2192
    %v2223 = vadd.f32 %v2139, %v2192
    %v2224 = vadd.f32 %v2140, %v2197
    %v2225 = vadd.f32 %v2141, %v2197
    %v2226 = vadd.f32 %v2142, %v2202
    %v2227 = vadd.f32 %v2143, %v2202
    %v2228 = vadd.f32 %v2144, %v2187
    %v2229 = vadd.f32 %v2145, %v2187
    %v2230 = vadd.f32 %v2146, %v2192
    %v2231 = vadd.f32 %v2147, %v2192
    %v2232 = vadd.f32 %v2148, %v2197
    %v2233 = vadd.f32 %v2149, %v2197
    %v2234 = vadd.f32 %v2150, %v2202
    %v2235 = vadd.f32 %v2151, %v2202
    %v2236 = vadd.f32 %v2152, %v2187
    %v2237 = vadd.f32 %v2153, %v2187
    %v2238 = vadd.f32 %v2154, %v2192
    %v2239 = vadd.f32 %v2155, %v2192
    %v2240 = vadd.f32 %v2156, %v2197
    %v2241 = vadd.f32 %v2157, %v2197
    %v2242 = vadd.f32 %v2158, %v2202
    %v2243 = vadd.f32 %v2159, %v2202
    %v2244 = vadd.f32 %v2160, %v2187
    %v2245 = vadd.f32 %v2161, %v2187
    %v2246 = vadd.f32 %v2162, %v2192
    %v2247 = vadd.f32 %v2163, %v2192
    %v2248 = vadd.f32 %v2164, %v2197
    %v2249 = vadd.f32 %v2165, %v2197
    %v2250 = vadd.f32 %v2166, %v2202
    %v2251 = vadd.f32 %v2167, %v2202
    %v2252 = vadd.f32 %v2168, %v2187
    %v2253 = vadd.f32 %v2169, %v2187
    %v2254 = vadd.f32 %v2170, %v2192
    %v2255 = vadd.f32 %v2171, %v2192
    %v2256 = vadd.f32 %v2172, %v2197
    %v2257 = vadd.f32 %v2173, %v2197
    %v2258 = vadd.f32 %v2174, %v2202
    %v2259 = vadd.f32 %v2175, %v2202
    %v2260 = vadd.f32 %v2176, %v2187
    %v2261 = vadd.f32 %v2177, %v2187
    %v2262 = vadd.f32 %v2178, %v2192
    %v2263 = vadd.f32 %v2179, %v2192
    %v2264 = vadd.f32 %v2180, %v2197
    %v2265 = vadd.f32 %v2181, %v2197
    %v2266 = vadd.f32 %v2182, %v2202
    %v2267 = vadd.f32 %v2183, %v2202
    %v2268 = vpack.c.bf16 %v2206, %v2204
    %v2269 = vpack.c.bf16 %v2207, %v2205
    %v2270 = vpack.c.bf16 %v2210, %v2208
    %v2271 = vpack.c.bf16 %v2211, %v2209
    %v2272 = vpack.c.bf16 %v2214, %v2212
    %v2273 = vpack.c.bf16 %v2215, %v2213
    %v2274 = vpack.c.bf16 %v2218, %v2216
    %v2275 = vpack.c.bf16 %v2219, %v2217
    %v2276 = vpack.c.bf16 %v2222, %v2220
    %v2277 = vpack.c.bf16 %v2223, %v2221
    %v2278 = vpack.c.bf16 %v2226, %v2224
    %v2279 = vpack.c.bf16 %v2227, %v2225
    %v2280 = vpack.c.bf16 %v2230, %v2228
    %v2281 = vpack.c.bf16 %v2231, %v2229
    %v2282 = vpack.c.bf16 %v2234, %v2232
    %v2283 = vpack.c.bf16 %v2235, %v2233
    %v2284 = vpack.c.bf16 %v2238, %v2236
    %v2285 = vpack.c.bf16 %v2239, %v2237
    %v2286 = vpack.c.bf16 %v2242, %v2240
    %v2287 = vpack.c.bf16 %v2243, %v2241
    %v2288 = vpack.c.bf16 %v2246, %v2244
    %v2289 = vpack.c.bf16 %v2247, %v2245
    %v2290 = vpack.c.bf16 %v2250, %v2248
    %v2291 = vpack.c.bf16 %v2251, %v2249
    %v2292 = vpack.c.bf16 %v2254, %v2252
    %v2293 = vpack.c.bf16 %v2255, %v2253
    %v2294 = vpack.c.bf16 %v2258, %v2256
    %v2295 = vpack.c.bf16 %v2259, %v2257
    %v2296 = vpack.c.bf16 %v2262, %v2260
    %v2297 = vpack.c.bf16 %v2263, %v2261
    %v2298 = vpack.c.bf16 %v2266, %v2264
    %v2299 = vpack.c.bf16 %v2267, %v2265
    %v2300 = vld [vmem:[%s8] sm:$0xff]
    %v2301 = vld [vmem:[%s8 + $0x8] sm:$0xff]
    %v2302 = vld [vmem:[%s8 + $0x10] sm:$0xff]
    %v2303 = vld [vmem:[%s8 + $0x18] sm:$0xff]
    %v2304 = vld [vmem:[%s8 + $0x20] sm:$0xff]
    %v2305 = vld [vmem:[%s8 + $0x28] sm:$0xff]
    %v2306 = vld [vmem:[%s8 + $0x30] sm:$0xff]
    %v2307 = vld [vmem:[%s8 + $0x38] sm:$0xff]
    %v2316 = vrot.slane %v63, 4
    %v2317 = vrot.slane %v65, 4
    %v2318 = vrot.slane %v67, 4
    %v2319 = vrot.slane %v69, 4
    %v2320 = vrot.slane %v71, 4
    %v2321 = vrot.slane %v73, 4
    %v2322 = vrot.slane %v75, 4
    %v2323 = vrot.slane %v77, 4
    %v2324 = vunpack.c.l.b16 %v2316
    %v2325 = vunpack.c.l.b16 %v2317
    %v2326 = vunpack.c.l.b16 %v2318
    %v2327 = vunpack.c.l.b16 %v2319
    %v2328 = vunpack.c.l.b16 %v2320
    %v2329 = vunpack.c.l.b16 %v2321
    %v2330 = vunpack.c.l.b16 %v2322
    %v2331 = vunpack.c.l.b16 %v2323
    %v2332 = vpack.c.b16 %v2325, %v2324
    %v2333 = vpack.c.b16 %v2327, %v2326
    %v2334 = vpack.c.b16 %v2329, %v2328
    %v2335 = vpack.c.b16 %v2331, %v2330
    %2356 = vrot.lane.b32.xlu0 %v2268, 127
    %v2357 = vpop.permute.xlu0 %2356
    %2358 = vrot.lane.b32.xlu0 %v2269, 127
    %v2359 = vpop.permute.xlu0 %2358
    %2360 = vrot.lane.b32.xlu0 %v2270, 127
    %v2361 = vpop.permute.xlu0 %2360
    %2362 = vrot.lane.b32.xlu0 %v2271, 127
    %v2363 = vpop.permute.xlu0 %2362
    %2364 = vrot.lane.b32.xlu0 %v2272, 127
    %v2365 = vpop.permute.xlu0 %2364
    %2366 = vrot.lane.b32.xlu0 %v2273, 127
    %v2367 = vpop.permute.xlu0 %2366
    %2368 = vrot.lane.b32.xlu0 %v2274, 127
    %v2369 = vpop.permute.xlu0 %2368
    %2370 = vrot.lane.b32.xlu0 %v2275, 127
    %v2371 = vpop.permute.xlu0 %2370
    %2372 = vrot.lane.b32.xlu0 %v2276, 127
    %v2373 = vpop.permute.xlu0 %2372
    %2374 = vrot.lane.b32.xlu0 %v2277, 127
    %v2375 = vpop.permute.xlu0 %2374
    %2376 = vrot.lane.b32.xlu0 %v2278, 127
    %v2377 = vpop.permute.xlu0 %2376
    %2378 = vrot.lane.b32.xlu0 %v2279, 127
    %v2379 = vpop.permute.xlu0 %2378
    %2380 = vrot.lane.b32.xlu0 %v2280, 127
    %v2381 = vpop.permute.xlu0 %2380
    %2382 = vrot.lane.b32.xlu0 %v2281, 127
    %v2383 = vpop.permute.xlu0 %2382
    %2384 = vrot.lane.b32.xlu0 %v2282, 127
    %v2385 = vpop.permute.xlu0 %2384
    %2386 = vrot.lane.b32.xlu0 %v2283, 127
    %v2387 = vpop.permute.xlu0 %2386
    %v2388 = vsel %vm99, %v2357, %v2359
    %v2389 = vsel %vm99, %v2361, %v2363
    %v2390 = vsel %vm99, %v2365, %v2367
    %v2391 = vsel %vm99, %v2369, %v2371
    %v2392 = vsel %vm99, %v2373, %v2375
    %v2393 = vsel %vm99, %v2377, %v2379
    %v2394 = vsel %vm99, %v2381, %v2383
    %v2395 = vsel %vm99, %v2385, %v2387
    %2412 = vmatprep.subr.bf16.mxu0 %v2387
    %2413 = vmatpush1.bf16.msra.mxu0 %v2395
    %2414 = vmatprep.subr.bf16.mxu0 %v2383
    %2415 = vmatpush1.bf16.msra.mxu0 %v2394
    %2416 = vmatprep.subr.bf16.mxu0 %v2379
    %2417 = vmatpush1.bf16.msra.mxu0 %v2393
    %2418 = vmatprep.subr.bf16.mxu0 %v2375
    %2419 = vmatpush1.bf16.msra.mxu0 %v2392
    %2420 = vmatprep.subr.bf16.mxu0 %v2371
    %2421 = vmatpush1.bf16.msra.mxu0 %v2391
    %2422 = vmatprep.subr.bf16.mxu0 %v2367
    %2423 = vmatpush1.bf16.msra.mxu0 %v2390
    %2424 = vmatprep.subr.bf16.mxu0 %v2363
    %2425 = vmatpush1.bf16.msra.mxu0 %v2389
    %2426 = vmatprep.subr.bf16.mxu0 %v2359
    %2427 = vmatpush1.bf16.msra.mxu0 %v2388
    %2428 = vmatprep.subr.bf16.mxu0 0
    %2429 = vmatpush2.bf16.msra.mxu0 0
    %2430 = vmatprep.subr.bf16.mxu0 0
    %2431 = vmatpush2.bf16.msra.mxu0 0
    %2432 = vmatprep.subr.bf16.mxu0 0
    %2433 = vmatpush2.bf16.msra.mxu0 0
    %2434 = vmatprep.subr.bf16.mxu0 0
    %2435 = vmatpush2.bf16.msra.mxu0 0
    %2436 = vmatprep.subr.bf16.mxu0 0
    %2437 = vmatpush2.bf16.msra.mxu0 0
    %2438 = vmatprep.subr.bf16.mxu0 0
    %2439 = vmatpush2.bf16.msra.mxu0 0
    %2440 = vmatprep.subr.bf16.mxu0 0
    %2441 = vmatpush2.bf16.msra.mxu0 0
    %2442 = vmatprep.subr.bf16.mxu0 0
    %2443 = vmatpush2.bf16.msra.mxu0 0
    %2444 = vmatprep.mubr.bf16.mxu0 0
    %2445 = vmatmul.mubr.bf16.gmra.mxu0 %v2332
    %v2446 = vpop.f32.mrf.mxu0
    %v2447 = vadd.f32 0.0, %v2446
    %v2448 = vpop.f32.mrf.mxu0
    %v2449 = vadd.f32 0.0, %v2448
    %v2450 = vpop.f32.mrf.mxu0
    %v2451 = vadd.f32 0.0, %v2450
    %v2452 = vpop.f32.mrf.mxu0
    %v2453 = vadd.f32 0.0, %v2452
    %2454 = vmatprep.mubr.bf16.mxu0 0
    %2455 = vmatmul.mubr.bf16.gmra.mxu0 %v2333
    %v2456 = vpop.f32.mrf.mxu0
    %v2457 = vadd.f32 0.0, %v2456
    %v2458 = vpop.f32.mrf.mxu0
    %v2459 = vadd.f32 0.0, %v2458
    %v2460 = vpop.f32.mrf.mxu0
    %v2461 = vadd.f32 0.0, %v2460
    %v2462 = vpop.f32.mrf.mxu0
    %v2463 = vadd.f32 0.0, %v2462
    %2464 = vmatprep.mubr.bf16.mxu0 0
    %2465 = vmatmul.mubr.bf16.gmra.mxu0 %v2334
    %v2466 = vpop.f32.mrf.mxu0
    %v2467 = vadd.f32 0.0, %v2466
    %v2468 = vpop.f32.mrf.mxu0
    %v2469 = vadd.f32 0.0, %v2468
    %v2470 = vpop.f32.mrf.mxu0
    %v2471 = vadd.f32 0.0, %v2470
    %v2472 = vpop.f32.mrf.mxu0
    %v2473 = vadd.f32 0.0, %v2472
    %2474 = vmatprep.mubr.bf16.mxu0 0
    %2475 = vmatmul.mubr.bf16.gmra.mxu0 %v2335
    %v2476 = vpop.f32.mrf.mxu0
    %v2477 = vadd.f32 0.0, %v2476
    %v2478 = vpop.f32.mrf.mxu0
    %v2479 = vadd.f32 0.0, %v2478
    %v2480 = vpop.f32.mrf.mxu0
    %v2481 = vadd.f32 0.0, %v2480
    %v2482 = vpop.f32.mrf.mxu0
    %v2483 = vadd.f32 0.0, %v2482
    %2484 = vdwg.mxu0
    %2501 = vrot.lane.b32.xlu0 %v2284, 127
    %v2502 = vpop.permute.xlu0 %2501
    %2503 = vrot.lane.b32.xlu0 %v2285, 127
    %v2504 = vpop.permute.xlu0 %2503
    %2505 = vrot.lane.b32.xlu0 %v2286, 127
    %v2506 = vpop.permute.xlu0 %2505
    %2507 = vrot.lane.b32.xlu0 %v2287, 127
    %v2508 = vpop.permute.xlu0 %2507
    %2509 = vrot.lane.b32.xlu0 %v2288, 127
    %v2510 = vpop.permute.xlu0 %2509
    %2511 = vrot.lane.b32.xlu0 %v2289, 127
    %v2512 = vpop.permute.xlu0 %2511
    %2513 = vrot.lane.b32.xlu0 %v2290, 127
    %v2514 = vpop.permute.xlu0 %2513
    %2515 = vrot.lane.b32.xlu0 %v2291, 127
    %v2516 = vpop.permute.xlu0 %2515
    %2517 = vrot.lane.b32.xlu0 %v2292, 127
    %v2518 = vpop.permute.xlu0 %2517
    %2519 = vrot.lane.b32.xlu0 %v2293, 127
    %v2520 = vpop.permute.xlu0 %2519
    %2521 = vrot.lane.b32.xlu0 %v2294, 127
    %v2522 = vpop.permute.xlu0 %2521
    %2523 = vrot.lane.b32.xlu0 %v2295, 127
    %v2524 = vpop.permute.xlu0 %2523
    %2525 = vrot.lane.b32.xlu0 %v2296, 127
    %v2526 = vpop.permute.xlu0 %2525
    %2527 = vrot.lane.b32.xlu0 %v2297, 127
    %v2528 = vpop.permute.xlu0 %2527
    %2529 = vrot.lane.b32.xlu0 %v2298, 127
    %v2530 = vpop.permute.xlu0 %2529
    %2531 = vrot.lane.b32.xlu0 %v2299, 127
    %v2532 = vpop.permute.xlu0 %2531
    %v2533 = vsel %vm99, %v2502, %v2504
    %v2534 = vsel %vm99, %v2506, %v2508
    %v2535 = vsel %vm99, %v2510, %v2512
    %v2536 = vsel %vm99, %v2514, %v2516
    %v2537 = vsel %vm99, %v2518, %v2520
    %v2538 = vsel %vm99, %v2522, %v2524
    %v2539 = vsel %vm99, %v2526, %v2528
    %v2540 = vsel %vm99, %v2530, %v2532
    %2557 = vmatprep.subr.bf16.mxu0 %v2532
    %2558 = vmatpush1.bf16.msra.mxu0 %v2540
    %2559 = vmatprep.subr.bf16.mxu0 %v2528
    %2560 = vmatpush1.bf16.msra.mxu0 %v2539
    %2561 = vmatprep.subr.bf16.mxu0 %v2524
    %2562 = vmatpush1.bf16.msra.mxu0 %v2538
    %2563 = vmatprep.subr.bf16.mxu0 %v2520
    %2564 = vmatpush1.bf16.msra.mxu0 %v2537
    %2565 = vmatprep.subr.bf16.mxu0 %v2516
    %2566 = vmatpush1.bf16.msra.mxu0 %v2536
    %2567 = vmatprep.subr.bf16.mxu0 %v2512
    %2568 = vmatpush1.bf16.msra.mxu0 %v2535
    %2569 = vmatprep.subr.bf16.mxu0 %v2508
    %2570 = vmatpush1.bf16.msra.mxu0 %v2534
    %2571 = vmatprep.subr.bf16.mxu0 %v2504
    %2572 = vmatpush1.bf16.msra.mxu0 %v2533
    %2573 = vmatprep.subr.bf16.mxu0 0
    %2574 = vmatpush2.bf16.msra.mxu0 0
    %2575 = vmatprep.subr.bf16.mxu0 0
    %2576 = vmatpush2.bf16.msra.mxu0 0
    %2577 = vmatprep.subr.bf16.mxu0 0
    %2578 = vmatpush2.bf16.msra.mxu0 0
    %2579 = vmatprep.subr.bf16.mxu0 0
    %2580 = vmatpush2.bf16.msra.mxu0 0
    %2581 = vmatprep.subr.bf16.mxu0 0
    %2582 = vmatpush2.bf16.msra.mxu0 0
    %2583 = vmatprep.subr.bf16.mxu0 0
    %2584 = vmatpush2.bf16.msra.mxu0 0
    %2585 = vmatprep.subr.bf16.mxu0 0
    %2586 = vmatpush2.bf16.msra.mxu0 0
    %2587 = vmatprep.subr.bf16.mxu0 0
    %2588 = vmatpush2.bf16.msra.mxu0 0
    %2589 = vmatprep.mubr.bf16.mxu0 0
    %2590 = vmatmul.mubr.bf16.gmra.mxu0 %v2332
    %v2591 = vpop.f32.mrf.mxu0
    %v2592 = vadd.f32 0.0, %v2591
    %v2593 = vpop.f32.mrf.mxu0
    %v2594 = vadd.f32 0.0, %v2593
    %v2595 = vpop.f32.mrf.mxu0
    %v2596 = vadd.f32 0.0, %v2595
    %v2597 = vpop.f32.mrf.mxu0
    %v2598 = vadd.f32 0.0, %v2597
    %2599 = vmatprep.mubr.bf16.mxu0 0
    %2600 = vmatmul.mubr.bf16.gmra.mxu0 %v2333
    %v2601 = vpop.f32.mrf.mxu0
    %v2602 = vadd.f32 0.0, %v2601
    %v2603 = vpop.f32.mrf.mxu0
    %v2604 = vadd.f32 0.0, %v2603
    %v2605 = vpop.f32.mrf.mxu0
    %v2606 = vadd.f32 0.0, %v2605
    %v2607 = vpop.f32.mrf.mxu0
    %v2608 = vadd.f32 0.0, %v2607
    %2609 = vmatprep.mubr.bf16.mxu0 0
    %2610 = vmatmul.mubr.bf16.gmra.mxu0 %v2334
    %v2611 = vpop.f32.mrf.mxu0
    %v2612 = vadd.f32 0.0, %v2611
    %v2613 = vpop.f32.mrf.mxu0
    %v2614 = vadd.f32 0.0, %v2613
    %v2615 = vpop.f32.mrf.mxu0
    %v2616 = vadd.f32 0.0, %v2615
    %v2617 = vpop.f32.mrf.mxu0
    %v2618 = vadd.f32 0.0, %v2617
    %2619 = vmatprep.mubr.bf16.mxu0 0
    %2620 = vmatmul.mubr.bf16.gmra.mxu0 %v2335
    %v2621 = vpop.f32.mrf.mxu0
    %v2622 = vadd.f32 0.0, %v2621
    %v2623 = vpop.f32.mrf.mxu0
    %v2624 = vadd.f32 0.0, %v2623
    %v2625 = vpop.f32.mrf.mxu0
    %v2626 = vadd.f32 0.0, %v2625
    %v2627 = vpop.f32.mrf.mxu0
    %v2628 = vadd.f32 0.0, %v2627
    %2629 = vdwg.mxu0
    %v2630 = vunpack.c.l.b16 %v63
    %v2631 = vunpack.c.l.b16 %v65
    %v2632 = vunpack.c.l.b16 %v67
    %v2633 = vunpack.c.l.b16 %v69
    %v2634 = vunpack.c.l.b16 %v71
    %v2635 = vunpack.c.l.b16 %v73
    %v2636 = vunpack.c.l.b16 %v75
    %v2637 = vunpack.c.l.b16 %v77
    %v2638 = vpack.c.b16 %v2631, %v2630
    %v2639 = vpack.c.b16 %v2633, %v2632
    %v2640 = vpack.c.b16 %v2635, %v2634
    %v2641 = vpack.c.b16 %v2637, %v2636
    %2646 = vmatprep.subr.bf16.mxu0 %v2283
    %2647 = vmatpush1.bf16.msra.mxu0 %v2282
    %2648 = vmatprep.subr.bf16.mxu0 %v2281
    %2649 = vmatpush1.bf16.msra.mxu0 %v2280
    %2650 = vmatprep.subr.bf16.mxu0 %v2279
    %2651 = vmatpush1.bf16.msra.mxu0 %v2278
    %2652 = vmatprep.subr.bf16.mxu0 %v2277
    %2653 = vmatpush1.bf16.msra.mxu0 %v2276
    %2654 = vmatprep.subr.bf16.mxu0 %v2275
    %2655 = vmatpush1.bf16.msra.mxu0 %v2274
    %2656 = vmatprep.subr.bf16.mxu0 %v2273
    %2657 = vmatpush1.bf16.msra.mxu0 %v2272
    %2658 = vmatprep.subr.bf16.mxu0 %v2271
    %2659 = vmatpush1.bf16.msra.mxu0 %v2270
    %2660 = vmatprep.subr.bf16.mxu0 %v2269
    %2661 = vmatpush1.bf16.msra.mxu0 %v2268
    %2662 = vmatprep.subr.bf16.mxu0 0
    %2663 = vmatpush2.bf16.msra.mxu0 0
    %2664 = vmatprep.subr.bf16.mxu0 0
    %2665 = vmatpush2.bf16.msra.mxu0 0
    %2666 = vmatprep.subr.bf16.mxu0 0
    %2667 = vmatpush2.bf16.msra.mxu0 0
    %2668 = vmatprep.subr.bf16.mxu0 0
    %2669 = vmatpush2.bf16.msra.mxu0 0
    %2670 = vmatprep.subr.bf16.mxu0 0
    %2671 = vmatpush2.bf16.msra.mxu0 0
    %2672 = vmatprep.subr.bf16.mxu0 0
    %2673 = vmatpush2.bf16.msra.mxu0 0
    %2674 = vmatprep.subr.bf16.mxu0 0
    %2675 = vmatpush2.bf16.msra.mxu0 0
    %2676 = vmatprep.subr.bf16.mxu0 0
    %2677 = vmatpush2.bf16.msra.mxu0 0
    %2678 = vmatprep.mubr.bf16.mxu0 0
    %2679 = vmatmul.mubr.bf16.gmra.mxu0 %v2638
    %v2680 = vpop.f32.mrf.mxu0
    %v2681 = vadd.f32 %v2447, %v2680
    %v2682 = vpop.f32.mrf.mxu0
    %v2683 = vadd.f32 %v2449, %v2682
    %v2684 = vpop.f32.mrf.mxu0
    %v2685 = vadd.f32 %v2451, %v2684
    %v2686 = vpop.f32.mrf.mxu0
    %v2687 = vadd.f32 %v2453, %v2686
    %2688 = vmatprep.mubr.bf16.mxu0 0
    %2689 = vmatmul.mubr.bf16.gmra.mxu0 %v2639
    %v2690 = vpop.f32.mrf.mxu0
    %v2691 = vadd.f32 %v2457, %v2690
    %v2692 = vpop.f32.mrf.mxu0
    %v2693 = vadd.f32 %v2459, %v2692
    %v2694 = vpop.f32.mrf.mxu0
    %v2695 = vadd.f32 %v2461, %v2694
    %v2696 = vpop.f32.mrf.mxu0
    %v2697 = vadd.f32 %v2463, %v2696
    %2698 = vmatprep.mubr.bf16.mxu0 0
    %2699 = vmatmul.mubr.bf16.gmra.mxu0 %v2640
    %v2700 = vpop.f32.mrf.mxu0
    %v2701 = vadd.f32 %v2467, %v2700
    %v2702 = vpop.f32.mrf.mxu0
    %v2703 = vadd.f32 %v2469, %v2702
    %v2704 = vpop.f32.mrf.mxu0
    %v2705 = vadd.f32 %v2471, %v2704
    %v2706 = vpop.f32.mrf.mxu0
    %v2707 = vadd.f32 %v2473, %v2706
    %2708 = vmatprep.mubr.bf16.mxu0 0
    %2709 = vmatmul.mubr.bf16.gmra.mxu0 %v2641
    %v2710 = vpop.f32.mrf.mxu0
    %v2711 = vadd.f32 %v2477, %v2710
    %v2712 = vpop.f32.mrf.mxu0
    %v2713 = vadd.f32 %v2479, %v2712
    %v2714 = vpop.f32.mrf.mxu0
    %v2715 = vadd.f32 %v2481, %v2714
    %v2716 = vpop.f32.mrf.mxu0
    %v2717 = vadd.f32 %v2483, %v2716
    %2718 = vdwg.mxu0
    %2719 = vmatprep.subr.bf16.mxu0 %v2299
    %2720 = vmatpush1.bf16.msra.mxu0 %v2298
    %2721 = vmatprep.subr.bf16.mxu0 %v2297
    %2722 = vmatpush1.bf16.msra.mxu0 %v2296
    %2723 = vmatprep.subr.bf16.mxu0 %v2295
    %2724 = vmatpush1.bf16.msra.mxu0 %v2294
    %2725 = vmatprep.subr.bf16.mxu0 %v2293
    %2726 = vmatpush1.bf16.msra.mxu0 %v2292
    %2727 = vmatprep.subr.bf16.mxu0 %v2291
    %2728 = vmatpush1.bf16.msra.mxu0 %v2290
    %2729 = vmatprep.subr.bf16.mxu0 %v2289
    %2730 = vmatpush1.bf16.msra.mxu0 %v2288
    %2731 = vmatprep.subr.bf16.mxu0 %v2287
    %2732 = vmatpush1.bf16.msra.mxu0 %v2286
    %2733 = vmatprep.subr.bf16.mxu0 %v2285
    %2734 = vmatpush1.bf16.msra.mxu0 %v2284
    %2735 = vmatprep.subr.bf16.mxu0 0
    %2736 = vmatpush2.bf16.msra.mxu0 0
    %2737 = vmatprep.subr.bf16.mxu0 0
    %2738 = vmatpush2.bf16.msra.mxu0 0
    %2739 = vmatprep.subr.bf16.mxu0 0
    %2740 = vmatpush2.bf16.msra.mxu0 0
    %2741 = vmatprep.subr.bf16.mxu0 0
    %2742 = vmatpush2.bf16.msra.mxu0 0
    %2743 = vmatprep.subr.bf16.mxu0 0
    %2744 = vmatpush2.bf16.msra.mxu0 0
    %2745 = vmatprep.subr.bf16.mxu0 0
    %2746 = vmatpush2.bf16.msra.mxu0 0
    %2747 = vmatprep.subr.bf16.mxu0 0
    %2748 = vmatpush2.bf16.msra.mxu0 0
    %2749 = vmatprep.subr.bf16.mxu0 0
    %2750 = vmatpush2.bf16.msra.mxu0 0
    %2751 = vmatprep.mubr.bf16.mxu0 0
    %2752 = vmatmul.mubr.bf16.gmra.mxu0 %v2638
    %v2753 = vpop.f32.mrf.mxu0
    %v2754 = vadd.f32 %v2592, %v2753
    %v2755 = vpop.f32.mrf.mxu0
    %v2756 = vadd.f32 %v2594, %v2755
    %v2757 = vpop.f32.mrf.mxu0
    %v2758 = vadd.f32 %v2596, %v2757
    %v2759 = vpop.f32.mrf.mxu0
    %v2760 = vadd.f32 %v2598, %v2759
    %2761 = vmatprep.mubr.bf16.mxu0 0
    %2762 = vmatmul.mubr.bf16.gmra.mxu0 %v2639
    %v2763 = vpop.f32.mrf.mxu0
    %v2764 = vadd.f32 %v2602, %v2763
    %v2765 = vpop.f32.mrf.mxu0
    %v2766 = vadd.f32 %v2604, %v2765
    %v2767 = vpop.f32.mrf.mxu0
    %v2768 = vadd.f32 %v2606, %v2767
    %v2769 = vpop.f32.mrf.mxu0
    %v2770 = vadd.f32 %v2608, %v2769
    %2771 = vmatprep.mubr.bf16.mxu0 0
    %2772 = vmatmul.mubr.bf16.gmra.mxu0 %v2640
    %v2773 = vpop.f32.mrf.mxu0
    %v2774 = vadd.f32 %v2612, %v2773
    %v2775 = vpop.f32.mrf.mxu0
    %v2776 = vadd.f32 %v2614, %v2775
    %v2777 = vpop.f32.mrf.mxu0
    %v2778 = vadd.f32 %v2616, %v2777
    %v2779 = vpop.f32.mrf.mxu0
    %v2780 = vadd.f32 %v2618, %v2779
    %2781 = vmatprep.mubr.bf16.mxu0 0
    %2782 = vmatmul.mubr.bf16.gmra.mxu0 %v2641
    %v2783 = vpop.f32.mrf.mxu0
    %v2784 = vadd.f32 %v2622, %v2783
    %v2785 = vpop.f32.mrf.mxu0
    %v2786 = vadd.f32 %v2624, %v2785
    %v2787 = vpop.f32.mrf.mxu0
    %v2788 = vadd.f32 %v2626, %v2787
    %v2789 = vpop.f32.mrf.mxu0
    %v2790 = vadd.f32 %v2628, %v2789
    %2791 = vdwg.mxu0
    %v2800 = vunpack.c.l.b16 %v64
    %v2801 = vunpack.c.l.b16 %v66
    %v2802 = vunpack.c.l.b16 %v68
    %v2803 = vunpack.c.l.b16 %v70
    %v2804 = vunpack.c.l.b16 %v72
    %v2805 = vunpack.c.l.b16 %v74
    %v2806 = vunpack.c.l.b16 %v76
    %v2807 = vunpack.c.l.b16 %v78
    %v2808 = vpack.c.b16 %v2801, %v2800
    %v2809 = vpack.c.b16 %v2803, %v2802
    %v2810 = vpack.c.b16 %v2805, %v2804
    %v2811 = vpack.c.b16 %v2807, %v2806
    %2816 = vrot.lane.b32.xlu0 %v2268, 126
    %v2817 = vpop.permute.xlu0 %2816
    %2818 = vrot.lane.b32.xlu0 %v2269, 126
    %v2819 = vpop.permute.xlu0 %2818
    %2820 = vrot.lane.b32.xlu0 %v2270, 126
    %v2821 = vpop.permute.xlu0 %2820
    %2822 = vrot.lane.b32.xlu0 %v2271, 126
    %v2823 = vpop.permute.xlu0 %2822
    %2824 = vrot.lane.b32.xlu0 %v2272, 126
    %v2825 = vpop.permute.xlu0 %2824
    %2826 = vrot.lane.b32.xlu0 %v2273, 126
    %v2827 = vpop.permute.xlu0 %2826
    %2828 = vrot.lane.b32.xlu0 %v2274, 126
    %v2829 = vpop.permute.xlu0 %2828
    %2830 = vrot.lane.b32.xlu0 %v2275, 126
    %v2831 = vpop.permute.xlu0 %2830
    %2832 = vrot.lane.b32.xlu0 %v2276, 126
    %v2833 = vpop.permute.xlu0 %2832
    %2834 = vrot.lane.b32.xlu0 %v2277, 126
    %v2835 = vpop.permute.xlu0 %2834
    %2836 = vrot.lane.b32.xlu0 %v2278, 126
    %v2837 = vpop.permute.xlu0 %2836
    %2838 = vrot.lane.b32.xlu0 %v2279, 126
    %v2839 = vpop.permute.xlu0 %2838
    %2840 = vrot.lane.b32.xlu0 %v2280, 126
    %v2841 = vpop.permute.xlu0 %2840
    %2842 = vrot.lane.b32.xlu0 %v2281, 126
    %v2843 = vpop.permute.xlu0 %2842
    %2844 = vrot.lane.b32.xlu0 %v2282, 126
    %v2845 = vpop.permute.xlu0 %2844
    %2846 = vrot.lane.b32.xlu0 %v2283, 126
    %v2847 = vpop.permute.xlu0 %2846
    %v2848 = vsel %vm610, %v2817, %v2819
    %v2849 = vsel %vm610, %v2821, %v2823
    %v2850 = vsel %vm610, %v2825, %v2827
    %v2851 = vsel %vm610, %v2829, %v2831
    %v2852 = vsel %vm610, %v2833, %v2835
    %v2853 = vsel %vm610, %v2837, %v2839
    %v2854 = vsel %vm610, %v2841, %v2843
    %v2855 = vsel %vm610, %v2845, %v2847
    %2872 = vmatprep.subr.bf16.mxu0 %v2847
    %2873 = vmatpush1.bf16.msra.mxu0 %v2855
    %2874 = vmatprep.subr.bf16.mxu0 %v2843
    %2875 = vmatpush1.bf16.msra.mxu0 %v2854
    %2876 = vmatprep.subr.bf16.mxu0 %v2839
    %2877 = vmatpush1.bf16.msra.mxu0 %v2853
    %2878 = vmatprep.subr.bf16.mxu0 %v2835
    %2879 = vmatpush1.bf16.msra.mxu0 %v2852
    %2880 = vmatprep.subr.bf16.mxu0 %v2831
    %2881 = vmatpush1.bf16.msra.mxu0 %v2851
    %2882 = vmatprep.subr.bf16.mxu0 %v2827
    %2883 = vmatpush1.bf16.msra.mxu0 %v2850
    %2884 = vmatprep.subr.bf16.mxu0 %v2823
    %2885 = vmatpush1.bf16.msra.mxu0 %v2849
    %2886 = vmatprep.subr.bf16.mxu0 %v2819
    %2887 = vmatpush1.bf16.msra.mxu0 %v2848
    %2888 = vmatprep.subr.bf16.mxu0 0
    %2889 = vmatpush2.bf16.msra.mxu0 0
    %2890 = vmatprep.subr.bf16.mxu0 0
    %2891 = vmatpush2.bf16.msra.mxu0 0
    %2892 = vmatprep.subr.bf16.mxu0 0
    %2893 = vmatpush2.bf16.msra.mxu0 0
    %2894 = vmatprep.subr.bf16.mxu0 0
    %2895 = vmatpush2.bf16.msra.mxu0 0
    %2896 = vmatprep.subr.bf16.mxu0 0
    %2897 = vmatpush2.bf16.msra.mxu0 0
    %2898 = vmatprep.subr.bf16.mxu0 0
    %2899 = vmatpush2.bf16.msra.mxu0 0
    %2900 = vmatprep.subr.bf16.mxu0 0
    %2901 = vmatpush2.bf16.msra.mxu0 0
    %2902 = vmatprep.subr.bf16.mxu0 0
    %2903 = vmatpush2.bf16.msra.mxu0 0
    %2904 = vmatprep.mubr.bf16.mxu0 0
    %2905 = vmatmul.mubr.bf16.gmra.mxu0 %v2808
    %v2906 = vpop.f32.mrf.mxu0
    %v2907 = vadd.f32 0.0, %v2906
    %v2908 = vpop.f32.mrf.mxu0
    %v2909 = vadd.f32 0.0, %v2908
    %v2910 = vpop.f32.mrf.mxu0
    %v2911 = vadd.f32 0.0, %v2910
    %v2912 = vpop.f32.mrf.mxu0
    %v2913 = vadd.f32 0.0, %v2912
    %2914 = vmatprep.mubr.bf16.mxu0 0
    %2915 = vmatmul.mubr.bf16.gmra.mxu0 %v2809
    %v2916 = vpop.f32.mrf.mxu0
    %v2917 = vadd.f32 0.0, %v2916
    %v2918 = vpop.f32.mrf.mxu0
    %v2919 = vadd.f32 0.0, %v2918
    %v2920 = vpop.f32.mrf.mxu0
    %v2921 = vadd.f32 0.0, %v2920
    %v2922 = vpop.f32.mrf.mxu0
    %v2923 = vadd.f32 0.0, %v2922
    %2924 = vmatprep.mubr.bf16.mxu0 0
    %2925 = vmatmul.mubr.bf16.gmra.mxu0 %v2810
    %v2926 = vpop.f32.mrf.mxu0
    %v2927 = vadd.f32 0.0, %v2926
    %v2928 = vpop.f32.mrf.mxu0
    %v2929 = vadd.f32 0.0, %v2928
    %v2930 = vpop.f32.mrf.mxu0
    %v2931 = vadd.f32 0.0, %v2930
    %v2932 = vpop.f32.mrf.mxu0
    %v2933 = vadd.f32 0.0, %v2932
    %2934 = vmatprep.mubr.bf16.mxu0 0
    %2935 = vmatmul.mubr.bf16.gmra.mxu0 %v2811
    %v2936 = vpop.f32.mrf.mxu0
    %v2937 = vadd.f32 0.0, %v2936
    %v2938 = vpop.f32.mrf.mxu0
    %v2939 = vadd.f32 0.0, %v2938
    %v2940 = vpop.f32.mrf.mxu0
    %v2941 = vadd.f32 0.0, %v2940
    %v2942 = vpop.f32.mrf.mxu0
    %v2943 = vadd.f32 0.0, %v2942
    %2944 = vdwg.mxu0
    %2945 = vrot.lane.b32.xlu0 %v2284, 126
    %v2946 = vpop.permute.xlu0 %2945
    %2947 = vrot.lane.b32.xlu0 %v2285, 126
    %v2948 = vpop.permute.xlu0 %2947
    %2949 = vrot.lane.b32.xlu0 %v2286, 126
    %v2950 = vpop.permute.xlu0 %2949
    %2951 = vrot.lane.b32.xlu0 %v2287, 126
    %v2952 = vpop.permute.xlu0 %2951
    %2953 = vrot.lane.b32.xlu0 %v2288, 126
    %v2954 = vpop.permute.xlu0 %2953
    %2955 = vrot.lane.b32.xlu0 %v2289, 126
    %v2956 = vpop.permute.xlu0 %2955
    %2957 = vrot.lane.b32.xlu0 %v2290, 126
    %v2958 = vpop.permute.xlu0 %2957
    %2959 = vrot.lane.b32.xlu0 %v2291, 126
    %v2960 = vpop.permute.xlu0 %2959
    %2961 = vrot.lane.b32.xlu0 %v2292, 126
    %v2962 = vpop.permute.xlu0 %2961
    %2963 = vrot.lane.b32.xlu0 %v2293, 126
    %v2964 = vpop.permute.xlu0 %2963
    %2965 = vrot.lane.b32.xlu0 %v2294, 126
    %v2966 = vpop.permute.xlu0 %2965
    %2967 = vrot.lane.b32.xlu0 %v2295, 126
    %v2968 = vpop.permute.xlu0 %2967
    %2969 = vrot.lane.b32.xlu0 %v2296, 126
    %v2970 = vpop.permute.xlu0 %2969
    %2971 = vrot.lane.b32.xlu0 %v2297, 126
    %v2972 = vpop.permute.xlu0 %2971
    %2973 = vrot.lane.b32.xlu0 %v2298, 126
    %v2974 = vpop.permute.xlu0 %2973
    %2975 = vrot.lane.b32.xlu0 %v2299, 126
    %v2976 = vpop.permute.xlu0 %2975
    %v2977 = vsel %vm610, %v2946, %v2948
    %v2978 = vsel %vm610, %v2950, %v2952
    %v2979 = vsel %vm610, %v2954, %v2956
    %v2980 = vsel %vm610, %v2958, %v2960
    %v2981 = vsel %vm610, %v2962, %v2964
    %v2982 = vsel %vm610, %v2966, %v2968
    %v2983 = vsel %vm610, %v2970, %v2972
    %v2984 = vsel %vm610, %v2974, %v2976
    %3001 = vmatprep.subr.bf16.mxu0 %v2976
    %3002 = vmatpush1.bf16.msra.mxu0 %v2984
    %3003 = vmatprep.subr.bf16.mxu0 %v2972
    %3004 = vmatpush1.bf16.msra.mxu0 %v2983
    %3005 = vmatprep.subr.bf16.mxu0 %v2968
    %3006 = vmatpush1.bf16.msra.mxu0 %v2982
    %3007 = vmatprep.subr.bf16.mxu0 %v2964
    %3008 = vmatpush1.bf16.msra.mxu0 %v2981
    %3009 = vmatprep.subr.bf16.mxu0 %v2960
    %3010 = vmatpush1.bf16.msra.mxu0 %v2980
    %3011 = vmatprep.subr.bf16.mxu0 %v2956
    %3012 = vmatpush1.bf16.msra.mxu0 %v2979
    %3013 = vmatprep.subr.bf16.mxu0 %v2952
    %3014 = vmatpush1.bf16.msra.mxu0 %v2978
    %3015 = vmatprep.subr.bf16.mxu0 %v2948
    %3016 = vmatpush1.bf16.msra.mxu0 %v2977
    %3017 = vmatprep.subr.bf16.mxu0 0
    %3018 = vmatpush2.bf16.msra.mxu0 0
    %3019 = vmatprep.subr.bf16.mxu0 0
    %3020 = vmatpush2.bf16.msra.mxu0 0
    %3021 = vmatprep.subr.bf16.mxu0 0
    %3022 = vmatpush2.bf16.msra.mxu0 0
    %3023 = vmatprep.subr.bf16.mxu0 0
    %3024 = vmatpush2.bf16.msra.mxu0 0
    %3025 = vmatprep.subr.bf16.mxu0 0
    %3026 = vmatpush2.bf16.msra.mxu0 0
    %3027 = vmatprep.subr.bf16.mxu0 0
    %3028 = vmatpush2.bf16.msra.mxu0 0
    %3029 = vmatprep.subr.bf16.mxu0 0
    %3030 = vmatpush2.bf16.msra.mxu0 0
    %3031 = vmatprep.subr.bf16.mxu0 0
    %3032 = vmatpush2.bf16.msra.mxu0 0
    %3033 = vmatprep.mubr.bf16.mxu0 0
    %3034 = vmatmul.mubr.bf16.gmra.mxu0 %v2808
    %v3035 = vpop.f32.mrf.mxu0
    %v3036 = vadd.f32 0.0, %v3035
    %v3037 = vpop.f32.mrf.mxu0
    %v3038 = vadd.f32 0.0, %v3037
    %v3039 = vpop.f32.mrf.mxu0
    %v3040 = vadd.f32 0.0, %v3039
    %v3041 = vpop.f32.mrf.mxu0
    %v3042 = vadd.f32 0.0, %v3041
    %3043 = vmatprep.mubr.bf16.mxu0 0
    %3044 = vmatmul.mubr.bf16.gmra.mxu0 %v2809
    %v3045 = vpop.f32.mrf.mxu0
    %v3046 = vadd.f32 0.0, %v3045
    %v3047 = vpop.f32.mrf.mxu0
    %v3048 = vadd.f32 0.0, %v3047
    %v3049 = vpop.f32.mrf.mxu0
    %v3050 = vadd.f32 0.0, %v3049
    %v3051 = vpop.f32.mrf.mxu0
    %v3052 = vadd.f32 0.0, %v3051
    %3053 = vmatprep.mubr.bf16.mxu0 0
    %3054 = vmatmul.mubr.bf16.gmra.mxu0 %v2810
    %v3055 = vpop.f32.mrf.mxu0
    %v3056 = vadd.f32 0.0, %v3055
    %v3057 = vpop.f32.mrf.mxu0
    %v3058 = vadd.f32 0.0, %v3057
    %v3059 = vpop.f32.mrf.mxu0
    %v3060 = vadd.f32 0.0, %v3059
    %v3061 = vpop.f32.mrf.mxu0
    %v3062 = vadd.f32 0.0, %v3061
    %3063 = vmatprep.mubr.bf16.mxu0 0
    %3064 = vmatmul.mubr.bf16.gmra.mxu0 %v2811
    %v3065 = vpop.f32.mrf.mxu0
    %v3066 = vadd.f32 0.0, %v3065
    %v3067 = vpop.f32.mrf.mxu0
    %v3068 = vadd.f32 0.0, %v3067
    %v3069 = vpop.f32.mrf.mxu0
    %v3070 = vadd.f32 0.0, %v3069
    %v3071 = vpop.f32.mrf.mxu0
    %v3072 = vadd.f32 0.0, %v3071
    %3073 = vdwg.mxu0
    %v3074 = vadd.f32 %v2681, %v2907
    %v3075 = vadd.f32 %v2683, %v2909
    %v3076 = vadd.f32 %v2685, %v2911
    %v3077 = vadd.f32 %v2687, %v2913
    %v3078 = vadd.f32 %v2691, %v2917
    %v3079 = vadd.f32 %v2693, %v2919
    %v3080 = vadd.f32 %v2695, %v2921
    %v3081 = vadd.f32 %v2697, %v2923
    %v3082 = vadd.f32 %v2701, %v2927
    %v3083 = vadd.f32 %v2703, %v2929
    %v3084 = vadd.f32 %v2705, %v2931
    %v3085 = vadd.f32 %v2707, %v2933
    %v3086 = vadd.f32 %v2711, %v2937
    %v3087 = vadd.f32 %v2713, %v2939
    %v3088 = vadd.f32 %v2715, %v2941
    %v3089 = vadd.f32 %v2717, %v2943
    %v3090 = vadd.f32 %v2754, %v3036
    %v3091 = vadd.f32 %v2756, %v3038
    %v3092 = vadd.f32 %v2758, %v3040
    %v3093 = vadd.f32 %v2760, %v3042
    %v3094 = vadd.f32 %v2764, %v3046
    %v3095 = vadd.f32 %v2766, %v3048
    %v3096 = vadd.f32 %v2768, %v3050
    %v3097 = vadd.f32 %v2770, %v3052
    %v3098 = vadd.f32 %v2774, %v3056
    %v3099 = vadd.f32 %v2776, %v3058
    %v3100 = vadd.f32 %v2778, %v3060
    %v3101 = vadd.f32 %v2780, %v3062
    %v3102 = vadd.f32 %v2784, %v3066
    %v3103 = vadd.f32 %v2786, %v3068
    %v3104 = vadd.f32 %v2788, %v3070
    %v3105 = vadd.f32 %v2790, %v3072
    %v3106 = vrot.slane %v64, 4
    %v3107 = vrot.slane %v66, 4
    %v3108 = vrot.slane %v68, 4
    %v3109 = vrot.slane %v70, 4
    %v3110 = vrot.slane %v72, 4
    %v3111 = vrot.slane %v74, 4
    %v3112 = vrot.slane %v76, 4
    %v3113 = vrot.slane %v78, 4
    %v3114 = vunpack.c.l.b16 %v3106
    %v3115 = vunpack.c.l.b16 %v3107
    %v3116 = vunpack.c.l.b16 %v3108
    %v3117 = vunpack.c.l.b16 %v3109
    %v3118 = vunpack.c.l.b16 %v3110
    %v3119 = vunpack.c.l.b16 %v3111
    %v3120 = vunpack.c.l.b16 %v3112
    %v3121 = vunpack.c.l.b16 %v3113
    %v3122 = vpack.c.b16 %v3115, %v3114
    %v3123 = vpack.c.b16 %v3117, %v3116
    %v3124 = vpack.c.b16 %v3119, %v3118
    %v3125 = vpack.c.b16 %v3121, %v3120
    %3130 = vrot.lane.b32.xlu0 %v2268, 125
    %v3131 = vpop.permute.xlu0 %3130
    %3132 = vrot.lane.b32.xlu0 %v2269, 125
    %v3133 = vpop.permute.xlu0 %3132
    %3134 = vrot.lane.b32.xlu0 %v2270, 125
    %v3135 = vpop.permute.xlu0 %3134
    %3136 = vrot.lane.b32.xlu0 %v2271, 125
    %v3137 = vpop.permute.xlu0 %3136
    %3138 = vrot.lane.b32.xlu0 %v2272, 125
    %v3139 = vpop.permute.xlu0 %3138
    %3140 = vrot.lane.b32.xlu0 %v2273, 125
    %v3141 = vpop.permute.xlu0 %3140
    %3142 = vrot.lane.b32.xlu0 %v2274, 125
    %v3143 = vpop.permute.xlu0 %3142
    %3144 = vrot.lane.b32.xlu0 %v2275, 125
    %v3145 = vpop.permute.xlu0 %3144
    %3146 = vrot.lane.b32.xlu0 %v2276, 125
    %v3147 = vpop.permute.xlu0 %3146
    %3148 = vrot.lane.b32.xlu0 %v2277, 125
    %v3149 = vpop.permute.xlu0 %3148
    %3150 = vrot.lane.b32.xlu0 %v2278, 125
    %v3151 = vpop.permute.xlu0 %3150
    %3152 = vrot.lane.b32.xlu0 %v2279, 125
    %v3153 = vpop.permute.xlu0 %3152
    %3154 = vrot.lane.b32.xlu0 %v2280, 125
    %v3155 = vpop.permute.xlu0 %3154
    %3156 = vrot.lane.b32.xlu0 %v2281, 125
    %v3157 = vpop.permute.xlu0 %3156
    %3158 = vrot.lane.b32.xlu0 %v2282, 125
    %v3159 = vpop.permute.xlu0 %3158
    %3160 = vrot.lane.b32.xlu0 %v2283, 125
    %v3161 = vpop.permute.xlu0 %3160
    %vm3162 = vcmask 1022976
    %v3163 = vsel %vm3162, %v3131, %v3133
    %v3164 = vsel %vm3162, %v3135, %v3137
    %v3165 = vsel %vm3162, %v3139, %v3141
    %v3166 = vsel %vm3162, %v3143, %v3145
    %v3167 = vsel %vm3162, %v3147, %v3149
    %v3168 = vsel %vm3162, %v3151, %v3153
    %v3169 = vsel %vm3162, %v3155, %v3157
    %v3170 = vsel %vm3162, %v3159, %v3161
    %3187 = vmatprep.subr.bf16.mxu0 %v3161
    %3188 = vmatpush1.bf16.msra.mxu0 %v3170
    %3189 = vmatprep.subr.bf16.mxu0 %v3157
    %3190 = vmatpush1.bf16.msra.mxu0 %v3169
    %3191 = vmatprep.subr.bf16.mxu0 %v3153
    %3192 = vmatpush1.bf16.msra.mxu0 %v3168
    %3193 = vmatprep.subr.bf16.mxu0 %v3149
    %3194 = vmatpush1.bf16.msra.mxu0 %v3167
    %3195 = vmatprep.subr.bf16.mxu0 %v3145
    %3196 = vmatpush1.bf16.msra.mxu0 %v3166
    %3197 = vmatprep.subr.bf16.mxu0 %v3141
    %3198 = vmatpush1.bf16.msra.mxu0 %v3165
    %3199 = vmatprep.subr.bf16.mxu0 %v3137
    %3200 = vmatpush1.bf16.msra.mxu0 %v3164
    %3201 = vmatprep.subr.bf16.mxu0 %v3133
    %3202 = vmatpush1.bf16.msra.mxu0 %v3163
    %3203 = vmatprep.subr.bf16.mxu0 0
    %3204 = vmatpush2.bf16.msra.mxu0 0
    %3205 = vmatprep.subr.bf16.mxu0 0
    %3206 = vmatpush2.bf16.msra.mxu0 0
    %3207 = vmatprep.subr.bf16.mxu0 0
    %3208 = vmatpush2.bf16.msra.mxu0 0
    %3209 = vmatprep.subr.bf16.mxu0 0
    %3210 = vmatpush2.bf16.msra.mxu0 0
    %3211 = vmatprep.subr.bf16.mxu0 0
    %3212 = vmatpush2.bf16.msra.mxu0 0
    %3213 = vmatprep.subr.bf16.mxu0 0
    %3214 = vmatpush2.bf16.msra.mxu0 0
    %3215 = vmatprep.subr.bf16.mxu0 0
    %3216 = vmatpush2.bf16.msra.mxu0 0
    %3217 = vmatprep.subr.bf16.mxu0 0
    %3218 = vmatpush2.bf16.msra.mxu0 0
    %3219 = vmatprep.mubr.bf16.mxu0 0
    %3220 = vmatmul.mubr.bf16.gmra.mxu0 %v3122
    %v3221 = vpop.f32.mrf.mxu0
    %v3222 = vadd.f32 0.0, %v3221
    %v3223 = vpop.f32.mrf.mxu0
    %v3224 = vadd.f32 0.0, %v3223
    %v3225 = vpop.f32.mrf.mxu0
    %v3226 = vadd.f32 0.0, %v3225
    %v3227 = vpop.f32.mrf.mxu0
    %v3228 = vadd.f32 0.0, %v3227
    %3229 = vmatprep.mubr.bf16.mxu0 0
    %3230 = vmatmul.mubr.bf16.gmra.mxu0 %v3123
    %v3231 = vpop.f32.mrf.mxu0
    %v3232 = vadd.f32 0.0, %v3231
    %v3233 = vpop.f32.mrf.mxu0
    %v3234 = vadd.f32 0.0, %v3233
    %v3235 = vpop.f32.mrf.mxu0
    %v3236 = vadd.f32 0.0, %v3235
    %v3237 = vpop.f32.mrf.mxu0
    %v3238 = vadd.f32 0.0, %v3237
    %3239 = vmatprep.mubr.bf16.mxu0 0
    %3240 = vmatmul.mubr.bf16.gmra.mxu0 %v3124
    %v3241 = vpop.f32.mrf.mxu0
    %v3242 = vadd.f32 0.0, %v3241
    %v3243 = vpop.f32.mrf.mxu0
    %v3244 = vadd.f32 0.0, %v3243
    %v3245 = vpop.f32.mrf.mxu0
    %v3246 = vadd.f32 0.0, %v3245
    %v3247 = vpop.f32.mrf.mxu0
    %v3248 = vadd.f32 0.0, %v3247
    %3249 = vmatprep.mubr.bf16.mxu0 0
    %3250 = vmatmul.mubr.bf16.gmra.mxu0 %v3125
    %v3251 = vpop.f32.mrf.mxu0
    %v3252 = vadd.f32 0.0, %v3251
    %v3253 = vpop.f32.mrf.mxu0
    %v3254 = vadd.f32 0.0, %v3253
    %v3255 = vpop.f32.mrf.mxu0
    %v3256 = vadd.f32 0.0, %v3255
    %v3257 = vpop.f32.mrf.mxu0
    %v3258 = vadd.f32 0.0, %v3257
    %3259 = vdwg.mxu0
    %3260 = vrot.lane.b32.xlu0 %v2284, 125
    %v3261 = vpop.permute.xlu0 %3260
    %3262 = vrot.lane.b32.xlu0 %v2285, 125
    %v3263 = vpop.permute.xlu0 %3262
    %3264 = vrot.lane.b32.xlu0 %v2286, 125
    %v3265 = vpop.permute.xlu0 %3264
    %3266 = vrot.lane.b32.xlu0 %v2287, 125
    %v3267 = vpop.permute.xlu0 %3266
    %3268 = vrot.lane.b32.xlu0 %v2288, 125
    %v3269 = vpop.permute.xlu0 %3268
    %3270 = vrot.lane.b32.xlu0 %v2289, 125
    %v3271 = vpop.permute.xlu0 %3270
    %3272 = vrot.lane.b32.xlu0 %v2290, 125
    %v3273 = vpop.permute.xlu0 %3272
    %3274 = vrot.lane.b32.xlu0 %v2291, 125
    %v3275 = vpop.permute.xlu0 %3274
    %3276 = vrot.lane.b32.xlu0 %v2292, 125
    %v3277 = vpop.permute.xlu0 %3276
    %3278 = vrot.lane.b32.xlu0 %v2293, 125
    %v3279 = vpop.permute.xlu0 %3278
    %3280 = vrot.lane.b32.xlu0 %v2294, 125
    %v3281 = vpop.permute.xlu0 %3280
    %3282 = vrot.lane.b32.xlu0 %v2295, 125
    %v3283 = vpop.permute.xlu0 %3282
    %3284 = vrot.lane.b32.xlu0 %v2296, 125
    %v3285 = vpop.permute.xlu0 %3284
    %3286 = vrot.lane.b32.xlu0 %v2297, 125
    %v3287 = vpop.permute.xlu0 %3286
    %3288 = vrot.lane.b32.xlu0 %v2298, 125
    %v3289 = vpop.permute.xlu0 %3288
    %3290 = vrot.lane.b32.xlu0 %v2299, 125
    %v3291 = vpop.permute.xlu0 %3290
    %v3292 = vsel %vm3162, %v3261, %v3263
    %v3293 = vsel %vm3162, %v3265, %v3267
    %v3294 = vsel %vm3162, %v3269, %v3271
    %v3295 = vsel %vm3162, %v3273, %v3275
    %v3296 = vsel %vm3162, %v3277, %v3279
    %v3297 = vsel %vm3162, %v3281, %v3283
    %v3298 = vsel %vm3162, %v3285, %v3287
    %v3299 = vsel %vm3162, %v3289, %v3291
    %3316 = vmatprep.subr.bf16.mxu0 %v3291
    %3317 = vmatpush1.bf16.msra.mxu0 %v3299
    %3318 = vmatprep.subr.bf16.mxu0 %v3287
    %3319 = vmatpush1.bf16.msra.mxu0 %v3298
    %3320 = vmatprep.subr.bf16.mxu0 %v3283
    %3321 = vmatpush1.bf16.msra.mxu0 %v3297
    %3322 = vmatprep.subr.bf16.mxu0 %v3279
    %3323 = vmatpush1.bf16.msra.mxu0 %v3296
    %3324 = vmatprep.subr.bf16.mxu0 %v3275
    %3325 = vmatpush1.bf16.msra.mxu0 %v3295
    %3326 = vmatprep.subr.bf16.mxu0 %v3271
    %3327 = vmatpush1.bf16.msra.mxu0 %v3294
    %3328 = vmatprep.subr.bf16.mxu0 %v3267
    %3329 = vmatpush1.bf16.msra.mxu0 %v3293
    %3330 = vmatprep.subr.bf16.mxu0 %v3263
    %3331 = vmatpush1.bf16.msra.mxu0 %v3292
    %3332 = vmatprep.subr.bf16.mxu0 0
    %3333 = vmatpush2.bf16.msra.mxu0 0
    %3334 = vmatprep.subr.bf16.mxu0 0
    %3335 = vmatpush2.bf16.msra.mxu0 0
    %3336 = vmatprep.subr.bf16.mxu0 0
    %3337 = vmatpush2.bf16.msra.mxu0 0
    %3338 = vmatprep.subr.bf16.mxu0 0
    %3339 = vmatpush2.bf16.msra.mxu0 0
    %3340 = vmatprep.subr.bf16.mxu0 0
    %3341 = vmatpush2.bf16.msra.mxu0 0
    %3342 = vmatprep.subr.bf16.mxu0 0
    %3343 = vmatpush2.bf16.msra.mxu0 0
    %3344 = vmatprep.subr.bf16.mxu0 0
    %3345 = vmatpush2.bf16.msra.mxu0 0
    %3346 = vmatprep.subr.bf16.mxu0 0
    %3347 = vmatpush2.bf16.msra.mxu0 0
    %3348 = vmatprep.mubr.bf16.mxu0 0
    %3349 = vmatmul.mubr.bf16.gmra.mxu0 %v3122
    %v3350 = vpop.f32.mrf.mxu0
    %v3351 = vadd.f32 0.0, %v3350
    %v3352 = vpop.f32.mrf.mxu0
    %v3353 = vadd.f32 0.0, %v3352
    %v3354 = vpop.f32.mrf.mxu0
    %v3355 = vadd.f32 0.0, %v3354
    %v3356 = vpop.f32.mrf.mxu0
    %v3357 = vadd.f32 0.0, %v3356
    %3358 = vmatprep.mubr.bf16.mxu0 0
    %3359 = vmatmul.mubr.bf16.gmra.mxu0 %v3123
    %v3360 = vpop.f32.mrf.mxu0
    %v3361 = vadd.f32 0.0, %v3360
    %v3362 = vpop.f32.mrf.mxu0
    %v3363 = vadd.f32 0.0, %v3362
    %v3364 = vpop.f32.mrf.mxu0
    %v3365 = vadd.f32 0.0, %v3364
    %v3366 = vpop.f32.mrf.mxu0
    %v3367 = vadd.f32 0.0, %v3366
    %3368 = vmatprep.mubr.bf16.mxu0 0
    %3369 = vmatmul.mubr.bf16.gmra.mxu0 %v3124
    %v3370 = vpop.f32.mrf.mxu0
    %v3371 = vadd.f32 0.0, %v3370
    %v3372 = vpop.f32.mrf.mxu0
    %v3373 = vadd.f32 0.0, %v3372
    %v3374 = vpop.f32.mrf.mxu0
    %v3375 = vadd.f32 0.0, %v3374
    %v3376 = vpop.f32.mrf.mxu0
    %v3377 = vadd.f32 0.0, %v3376
    %3378 = vmatprep.mubr.bf16.mxu0 0
    %3379 = vmatmul.mubr.bf16.gmra.mxu0 %v3125
    %v3380 = vpop.f32.mrf.mxu0
    %v3381 = vadd.f32 0.0, %v3380
    %v3382 = vpop.f32.mrf.mxu0
    %v3383 = vadd.f32 0.0, %v3382
    %v3384 = vpop.f32.mrf.mxu0
    %v3385 = vadd.f32 0.0, %v3384
    %v3386 = vpop.f32.mrf.mxu0
    %v3387 = vadd.f32 0.0, %v3386
    %3388 = vdwg.mxu0
    %v3389 = vadd.f32 %v3074, %v3222
    %v3390 = vadd.f32 %v3075, %v3224
    %v3391 = vadd.f32 %v3076, %v3226
    %v3392 = vadd.f32 %v3077, %v3228
    %v3393 = vadd.f32 %v3078, %v3232
    %v3394 = vadd.f32 %v3079, %v3234
    %v3395 = vadd.f32 %v3080, %v3236
    %v3396 = vadd.f32 %v3081, %v3238
    %v3397 = vadd.f32 %v3082, %v3242
    %v3398 = vadd.f32 %v3083, %v3244
    %v3399 = vadd.f32 %v3084, %v3246
    %v3400 = vadd.f32 %v3085, %v3248
    %v3401 = vadd.f32 %v3086, %v3252
    %v3402 = vadd.f32 %v3087, %v3254
    %v3403 = vadd.f32 %v3088, %v3256
    %v3404 = vadd.f32 %v3089, %v3258
    %v3405 = vadd.f32 %v3090, %v3351
    %v3406 = vadd.f32 %v3091, %v3353
    %v3407 = vadd.f32 %v3092, %v3355
    %v3408 = vadd.f32 %v3093, %v3357
    %v3409 = vadd.f32 %v3094, %v3361
    %v3410 = vadd.f32 %v3095, %v3363
    %v3411 = vadd.f32 %v3096, %v3365
    %v3412 = vadd.f32 %v3097, %v3367
    %v3413 = vadd.f32 %v3098, %v3371
    %v3414 = vadd.f32 %v3099, %v3373
    %v3415 = vadd.f32 %v3100, %v3375
    %v3416 = vadd.f32 %v3101, %v3377
    %v3417 = vadd.f32 %v3102, %v3381
    %v3418 = vadd.f32 %v3103, %v3383
    %v3419 = vadd.f32 %v3104, %v3385
    %v3420 = vadd.f32 %v3105, %v3387
    %3422 = vset.pattern.permute.xlu0 0
    %3423 = vperm.xlu0 %3422, %v2300
    %v3424 = vpop.permute.xlu0 %3423
    %3427 = vset.pattern.permute.xlu0 0
    %3428 = vperm.xlu0 %3427, %v2301
    %v3429 = vpop.permute.xlu0 %3428
    %3432 = vset.pattern.permute.xlu0 0
    %3433 = vperm.xlu0 %3432, %v2302
    %v3434 = vpop.permute.xlu0 %3433
    %3437 = vset.pattern.permute.xlu0 0
    %3438 = vperm.xlu0 %3437, %v2303
    %v3439 = vpop.permute.xlu0 %3438
    %3442 = vset.pattern.permute.xlu0 0
    %3443 = vperm.xlu0 %3442, %v2304
    %v3444 = vpop.permute.xlu0 %3443
    %3447 = vset.pattern.permute.xlu0 0
    %3448 = vperm.xlu0 %3447, %v2305
    %v3449 = vpop.permute.xlu0 %3448
    %3452 = vset.pattern.permute.xlu0 0
    %3453 = vperm.xlu0 %3452, %v2306
    %v3454 = vpop.permute.xlu0 %3453
    %3457 = vset.pattern.permute.xlu0 0
    %3458 = vperm.xlu0 %3457, %v2307
    %v3459 = vpop.permute.xlu0 %3458
    %v3461 = vadd.f32 %v3389, %v3424
    %v3462 = vadd.f32 %v3390, %v3424
    %v3463 = vadd.f32 %v3391, %v3429
    %v3464 = vadd.f32 %v3392, %v3429
    %v3465 = vadd.f32 %v3393, %v3434
    %v3466 = vadd.f32 %v3394, %v3434
    %v3467 = vadd.f32 %v3395, %v3439
    %v3468 = vadd.f32 %v3396, %v3439
    %v3469 = vadd.f32 %v3397, %v3444
    %v3470 = vadd.f32 %v3398, %v3444
    %v3471 = vadd.f32 %v3399, %v3449
    %v3472 = vadd.f32 %v3400, %v3449
    %v3473 = vadd.f32 %v3401, %v3454
    %v3474 = vadd.f32 %v3402, %v3454
    %v3475 = vadd.f32 %v3403, %v3459
    %v3476 = vadd.f32 %v3404, %v3459
    %v3477 = vadd.f32 %v3405, %v3424
    %v3478 = vadd.f32 %v3406, %v3424
    %v3479 = vadd.f32 %v3407, %v3429
    %v3480 = vadd.f32 %v3408, %v3429
    %v3481 = vadd.f32 %v3409, %v3434
    %v3482 = vadd.f32 %v3410, %v3434
    %v3483 = vadd.f32 %v3411, %v3439
    %v3484 = vadd.f32 %v3412, %v3439
    %v3485 = vadd.f32 %v3413, %v3444
    %v3486 = vadd.f32 %v3414, %v3444
    %v3487 = vadd.f32 %v3415, %v3449
    %v3488 = vadd.f32 %v3416, %v3449
    %v3489 = vadd.f32 %v3417, %v3454
    %v3490 = vadd.f32 %v3418, %v3454
    %v3491 = vadd.f32 %v3419, %v3459
    %v3492 = vadd.f32 %v3420, %v3459
    %v3493 = vmax.f32 %v3461, 0.0
    %v3494 = vmax.f32 %v3462, 0.0
    %v3495 = vmax.f32 %v3463, 0.0
    %v3496 = vmax.f32 %v3464, 0.0
    %v3497 = vmax.f32 %v3465, 0.0
    %v3498 = vmax.f32 %v3466, 0.0
    %v3499 = vmax.f32 %v3467, 0.0
    %v3500 = vmax.f32 %v3468, 0.0
    %v3501 = vmax.f32 %v3469, 0.0
    %v3502 = vmax.f32 %v3470, 0.0
    %v3503 = vmax.f32 %v3471, 0.0
    %v3504 = vmax.f32 %v3472, 0.0
    %v3505 = vmax.f32 %v3473, 0.0
    %v3506 = vmax.f32 %v3474, 0.0
    %v3507 = vmax.f32 %v3475, 0.0
    %v3508 = vmax.f32 %v3476, 0.0
    %v3509 = vmax.f32 %v3477, 0.0
    %v3510 = vmax.f32 %v3478, 0.0
    %v3511 = vmax.f32 %v3479, 0.0
    %v3512 = vmax.f32 %v3480, 0.0
    %v3513 = vmax.f32 %v3481, 0.0
    %v3514 = vmax.f32 %v3482, 0.0
    %v3515 = vmax.f32 %v3483, 0.0
    %v3516 = vmax.f32 %v3484, 0.0
    %v3517 = vmax.f32 %v3485, 0.0
    %v3518 = vmax.f32 %v3486, 0.0
    %v3519 = vmax.f32 %v3487, 0.0
    %v3520 = vmax.f32 %v3488, 0.0
    %v3521 = vmax.f32 %v3489, 0.0
    %v3522 = vmax.f32 %v3490, 0.0
    %v3523 = vmax.f32 %v3491, 0.0
    %v3524 = vmax.f32 %v3492, 0.0
    %v3525 = vunpack.c.h.b16 %v63
    %v3526 = vunpack.c.h.b16 %v65
    %v3527 = vunpack.c.h.b16 %v67
    %v3528 = vunpack.c.h.b16 %v69
    %v3529 = vunpack.c.h.b16 %v71
    %v3530 = vunpack.c.h.b16 %v73
    %v3531 = vunpack.c.h.b16 %v75
    %v3532 = vunpack.c.h.b16 %v77
    %v3533 = vpack.c.b16 %v3526, %v3525
    %v3534 = vpack.c.b16 %v3528, %v3527
    %v3535 = vpack.c.b16 %v3530, %v3529
    %v3536 = vpack.c.b16 %v3532, %v3531
    %3537 = vrot.lane.b32.xlu0 %v2638, 64
    %v3538 = vpop.permute.xlu0 %3537
    %3539 = vrot.lane.b32.xlu0 %v3533, 64
    %v3540 = vpop.permute.xlu0 %3539
    %3541 = vrot.lane.b32.xlu0 %v2639, 64
    %v3542 = vpop.permute.xlu0 %3541
    %3543 = vrot.lane.b32.xlu0 %v3534, 64
    %v3544 = vpop.permute.xlu0 %3543
    %3545 = vrot.lane.b32.xlu0 %v2640, 64
    %v3546 = vpop.permute.xlu0 %3545
    %3547 = vrot.lane.b32.xlu0 %v3535, 64
    %v3548 = vpop.permute.xlu0 %3547
    %3549 = vrot.lane.b32.xlu0 %v2641, 64
    %v3550 = vpop.permute.xlu0 %3549
    %3551 = vrot.lane.b32.xlu0 %v3536, 64
    %v3552 = vpop.permute.xlu0 %3551
    %vm3553 = vcmask 523264
    %v3554 = vsel %vm3553, %v3538, %v3540
    %v3555 = vsel %vm3553, %v3542, %v3544
    %v3556 = vsel %vm3553, %v3546, %v3548
    %v3557 = vsel %vm3553, %v3550, %v3552
    %3562 = vmatprep.subr.bf16.mxu0 %v2387
    %3563 = vmatpush1.bf16.msra.mxu0 %v2395
    %3564 = vmatprep.subr.bf16.mxu0 %v2383
    %3565 = vmatpush1.bf16.msra.mxu0 %v2394
    %3566 = vmatprep.subr.bf16.mxu0 %v2379
    %3567 = vmatpush1.bf16.msra.mxu0 %v2393
    %3568 = vmatprep.subr.bf16.mxu0 %v2375
    %3569 = vmatpush1.bf16.msra.mxu0 %v2392
    %3570 = vmatprep.subr.bf16.mxu0 %v2371
    %3571 = vmatpush1.bf16.msra.mxu0 %v2391
    %3572 = vmatprep.subr.bf16.mxu0 %v2367
    %3573 = vmatpush1.bf16.msra.mxu0 %v2390
    %3574 = vmatprep.subr.bf16.mxu0 %v2363
    %3575 = vmatpush1.bf16.msra.mxu0 %v2389
    %3576 = vmatprep.subr.bf16.mxu0 %v2359
    %3577 = vmatpush1.bf16.msra.mxu0 %v2388
    %3578 = vmatprep.subr.bf16.mxu0 0
    %3579 = vmatpush2.bf16.msra.mxu0 0
    %3580 = vmatprep.subr.bf16.mxu0 0
    %3581 = vmatpush2.bf16.msra.mxu0 0
    %3582 = vmatprep.subr.bf16.mxu0 0
    %3583 = vmatpush2.bf16.msra.mxu0 0
    %3584 = vmatprep.subr.bf16.mxu0 0
    %3585 = vmatpush2.bf16.msra.mxu0 0
    %3586 = vmatprep.subr.bf16.mxu0 0
    %3587 = vmatpush2.bf16.msra.mxu0 0
    %3588 = vmatprep.subr.bf16.mxu0 0
    %3589 = vmatpush2.bf16.msra.mxu0 0
    %3590 = vmatprep.subr.bf16.mxu0 0
    %3591 = vmatpush2.bf16.msra.mxu0 0
    %3592 = vmatprep.subr.bf16.mxu0 0
    %3593 = vmatpush2.bf16.msra.mxu0 0
    %3594 = vmatprep.mubr.bf16.mxu0 0
    %3595 = vmatmul.mubr.bf16.gmra.mxu0 %v3554
    %v3596 = vpop.f32.mrf.mxu0
    %v3597 = vadd.f32 0.0, %v3596
    %v3598 = vpop.f32.mrf.mxu0
    %v3599 = vadd.f32 0.0, %v3598
    %v3600 = vpop.f32.mrf.mxu0
    %v3601 = vadd.f32 0.0, %v3600
    %v3602 = vpop.f32.mrf.mxu0
    %v3603 = vadd.f32 0.0, %v3602
    %3604 = vmatprep.mubr.bf16.mxu0 0
    %3605 = vmatmul.mubr.bf16.gmra.mxu0 %v3555
    %v3606 = vpop.f32.mrf.mxu0
    %v3607 = vadd.f32 0.0, %v3606
    %v3608 = vpop.f32.mrf.mxu0
    %v3609 = vadd.f32 0.0, %v3608
    %v3610 = vpop.f32.mrf.mxu0
    %v3611 = vadd.f32 0.0, %v3610
    %v3612 = vpop.f32.mrf.mxu0
    %v3613 = vadd.f32 0.0, %v3612
    %3614 = vmatprep.mubr.bf16.mxu0 0
    %3615 = vmatmul.mubr.bf16.gmra.mxu0 %v3556
    %v3616 = vpop.f32.mrf.mxu0
    %v3617 = vadd.f32 0.0, %v3616
    %v3618 = vpop.f32.mrf.mxu0
    %v3619 = vadd.f32 0.0, %v3618
    %v3620 = vpop.f32.mrf.mxu0
    %v3621 = vadd.f32 0.0, %v3620
    %v3622 = vpop.f32.mrf.mxu0
    %v3623 = vadd.f32 0.0, %v3622
    %3624 = vmatprep.mubr.bf16.mxu0 0
    %3625 = vmatmul.mubr.bf16.gmra.mxu0 %v3557
    %v3626 = vpop.f32.mrf.mxu0
    %v3627 = vadd.f32 0.0, %v3626
    %v3628 = vpop.f32.mrf.mxu0
    %v3629 = vadd.f32 0.0, %v3628
    %v3630 = vpop.f32.mrf.mxu0
    %v3631 = vadd.f32 0.0, %v3630
    %v3632 = vpop.f32.mrf.mxu0
    %v3633 = vadd.f32 0.0, %v3632
    %3634 = vdwg.mxu0
    %3635 = vmatprep.subr.bf16.mxu0 %v2532
    %3636 = vmatpush1.bf16.msra.mxu0 %v2540
    %3637 = vmatprep.subr.bf16.mxu0 %v2528
    %3638 = vmatpush1.bf16.msra.mxu0 %v2539
    %3639 = vmatprep.subr.bf16.mxu0 %v2524
    %3640 = vmatpush1.bf16.msra.mxu0 %v2538
    %3641 = vmatprep.subr.bf16.mxu0 %v2520
    %3642 = vmatpush1.bf16.msra.mxu0 %v2537
    %3643 = vmatprep.subr.bf16.mxu0 %v2516
    %3644 = vmatpush1.bf16.msra.mxu0 %v2536
    %3645 = vmatprep.subr.bf16.mxu0 %v2512
    %3646 = vmatpush1.bf16.msra.mxu0 %v2535
    %3647 = vmatprep.subr.bf16.mxu0 %v2508
    %3648 = vmatpush1.bf16.msra.mxu0 %v2534
    %3649 = vmatprep.subr.bf16.mxu0 %v2504
    %3650 = vmatpush1.bf16.msra.mxu0 %v2533
    %3651 = vmatprep.subr.bf16.mxu0 0
    %3652 = vmatpush2.bf16.msra.mxu0 0
    %3653 = vmatprep.subr.bf16.mxu0 0
    %3654 = vmatpush2.bf16.msra.mxu0 0
    %3655 = vmatprep.subr.bf16.mxu0 0
    %3656 = vmatpush2.bf16.msra.mxu0 0
    %3657 = vmatprep.subr.bf16.mxu0 0
    %3658 = vmatpush2.bf16.msra.mxu0 0
    %3659 = vmatprep.subr.bf16.mxu0 0
    %3660 = vmatpush2.bf16.msra.mxu0 0
    %3661 = vmatprep.subr.bf16.mxu0 0
    %3662 = vmatpush2.bf16.msra.mxu0 0
    %3663 = vmatprep.subr.bf16.mxu0 0
    %3664 = vmatpush2.bf16.msra.mxu0 0
    %3665 = vmatprep.subr.bf16.mxu0 0
    %3666 = vmatpush2.bf16.msra.mxu0 0
    %3667 = vmatprep.mubr.bf16.mxu0 0
    %3668 = vmatmul.mubr.bf16.gmra.mxu0 %v3554
    %v3669 = vpop.f32.mrf.mxu0
    %v3670 = vadd.f32 0.0, %v3669
    %v3671 = vpop.f32.mrf.mxu0
    %v3672 = vadd.f32 0.0, %v3671
    %v3673 = vpop.f32.mrf.mxu0
    %v3674 = vadd.f32 0.0, %v3673
    %v3675 = vpop.f32.mrf.mxu0
    %v3676 = vadd.f32 0.0, %v3675
    %3677 = vmatprep.mubr.bf16.mxu0 0
    %3678 = vmatmul.mubr.bf16.gmra.mxu0 %v3555
    %v3679 = vpop.f32.mrf.mxu0
    %v3680 = vadd.f32 0.0, %v3679
    %v3681 = vpop.f32.mrf.mxu0
    %v3682 = vadd.f32 0.0, %v3681
    %v3683 = vpop.f32.mrf.mxu0
    %v3684 = vadd.f32 0.0, %v3683
    %v3685 = vpop.f32.mrf.mxu0
    %v3686 = vadd.f32 0.0, %v3685
    %3687 = vmatprep.mubr.bf16.mxu0 0
    %3688 = vmatmul.mubr.bf16.gmra.mxu0 %v3556
    %v3689 = vpop.f32.mrf.mxu0
    %v3690 = vadd.f32 0.0, %v3689
    %v3691 = vpop.f32.mrf.mxu0
    %v3692 = vadd.f32 0.0, %v3691
    %v3693 = vpop.f32.mrf.mxu0
    %v3694 = vadd.f32 0.0, %v3693
    %v3695 = vpop.f32.mrf.mxu0
    %v3696 = vadd.f32 0.0, %v3695
    %3697 = vmatprep.mubr.bf16.mxu0 0
    %3698 = vmatmul.mubr.bf16.gmra.mxu0 %v3557
    %v3699 = vpop.f32.mrf.mxu0
    %v3700 = vadd.f32 0.0, %v3699
    %v3701 = vpop.f32.mrf.mxu0
    %v3702 = vadd.f32 0.0, %v3701
    %v3703 = vpop.f32.mrf.mxu0
    %v3704 = vadd.f32 0.0, %v3703
    %v3705 = vpop.f32.mrf.mxu0
    %v3706 = vadd.f32 0.0, %v3705
    %3707 = vdwg.mxu0
    %vm3708 = vcmask 523264
    %v3710 = vsel %vm3708, %v2638, 0
    %v3713 = vsel %vm3708, %v2639, 0
    %v3716 = vsel %vm3708, %v2640, 0
    %v3719 = vsel %vm3708, %v2641, 0
    %3721 = vmatprep.subr.bf16.mxu0 0
    %3722 = vmatpush1.bf16.msra.mxu0 0
    %3723 = vmatprep.subr.bf16.mxu0 0
    %3724 = vmatpush1.bf16.msra.mxu0 0
    %3725 = vmatprep.subr.bf16.mxu0 0
    %3726 = vmatpush1.bf16.msra.mxu0 0
    %3727 = vmatprep.subr.bf16.mxu0 0
    %3728 = vmatpush1.bf16.msra.mxu0 0
    %3729 = vmatprep.subr.bf16.mxu0 %v2283
    %3730 = vmatpush1.bf16.msra.mxu0 %v2282
    %3731 = vmatprep.subr.bf16.mxu0 %v2281
    %3732 = vmatpush1.bf16.msra.mxu0 %v2280
    %3733 = vmatprep.subr.bf16.mxu0 %v2279
    %3734 = vmatpush1.bf16.msra.mxu0 %v2278
    %3735 = vmatprep.subr.bf16.mxu0 %v2277
    %3736 = vmatpush1.bf16.msra.mxu0 %v2276
    %3737 = vmatprep.subr.bf16.mxu0 0
    %3738 = vmatpush2.bf16.msra.mxu0 0
    %3739 = vmatprep.subr.bf16.mxu0 0
    %3740 = vmatpush2.bf16.msra.mxu0 0
    %3741 = vmatprep.subr.bf16.mxu0 0
    %3742 = vmatpush2.bf16.msra.mxu0 0
    %3743 = vmatprep.subr.bf16.mxu0 0
    %3744 = vmatpush2.bf16.msra.mxu0 0
    %3745 = vmatprep.subr.bf16.mxu0 0
    %3746 = vmatpush2.bf16.msra.mxu0 0
    %3747 = vmatprep.subr.bf16.mxu0 0
    %3748 = vmatpush2.bf16.msra.mxu0 0
    %3749 = vmatprep.subr.bf16.mxu0 0
    %3750 = vmatpush2.bf16.msra.mxu0 0
    %3751 = vmatprep.subr.bf16.mxu0 0
    %3752 = vmatpush2.bf16.msra.mxu0 0
    %3753 = vmatprep.mubr.bf16.mxu0 0
    %3754 = vmatmul.mubr.bf16.gmra.mxu0 %v3710
    %v3755 = vpop.f32.mrf.mxu0
    %v3756 = vadd.f32 %v3597, %v3755
    %v3757 = vpop.f32.mrf.mxu0
    %v3758 = vadd.f32 %v3599, %v3757
    %v3759 = vpop.f32.mrf.mxu0
    %v3760 = vadd.f32 %v3601, %v3759
    %v3761 = vpop.f32.mrf.mxu0
    %v3762 = vadd.f32 %v3603, %v3761
    %3763 = vmatprep.mubr.bf16.mxu0 0
    %3764 = vmatmul.mubr.bf16.gmra.mxu0 %v3713
    %v3765 = vpop.f32.mrf.mxu0
    %v3766 = vadd.f32 %v3607, %v3765
    %v3767 = vpop.f32.mrf.mxu0
    %v3768 = vadd.f32 %v3609, %v3767
    %v3769 = vpop.f32.mrf.mxu0
    %v3770 = vadd.f32 %v3611, %v3769
    %v3771 = vpop.f32.mrf.mxu0
    %v3772 = vadd.f32 %v3613, %v3771
    %3773 = vmatprep.mubr.bf16.mxu0 0
    %3774 = vmatmul.mubr.bf16.gmra.mxu0 %v3716
    %v3775 = vpop.f32.mrf.mxu0
    %v3776 = vadd.f32 %v3617, %v3775
    %v3777 = vpop.f32.mrf.mxu0
    %v3778 = vadd.f32 %v3619, %v3777
    %v3779 = vpop.f32.mrf.mxu0
    %v3780 = vadd.f32 %v3621, %v3779
    %v3781 = vpop.f32.mrf.mxu0
    %v3782 = vadd.f32 %v3623, %v3781
    %3783 = vmatprep.mubr.bf16.mxu0 0
    %3784 = vmatmul.mubr.bf16.gmra.mxu0 %v3719
    %v3785 = vpop.f32.mrf.mxu0
    %v3786 = vadd.f32 %v3627, %v3785
    %v3787 = vpop.f32.mrf.mxu0
    %v3788 = vadd.f32 %v3629, %v3787
    %v3789 = vpop.f32.mrf.mxu0
    %v3790 = vadd.f32 %v3631, %v3789
    %v3791 = vpop.f32.mrf.mxu0
    %v3792 = vadd.f32 %v3633, %v3791
    %3793 = vdwg.mxu0
    %3794 = vmatprep.subr.bf16.mxu0 0
    %3795 = vmatpush1.bf16.msra.mxu0 0
    %3796 = vmatprep.subr.bf16.mxu0 0
    %3797 = vmatpush1.bf16.msra.mxu0 0
    %3798 = vmatprep.subr.bf16.mxu0 0
    %3799 = vmatpush1.bf16.msra.mxu0 0
    %3800 = vmatprep.subr.bf16.mxu0 0
    %3801 = vmatpush1.bf16.msra.mxu0 0
    %3802 = vmatprep.subr.bf16.mxu0 %v2299
    %3803 = vmatpush1.bf16.msra.mxu0 %v2298
    %3804 = vmatprep.subr.bf16.mxu0 %v2297
    %3805 = vmatpush1.bf16.msra.mxu0 %v2296
    %3806 = vmatprep.subr.bf16.mxu0 %v2295
    %3807 = vmatpush1.bf16.msra.mxu0 %v2294
    %3808 = vmatprep.subr.bf16.mxu0 %v2293
    %3809 = vmatpush1.bf16.msra.mxu0 %v2292
    %3810 = vmatprep.subr.bf16.mxu0 0
    %3811 = vmatpush2.bf16.msra.mxu0 0
    %3812 = vmatprep.subr.bf16.mxu0 0
    %3813 = vmatpush2.bf16.msra.mxu0 0
    %3814 = vmatprep.subr.bf16.mxu0 0
    %3815 = vmatpush2.bf16.msra.mxu0 0
    %3816 = vmatprep.subr.bf16.mxu0 0
    %3817 = vmatpush2.bf16.msra.mxu0 0
    %3818 = vmatprep.subr.bf16.mxu0 0
    %3819 = vmatpush2.bf16.msra.mxu0 0
    %3820 = vmatprep.subr.bf16.mxu0 0
    %3821 = vmatpush2.bf16.msra.mxu0 0
    %3822 = vmatprep.subr.bf16.mxu0 0
    %3823 = vmatpush2.bf16.msra.mxu0 0
    %3824 = vmatprep.subr.bf16.mxu0 0
    %3825 = vmatpush2.bf16.msra.mxu0 0
    %3826 = vmatprep.mubr.bf16.mxu0 0
    %3827 = vmatmul.mubr.bf16.gmra.mxu0 %v3710
    %v3828 = vpop.f32.mrf.mxu0
    %v3829 = vadd.f32 %v3670, %v3828
    %v3830 = vpop.f32.mrf.mxu0
    %v3831 = vadd.f32 %v3672, %v3830
    %v3832 = vpop.f32.mrf.mxu0
    %v3833 = vadd.f32 %v3674, %v3832
    %v3834 = vpop.f32.mrf.mxu0
    %v3835 = vadd.f32 %v3676, %v3834
    %3836 = vmatprep.mubr.bf16.mxu0 0
    %3837 = vmatmul.mubr.bf16.gmra.mxu0 %v3713
    %v3838 = vpop.f32.mrf.mxu0
    %v3839 = vadd.f32 %v3680, %v3838
    %v3840 = vpop.f32.mrf.mxu0
    %v3841 = vadd.f32 %v3682, %v3840
    %v3842 = vpop.f32.mrf.mxu0
    %v3843 = vadd.f32 %v3684, %v3842
    %v3844 = vpop.f32.mrf.mxu0
    %v3845 = vadd.f32 %v3686, %v3844
    %3846 = vmatprep.mubr.bf16.mxu0 0
    %3847 = vmatmul.mubr.bf16.gmra.mxu0 %v3716
    %v3848 = vpop.f32.mrf.mxu0
    %v3849 = vadd.f32 %v3690, %v3848
    %v3850 = vpop.f32.mrf.mxu0
    %v3851 = vadd.f32 %v3692, %v3850
    %v3852 = vpop.f32.mrf.mxu0
    %v3853 = vadd.f32 %v3694, %v3852
    %v3854 = vpop.f32.mrf.mxu0
    %v3855 = vadd.f32 %v3696, %v3854
    %3856 = vmatprep.mubr.bf16.mxu0 0
    %3857 = vmatmul.mubr.bf16.gmra.mxu0 %v3719
    %v3858 = vpop.f32.mrf.mxu0
    %v3859 = vadd.f32 %v3700, %v3858
    %v3860 = vpop.f32.mrf.mxu0
    %v3861 = vadd.f32 %v3702, %v3860
    %v3862 = vpop.f32.mrf.mxu0
    %v3863 = vadd.f32 %v3704, %v3862
    %v3864 = vpop.f32.mrf.mxu0
    %v3865 = vadd.f32 %v3706, %v3864
    %3866 = vdwg.mxu0
    %3867 = vrot.lane.b32.xlu0 %v63, 64
    %v3868 = vpop.permute.xlu0 %3867
    %3869 = vrot.lane.b32.xlu0 %v64, 64
    %v3870 = vpop.permute.xlu0 %3869
    %3871 = vrot.lane.b32.xlu0 %v65, 64
    %v3872 = vpop.permute.xlu0 %3871
    %3873 = vrot.lane.b32.xlu0 %v66, 64
    %v3874 = vpop.permute.xlu0 %3873
    %3875 = vrot.lane.b32.xlu0 %v67, 64
    %v3876 = vpop.permute.xlu0 %3875
    %3877 = vrot.lane.b32.xlu0 %v68, 64
    %v3878 = vpop.permute.xlu0 %3877
    %3879 = vrot.lane.b32.xlu0 %v69, 64
    %v3880 = vpop.permute.xlu0 %3879
    %3881 = vrot.lane.b32.xlu0 %v70, 64
    %v3882 = vpop.permute.xlu0 %3881
    %3883 = vrot.lane.b32.xlu0 %v71, 64
    %v3884 = vpop.permute.xlu0 %3883
    %3885 = vrot.lane.b32.xlu0 %v72, 64
    %v3886 = vpop.permute.xlu0 %3885
    %3887 = vrot.lane.b32.xlu0 %v73, 64
    %v3888 = vpop.permute.xlu0 %3887
    %3889 = vrot.lane.b32.xlu0 %v74, 64
    %v3890 = vpop.permute.xlu0 %3889
    %3891 = vrot.lane.b32.xlu0 %v75, 64
    %v3892 = vpop.permute.xlu0 %3891
    %3893 = vrot.lane.b32.xlu0 %v76, 64
    %v3894 = vpop.permute.xlu0 %3893
    %3895 = vrot.lane.b32.xlu0 %v77, 64
    %v3896 = vpop.permute.xlu0 %3895
    %3897 = vrot.lane.b32.xlu0 %v78, 64
    %v3898 = vpop.permute.xlu0 %3897
    %v3899 = vrot.slane %v3868, 4
    %v3900 = vrot.slane %v3872, 4
    %v3901 = vrot.slane %v3876, 4
    %v3902 = vrot.slane %v3880, 4
    %v3903 = vrot.slane %v3884, 4
    %v3904 = vrot.slane %v3888, 4
    %v3905 = vrot.slane %v3892, 4
    %v3906 = vrot.slane %v3896, 4
    %v3907 = vsel %vm3553, %v3899, %v3870
    %v3908 = vsel %vm3553, %v3900, %v3874
    %v3909 = vsel %vm3553, %v3901, %v3878
    %v3910 = vsel %vm3553, %v3902, %v3882
    %v3911 = vsel %vm3553, %v3903, %v3886
    %v3912 = vsel %vm3553, %v3904, %v3890
    %v3913 = vsel %vm3553, %v3905, %v3894
    %v3914 = vsel %vm3553, %v3906, %v3898
    %v3915 = vunpack.c.l.b16 %v3907
    %v3916 = vunpack.c.l.b16 %v3908
    %v3917 = vunpack.c.l.b16 %v3909
    %v3918 = vunpack.c.l.b16 %v3910
    %v3919 = vunpack.c.l.b16 %v3911
    %v3920 = vunpack.c.l.b16 %v3912
    %v3921 = vunpack.c.l.b16 %v3913
    %v3922 = vunpack.c.l.b16 %v3914
    %v3923 = vpack.c.b16 %v3916, %v3915
    %v3924 = vpack.c.b16 %v3918, %v3917
    %v3925 = vpack.c.b16 %v3920, %v3919
    %v3926 = vpack.c.b16 %v3922, %v3921
    %3931 = vmatprep.subr.bf16.mxu0 %v2847
    %3932 = vmatpush1.bf16.msra.mxu0 %v2855
    %3933 = vmatprep.subr.bf16.mxu0 %v2843
    %3934 = vmatpush1.bf16.msra.mxu0 %v2854
    %3935 = vmatprep.subr.bf16.mxu0 %v2839
    %3936 = vmatpush1.bf16.msra.mxu0 %v2853
    %3937 = vmatprep.subr.bf16.mxu0 %v2835
    %3938 = vmatpush1.bf16.msra.mxu0 %v2852
    %3939 = vmatprep.subr.bf16.mxu0 %v2831
    %3940 = vmatpush1.bf16.msra.mxu0 %v2851
    %3941 = vmatprep.subr.bf16.mxu0 %v2827
    %3942 = vmatpush1.bf16.msra.mxu0 %v2850
    %3943 = vmatprep.subr.bf16.mxu0 %v2823
    %3944 = vmatpush1.bf16.msra.mxu0 %v2849
    %3945 = vmatprep.subr.bf16.mxu0 %v2819
    %3946 = vmatpush1.bf16.msra.mxu0 %v2848
    %3947 = vmatprep.subr.bf16.mxu0 0
    %3948 = vmatpush2.bf16.msra.mxu0 0
    %3949 = vmatprep.subr.bf16.mxu0 0
    %3950 = vmatpush2.bf16.msra.mxu0 0
    %3951 = vmatprep.subr.bf16.mxu0 0
    %3952 = vmatpush2.bf16.msra.mxu0 0
    %3953 = vmatprep.subr.bf16.mxu0 0
    %3954 = vmatpush2.bf16.msra.mxu0 0
    %3955 = vmatprep.subr.bf16.mxu0 0
    %3956 = vmatpush2.bf16.msra.mxu0 0
    %3957 = vmatprep.subr.bf16.mxu0 0
    %3958 = vmatpush2.bf16.msra.mxu0 0
    %3959 = vmatprep.subr.bf16.mxu0 0
    %3960 = vmatpush2.bf16.msra.mxu0 0
    %3961 = vmatprep.subr.bf16.mxu0 0
    %3962 = vmatpush2.bf16.msra.mxu0 0
    %3963 = vmatprep.mubr.bf16.mxu0 0
    %3964 = vmatmul.mubr.bf16.gmra.mxu0 %v3923
    %v3965 = vpop.f32.mrf.mxu0
    %v3966 = vadd.f32 0.0, %v3965
    %v3967 = vpop.f32.mrf.mxu0
    %v3968 = vadd.f32 0.0, %v3967
    %v3969 = vpop.f32.mrf.mxu0
    %v3970 = vadd.f32 0.0, %v3969
    %v3971 = vpop.f32.mrf.mxu0
    %v3972 = vadd.f32 0.0, %v3971
    %3973 = vmatprep.mubr.bf16.mxu0 0
    %3974 = vmatmul.mubr.bf16.gmra.mxu0 %v3924
    %v3975 = vpop.f32.mrf.mxu0
    %v3976 = vadd.f32 0.0, %v3975
    %v3977 = vpop.f32.mrf.mxu0
    %v3978 = vadd.f32 0.0, %v3977
    %v3979 = vpop.f32.mrf.mxu0
    %v3980 = vadd.f32 0.0, %v3979
    %v3981 = vpop.f32.mrf.mxu0
    %v3982 = vadd.f32 0.0, %v3981
    %3983 = vmatprep.mubr.bf16.mxu0 0
    %3984 = vmatmul.mubr.bf16.gmra.mxu0 %v3925
    %v3985 = vpop.f32.mrf.mxu0
    %v3986 = vadd.f32 0.0, %v3985
    %v3987 = vpop.f32.mrf.mxu0
    %v3988 = vadd.f32 0.0, %v3987
    %v3989 = vpop.f32.mrf.mxu0
    %v3990 = vadd.f32 0.0, %v3989
    %v3991 = vpop.f32.mrf.mxu0
    %v3992 = vadd.f32 0.0, %v3991
    %3993 = vmatprep.mubr.bf16.mxu0 0
    %3994 = vmatmul.mubr.bf16.gmra.mxu0 %v3926
    %v3995 = vpop.f32.mrf.mxu0
    %v3996 = vadd.f32 0.0, %v3995
    %v3997 = vpop.f32.mrf.mxu0
    %v3998 = vadd.f32 0.0, %v3997
    %v3999 = vpop.f32.mrf.mxu0
    %v4000 = vadd.f32 0.0, %v3999
    %v4001 = vpop.f32.mrf.mxu0
    %v4002 = vadd.f32 0.0, %v4001
    %4003 = vdwg.mxu0
    %4004 = vmatprep.subr.bf16.mxu0 %v2976
    %4005 = vmatpush1.bf16.msra.mxu0 %v2984
    %4006 = vmatprep.subr.bf16.mxu0 %v2972
    %4007 = vmatpush1.bf16.msra.mxu0 %v2983
    %4008 = vmatprep.subr.bf16.mxu0 %v2968
    %4009 = vmatpush1.bf16.msra.mxu0 %v2982
    %4010 = vmatprep.subr.bf16.mxu0 %v2964
    %4011 = vmatpush1.bf16.msra.mxu0 %v2981
    %4012 = vmatprep.subr.bf16.mxu0 %v2960
    %4013 = vmatpush1.bf16.msra.mxu0 %v2980
    %4014 = vmatprep.subr.bf16.mxu0 %v2956
    %4015 = vmatpush1.bf16.msra.mxu0 %v2979
    %4016 = vmatprep.subr.bf16.mxu0 %v2952
    %4017 = vmatpush1.bf16.msra.mxu0 %v2978
    %4018 = vmatprep.subr.bf16.mxu0 %v2948
    %4019 = vmatpush1.bf16.msra.mxu0 %v2977
    %4020 = vmatprep.subr.bf16.mxu0 0
    %4021 = vmatpush2.bf16.msra.mxu0 0
    %4022 = vmatprep.subr.bf16.mxu0 0
    %4023 = vmatpush2.bf16.msra.mxu0 0
    %4024 = vmatprep.subr.bf16.mxu0 0
    %4025 = vmatpush2.bf16.msra.mxu0 0
    %4026 = vmatprep.subr.bf16.mxu0 0
    %4027 = vmatpush2.bf16.msra.mxu0 0
    %4028 = vmatprep.subr.bf16.mxu0 0
    %4029 = vmatpush2.bf16.msra.mxu0 0
    %4030 = vmatprep.subr.bf16.mxu0 0
    %4031 = vmatpush2.bf16.msra.mxu0 0
    %4032 = vmatprep.subr.bf16.mxu0 0
    %4033 = vmatpush2.bf16.msra.mxu0 0
    %4034 = vmatprep.subr.bf16.mxu0 0
    %4035 = vmatpush2.bf16.msra.mxu0 0
    %4036 = vmatprep.mubr.bf16.mxu0 0
    %4037 = vmatmul.mubr.bf16.gmra.mxu0 %v3923
    %v4038 = vpop.f32.mrf.mxu0
    %v4039 = vadd.f32 0.0, %v4038
    %v4040 = vpop.f32.mrf.mxu0
    %v4041 = vadd.f32 0.0, %v4040
    %v4042 = vpop.f32.mrf.mxu0
    %v4043 = vadd.f32 0.0, %v4042
    %v4044 = vpop.f32.mrf.mxu0
    %v4045 = vadd.f32 0.0, %v4044
    %4046 = vmatprep.mubr.bf16.mxu0 0
    %4047 = vmatmul.mubr.bf16.gmra.mxu0 %v3924
    %v4048 = vpop.f32.mrf.mxu0
    %v4049 = vadd.f32 0.0, %v4048
    %v4050 = vpop.f32.mrf.mxu0
    %v4051 = vadd.f32 0.0, %v4050
    %v4052 = vpop.f32.mrf.mxu0
    %v4053 = vadd.f32 0.0, %v4052
    %v4054 = vpop.f32.mrf.mxu0
    %v4055 = vadd.f32 0.0, %v4054
    %4056 = vmatprep.mubr.bf16.mxu0 0
    %4057 = vmatmul.mubr.bf16.gmra.mxu0 %v3925
    %v4058 = vpop.f32.mrf.mxu0
    %v4059 = vadd.f32 0.0, %v4058
    %v4060 = vpop.f32.mrf.mxu0
    %v4061 = vadd.f32 0.0, %v4060
    %v4062 = vpop.f32.mrf.mxu0
    %v4063 = vadd.f32 0.0, %v4062
    %v4064 = vpop.f32.mrf.mxu0
    %v4065 = vadd.f32 0.0, %v4064
    %4066 = vmatprep.mubr.bf16.mxu0 0
    %4067 = vmatmul.mubr.bf16.gmra.mxu0 %v3926
    %v4068 = vpop.f32.mrf.mxu0
    %v4069 = vadd.f32 0.0, %v4068
    %v4070 = vpop.f32.mrf.mxu0
    %v4071 = vadd.f32 0.0, %v4070
    %v4072 = vpop.f32.mrf.mxu0
    %v4073 = vadd.f32 0.0, %v4072
    %v4074 = vpop.f32.mrf.mxu0
    %v4075 = vadd.f32 0.0, %v4074
    %4076 = vdwg.mxu0
    %v4077 = vadd.f32 %v3756, %v3966
    %v4078 = vadd.f32 %v3758, %v3968
    %v4079 = vadd.f32 %v3760, %v3970
    %v4080 = vadd.f32 %v3762, %v3972
    %v4081 = vadd.f32 %v3766, %v3976
    %v4082 = vadd.f32 %v3768, %v3978
    %v4083 = vadd.f32 %v3770, %v3980
    %v4084 = vadd.f32 %v3772, %v3982
    %v4085 = vadd.f32 %v3776, %v3986
    %v4086 = vadd.f32 %v3778, %v3988
    %v4087 = vadd.f32 %v3780, %v3990
    %v4088 = vadd.f32 %v3782, %v3992
    %v4089 = vadd.f32 %v3786, %v3996
    %v4090 = vadd.f32 %v3788, %v3998
    %v4091 = vadd.f32 %v3790, %v4000
    %v4092 = vadd.f32 %v3792, %v4002
    %v4093 = vadd.f32 %v3829, %v4039
    %v4094 = vadd.f32 %v3831, %v4041
    %v4095 = vadd.f32 %v3833, %v4043
    %v4096 = vadd.f32 %v3835, %v4045
    %v4097 = vadd.f32 %v3839, %v4049
    %v4098 = vadd.f32 %v3841, %v4051
    %v4099 = vadd.f32 %v3843, %v4053
    %v4100 = vadd.f32 %v3845, %v4055
    %v4101 = vadd.f32 %v3849, %v4059
    %v4102 = vadd.f32 %v3851, %v4061
    %v4103 = vadd.f32 %v3853, %v4063
    %v4104 = vadd.f32 %v3855, %v4065
    %v4105 = vadd.f32 %v3859, %v4069
    %v4106 = vadd.f32 %v3861, %v4071
    %v4107 = vadd.f32 %v3863, %v4073
    %v4108 = vadd.f32 %v3865, %v4075
    %v4109 = vunpack.c.h.b16 %v64
    %v4110 = vunpack.c.h.b16 %v66
    %v4111 = vunpack.c.h.b16 %v68
    %v4112 = vunpack.c.h.b16 %v70
    %v4113 = vunpack.c.h.b16 %v72
    %v4114 = vunpack.c.h.b16 %v74
    %v4115 = vunpack.c.h.b16 %v76
    %v4116 = vunpack.c.h.b16 %v78
    %v4117 = vpack.c.b16 %v4110, %v4109
    %v4118 = vpack.c.b16 %v4112, %v4111
    %v4119 = vpack.c.b16 %v4114, %v4113
    %v4120 = vpack.c.b16 %v4116, %v4115
    %4121 = vrot.lane.b32.xlu0 %v2808, 64
    %v4122 = vpop.permute.xlu0 %4121
    %4123 = vrot.lane.b32.xlu0 %v4117, 64
    %v4124 = vpop.permute.xlu0 %4123
    %4125 = vrot.lane.b32.xlu0 %v2809, 64
    %v4126 = vpop.permute.xlu0 %4125
    %4127 = vrot.lane.b32.xlu0 %v4118, 64
    %v4128 = vpop.permute.xlu0 %4127
    %4129 = vrot.lane.b32.xlu0 %v2810, 64
    %v4130 = vpop.permute.xlu0 %4129
    %4131 = vrot.lane.b32.xlu0 %v4119, 64
    %v4132 = vpop.permute.xlu0 %4131
    %4133 = vrot.lane.b32.xlu0 %v2811, 64
    %v4134 = vpop.permute.xlu0 %4133
    %4135 = vrot.lane.b32.xlu0 %v4120, 64
    %v4136 = vpop.permute.xlu0 %4135
    %v4137 = vsel %vm3553, %v4122, %v4124
    %v4138 = vsel %vm3553, %v4126, %v4128
    %v4139 = vsel %vm3553, %v4130, %v4132
    %v4140 = vsel %vm3553, %v4134, %v4136
    %4145 = vmatprep.subr.bf16.mxu0 %v3161
    %4146 = vmatpush1.bf16.msra.mxu0 %v3170
    %4147 = vmatprep.subr.bf16.mxu0 %v3157
    %4148 = vmatpush1.bf16.msra.mxu0 %v3169
    %4149 = vmatprep.subr.bf16.mxu0 %v3153
    %4150 = vmatpush1.bf16.msra.mxu0 %v3168
    %4151 = vmatprep.subr.bf16.mxu0 %v3149
    %4152 = vmatpush1.bf16.msra.mxu0 %v3167
    %4153 = vmatprep.subr.bf16.mxu0 %v3145
    %4154 = vmatpush1.bf16.msra.mxu0 %v3166
    %4155 = vmatprep.subr.bf16.mxu0 %v3141
    %4156 = vmatpush1.bf16.msra.mxu0 %v3165
    %4157 = vmatprep.subr.bf16.mxu0 %v3137
    %4158 = vmatpush1.bf16.msra.mxu0 %v3164
    %4159 = vmatprep.subr.bf16.mxu0 %v3133
    %4160 = vmatpush1.bf16.msra.mxu0 %v3163
    %4161 = vmatprep.subr.bf16.mxu0 0
    %4162 = vmatpush2.bf16.msra.mxu0 0
    %4163 = vmatprep.subr.bf16.mxu0 0
    %4164 = vmatpush2.bf16.msra.mxu0 0
    %4165 = vmatprep.subr.bf16.mxu0 0
    %4166 = vmatpush2.bf16.msra.mxu0 0
    %4167 = vmatprep.subr.bf16.mxu0 0
    %4168 = vmatpush2.bf16.msra.mxu0 0
    %4169 = vmatprep.subr.bf16.mxu0 0
    %4170 = vmatpush2.bf16.msra.mxu0 0
    %4171 = vmatprep.subr.bf16.mxu0 0
    %4172 = vmatpush2.bf16.msra.mxu0 0
    %4173 = vmatprep.subr.bf16.mxu0 0
    %4174 = vmatpush2.bf16.msra.mxu0 0
    %4175 = vmatprep.subr.bf16.mxu0 0
    %4176 = vmatpush2.bf16.msra.mxu0 0
    %4177 = vmatprep.mubr.bf16.mxu0 0
    %4178 = vmatmul.mubr.bf16.gmra.mxu0 %v4137
    %v4179 = vpop.f32.mrf.mxu0
    %v4180 = vadd.f32 0.0, %v4179
    %v4181 = vpop.f32.mrf.mxu0
    %v4182 = vadd.f32 0.0, %v4181
    %v4183 = vpop.f32.mrf.mxu0
    %v4184 = vadd.f32 0.0, %v4183
    %v4185 = vpop.f32.mrf.mxu0
    %v4186 = vadd.f32 0.0, %v4185
    %4187 = vmatprep.mubr.bf16.mxu0 0
    %4188 = vmatmul.mubr.bf16.gmra.mxu0 %v4138
    %v4189 = vpop.f32.mrf.mxu0
    %v4190 = vadd.f32 0.0, %v4189
    %v4191 = vpop.f32.mrf.mxu0
    %v4192 = vadd.f32 0.0, %v4191
    %v4193 = vpop.f32.mrf.mxu0
    %v4194 = vadd.f32 0.0, %v4193
    %v4195 = vpop.f32.mrf.mxu0
    %v4196 = vadd.f32 0.0, %v4195
    %4197 = vmatprep.mubr.bf16.mxu0 0
    %4198 = vmatmul.mubr.bf16.gmra.mxu0 %v4139
    %v4199 = vpop.f32.mrf.mxu0
    %v4200 = vadd.f32 0.0, %v4199
    %v4201 = vpop.f32.mrf.mxu0
    %v4202 = vadd.f32 0.0, %v4201
    %v4203 = vpop.f32.mrf.mxu0
    %v4204 = vadd.f32 0.0, %v4203
    %v4205 = vpop.f32.mrf.mxu0
    %v4206 = vadd.f32 0.0, %v4205
    %4207 = vmatprep.mubr.bf16.mxu0 0
    %4208 = vmatmul.mubr.bf16.gmra.mxu0 %v4140
    %v4209 = vpop.f32.mrf.mxu0
    %v4210 = vadd.f32 0.0, %v4209
    %v4211 = vpop.f32.mrf.mxu0
    %v4212 = vadd.f32 0.0, %v4211
    %v4213 = vpop.f32.mrf.mxu0
    %v4214 = vadd.f32 0.0, %v4213
    %v4215 = vpop.f32.mrf.mxu0
    %v4216 = vadd.f32 0.0, %v4215
    %4217 = vdwg.mxu0
    %4218 = vmatprep.subr.bf16.mxu0 %v3291
    %4219 = vmatpush1.bf16.msra.mxu0 %v3299
    %4220 = vmatprep.subr.bf16.mxu0 %v3287
    %4221 = vmatpush1.bf16.msra.mxu0 %v3298
    %4222 = vmatprep.subr.bf16.mxu0 %v3283
    %4223 = vmatpush1.bf16.msra.mxu0 %v3297
    %4224 = vmatprep.subr.bf16.mxu0 %v3279
    %4225 = vmatpush1.bf16.msra.mxu0 %v3296
    %4226 = vmatprep.subr.bf16.mxu0 %v3275
    %4227 = vmatpush1.bf16.msra.mxu0 %v3295
    %4228 = vmatprep.subr.bf16.mxu0 %v3271
    %4229 = vmatpush1.bf16.msra.mxu0 %v3294
    %4230 = vmatprep.subr.bf16.mxu0 %v3267
    %4231 = vmatpush1.bf16.msra.mxu0 %v3293
    %4232 = vmatprep.subr.bf16.mxu0 %v3263
    %4233 = vmatpush1.bf16.msra.mxu0 %v3292
    %4234 = vmatprep.subr.bf16.mxu0 0
    %4235 = vmatpush2.bf16.msra.mxu0 0
    %4236 = vmatprep.subr.bf16.mxu0 0
    %4237 = vmatpush2.bf16.msra.mxu0 0
    %4238 = vmatprep.subr.bf16.mxu0 0
    %4239 = vmatpush2.bf16.msra.mxu0 0
    %4240 = vmatprep.subr.bf16.mxu0 0
    %4241 = vmatpush2.bf16.msra.mxu0 0
    %4242 = vmatprep.subr.bf16.mxu0 0
    %4243 = vmatpush2.bf16.msra.mxu0 0
    %4244 = vmatprep.subr.bf16.mxu0 0
    %4245 = vmatpush2.bf16.msra.mxu0 0
    %4246 = vmatprep.subr.bf16.mxu0 0
    %4247 = vmatpush2.bf16.msra.mxu0 0
    %4248 = vmatprep.subr.bf16.mxu0 0
    %4249 = vmatpush2.bf16.msra.mxu0 0
    %4250 = vmatprep.mubr.bf16.mxu0 0
    %4251 = vmatmul.mubr.bf16.gmra.mxu0 %v4137
    %v4252 = vpop.f32.mrf.mxu0
    %v4253 = vadd.f32 0.0, %v4252
    %v4254 = vpop.f32.mrf.mxu0
    %v4255 = vadd.f32 0.0, %v4254
    %v4256 = vpop.f32.mrf.mxu0
    %v4257 = vadd.f32 0.0, %v4256
    %v4258 = vpop.f32.mrf.mxu0
    %v4259 = vadd.f32 0.0, %v4258
    %4260 = vmatprep.mubr.bf16.mxu0 0
    %4261 = vmatmul.mubr.bf16.gmra.mxu0 %v4138
    %v4262 = vpop.f32.mrf.mxu0
    %v4263 = vadd.f32 0.0, %v4262
    %v4264 = vpop.f32.mrf.mxu0
    %v4265 = vadd.f32 0.0, %v4264
    %v4266 = vpop.f32.mrf.mxu0
    %v4267 = vadd.f32 0.0, %v4266
    %v4268 = vpop.f32.mrf.mxu0
    %v4269 = vadd.f32 0.0, %v4268
    %4270 = vmatprep.mubr.bf16.mxu0 0
    %4271 = vmatmul.mubr.bf16.gmra.mxu0 %v4139
    %v4272 = vpop.f32.mrf.mxu0
    %v4273 = vadd.f32 0.0, %v4272
    %v4274 = vpop.f32.mrf.mxu0
    %v4275 = vadd.f32 0.0, %v4274
    %v4276 = vpop.f32.mrf.mxu0
    %v4277 = vadd.f32 0.0, %v4276
    %v4278 = vpop.f32.mrf.mxu0
    %v4279 = vadd.f32 0.0, %v4278
    %4280 = vmatprep.mubr.bf16.mxu0 0
    %4281 = vmatmul.mubr.bf16.gmra.mxu0 %v4140
    %v4282 = vpop.f32.mrf.mxu0
    %v4283 = vadd.f32 0.0, %v4282
    %v4284 = vpop.f32.mrf.mxu0
    %v4285 = vadd.f32 0.0, %v4284
    %v4286 = vpop.f32.mrf.mxu0
    %v4287 = vadd.f32 0.0, %v4286
    %v4288 = vpop.f32.mrf.mxu0
    %v4289 = vadd.f32 0.0, %v4288
    %4290 = vdwg.mxu0
    %v4291 = vadd.f32 %v4077, %v4180
    %v4292 = vadd.f32 %v4078, %v4182
    %v4293 = vadd.f32 %v4079, %v4184
    %v4294 = vadd.f32 %v4080, %v4186
    %v4295 = vadd.f32 %v4081, %v4190
    %v4296 = vadd.f32 %v4082, %v4192
    %v4297 = vadd.f32 %v4083, %v4194
    %v4298 = vadd.f32 %v4084, %v4196
    %v4299 = vadd.f32 %v4085, %v4200
    %v4300 = vadd.f32 %v4086, %v4202
    %v4301 = vadd.f32 %v4087, %v4204
    %v4302 = vadd.f32 %v4088, %v4206
    %v4303 = vadd.f32 %v4089, %v4210
    %v4304 = vadd.f32 %v4090, %v4212
    %v4305 = vadd.f32 %v4091, %v4214
    %v4306 = vadd.f32 %v4092, %v4216
    %v4307 = vadd.f32 %v4093, %v4253
    %v4308 = vadd.f32 %v4094, %v4255
    %v4309 = vadd.f32 %v4095, %v4257
    %v4310 = vadd.f32 %v4096, %v4259
    %v4311 = vadd.f32 %v4097, %v4263
    %v4312 = vadd.f32 %v4098, %v4265
    %v4313 = vadd.f32 %v4099, %v4267
    %v4314 = vadd.f32 %v4100, %v4269
    %v4315 = vadd.f32 %v4101, %v4273
    %v4316 = vadd.f32 %v4102, %v4275
    %v4317 = vadd.f32 %v4103, %v4277
    %v4318 = vadd.f32 %v4104, %v4279
    %v4319 = vadd.f32 %v4105, %v4283
    %v4320 = vadd.f32 %v4106, %v4285
    %v4321 = vadd.f32 %v4107, %v4287
    %v4322 = vadd.f32 %v4108, %v4289
    %v4323 = vrot.slane %v3870, 4
    %v4324 = vrot.slane %v3874, 4
    %v4325 = vrot.slane %v3878, 4
    %v4326 = vrot.slane %v3882, 4
    %v4327 = vrot.slane %v3886, 4
    %v4328 = vrot.slane %v3890, 4
    %v4329 = vrot.slane %v3894, 4
    %v4330 = vrot.slane %v3898, 4
    %v4331 = vunpack.c.l.b16 %v4323
    %v4332 = vunpack.c.l.b16 %v4324
    %v4333 = vunpack.c.l.b16 %v4325
    %v4334 = vunpack.c.l.b16 %v4326
    %v4335 = vunpack.c.l.b16 %v4327
    %v4336 = vunpack.c.l.b16 %v4328
    %v4337 = vunpack.c.l.b16 %v4329
    %v4338 = vunpack.c.l.b16 %v4330
    %v4339 = vpack.c.b16 %v4332, %v4331
    %v4340 = vpack.c.b16 %v4334, %v4333
    %v4341 = vpack.c.b16 %v4336, %v4335
    %v4342 = vpack.c.b16 %v4338, %v4337
    %4343 = vrot.lane.b32.xlu0 %v2268, 124
    %v4344 = vpop.permute.xlu0 %4343
    %4345 = vrot.lane.b32.xlu0 %v2269, 124
    %v4346 = vpop.permute.xlu0 %4345
    %4347 = vrot.lane.b32.xlu0 %v2270, 124
    %v4348 = vpop.permute.xlu0 %4347
    %4349 = vrot.lane.b32.xlu0 %v2271, 124
    %v4350 = vpop.permute.xlu0 %4349
    %4351 = vrot.lane.b32.xlu0 %v2272, 124
    %v4352 = vpop.permute.xlu0 %4351
    %4353 = vrot.lane.b32.xlu0 %v2273, 124
    %v4354 = vpop.permute.xlu0 %4353
    %4355 = vrot.lane.b32.xlu0 %v2274, 124
    %v4356 = vpop.permute.xlu0 %4355
    %4357 = vrot.lane.b32.xlu0 %v2275, 124
    %v4358 = vpop.permute.xlu0 %4357
    %vm4359 = vcmask 1014784
    %v4360 = vsel %vm4359, %v4344, %v4346
    %v4361 = vsel %vm4359, %v4348, %v4350
    %v4362 = vsel %vm4359, %v4352, %v4354
    %v4363 = vsel %vm4359, %v4356, %v4358
    %v4373 = vsel %vm3708, %v4339, 0
    %v4376 = vsel %vm3708, %v4340, 0
    %v4379 = vsel %vm3708, %v4341, 0
    %v4382 = vsel %vm3708, %v4342, 0
    %4384 = vmatprep.subr.bf16.mxu0 0
    %4385 = vmatpush1.bf16.msra.mxu0 0
    %4386 = vmatprep.subr.bf16.mxu0 0
    %4387 = vmatpush1.bf16.msra.mxu0 0
    %4388 = vmatprep.subr.bf16.mxu0 0
    %4389 = vmatpush1.bf16.msra.mxu0 0
    %4390 = vmatprep.subr.bf16.mxu0 0
    %4391 = vmatpush1.bf16.msra.mxu0 0
    %4392 = vmatprep.subr.bf16.mxu0 %v4358
    %4393 = vmatpush1.bf16.msra.mxu0 %v4363
    %4394 = vmatprep.subr.bf16.mxu0 %v4354
    %4395 = vmatpush1.bf16.msra.mxu0 %v4362
    %4396 = vmatprep.subr.bf16.mxu0 %v4350
    %4397 = vmatpush1.bf16.msra.mxu0 %v4361
    %4398 = vmatprep.subr.bf16.mxu0 %v4346
    %4399 = vmatpush1.bf16.msra.mxu0 %v4360
    %4400 = vmatprep.subr.bf16.mxu0 0
    %4401 = vmatpush2.bf16.msra.mxu0 0
    %4402 = vmatprep.subr.bf16.mxu0 0
    %4403 = vmatpush2.bf16.msra.mxu0 0
    %4404 = vmatprep.subr.bf16.mxu0 0
    %4405 = vmatpush2.bf16.msra.mxu0 0
    %4406 = vmatprep.subr.bf16.mxu0 0
    %4407 = vmatpush2.bf16.msra.mxu0 0
    %4408 = vmatprep.subr.bf16.mxu0 0
    %4409 = vmatpush2.bf16.msra.mxu0 0
    %4410 = vmatprep.subr.bf16.mxu0 0
    %4411 = vmatpush2.bf16.msra.mxu0 0
    %4412 = vmatprep.subr.bf16.mxu0 0
    %4413 = vmatpush2.bf16.msra.mxu0 0
    %4414 = vmatprep.subr.bf16.mxu0 0
    %4415 = vmatpush2.bf16.msra.mxu0 0
    %4416 = vmatprep.mubr.bf16.mxu0 0
    %4417 = vmatmul.mubr.bf16.gmra.mxu0 %v4373
    %v4418 = vpop.f32.mrf.mxu0
    %v4419 = vadd.f32 0.0, %v4418
    %v4420 = vpop.f32.mrf.mxu0
    %v4421 = vadd.f32 0.0, %v4420
    %v4422 = vpop.f32.mrf.mxu0
    %v4423 = vadd.f32 0.0, %v4422
    %v4424 = vpop.f32.mrf.mxu0
    %v4425 = vadd.f32 0.0, %v4424
    %4426 = vmatprep.mubr.bf16.mxu0 0
    %4427 = vmatmul.mubr.bf16.gmra.mxu0 %v4376
    %v4428 = vpop.f32.mrf.mxu0
    %v4429 = vadd.f32 0.0, %v4428
    %v4430 = vpop.f32.mrf.mxu0
    %v4431 = vadd.f32 0.0, %v4430
    %v4432 = vpop.f32.mrf.mxu0
    %v4433 = vadd.f32 0.0, %v4432
    %v4434 = vpop.f32.mrf.mxu0
    %v4435 = vadd.f32 0.0, %v4434
    %4436 = vmatprep.mubr.bf16.mxu0 0
    %4437 = vmatmul.mubr.bf16.gmra.mxu0 %v4379
    %v4438 = vpop.f32.mrf.mxu0
    %v4439 = vadd.f32 0.0, %v4438
    %v4440 = vpop.f32.mrf.mxu0
    %v4441 = vadd.f32 0.0, %v4440
    %v4442 = vpop.f32.mrf.mxu0
    %v4443 = vadd.f32 0.0, %v4442
    %v4444 = vpop.f32.mrf.mxu0
    %v4445 = vadd.f32 0.0, %v4444
    %4446 = vmatprep.mubr.bf16.mxu0 0
    %4447 = vmatmul.mubr.bf16.gmra.mxu0 %v4382
    %v4448 = vpop.f32.mrf.mxu0
    %v4449 = vadd.f32 0.0, %v4448
    %v4450 = vpop.f32.mrf.mxu0
    %v4451 = vadd.f32 0.0, %v4450
    %v4452 = vpop.f32.mrf.mxu0
    %v4453 = vadd.f32 0.0, %v4452
    %v4454 = vpop.f32.mrf.mxu0
    %v4455 = vadd.f32 0.0, %v4454
    %4456 = vdwg.mxu0
    %4457 = vrot.lane.b32.xlu0 %v2284, 124
    %v4458 = vpop.permute.xlu0 %4457
    %4459 = vrot.lane.b32.xlu0 %v2285, 124
    %v4460 = vpop.permute.xlu0 %4459
    %4461 = vrot.lane.b32.xlu0 %v2286, 124
    %v4462 = vpop.permute.xlu0 %4461
    %4463 = vrot.lane.b32.xlu0 %v2287, 124
    %v4464 = vpop.permute.xlu0 %4463
    %4465 = vrot.lane.b32.xlu0 %v2288, 124
    %v4466 = vpop.permute.xlu0 %4465
    %4467 = vrot.lane.b32.xlu0 %v2289, 124
    %v4468 = vpop.permute.xlu0 %4467
    %4469 = vrot.lane.b32.xlu0 %v2290, 124
    %v4470 = vpop.permute.xlu0 %4469
    %4471 = vrot.lane.b32.xlu0 %v2291, 124
    %v4472 = vpop.permute.xlu0 %4471
    %v4473 = vsel %vm4359, %v4458, %v4460
    %v4474 = vsel %vm4359, %v4462, %v4464
    %v4475 = vsel %vm4359, %v4466, %v4468
    %v4476 = vsel %vm4359, %v4470, %v4472
    %4485 = vmatprep.subr.bf16.mxu0 0
    %4486 = vmatpush1.bf16.msra.mxu0 0
    %4487 = vmatprep.subr.bf16.mxu0 0
    %4488 = vmatpush1.bf16.msra.mxu0 0
    %4489 = vmatprep.subr.bf16.mxu0 0
    %4490 = vmatpush1.bf16.msra.mxu0 0
    %4491 = vmatprep.subr.bf16.mxu0 0
    %4492 = vmatpush1.bf16.msra.mxu0 0
    %4493 = vmatprep.subr.bf16.mxu0 %v4472
    %4494 = vmatpush1.bf16.msra.mxu0 %v4476
    %4495 = vmatprep.subr.bf16.mxu0 %v4468
    %4496 = vmatpush1.bf16.msra.mxu0 %v4475
    %4497 = vmatprep.subr.bf16.mxu0 %v4464
    %4498 = vmatpush1.bf16.msra.mxu0 %v4474
    %4499 = vmatprep.subr.bf16.mxu0 %v4460
    %4500 = vmatpush1.bf16.msra.mxu0 %v4473
    %4501 = vmatprep.subr.bf16.mxu0 0
    %4502 = vmatpush2.bf16.msra.mxu0 0
    %4503 = vmatprep.subr.bf16.mxu0 0
    %4504 = vmatpush2.bf16.msra.mxu0 0
    %4505 = vmatprep.subr.bf16.mxu0 0
    %4506 = vmatpush2.bf16.msra.mxu0 0
    %4507 = vmatprep.subr.bf16.mxu0 0
    %4508 = vmatpush2.bf16.msra.mxu0 0
    %4509 = vmatprep.subr.bf16.mxu0 0
    %4510 = vmatpush2.bf16.msra.mxu0 0
    %4511 = vmatprep.subr.bf16.mxu0 0
    %4512 = vmatpush2.bf16.msra.mxu0 0
    %4513 = vmatprep.subr.bf16.mxu0 0
    %4514 = vmatpush2.bf16.msra.mxu0 0
    %4515 = vmatprep.subr.bf16.mxu0 0
    %4516 = vmatpush2.bf16.msra.mxu0 0
    %4517 = vmatprep.mubr.bf16.mxu0 0
    %4518 = vmatmul.mubr.bf16.gmra.mxu0 %v4373
    %v4519 = vpop.f32.mrf.mxu0
    %v4520 = vadd.f32 0.0, %v4519
    %v4521 = vpop.f32.mrf.mxu0
    %v4522 = vadd.f32 0.0, %v4521
    %v4523 = vpop.f32.mrf.mxu0
    %v4524 = vadd.f32 0.0, %v4523
    %v4525 = vpop.f32.mrf.mxu0
    %v4526 = vadd.f32 0.0, %v4525
    %4527 = vmatprep.mubr.bf16.mxu0 0
    %4528 = vmatmul.mubr.bf16.gmra.mxu0 %v4376
    %v4529 = vpop.f32.mrf.mxu0
    %v4530 = vadd.f32 0.0, %v4529
    %v4531 = vpop.f32.mrf.mxu0
    %v4532 = vadd.f32 0.0, %v4531
    %v4533 = vpop.f32.mrf.mxu0
    %v4534 = vadd.f32 0.0, %v4533
    %v4535 = vpop.f32.mrf.mxu0
    %v4536 = vadd.f32 0.0, %v4535
    %4537 = vmatprep.mubr.bf16.mxu0 0
    %4538 = vmatmul.mubr.bf16.gmra.mxu0 %v4379
    %v4539 = vpop.f32.mrf.mxu0
    %v4540 = vadd.f32 0.0, %v4539
    %v4541 = vpop.f32.mrf.mxu0
    %v4542 = vadd.f32 0.0, %v4541
    %v4543 = vpop.f32.mrf.mxu0
    %v4544 = vadd.f32 0.0, %v4543
    %v4545 = vpop.f32.mrf.mxu0
    %v4546 = vadd.f32 0.0, %v4545
    %4547 = vmatprep.mubr.bf16.mxu0 0
    %4548 = vmatmul.mubr.bf16.gmra.mxu0 %v4382
    %v4549 = vpop.f32.mrf.mxu0
    %v4550 = vadd.f32 0.0, %v4549
    %v4551 = vpop.f32.mrf.mxu0
    %v4552 = vadd.f32 0.0, %v4551
    %v4553 = vpop.f32.mrf.mxu0
    %v4554 = vadd.f32 0.0, %v4553
    %v4555 = vpop.f32.mrf.mxu0
    %v4556 = vadd.f32 0.0, %v4555
    %4557 = vdwg.mxu0
    %v4558 = vadd.f32 %v4291, %v4419
    %v4559 = vadd.f32 %v4292, %v4421
    %v4560 = vadd.f32 %v4293, %v4423
    %v4561 = vadd.f32 %v4294, %v4425
    %v4562 = vadd.f32 %v4295, %v4429
    %v4563 = vadd.f32 %v4296, %v4431
    %v4564 = vadd.f32 %v4297, %v4433
    %v4565 = vadd.f32 %v4298, %v4435
    %v4566 = vadd.f32 %v4299, %v4439
    %v4567 = vadd.f32 %v4300, %v4441
    %v4568 = vadd.f32 %v4301, %v4443
    %v4569 = vadd.f32 %v4302, %v4445
    %v4570 = vadd.f32 %v4303, %v4449
    %v4571 = vadd.f32 %v4304, %v4451
    %v4572 = vadd.f32 %v4305, %v4453
    %v4573 = vadd.f32 %v4306, %v4455
    %v4574 = vadd.f32 %v4307, %v4520
    %v4575 = vadd.f32 %v4308, %v4522
    %v4576 = vadd.f32 %v4309, %v4524
    %v4577 = vadd.f32 %v4310, %v4526
    %v4578 = vadd.f32 %v4311, %v4530
    %v4579 = vadd.f32 %v4312, %v4532
    %v4580 = vadd.f32 %v4313, %v4534
    %v4581 = vadd.f32 %v4314, %v4536
    %v4582 = vadd.f32 %v4315, %v4540
    %v4583 = vadd.f32 %v4316, %v4542
    %v4584 = vadd.f32 %v4317, %v4544
    %v4585 = vadd.f32 %v4318, %v4546
    %v4586 = vadd.f32 %v4319, %v4550
    %v4587 = vadd.f32 %v4320, %v4552
    %v4588 = vadd.f32 %v4321, %v4554
    %v4589 = vadd.f32 %v4322, %v4556
    %v4590 = vadd.f32 %v4558, %v3424
    %v4591 = vadd.f32 %v4559, %v3424
    %v4592 = vadd.f32 %v4560, %v3429
    %v4593 = vadd.f32 %v4561, %v3429
    %v4594 = vadd.f32 %v4562, %v3434
    %v4595 = vadd.f32 %v4563, %v3434
    %v4596 = vadd.f32 %v4564, %v3439
    %v4597 = vadd.f32 %v4565, %v3439
    %v4598 = vadd.f32 %v4566, %v3444
    %v4599 = vadd.f32 %v4567, %v3444
    %v4600 = vadd.f32 %v4568, %v3449
    %v4601 = vadd.f32 %v4569, %v3449
    %v4602 = vadd.f32 %v4570, %v3454
    %v4603 = vadd.f32 %v4571, %v3454
    %v4604 = vadd.f32 %v4572, %v3459
    %v4605 = vadd.f32 %v4573, %v3459
    %v4606 = vadd.f32 %v4574, %v3424
    %v4607 = vadd.f32 %v4575, %v3424
    %v4608 = vadd.f32 %v4576, %v3429
    %v4609 = vadd.f32 %v4577, %v3429
    %v4610 = vadd.f32 %v4578, %v3434
    %v4611 = vadd.f32 %v4579, %v3434
    %v4612 = vadd.f32 %v4580, %v3439
    %v4613 = vadd.f32 %v4581, %v3439
    %v4614 = vadd.f32 %v4582, %v3444
    %v4615 = vadd.f32 %v4583, %v3444
    %v4616 = vadd.f32 %v4584, %v3449
    %v4617 = vadd.f32 %v4585, %v3449
    %v4618 = vadd.f32 %v4586, %v3454
    %v4619 = vadd.f32 %v4587, %v3454
    %v4620 = vadd.f32 %v4588, %v3459
    %v4621 = vadd.f32 %v4589, %v3459
    %v4622 = vmax.f32 %v4590, 0.0
    %v4623 = vmax.f32 %v4591, 0.0
    %v4624 = vmax.f32 %v4592, 0.0
    %v4625 = vmax.f32 %v4593, 0.0
    %v4626 = vmax.f32 %v4594, 0.0
    %v4627 = vmax.f32 %v4595, 0.0
    %v4628 = vmax.f32 %v4596, 0.0
    %v4629 = vmax.f32 %v4597, 0.0
    %v4630 = vmax.f32 %v4598, 0.0
    %v4631 = vmax.f32 %v4599, 0.0
    %v4632 = vmax.f32 %v4600, 0.0
    %v4633 = vmax.f32 %v4601, 0.0
    %v4634 = vmax.f32 %v4602, 0.0
    %v4635 = vmax.f32 %v4603, 0.0
    %v4636 = vmax.f32 %v4604, 0.0
    %v4637 = vmax.f32 %v4605, 0.0
    %v4638 = vmax.f32 %v4606, 0.0
    %v4639 = vmax.f32 %v4607, 0.0
    %v4640 = vmax.f32 %v4608, 0.0
    %v4641 = vmax.f32 %v4609, 0.0
    %v4642 = vmax.f32 %v4610, 0.0
    %v4643 = vmax.f32 %v4611, 0.0
    %v4644 = vmax.f32 %v4612, 0.0
    %v4645 = vmax.f32 %v4613, 0.0
    %v4646 = vmax.f32 %v4614, 0.0
    %v4647 = vmax.f32 %v4615, 0.0
    %v4648 = vmax.f32 %v4616, 0.0
    %v4649 = vmax.f32 %v4617, 0.0
    %v4650 = vmax.f32 %v4618, 0.0
    %v4651 = vmax.f32 %v4619, 0.0
    %v4652 = vmax.f32 %v4620, 0.0
    %v4653 = vmax.f32 %v4621, 0.0
    %vm4654 = vcmask 318464
    %v4655 = vsel %vm4654, %v3494, 0.0
    %v4656 = vadd.f32 %v3493, %v4655
    %4657 = vadd.xlane.f32.xlu0 %v4656
    %v4658 = vpop.xlane.xlu0 %4657
    %v4659 = vsel %vm4654, %v3496, 0.0
    %v4660 = vadd.f32 %v3495, %v4659
    %4661 = vadd.xlane.f32.xlu0 %v4660
    %v4662 = vpop.xlane.xlu0 %4661
    %v4663 = vsel %vm4654, %v3498, 0.0
    %v4664 = vadd.f32 %v3497, %v4663
    %4665 = vadd.xlane.f32.xlu0 %v4664
    %v4666 = vpop.xlane.xlu0 %4665
    %v4667 = vsel %vm4654, %v3500, 0.0
    %v4668 = vadd.f32 %v3499, %v4667
    %4669 = vadd.xlane.f32.xlu0 %v4668
    %v4670 = vpop.xlane.xlu0 %4669
    %v4671 = vsel %vm4654, %v3502, 0.0
    %v4672 = vadd.f32 %v3501, %v4671
    %4673 = vadd.xlane.f32.xlu0 %v4672
    %v4674 = vpop.xlane.xlu0 %4673
    %v4675 = vsel %vm4654, %v3504, 0.0
    %v4676 = vadd.f32 %v3503, %v4675
    %4677 = vadd.xlane.f32.xlu0 %v4676
    %v4678 = vpop.xlane.xlu0 %4677
    %v4679 = vsel %vm4654, %v3506, 0.0
    %v4680 = vadd.f32 %v3505, %v4679
    %4681 = vadd.xlane.f32.xlu0 %v4680
    %v4682 = vpop.xlane.xlu0 %4681
    %v4683 = vsel %vm4654, %v3508, 0.0
    %v4684 = vadd.f32 %v3507, %v4683
    %4685 = vadd.xlane.f32.xlu0 %v4684
    %v4686 = vpop.xlane.xlu0 %4685
    %v4687 = vsel %vm4654, %v3510, 0.0
    %v4688 = vadd.f32 %v3509, %v4687
    %4689 = vadd.xlane.f32.xlu0 %v4688
    %v4690 = vpop.xlane.xlu0 %4689
    %v4691 = vsel %vm4654, %v3512, 0.0
    %v4692 = vadd.f32 %v3511, %v4691
    %4693 = vadd.xlane.f32.xlu0 %v4692
    %v4694 = vpop.xlane.xlu0 %4693
    %v4695 = vsel %vm4654, %v3514, 0.0
    %v4696 = vadd.f32 %v3513, %v4695
    %4697 = vadd.xlane.f32.xlu0 %v4696
    %v4698 = vpop.xlane.xlu0 %4697
    %v4699 = vsel %vm4654, %v3516, 0.0
    %v4700 = vadd.f32 %v3515, %v4699
    %4701 = vadd.xlane.f32.xlu0 %v4700
    %v4702 = vpop.xlane.xlu0 %4701
    %v4703 = vsel %vm4654, %v3518, 0.0
    %v4704 = vadd.f32 %v3517, %v4703
    %4705 = vadd.xlane.f32.xlu0 %v4704
    %v4706 = vpop.xlane.xlu0 %4705
    %v4707 = vsel %vm4654, %v3520, 0.0
    %v4708 = vadd.f32 %v3519, %v4707
    %4709 = vadd.xlane.f32.xlu0 %v4708
    %v4710 = vpop.xlane.xlu0 %4709
    %v4711 = vsel %vm4654, %v3522, 0.0
    %v4712 = vadd.f32 %v3521, %v4711
    %4713 = vadd.xlane.f32.xlu0 %v4712
    %v4714 = vpop.xlane.xlu0 %4713
    %v4715 = vsel %vm4654, %v3524, 0.0
    %v4716 = vadd.f32 %v3523, %v4715
    %4717 = vadd.xlane.f32.xlu0 %v4716
    %v4718 = vpop.xlane.xlu0 %4717
    %v4719 = vadd.f32 %v4658, %v4690
    %v4720 = vadd.f32 %v4662, %v4694
    %v4721 = vadd.f32 %v4666, %v4698
    %v4722 = vadd.f32 %v4670, %v4702
    %v4723 = vadd.f32 %v4674, %v4706
    %v4724 = vadd.f32 %v4678, %v4710
    %v4725 = vadd.f32 %v4682, %v4714
    %v4726 = vadd.f32 %v4686, %v4718
    %v4727 = vsel %vm4654, %v4623, 0.0
    %v4728 = vadd.f32 %v4622, %v4727
    %4729 = vadd.xlane.f32.xlu0 %v4728
    %v4730 = vpop.xlane.xlu0 %4729
    %v4731 = vsel %vm4654, %v4625, 0.0
    %v4732 = vadd.f32 %v4624, %v4731
    %4733 = vadd.xlane.f32.xlu0 %v4732
    %v4734 = vpop.xlane.xlu0 %4733
    %v4735 = vsel %vm4654, %v4627, 0.0
    %v4736 = vadd.f32 %v4626, %v4735
    %4737 = vadd.xlane.f32.xlu0 %v4736
    %v4738 = vpop.xlane.xlu0 %4737
    %v4739 = vsel %vm4654, %v4629, 0.0
    %v4740 = vadd.f32 %v4628, %v4739
    %4741 = vadd.xlane.f32.xlu0 %v4740
    %v4742 = vpop.xlane.xlu0 %4741
    %v4743 = vsel %vm4654, %v4631, 0.0
    %v4744 = vadd.f32 %v4630, %v4743
    %4745 = vadd.xlane.f32.xlu0 %v4744
    %v4746 = vpop.xlane.xlu0 %4745
    %v4747 = vsel %vm4654, %v4633, 0.0
    %v4748 = vadd.f32 %v4632, %v4747
    %4749 = vadd.xlane.f32.xlu0 %v4748
    %v4750 = vpop.xlane.xlu0 %4749
    %v4751 = vsel %vm4654, %v4635, 0.0
    %v4752 = vadd.f32 %v4634, %v4751
    %4753 = vadd.xlane.f32.xlu0 %v4752
    %v4754 = vpop.xlane.xlu0 %4753
    %v4755 = vsel %vm4654, %v4637, 0.0
    %v4756 = vadd.f32 %v4636, %v4755
    %4757 = vadd.xlane.f32.xlu0 %v4756
    %v4758 = vpop.xlane.xlu0 %4757
    %v4759 = vsel %vm4654, %v4639, 0.0
    %v4760 = vadd.f32 %v4638, %v4759
    %4761 = vadd.xlane.f32.xlu0 %v4760
    %v4762 = vpop.xlane.xlu0 %4761
    %v4763 = vsel %vm4654, %v4641, 0.0
    %v4764 = vadd.f32 %v4640, %v4763
    %4765 = vadd.xlane.f32.xlu0 %v4764
    %v4766 = vpop.xlane.xlu0 %4765
    %v4767 = vsel %vm4654, %v4643, 0.0
    %v4768 = vadd.f32 %v4642, %v4767
    %4769 = vadd.xlane.f32.xlu0 %v4768
    %v4770 = vpop.xlane.xlu0 %4769
    %v4771 = vsel %vm4654, %v4645, 0.0
    %v4772 = vadd.f32 %v4644, %v4771
    %4773 = vadd.xlane.f32.xlu0 %v4772
    %v4774 = vpop.xlane.xlu0 %4773
    %v4775 = vsel %vm4654, %v4647, 0.0
    %v4776 = vadd.f32 %v4646, %v4775
    %4777 = vadd.xlane.f32.xlu0 %v4776
    %v4778 = vpop.xlane.xlu0 %4777
    %v4779 = vsel %vm4654, %v4649, 0.0
    %v4780 = vadd.f32 %v4648, %v4779
    %4781 = vadd.xlane.f32.xlu0 %v4780
    %v4782 = vpop.xlane.xlu0 %4781
    %v4783 = vsel %vm4654, %v4651, 0.0
    %v4784 = vadd.f32 %v4650, %v4783
    %4785 = vadd.xlane.f32.xlu0 %v4784
    %v4786 = vpop.xlane.xlu0 %4785
    %v4787 = vsel %vm4654, %v4653, 0.0
    %v4788 = vadd.f32 %v4652, %v4787
    %4789 = vadd.xlane.f32.xlu0 %v4788
    %v4790 = vpop.xlane.xlu0 %4789
    %v4791 = vadd.f32 %v4730, %v4762
    %v4792 = vadd.f32 %v4734, %v4766
    %v4793 = vadd.f32 %v4738, %v4770
    %v4794 = vadd.f32 %v4742, %v4774
    %v4795 = vadd.f32 %v4746, %v4778
    %v4796 = vadd.f32 %v4750, %v4782
    %v4797 = vadd.f32 %v4754, %v4786
    %v4798 = vadd.f32 %v4758, %v4790
    %v4799 = vadd.f32 %v4719, %v4791
    %v4800 = vadd.f32 %v4720, %v4792
    %v4801 = vadd.f32 %v4721, %v4793
    %v4802 = vadd.f32 %v4722, %v4794
    %v4803 = vadd.f32 %v4723, %v4795
    %v4804 = vadd.f32 %v4724, %v4796
    %v4805 = vadd.f32 %v4725, %v4797
    %v4806 = vadd.f32 %v4726, %v4798
    %v4807 = vmul.f32 %v3493, %v3493
    %v4808 = vmul.f32 %v3494, %v3494
    %v4809 = vmul.f32 %v3495, %v3495
    %v4810 = vmul.f32 %v3496, %v3496
    %v4811 = vmul.f32 %v3497, %v3497
    %v4812 = vmul.f32 %v3498, %v3498
    %v4813 = vmul.f32 %v3499, %v3499
    %v4814 = vmul.f32 %v3500, %v3500
    %v4815 = vmul.f32 %v3501, %v3501
    %v4816 = vmul.f32 %v3502, %v3502
    %v4817 = vmul.f32 %v3503, %v3503
    %v4818 = vmul.f32 %v3504, %v3504
    %v4819 = vmul.f32 %v3505, %v3505
    %v4820 = vmul.f32 %v3506, %v3506
    %v4821 = vmul.f32 %v3507, %v3507
    %v4822 = vmul.f32 %v3508, %v3508
    %v4823 = vmul.f32 %v3509, %v3509
    %v4824 = vmul.f32 %v3510, %v3510
    %v4825 = vmul.f32 %v3511, %v3511
    %v4826 = vmul.f32 %v3512, %v3512
    %v4827 = vmul.f32 %v3513, %v3513
    %v4828 = vmul.f32 %v3514, %v3514
    %v4829 = vmul.f32 %v3515, %v3515
    %v4830 = vmul.f32 %v3516, %v3516
    %v4831 = vmul.f32 %v3517, %v3517
    %v4832 = vmul.f32 %v3518, %v3518
    %v4833 = vmul.f32 %v3519, %v3519
    %v4834 = vmul.f32 %v3520, %v3520
    %v4835 = vmul.f32 %v3521, %v3521
    %v4836 = vmul.f32 %v3522, %v3522
    %v4837 = vmul.f32 %v3523, %v3523
    %v4838 = vmul.f32 %v3524, %v3524
    %v4839 = vsel %vm4654, %v4808, 0.0
    %v4840 = vadd.f32 %v4807, %v4839
    %4841 = vadd.xlane.f32.xlu0 %v4840
    %v4842 = vpop.xlane.xlu0 %4841
    %v4843 = vsel %vm4654, %v4810, 0.0
    %v4844 = vadd.f32 %v4809, %v4843
    %4845 = vadd.xlane.f32.xlu0 %v4844
    %v4846 = vpop.xlane.xlu0 %4845
    %v4847 = vsel %vm4654, %v4812, 0.0
    %v4848 = vadd.f32 %v4811, %v4847
    %4849 = vadd.xlane.f32.xlu0 %v4848
    %v4850 = vpop.xlane.xlu0 %4849
    %v4851 = vsel %vm4654, %v4814, 0.0
    %v4852 = vadd.f32 %v4813, %v4851
    %4853 = vadd.xlane.f32.xlu0 %v4852
    %v4854 = vpop.xlane.xlu0 %4853
    %v4855 = vsel %vm4654, %v4816, 0.0
    %v4856 = vadd.f32 %v4815, %v4855
    %4857 = vadd.xlane.f32.xlu0 %v4856
    %v4858 = vpop.xlane.xlu0 %4857
    %v4859 = vsel %vm4654, %v4818, 0.0
    %v4860 = vadd.f32 %v4817, %v4859
    %4861 = vadd.xlane.f32.xlu0 %v4860
    %v4862 = vpop.xlane.xlu0 %4861
    %v4863 = vsel %vm4654, %v4820, 0.0
    %v4864 = vadd.f32 %v4819, %v4863
    %4865 = vadd.xlane.f32.xlu0 %v4864
    %v4866 = vpop.xlane.xlu0 %4865
    %v4867 = vsel %vm4654, %v4822, 0.0
    %v4868 = vadd.f32 %v4821, %v4867
    %4869 = vadd.xlane.f32.xlu0 %v4868
    %v4870 = vpop.xlane.xlu0 %4869
    %v4871 = vsel %vm4654, %v4824, 0.0
    %v4872 = vadd.f32 %v4823, %v4871
    %4873 = vadd.xlane.f32.xlu0 %v4872
    %v4874 = vpop.xlane.xlu0 %4873
    %v4875 = vsel %vm4654, %v4826, 0.0
    %v4876 = vadd.f32 %v4825, %v4875
    %4877 = vadd.xlane.f32.xlu0 %v4876
    %v4878 = vpop.xlane.xlu0 %4877
    %v4879 = vsel %vm4654, %v4828, 0.0
    %v4880 = vadd.f32 %v4827, %v4879
    %4881 = vadd.xlane.f32.xlu0 %v4880
    %v4882 = vpop.xlane.xlu0 %4881
    %v4883 = vsel %vm4654, %v4830, 0.0
    %v4884 = vadd.f32 %v4829, %v4883
    %4885 = vadd.xlane.f32.xlu0 %v4884
    %v4886 = vpop.xlane.xlu0 %4885
    %v4887 = vsel %vm4654, %v4832, 0.0
    %v4888 = vadd.f32 %v4831, %v4887
    %4889 = vadd.xlane.f32.xlu0 %v4888
    %v4890 = vpop.xlane.xlu0 %4889
    %v4891 = vsel %vm4654, %v4834, 0.0
    %v4892 = vadd.f32 %v4833, %v4891
    %4893 = vadd.xlane.f32.xlu0 %v4892
    %v4894 = vpop.xlane.xlu0 %4893
    %v4895 = vsel %vm4654, %v4836, 0.0
    %v4896 = vadd.f32 %v4835, %v4895
    %4897 = vadd.xlane.f32.xlu0 %v4896
    %v4898 = vpop.xlane.xlu0 %4897
    %v4899 = vsel %vm4654, %v4838, 0.0
    %v4900 = vadd.f32 %v4837, %v4899
    %4901 = vadd.xlane.f32.xlu0 %v4900
    %v4902 = vpop.xlane.xlu0 %4901
    %v4903 = vadd.f32 %v4842, %v4874
    %v4904 = vadd.f32 %v4846, %v4878
    %v4905 = vadd.f32 %v4850, %v4882
    %v4906 = vadd.f32 %v4854, %v4886
    %v4907 = vadd.f32 %v4858, %v4890
    %v4908 = vadd.f32 %v4862, %v4894
    %v4909 = vadd.f32 %v4866, %v4898
    %v4910 = vadd.f32 %v4870, %v4902
    %v4911 = vmul.f32 %v4622, %v4622
    %v4912 = vmul.f32 %v4623, %v4623
    %v4913 = vmul.f32 %v4624, %v4624
    %v4914 = vmul.f32 %v4625, %v4625
    %v4915 = vmul.f32 %v4626, %v4626
    %v4916 = vmul.f32 %v4627, %v4627
    %v4917 = vmul.f32 %v4628, %v4628
    %v4918 = vmul.f32 %v4629, %v4629
    %v4919 = vmul.f32 %v4630, %v4630
    %v4920 = vmul.f32 %v4631, %v4631
    %v4921 = vmul.f32 %v4632, %v4632
    %v4922 = vmul.f32 %v4633, %v4633
    %v4923 = vmul.f32 %v4634, %v4634
    %v4924 = vmul.f32 %v4635, %v4635
    %v4925 = vmul.f32 %v4636, %v4636
    %v4926 = vmul.f32 %v4637, %v4637
    %v4927 = vmul.f32 %v4638, %v4638
    %v4928 = vmul.f32 %v4639, %v4639
    %v4929 = vmul.f32 %v4640, %v4640
    %v4930 = vmul.f32 %v4641, %v4641
    %v4931 = vmul.f32 %v4642, %v4642
    %v4932 = vmul.f32 %v4643, %v4643
    %v4933 = vmul.f32 %v4644, %v4644
    %v4934 = vmul.f32 %v4645, %v4645
    %v4935 = vmul.f32 %v4646, %v4646
    %v4936 = vmul.f32 %v4647, %v4647
    %v4937 = vmul.f32 %v4648, %v4648
    %v4938 = vmul.f32 %v4649, %v4649
    %v4939 = vmul.f32 %v4650, %v4650
    %v4940 = vmul.f32 %v4651, %v4651
    %v4941 = vmul.f32 %v4652, %v4652
    %v4942 = vmul.f32 %v4653, %v4653
    %v4943 = vsel %vm4654, %v4912, 0.0
    %v4944 = vadd.f32 %v4911, %v4943
    %4945 = vadd.xlane.f32.xlu0 %v4944
    %v4946 = vpop.xlane.xlu0 %4945
    %v4947 = vsel %vm4654, %v4914, 0.0
    %v4948 = vadd.f32 %v4913, %v4947
    %4949 = vadd.xlane.f32.xlu0 %v4948
    %v4950 = vpop.xlane.xlu0 %4949
    %v4951 = vsel %vm4654, %v4916, 0.0
    %v4952 = vadd.f32 %v4915, %v4951
    %4953 = vadd.xlane.f32.xlu0 %v4952
    %v4954 = vpop.xlane.xlu0 %4953
    %v4955 = vsel %vm4654, %v4918, 0.0
    %v4956 = vadd.f32 %v4917, %v4955
    %4957 = vadd.xlane.f32.xlu0 %v4956
    %v4958 = vpop.xlane.xlu0 %4957
    %v4959 = vsel %vm4654, %v4920, 0.0
    %v4960 = vadd.f32 %v4919, %v4959
    %4961 = vadd.xlane.f32.xlu0 %v4960
    %v4962 = vpop.xlane.xlu0 %4961
    %v4963 = vsel %vm4654, %v4922, 0.0
    %v4964 = vadd.f32 %v4921, %v4963
    %4965 = vadd.xlane.f32.xlu0 %v4964
    %v4966 = vpop.xlane.xlu0 %4965
    %v4967 = vsel %vm4654, %v4924, 0.0
    %v4968 = vadd.f32 %v4923, %v4967
    %4969 = vadd.xlane.f32.xlu0 %v4968
    %v4970 = vpop.xlane.xlu0 %4969
    %v4971 = vsel %vm4654, %v4926, 0.0
    %v4972 = vadd.f32 %v4925, %v4971
    %4973 = vadd.xlane.f32.xlu0 %v4972
    %v4974 = vpop.xlane.xlu0 %4973
    %v4975 = vsel %vm4654, %v4928, 0.0
    %v4976 = vadd.f32 %v4927, %v4975
    %4977 = vadd.xlane.f32.xlu0 %v4976
    %v4978 = vpop.xlane.xlu0 %4977
    %v4979 = vsel %vm4654, %v4930, 0.0
    %v4980 = vadd.f32 %v4929, %v4979
    %4981 = vadd.xlane.f32.xlu0 %v4980
    %v4982 = vpop.xlane.xlu0 %4981
    %v4983 = vsel %vm4654, %v4932, 0.0
    %v4984 = vadd.f32 %v4931, %v4983
    %4985 = vadd.xlane.f32.xlu0 %v4984
    %v4986 = vpop.xlane.xlu0 %4985
    %v4987 = vsel %vm4654, %v4934, 0.0
    %v4988 = vadd.f32 %v4933, %v4987
    %4989 = vadd.xlane.f32.xlu0 %v4988
    %v4990 = vpop.xlane.xlu0 %4989
    %v4991 = vsel %vm4654, %v4936, 0.0
    %v4992 = vadd.f32 %v4935, %v4991
    %4993 = vadd.xlane.f32.xlu0 %v4992
    %v4994 = vpop.xlane.xlu0 %4993
    %v4995 = vsel %vm4654, %v4938, 0.0
    %v4996 = vadd.f32 %v4937, %v4995
    %4997 = vadd.xlane.f32.xlu0 %v4996
    %v4998 = vpop.xlane.xlu0 %4997
    %v4999 = vsel %vm4654, %v4940, 0.0
    %v5000 = vadd.f32 %v4939, %v4999
    %5001 = vadd.xlane.f32.xlu0 %v5000
    %v5002 = vpop.xlane.xlu0 %5001
    %v5003 = vsel %vm4654, %v4942, 0.0
    %v5004 = vadd.f32 %v4941, %v5003
    %5005 = vadd.xlane.f32.xlu0 %v5004
    %v5006 = vpop.xlane.xlu0 %5005
    %v5007 = vadd.f32 %v4946, %v4978
    %v5008 = vadd.f32 %v4950, %v4982
    %v5009 = vadd.f32 %v4954, %v4986
    %v5010 = vadd.f32 %v4958, %v4990
    %v5011 = vadd.f32 %v4962, %v4994
    %v5012 = vadd.f32 %v4966, %v4998
    %v5013 = vadd.f32 %v4970, %v5002
    %v5014 = vadd.f32 %v4974, %v5006
    %v5015 = vadd.f32 %v4903, %v5007
    %v5016 = vadd.f32 %v4904, %v5008
    %v5017 = vadd.f32 %v4905, %v5009
    %v5018 = vadd.f32 %v4906, %v5010
    %v5019 = vadd.f32 %v4907, %v5011
    %v5020 = vadd.f32 %v4908, %v5012
    %v5021 = vadd.f32 %v4909, %v5013
    %v5022 = vadd.f32 %v4910, %v5014
    %v5023 = vrcp.pop 668.0
    %v5024 = vmul.f32 %v4799, %v5023
    %v5025 = vmul.f32 %v4800, %v5023
    %v5026 = vmul.f32 %v4801, %v5023
    %v5027 = vmul.f32 %v4802, %v5023
    %v5028 = vmul.f32 %v4803, %v5023
    %v5029 = vmul.f32 %v4804, %v5023
    %v5030 = vmul.f32 %v4805, %v5023
    %v5031 = vmul.f32 %v4806, %v5023
    %v5032 = vmul.f32 %v5015, %v5023
    %v5033 = vmul.f32 %v5016, %v5023
    %v5034 = vmul.f32 %v5017, %v5023
    %v5035 = vmul.f32 %v5018, %v5023
    %v5036 = vmul.f32 %v5019, %v5023
    %v5037 = vmul.f32 %v5020, %v5023
    %v5038 = vmul.f32 %v5021, %v5023
    %v5039 = vmul.f32 %v5022, %v5023
    %v5040 = vmul.f32 %v5024, %v5024
    %v5041 = vmul.f32 %v5025, %v5025
    %v5042 = vmul.f32 %v5026, %v5026
    %v5043 = vmul.f32 %v5027, %v5027
    %v5044 = vmul.f32 %v5028, %v5028
    %v5045 = vmul.f32 %v5029, %v5029
    %v5046 = vmul.f32 %v5030, %v5030
    %v5047 = vmul.f32 %v5031, %v5031
    %v5048 = vsub.f32 %v5032, %v5040
    %v5049 = vsub.f32 %v5033, %v5041
    %v5050 = vsub.f32 %v5034, %v5042
    %v5051 = vsub.f32 %v5035, %v5043
    %v5052 = vsub.f32 %v5036, %v5044
    %v5053 = vsub.f32 %v5037, %v5045
    %v5054 = vsub.f32 %v5038, %v5046
    %v5055 = vsub.f32 %v5039, %v5047
    %v5056 = vadd.f32 %v5048, 1e-05
    %v5057 = vadd.f32 %v5049, 1e-05
    %v5058 = vadd.f32 %v5050, 1e-05
    %v5059 = vadd.f32 %v5051, 1e-05
    %v5060 = vadd.f32 %v5052, 1e-05
    %v5061 = vadd.f32 %v5053, 1e-05
    %v5062 = vadd.f32 %v5054, 1e-05
    %v5063 = vadd.f32 %v5055, 1e-05
    %v5064 = vrsqrt.pop %v5056
    %v5065 = vrsqrt.pop %v5057
    %v5066 = vrsqrt.pop %v5058
    %v5067 = vrsqrt.pop %v5059
    %v5068 = vrsqrt.pop %v5060
    %v5069 = vrsqrt.pop %v5061
    %v5070 = vrsqrt.pop %v5062
    %v5071 = vrsqrt.pop %v5063
    %v5072 = vld [vmem:[%s9] sm:$0xff]
    %v5073 = vld [vmem:[%s9 + $0x8] sm:$0xff]
    %v5074 = vld [vmem:[%s9 + $0x10] sm:$0xff]
    %v5075 = vld [vmem:[%s9 + $0x18] sm:$0xff]
    %v5076 = vld [vmem:[%s9 + $0x20] sm:$0xff]
    %v5077 = vld [vmem:[%s9 + $0x28] sm:$0xff]
    %v5078 = vld [vmem:[%s9 + $0x30] sm:$0xff]
    %v5079 = vld [vmem:[%s9 + $0x38] sm:$0xff]
    %v5080 = vmul.f32 %v5064, %v5072
    %v5081 = vmul.f32 %v5065, %v5073
    %v5082 = vmul.f32 %v5066, %v5074
    %v5083 = vmul.f32 %v5067, %v5075
    %v5084 = vmul.f32 %v5068, %v5076
    %v5085 = vmul.f32 %v5069, %v5077
    %v5086 = vmul.f32 %v5070, %v5078
    %v5087 = vmul.f32 %v5071, %v5079
    %v5088 = vld [vmem:[%s10] sm:$0xff]
    %v5089 = vld [vmem:[%s10 + $0x8] sm:$0xff]
    %v5090 = vld [vmem:[%s10 + $0x10] sm:$0xff]
    %v5091 = vld [vmem:[%s10 + $0x18] sm:$0xff]
    %v5092 = vld [vmem:[%s10 + $0x20] sm:$0xff]
    %v5093 = vld [vmem:[%s10 + $0x28] sm:$0xff]
    %v5094 = vld [vmem:[%s10 + $0x30] sm:$0xff]
    %v5095 = vld [vmem:[%s10 + $0x38] sm:$0xff]
    %v5096 = vmul.f32 %v5024, %v5080
    %v5097 = vmul.f32 %v5025, %v5081
    %v5098 = vmul.f32 %v5026, %v5082
    %v5099 = vmul.f32 %v5027, %v5083
    %v5100 = vmul.f32 %v5028, %v5084
    %v5101 = vmul.f32 %v5029, %v5085
    %v5102 = vmul.f32 %v5030, %v5086
    %v5103 = vmul.f32 %v5031, %v5087
    %v5104 = vsub.f32 %v5088, %v5096
    %v5105 = vsub.f32 %v5089, %v5097
    %v5106 = vsub.f32 %v5090, %v5098
    %v5107 = vsub.f32 %v5091, %v5099
    %v5108 = vsub.f32 %v5092, %v5100
    %v5109 = vsub.f32 %v5093, %v5101
    %v5110 = vsub.f32 %v5094, %v5102
    %v5111 = vsub.f32 %v5095, %v5103
    %5113 = vset.pattern.permute.xlu0 0
    %5114 = vperm.xlu0 %5113, %v5080
    %v5115 = vpop.permute.xlu0 %5114
    %5118 = vset.pattern.permute.xlu0 0
    %5119 = vperm.xlu0 %5118, %v5081
    %v5120 = vpop.permute.xlu0 %5119
    %5123 = vset.pattern.permute.xlu0 0
    %5124 = vperm.xlu0 %5123, %v5082
    %v5125 = vpop.permute.xlu0 %5124
    %5128 = vset.pattern.permute.xlu0 0
    %5129 = vperm.xlu0 %5128, %v5083
    %v5130 = vpop.permute.xlu0 %5129
    %5133 = vset.pattern.permute.xlu0 0
    %5134 = vperm.xlu0 %5133, %v5084
    %v5135 = vpop.permute.xlu0 %5134
    %5138 = vset.pattern.permute.xlu0 0
    %5139 = vperm.xlu0 %5138, %v5085
    %v5140 = vpop.permute.xlu0 %5139
    %5143 = vset.pattern.permute.xlu0 0
    %5144 = vperm.xlu0 %5143, %v5086
    %v5145 = vpop.permute.xlu0 %5144
    %5148 = vset.pattern.permute.xlu0 0
    %5149 = vperm.xlu0 %5148, %v5087
    %v5150 = vpop.permute.xlu0 %5149
    %v5152 = vmul.f32 %v3493, %v5115
    %v5153 = vmul.f32 %v3494, %v5115
    %v5154 = vmul.f32 %v3495, %v5120
    %v5155 = vmul.f32 %v3496, %v5120
    %v5156 = vmul.f32 %v3497, %v5125
    %v5157 = vmul.f32 %v3498, %v5125
    %v5158 = vmul.f32 %v3499, %v5130
    %v5159 = vmul.f32 %v3500, %v5130
    %v5160 = vmul.f32 %v3501, %v5135
    %v5161 = vmul.f32 %v3502, %v5135
    %v5162 = vmul.f32 %v3503, %v5140
    %v5163 = vmul.f32 %v3504, %v5140
    %v5164 = vmul.f32 %v3505, %v5145
    %v5165 = vmul.f32 %v3506, %v5145
    %v5166 = vmul.f32 %v3507, %v5150
    %v5167 = vmul.f32 %v3508, %v5150
    %v5168 = vmul.f32 %v3509, %v5115
    %v5169 = vmul.f32 %v3510, %v5115
    %v5170 = vmul.f32 %v3511, %v5120
    %v5171 = vmul.f32 %v3512, %v5120
    %v5172 = vmul.f32 %v3513, %v5125
    %v5173 = vmul.f32 %v3514, %v5125
    %v5174 = vmul.f32 %v3515, %v5130
    %v5175 = vmul.f32 %v3516, %v5130
    %v5176 = vmul.f32 %v3517, %v5135
    %v5177 = vmul.f32 %v3518, %v5135
    %v5178 = vmul.f32 %v3519, %v5140
    %v5179 = vmul.f32 %v3520, %v5140
    %v5180 = vmul.f32 %v3521, %v5145
    %v5181 = vmul.f32 %v3522, %v5145
    %v5182 = vmul.f32 %v3523, %v5150
    %v5183 = vmul.f32 %v3524, %v5150
    %5185 = vset.pattern.permute.xlu0 0
    %5186 = vperm.xlu0 %5185, %v5104
    %v5187 = vpop.permute.xlu0 %5186
    %5190 = vset.pattern.permute.xlu0 0
    %5191 = vperm.xlu0 %5190, %v5105
    %v5192 = vpop.permute.xlu0 %5191
    %5195 = vset.pattern.permute.xlu0 0
    %5196 = vperm.xlu0 %5195, %v5106
    %v5197 = vpop.permute.xlu0 %5196
    %5200 = vset.pattern.permute.xlu0 0
    %5201 = vperm.xlu0 %5200, %v5107
    %v5202 = vpop.permute.xlu0 %5201
    %5205 = vset.pattern.permute.xlu0 0
    %5206 = vperm.xlu0 %5205, %v5108
    %v5207 = vpop.permute.xlu0 %5206
    %5210 = vset.pattern.permute.xlu0 0
    %5211 = vperm.xlu0 %5210, %v5109
    %v5212 = vpop.permute.xlu0 %5211
    %5215 = vset.pattern.permute.xlu0 0
    %5216 = vperm.xlu0 %5215, %v5110
    %v5217 = vpop.permute.xlu0 %5216
    %5220 = vset.pattern.permute.xlu0 0
    %5221 = vperm.xlu0 %5220, %v5111
    %v5222 = vpop.permute.xlu0 %5221
    %v5224 = vadd.f32 %v5152, %v5187
    %v5225 = vadd.f32 %v5153, %v5187
    %v5226 = vadd.f32 %v5154, %v5192
    %v5227 = vadd.f32 %v5155, %v5192
    %v5228 = vadd.f32 %v5156, %v5197
    %v5229 = vadd.f32 %v5157, %v5197
    %v5230 = vadd.f32 %v5158, %v5202
    %v5231 = vadd.f32 %v5159, %v5202
    %v5232 = vadd.f32 %v5160, %v5207
    %v5233 = vadd.f32 %v5161, %v5207
    %v5234 = vadd.f32 %v5162, %v5212
    %v5235 = vadd.f32 %v5163, %v5212
    %v5236 = vadd.f32 %v5164, %v5217
    %v5237 = vadd.f32 %v5165, %v5217
    %v5238 = vadd.f32 %v5166, %v5222
    %v5239 = vadd.f32 %v5167, %v5222
    %v5240 = vadd.f32 %v5168, %v5187
    %v5241 = vadd.f32 %v5169, %v5187
    %v5242 = vadd.f32 %v5170, %v5192
    %v5243 = vadd.f32 %v5171, %v5192
    %v5244 = vadd.f32 %v5172, %v5197
    %v5245 = vadd.f32 %v5173, %v5197
    %v5246 = vadd.f32 %v5174, %v5202
    %v5247 = vadd.f32 %v5175, %v5202
    %v5248 = vadd.f32 %v5176, %v5207
    %v5249 = vadd.f32 %v5177, %v5207
    %v5250 = vadd.f32 %v5178, %v5212
    %v5251 = vadd.f32 %v5179, %v5212
    %v5252 = vadd.f32 %v5180, %v5217
    %v5253 = vadd.f32 %v5181, %v5217
    %v5254 = vadd.f32 %v5182, %v5222
    %v5255 = vadd.f32 %v5183, %v5222
    %v5256 = vmul.f32 %v4622, %v5115
    %v5257 = vmul.f32 %v4623, %v5115
    %v5258 = vmul.f32 %v4624, %v5120
    %v5259 = vmul.f32 %v4625, %v5120
    %v5260 = vmul.f32 %v4626, %v5125
    %v5261 = vmul.f32 %v4627, %v5125
    %v5262 = vmul.f32 %v4628, %v5130
    %v5263 = vmul.f32 %v4629, %v5130
    %v5264 = vmul.f32 %v4630, %v5135
    %v5265 = vmul.f32 %v4631, %v5135
    %v5266 = vmul.f32 %v4632, %v5140
    %v5267 = vmul.f32 %v4633, %v5140
    %v5268 = vmul.f32 %v4634, %v5145
    %v5269 = vmul.f32 %v4635, %v5145
    %v5270 = vmul.f32 %v4636, %v5150
    %v5271 = vmul.f32 %v4637, %v5150
    %v5272 = vmul.f32 %v4638, %v5115
    %v5273 = vmul.f32 %v4639, %v5115
    %v5274 = vmul.f32 %v4640, %v5120
    %v5275 = vmul.f32 %v4641, %v5120
    %v5276 = vmul.f32 %v4642, %v5125
    %v5277 = vmul.f32 %v4643, %v5125
    %v5278 = vmul.f32 %v4644, %v5130
    %v5279 = vmul.f32 %v4645, %v5130
    %v5280 = vmul.f32 %v4646, %v5135
    %v5281 = vmul.f32 %v4647, %v5135
    %v5282 = vmul.f32 %v4648, %v5140
    %v5283 = vmul.f32 %v4649, %v5140
    %v5284 = vmul.f32 %v4650, %v5145
    %v5285 = vmul.f32 %v4651, %v5145
    %v5286 = vmul.f32 %v4652, %v5150
    %v5287 = vmul.f32 %v4653, %v5150
    %v5288 = vadd.f32 %v5256, %v5187
    %v5289 = vadd.f32 %v5257, %v5187
    %v5290 = vadd.f32 %v5258, %v5192
    %v5291 = vadd.f32 %v5259, %v5192
    %v5292 = vadd.f32 %v5260, %v5197
    %v5293 = vadd.f32 %v5261, %v5197
    %v5294 = vadd.f32 %v5262, %v5202
    %v5295 = vadd.f32 %v5263, %v5202
    %v5296 = vadd.f32 %v5264, %v5207
    %v5297 = vadd.f32 %v5265, %v5207
    %v5298 = vadd.f32 %v5266, %v5212
    %v5299 = vadd.f32 %v5267, %v5212
    %v5300 = vadd.f32 %v5268, %v5217
    %v5301 = vadd.f32 %v5269, %v5217
    %v5302 = vadd.f32 %v5270, %v5222
    %v5303 = vadd.f32 %v5271, %v5222
    %v5304 = vadd.f32 %v5272, %v5187
    %v5305 = vadd.f32 %v5273, %v5187
    %v5306 = vadd.f32 %v5274, %v5192
    %v5307 = vadd.f32 %v5275, %v5192
    %v5308 = vadd.f32 %v5276, %v5197
    %v5309 = vadd.f32 %v5277, %v5197
    %v5310 = vadd.f32 %v5278, %v5202
    %v5311 = vadd.f32 %v5279, %v5202
    %v5312 = vadd.f32 %v5280, %v5207
    %v5313 = vadd.f32 %v5281, %v5207
    %v5314 = vadd.f32 %v5282, %v5212
    %v5315 = vadd.f32 %v5283, %v5212
    %v5316 = vadd.f32 %v5284, %v5217
    %v5317 = vadd.f32 %v5285, %v5217
    %v5318 = vadd.f32 %v5286, %v5222
    %v5319 = vadd.f32 %v5287, %v5222
    %v5320 = vld [vmem:[%s3] sm:$0xff]
    %v5321 = vld [vmem:[%s3 + $0x8] sm:$0xff]
    %v5322 = vld [vmem:[%s3 + $0x10] sm:$0xff]
    %v5323 = vld [vmem:[%s3 + $0x18] sm:$0xff]
    %v5324 = vld [vmem:[%s3 + $0x20] sm:$0xff]
    %v5325 = vld [vmem:[%s3 + $0x28] sm:$0xff]
    %v5326 = vld [vmem:[%s3 + $0x30] sm:$0xff]
    %v5327 = vld [vmem:[%s3 + $0x38] sm:$0xff]
    %v5328 = vld [vmem:[%s3 + $0x40] sm:$0xff]
    %v5329 = vld [vmem:[%s3 + $0x48] sm:$0xff]
    %v5330 = vld [vmem:[%s3 + $0x50] sm:$0xff]
    %v5331 = vld [vmem:[%s3 + $0x58] sm:$0xff]
    %v5332 = vld [vmem:[%s3 + $0x60] sm:$0xff]
    %v5333 = vld [vmem:[%s3 + $0x68] sm:$0xff]
    %v5334 = vld [vmem:[%s3 + $0x70] sm:$0xff]
    %v5335 = vld [vmem:[%s3 + $0x78] sm:$0xff]
    %v5336 = vld [vmem:[%s3 + $0x80] sm:$0xff]
    %v5337 = vld [vmem:[%s3 + $0x88] sm:$0xff]
    %v5338 = vld [vmem:[%s3 + $0x90] sm:$0xff]
    %v5339 = vld [vmem:[%s3 + $0x98] sm:$0xff]
    %v5340 = vld [vmem:[%s3 + $0xa0] sm:$0xff]
    %v5341 = vld [vmem:[%s3 + $0xa8] sm:$0xff]
    %v5342 = vld [vmem:[%s3 + $0xb0] sm:$0xff]
    %v5343 = vld [vmem:[%s3 + $0xb8] sm:$0xff]
    %v5344 = vld [vmem:[%s3 + $0xc0] sm:$0xff]
    %v5345 = vld [vmem:[%s3 + $0xc8] sm:$0xff]
    %v5346 = vld [vmem:[%s3 + $0xd0] sm:$0xff]
    %v5347 = vld [vmem:[%s3 + $0xd8] sm:$0xff]
    %v5348 = vld [vmem:[%s3 + $0xe0] sm:$0xff]
    %v5349 = vld [vmem:[%s3 + $0xe8] sm:$0xff]
    %v5350 = vld [vmem:[%s3 + $0xf0] sm:$0xff]
    %v5351 = vld [vmem:[%s3 + $0xf8] sm:$0xff]
    %v5352 = vld [vmem:[%s3 + $0x100] sm:$0xff]
    %v5353 = vld [vmem:[%s3 + $0x108] sm:$0xff]
    %v5354 = vld [vmem:[%s3 + $0x110] sm:$0xff]
    %v5355 = vld [vmem:[%s3 + $0x118] sm:$0xff]
    %v5356 = vld [vmem:[%s3 + $0x120] sm:$0xff]
    %v5357 = vld [vmem:[%s3 + $0x128] sm:$0xff]
    %v5358 = vld [vmem:[%s3 + $0x130] sm:$0xff]
    %v5359 = vld [vmem:[%s3 + $0x138] sm:$0xff]
    %v5360 = vld [vmem:[%s3 + $0x140] sm:$0xff]
    %v5361 = vld [vmem:[%s3 + $0x148] sm:$0xff]
    %v5362 = vld [vmem:[%s3 + $0x150] sm:$0xff]
    %v5363 = vld [vmem:[%s3 + $0x158] sm:$0xff]
    %v5364 = vld [vmem:[%s3 + $0x160] sm:$0xff]
    %v5365 = vld [vmem:[%s3 + $0x168] sm:$0xff]
    %v5366 = vld [vmem:[%s3 + $0x170] sm:$0xff]
    %v5367 = vld [vmem:[%s3 + $0x178] sm:$0xff]
    %v5368 = vld [vmem:[%s3 + $0x180] sm:$0xff]
    %v5369 = vld [vmem:[%s3 + $0x188] sm:$0xff]
    %v5370 = vld [vmem:[%s3 + $0x190] sm:$0xff]
    %v5371 = vld [vmem:[%s3 + $0x198] sm:$0xff]
    %v5372 = vld [vmem:[%s3 + $0x1a0] sm:$0xff]
    %v5373 = vld [vmem:[%s3 + $0x1a8] sm:$0xff]
    %v5374 = vld [vmem:[%s3 + $0x1b0] sm:$0xff]
    %v5375 = vld [vmem:[%s3 + $0x1b8] sm:$0xff]
    %v5376 = vld [vmem:[%s3 + $0x1c0] sm:$0xff]
    %v5377 = vld [vmem:[%s3 + $0x1c8] sm:$0xff]
    %v5378 = vld [vmem:[%s3 + $0x1d0] sm:$0xff]
    %v5379 = vld [vmem:[%s3 + $0x1d8] sm:$0xff]
    %v5380 = vld [vmem:[%s3 + $0x1e0] sm:$0xff]
    %v5381 = vld [vmem:[%s3 + $0x1e8] sm:$0xff]
    %v5382 = vld [vmem:[%s3 + $0x1f0] sm:$0xff]
    %v5383 = vld [vmem:[%s3 + $0x1f8] sm:$0xff]
    %v5384 = vld [vmem:[%s4] sm:$0xff]
    %v5385 = vld [vmem:[%s4 + $0x8] sm:$0xff]
    %v5386 = vld [vmem:[%s4 + $0x10] sm:$0xff]
    %v5387 = vld [vmem:[%s4 + $0x18] sm:$0xff]
    %v5388 = vld [vmem:[%s4 + $0x20] sm:$0xff]
    %v5389 = vld [vmem:[%s4 + $0x28] sm:$0xff]
    %v5390 = vld [vmem:[%s4 + $0x30] sm:$0xff]
    %v5391 = vld [vmem:[%s4 + $0x38] sm:$0xff]
    %v5392 = vld [vmem:[%s4 + $0x40] sm:$0xff]
    %v5393 = vld [vmem:[%s4 + $0x48] sm:$0xff]
    %v5394 = vld [vmem:[%s4 + $0x50] sm:$0xff]
    %v5395 = vld [vmem:[%s4 + $0x58] sm:$0xff]
    %v5396 = vld [vmem:[%s4 + $0x60] sm:$0xff]
    %v5397 = vld [vmem:[%s4 + $0x68] sm:$0xff]
    %v5398 = vld [vmem:[%s4 + $0x70] sm:$0xff]
    %v5399 = vld [vmem:[%s4 + $0x78] sm:$0xff]
    %v5400 = vld [vmem:[%s4 + $0x80] sm:$0xff]
    %v5401 = vld [vmem:[%s4 + $0x88] sm:$0xff]
    %v5402 = vld [vmem:[%s4 + $0x90] sm:$0xff]
    %v5403 = vld [vmem:[%s4 + $0x98] sm:$0xff]
    %v5404 = vld [vmem:[%s4 + $0xa0] sm:$0xff]
    %v5405 = vld [vmem:[%s4 + $0xa8] sm:$0xff]
    %v5406 = vld [vmem:[%s4 + $0xb0] sm:$0xff]
    %v5407 = vld [vmem:[%s4 + $0xb8] sm:$0xff]
    %v5408 = vld [vmem:[%s4 + $0xc0] sm:$0xff]
    %v5409 = vld [vmem:[%s4 + $0xc8] sm:$0xff]
    %v5410 = vld [vmem:[%s4 + $0xd0] sm:$0xff]
    %v5411 = vld [vmem:[%s4 + $0xd8] sm:$0xff]
    %v5412 = vld [vmem:[%s4 + $0xe0] sm:$0xff]
    %v5413 = vld [vmem:[%s4 + $0xe8] sm:$0xff]
    %v5414 = vld [vmem:[%s4 + $0xf0] sm:$0xff]
    %v5415 = vld [vmem:[%s4 + $0xf8] sm:$0xff]
    %v5416 = vld [vmem:[%s4 + $0x100] sm:$0xff]
    %v5417 = vld [vmem:[%s4 + $0x108] sm:$0xff]
    %v5418 = vld [vmem:[%s4 + $0x110] sm:$0xff]
    %v5419 = vld [vmem:[%s4 + $0x118] sm:$0xff]
    %v5420 = vld [vmem:[%s4 + $0x120] sm:$0xff]
    %v5421 = vld [vmem:[%s4 + $0x128] sm:$0xff]
    %v5422 = vld [vmem:[%s4 + $0x130] sm:$0xff]
    %v5423 = vld [vmem:[%s4 + $0x138] sm:$0xff]
    %v5424 = vld [vmem:[%s4 + $0x140] sm:$0xff]
    %v5425 = vld [vmem:[%s4 + $0x148] sm:$0xff]
    %v5426 = vld [vmem:[%s4 + $0x150] sm:$0xff]
    %v5427 = vld [vmem:[%s4 + $0x158] sm:$0xff]
    %v5428 = vld [vmem:[%s4 + $0x160] sm:$0xff]
    %v5429 = vld [vmem:[%s4 + $0x168] sm:$0xff]
    %v5430 = vld [vmem:[%s4 + $0x170] sm:$0xff]
    %v5431 = vld [vmem:[%s4 + $0x178] sm:$0xff]
    %v5432 = vld [vmem:[%s4 + $0x180] sm:$0xff]
    %v5433 = vld [vmem:[%s4 + $0x188] sm:$0xff]
    %v5434 = vld [vmem:[%s4 + $0x190] sm:$0xff]
    %v5435 = vld [vmem:[%s4 + $0x198] sm:$0xff]
    %v5436 = vld [vmem:[%s4 + $0x1a0] sm:$0xff]
    %v5437 = vld [vmem:[%s4 + $0x1a8] sm:$0xff]
    %v5438 = vld [vmem:[%s4 + $0x1b0] sm:$0xff]
    %v5439 = vld [vmem:[%s4 + $0x1b8] sm:$0xff]
    %v5440 = vld [vmem:[%s4 + $0x1c0] sm:$0xff]
    %v5441 = vld [vmem:[%s4 + $0x1c8] sm:$0xff]
    %v5442 = vld [vmem:[%s4 + $0x1d0] sm:$0xff]
    %v5443 = vld [vmem:[%s4 + $0x1d8] sm:$0xff]
    %v5444 = vld [vmem:[%s4 + $0x1e0] sm:$0xff]
    %v5445 = vld [vmem:[%s4 + $0x1e8] sm:$0xff]
    %v5446 = vld [vmem:[%s4 + $0x1f0] sm:$0xff]
    %v5447 = vld [vmem:[%s4 + $0x1f8] sm:$0xff]
    %5449 = vset.pattern.permute.xlu0 0
    %5450 = vperm.xlu0 %5449, %v5320
    %v5451 = vpop.permute.xlu0 %5450
    %5454 = vset.pattern.permute.xlu0 0
    %5455 = vperm.xlu0 %5454, %v5321
    %v5456 = vpop.permute.xlu0 %5455
    %5459 = vset.pattern.permute.xlu0 0
    %5460 = vperm.xlu0 %5459, %v5322
    %v5461 = vpop.permute.xlu0 %5460
    %5464 = vset.pattern.permute.xlu0 0
    %5465 = vperm.xlu0 %5464, %v5323
    %v5466 = vpop.permute.xlu0 %5465
    %5469 = vset.pattern.permute.xlu0 0
    %5470 = vperm.xlu0 %5469, %v5324
    %v5471 = vpop.permute.xlu0 %5470
    %5474 = vset.pattern.permute.xlu0 0
    %5475 = vperm.xlu0 %5474, %v5325
    %v5476 = vpop.permute.xlu0 %5475
    %5479 = vset.pattern.permute.xlu0 0
    %5480 = vperm.xlu0 %5479, %v5326
    %v5481 = vpop.permute.xlu0 %5480
    %5484 = vset.pattern.permute.xlu0 0
    %5485 = vperm.xlu0 %5484, %v5327
    %v5486 = vpop.permute.xlu0 %5485
    %v5488 = vmul.f32 %v5224, %v5451
    %v5489 = vmul.f32 %v5225, %v5451
    %v5490 = vmul.f32 %v5226, %v5456
    %v5491 = vmul.f32 %v5227, %v5456
    %v5492 = vmul.f32 %v5228, %v5461
    %v5493 = vmul.f32 %v5229, %v5461
    %v5494 = vmul.f32 %v5230, %v5466
    %v5495 = vmul.f32 %v5231, %v5466
    %v5496 = vmul.f32 %v5232, %v5471
    %v5497 = vmul.f32 %v5233, %v5471
    %v5498 = vmul.f32 %v5234, %v5476
    %v5499 = vmul.f32 %v5235, %v5476
    %v5500 = vmul.f32 %v5236, %v5481
    %v5501 = vmul.f32 %v5237, %v5481
    %v5502 = vmul.f32 %v5238, %v5486
    %v5503 = vmul.f32 %v5239, %v5486
    %v5504 = vmul.f32 %v5240, %v5451
    %v5505 = vmul.f32 %v5241, %v5451
    %v5506 = vmul.f32 %v5242, %v5456
    %v5507 = vmul.f32 %v5243, %v5456
    %v5508 = vmul.f32 %v5244, %v5461
    %v5509 = vmul.f32 %v5245, %v5461
    %v5510 = vmul.f32 %v5246, %v5466
    %v5511 = vmul.f32 %v5247, %v5466
    %v5512 = vmul.f32 %v5248, %v5471
    %v5513 = vmul.f32 %v5249, %v5471
    %v5514 = vmul.f32 %v5250, %v5476
    %v5515 = vmul.f32 %v5251, %v5476
    %v5516 = vmul.f32 %v5252, %v5481
    %v5517 = vmul.f32 %v5253, %v5481
    %v5518 = vmul.f32 %v5254, %v5486
    %v5519 = vmul.f32 %v5255, %v5486
    %v5520 = vadd.f32 %v5488, 0.0
    %v5521 = vadd.f32 %v5489, 0.0
    %v5522 = vadd.f32 %v5490, 0.0
    %v5523 = vadd.f32 %v5491, 0.0
    %v5524 = vadd.f32 %v5492, 0.0
    %v5525 = vadd.f32 %v5493, 0.0
    %v5526 = vadd.f32 %v5494, 0.0
    %v5527 = vadd.f32 %v5495, 0.0
    %v5528 = vadd.f32 %v5496, 0.0
    %v5529 = vadd.f32 %v5497, 0.0
    %v5530 = vadd.f32 %v5498, 0.0
    %v5531 = vadd.f32 %v5499, 0.0
    %v5532 = vadd.f32 %v5500, 0.0
    %v5533 = vadd.f32 %v5501, 0.0
    %v5534 = vadd.f32 %v5502, 0.0
    %v5535 = vadd.f32 %v5503, 0.0
    %v5536 = vadd.f32 %v5504, 0.0
    %v5537 = vadd.f32 %v5505, 0.0
    %v5538 = vadd.f32 %v5506, 0.0
    %v5539 = vadd.f32 %v5507, 0.0
    %v5540 = vadd.f32 %v5508, 0.0
    %v5541 = vadd.f32 %v5509, 0.0
    %v5542 = vadd.f32 %v5510, 0.0
    %v5543 = vadd.f32 %v5511, 0.0
    %v5544 = vadd.f32 %v5512, 0.0
    %v5545 = vadd.f32 %v5513, 0.0
    %v5546 = vadd.f32 %v5514, 0.0
    %v5547 = vadd.f32 %v5515, 0.0
    %v5548 = vadd.f32 %v5516, 0.0
    %v5549 = vadd.f32 %v5517, 0.0
    %v5550 = vadd.f32 %v5518, 0.0
    %v5551 = vadd.f32 %v5519, 0.0
    %5553 = vset.pattern.permute.xlu0 0
    %5554 = vperm.xlu0 %5553, %v5384
    %v5555 = vpop.permute.xlu0 %5554
    %5558 = vset.pattern.permute.xlu0 0
    %5559 = vperm.xlu0 %5558, %v5385
    %v5560 = vpop.permute.xlu0 %5559
    %5563 = vset.pattern.permute.xlu0 0
    %5564 = vperm.xlu0 %5563, %v5386
    %v5565 = vpop.permute.xlu0 %5564
    %5568 = vset.pattern.permute.xlu0 0
    %5569 = vperm.xlu0 %5568, %v5387
    %v5570 = vpop.permute.xlu0 %5569
    %5573 = vset.pattern.permute.xlu0 0
    %5574 = vperm.xlu0 %5573, %v5388
    %v5575 = vpop.permute.xlu0 %5574
    %5578 = vset.pattern.permute.xlu0 0
    %5579 = vperm.xlu0 %5578, %v5389
    %v5580 = vpop.permute.xlu0 %5579
    %5583 = vset.pattern.permute.xlu0 0
    %5584 = vperm.xlu0 %5583, %v5390
    %v5585 = vpop.permute.xlu0 %5584
    %5588 = vset.pattern.permute.xlu0 0
    %5589 = vperm.xlu0 %5588, %v5391
    %v5590 = vpop.permute.xlu0 %5589
    %v5592 = vmul.f32 %v5288, %v5555
    %v5593 = vmul.f32 %v5289, %v5555
    %v5594 = vmul.f32 %v5290, %v5560
    %v5595 = vmul.f32 %v5291, %v5560
    %v5596 = vmul.f32 %v5292, %v5565
    %v5597 = vmul.f32 %v5293, %v5565
    %v5598 = vmul.f32 %v5294, %v5570
    %v5599 = vmul.f32 %v5295, %v5570
    %v5600 = vmul.f32 %v5296, %v5575
    %v5601 = vmul.f32 %v5297, %v5575
    %v5602 = vmul.f32 %v5298, %v5580
    %v5603 = vmul.f32 %v5299, %v5580
    %v5604 = vmul.f32 %v5300, %v5585
    %v5605 = vmul.f32 %v5301, %v5585
    %v5606 = vmul.f32 %v5302, %v5590
    %v5607 = vmul.f32 %v5303, %v5590
    %v5608 = vmul.f32 %v5304, %v5555
    %v5609 = vmul.f32 %v5305, %v5555
    %v5610 = vmul.f32 %v5306, %v5560
    %v5611 = vmul.f32 %v5307, %v5560
    %v5612 = vmul.f32 %v5308, %v5565
    %v5613 = vmul.f32 %v5309, %v5565
    %v5614 = vmul.f32 %v5310, %v5570
    %v5615 = vmul.f32 %v5311, %v5570
    %v5616 = vmul.f32 %v5312, %v5575
    %v5617 = vmul.f32 %v5313, %v5575
    %v5618 = vmul.f32 %v5314, %v5580
    %v5619 = vmul.f32 %v5315, %v5580
    %v5620 = vmul.f32 %v5316, %v5585
    %v5621 = vmul.f32 %v5317, %v5585
    %v5622 = vmul.f32 %v5318, %v5590
    %v5623 = vmul.f32 %v5319, %v5590
    %v5624 = vadd.f32 %v5520, %v5592
    %v5625 = vadd.f32 %v5521, %v5593
    %v5626 = vadd.f32 %v5522, %v5594
    %v5627 = vadd.f32 %v5523, %v5595
    %v5628 = vadd.f32 %v5524, %v5596
    %v5629 = vadd.f32 %v5525, %v5597
    %v5630 = vadd.f32 %v5526, %v5598
    %v5631 = vadd.f32 %v5527, %v5599
    %v5632 = vadd.f32 %v5528, %v5600
    %v5633 = vadd.f32 %v5529, %v5601
    %v5634 = vadd.f32 %v5530, %v5602
    %v5635 = vadd.f32 %v5531, %v5603
    %v5636 = vadd.f32 %v5532, %v5604
    %v5637 = vadd.f32 %v5533, %v5605
    %v5638 = vadd.f32 %v5534, %v5606
    %v5639 = vadd.f32 %v5535, %v5607
    %v5640 = vadd.f32 %v5536, %v5608
    %v5641 = vadd.f32 %v5537, %v5609
    %v5642 = vadd.f32 %v5538, %v5610
    %v5643 = vadd.f32 %v5539, %v5611
    %v5644 = vadd.f32 %v5540, %v5612
    %v5645 = vadd.f32 %v5541, %v5613
    %v5646 = vadd.f32 %v5542, %v5614
    %v5647 = vadd.f32 %v5543, %v5615
    %v5648 = vadd.f32 %v5544, %v5616
    %v5649 = vadd.f32 %v5545, %v5617
    %v5650 = vadd.f32 %v5546, %v5618
    %v5651 = vadd.f32 %v5547, %v5619
    %v5652 = vadd.f32 %v5548, %v5620
    %v5653 = vadd.f32 %v5549, %v5621
    %v5654 = vadd.f32 %v5550, %v5622
    %v5655 = vadd.f32 %v5551, %v5623
    %5657 = vset.pattern.permute.xlu0 0
    %5658 = vperm.xlu0 %5657, %v5328
    %v5659 = vpop.permute.xlu0 %5658
    %5662 = vset.pattern.permute.xlu0 0
    %5663 = vperm.xlu0 %5662, %v5329
    %v5664 = vpop.permute.xlu0 %5663
    %5667 = vset.pattern.permute.xlu0 0
    %5668 = vperm.xlu0 %5667, %v5330
    %v5669 = vpop.permute.xlu0 %5668
    %5672 = vset.pattern.permute.xlu0 0
    %5673 = vperm.xlu0 %5672, %v5331
    %v5674 = vpop.permute.xlu0 %5673
    %5677 = vset.pattern.permute.xlu0 0
    %5678 = vperm.xlu0 %5677, %v5332
    %v5679 = vpop.permute.xlu0 %5678
    %5682 = vset.pattern.permute.xlu0 0
    %5683 = vperm.xlu0 %5682, %v5333
    %v5684 = vpop.permute.xlu0 %5683
    %5687 = vset.pattern.permute.xlu0 0
    %5688 = vperm.xlu0 %5687, %v5334
    %v5689 = vpop.permute.xlu0 %5688
    %5692 = vset.pattern.permute.xlu0 0
    %5693 = vperm.xlu0 %5692, %v5335
    %v5694 = vpop.permute.xlu0 %5693
    %v5696 = vmul.f32 %v5224, %v5659
    %v5697 = vmul.f32 %v5225, %v5659
    %v5698 = vmul.f32 %v5226, %v5664
    %v5699 = vmul.f32 %v5227, %v5664
    %v5700 = vmul.f32 %v5228, %v5669
    %v5701 = vmul.f32 %v5229, %v5669
    %v5702 = vmul.f32 %v5230, %v5674
    %v5703 = vmul.f32 %v5231, %v5674
    %v5704 = vmul.f32 %v5232, %v5679
    %v5705 = vmul.f32 %v5233, %v5679
    %v5706 = vmul.f32 %v5234, %v5684
    %v5707 = vmul.f32 %v5235, %v5684
    %v5708 = vmul.f32 %v5236, %v5689
    %v5709 = vmul.f32 %v5237, %v5689
    %v5710 = vmul.f32 %v5238, %v5694
    %v5711 = vmul.f32 %v5239, %v5694
    %v5712 = vmul.f32 %v5240, %v5659
    %v5713 = vmul.f32 %v5241, %v5659
    %v5714 = vmul.f32 %v5242, %v5664
    %v5715 = vmul.f32 %v5243, %v5664
    %v5716 = vmul.f32 %v5244, %v5669
    %v5717 = vmul.f32 %v5245, %v5669
    %v5718 = vmul.f32 %v5246, %v5674
    %v5719 = vmul.f32 %v5247, %v5674
    %v5720 = vmul.f32 %v5248, %v5679
    %v5721 = vmul.f32 %v5249, %v5679
    %v5722 = vmul.f32 %v5250, %v5684
    %v5723 = vmul.f32 %v5251, %v5684
    %v5724 = vmul.f32 %v5252, %v5689
    %v5725 = vmul.f32 %v5253, %v5689
    %v5726 = vmul.f32 %v5254, %v5694
    %v5727 = vmul.f32 %v5255, %v5694
    %5760 = vrot.lane.b32.xlu0 %v5696, 127
    %v5761 = vpop.permute.xlu0 %5760
    %5762 = vrot.lane.b32.xlu0 %v5697, 127
    %v5763 = vpop.permute.xlu0 %5762
    %5764 = vrot.lane.b32.xlu0 %v5698, 127
    %v5765 = vpop.permute.xlu0 %5764
    %5766 = vrot.lane.b32.xlu0 %v5699, 127
    %v5767 = vpop.permute.xlu0 %5766
    %5768 = vrot.lane.b32.xlu0 %v5700, 127
    %v5769 = vpop.permute.xlu0 %5768
    %5770 = vrot.lane.b32.xlu0 %v5701, 127
    %v5771 = vpop.permute.xlu0 %5770
    %5772 = vrot.lane.b32.xlu0 %v5702, 127
    %v5773 = vpop.permute.xlu0 %5772
    %5774 = vrot.lane.b32.xlu0 %v5703, 127
    %v5775 = vpop.permute.xlu0 %5774
    %5776 = vrot.lane.b32.xlu0 %v5704, 127
    %v5777 = vpop.permute.xlu0 %5776
    %5778 = vrot.lane.b32.xlu0 %v5705, 127
    %v5779 = vpop.permute.xlu0 %5778
    %5780 = vrot.lane.b32.xlu0 %v5706, 127
    %v5781 = vpop.permute.xlu0 %5780
    %5782 = vrot.lane.b32.xlu0 %v5707, 127
    %v5783 = vpop.permute.xlu0 %5782
    %5784 = vrot.lane.b32.xlu0 %v5708, 127
    %v5785 = vpop.permute.xlu0 %5784
    %5786 = vrot.lane.b32.xlu0 %v5709, 127
    %v5787 = vpop.permute.xlu0 %5786
    %5788 = vrot.lane.b32.xlu0 %v5710, 127
    %v5789 = vpop.permute.xlu0 %5788
    %5790 = vrot.lane.b32.xlu0 %v5711, 127
    %v5791 = vpop.permute.xlu0 %5790
    %5792 = vrot.lane.b32.xlu0 %v5712, 127
    %v5793 = vpop.permute.xlu0 %5792
    %5794 = vrot.lane.b32.xlu0 %v5713, 127
    %v5795 = vpop.permute.xlu0 %5794
    %5796 = vrot.lane.b32.xlu0 %v5714, 127
    %v5797 = vpop.permute.xlu0 %5796
    %5798 = vrot.lane.b32.xlu0 %v5715, 127
    %v5799 = vpop.permute.xlu0 %5798
    %5800 = vrot.lane.b32.xlu0 %v5716, 127
    %v5801 = vpop.permute.xlu0 %5800
    %5802 = vrot.lane.b32.xlu0 %v5717, 127
    %v5803 = vpop.permute.xlu0 %5802
    %5804 = vrot.lane.b32.xlu0 %v5718, 127
    %v5805 = vpop.permute.xlu0 %5804
    %5806 = vrot.lane.b32.xlu0 %v5719, 127
    %v5807 = vpop.permute.xlu0 %5806
    %5808 = vrot.lane.b32.xlu0 %v5720, 127
    %v5809 = vpop.permute.xlu0 %5808
    %5810 = vrot.lane.b32.xlu0 %v5721, 127
    %v5811 = vpop.permute.xlu0 %5810
    %5812 = vrot.lane.b32.xlu0 %v5722, 127
    %v5813 = vpop.permute.xlu0 %5812
    %5814 = vrot.lane.b32.xlu0 %v5723, 127
    %v5815 = vpop.permute.xlu0 %5814
    %5816 = vrot.lane.b32.xlu0 %v5724, 127
    %v5817 = vpop.permute.xlu0 %5816
    %5818 = vrot.lane.b32.xlu0 %v5725, 127
    %v5819 = vpop.permute.xlu0 %5818
    %5820 = vrot.lane.b32.xlu0 %v5726, 127
    %v5821 = vpop.permute.xlu0 %5820
    %5822 = vrot.lane.b32.xlu0 %v5727, 127
    %v5823 = vpop.permute.xlu0 %5822
    %vm5824 = vcmask 1039360
    %v5825 = vsel %vm5824, %v5761, %v5763
    %v5826 = vsel %vm5824, %v5765, %v5767
    %v5827 = vsel %vm5824, %v5769, %v5771
    %v5828 = vsel %vm5824, %v5773, %v5775
    %v5829 = vsel %vm5824, %v5777, %v5779
    %v5830 = vsel %vm5824, %v5781, %v5783
    %v5831 = vsel %vm5824, %v5785, %v5787
    %v5832 = vsel %vm5824, %v5789, %v5791
    %v5833 = vsel %vm5824, %v5793, %v5795
    %v5834 = vsel %vm5824, %v5797, %v5799
    %v5835 = vsel %vm5824, %v5801, %v5803
    %v5836 = vsel %vm5824, %v5805, %v5807
    %v5837 = vsel %vm5824, %v5809, %v5811
    %v5838 = vsel %vm5824, %v5813, %v5815
    %v5839 = vsel %vm5824, %v5817, %v5819
    %v5840 = vsel %vm5824, %v5821, %v5823
    %v5873 = vadd.f32 %v5624, %v5825
    %v5874 = vadd.f32 %v5625, %v5763
    %v5875 = vadd.f32 %v5626, %v5826
    %v5876 = vadd.f32 %v5627, %v5767
    %v5877 = vadd.f32 %v5628, %v5827
    %v5878 = vadd.f32 %v5629, %v5771
    %v5879 = vadd.f32 %v5630, %v5828
    %v5880 = vadd.f32 %v5631, %v5775
    %v5881 = vadd.f32 %v5632, %v5829
    %v5882 = vadd.f32 %v5633, %v5779
    %v5883 = vadd.f32 %v5634, %v5830
    %v5884 = vadd.f32 %v5635, %v5783
    %v5885 = vadd.f32 %v5636, %v5831
    %v5886 = vadd.f32 %v5637, %v5787
    %v5887 = vadd.f32 %v5638, %v5832
    %v5888 = vadd.f32 %v5639, %v5791
    %v5889 = vadd.f32 %v5640, %v5833
    %v5890 = vadd.f32 %v5641, %v5795
    %v5891 = vadd.f32 %v5642, %v5834
    %v5892 = vadd.f32 %v5643, %v5799
    %v5893 = vadd.f32 %v5644, %v5835
    %v5894 = vadd.f32 %v5645, %v5803
    %v5895 = vadd.f32 %v5646, %v5836
    %v5896 = vadd.f32 %v5647, %v5807
    %v5897 = vadd.f32 %v5648, %v5837
    %v5898 = vadd.f32 %v5649, %v5811
    %v5899 = vadd.f32 %v5650, %v5838
    %v5900 = vadd.f32 %v5651, %v5815
    %v5901 = vadd.f32 %v5652, %v5839
    %v5902 = vadd.f32 %v5653, %v5819
    %v5903 = vadd.f32 %v5654, %v5840
    %v5904 = vadd.f32 %v5655, %v5823
    %5906 = vset.pattern.permute.xlu0 0
    %5907 = vperm.xlu0 %5906, %v5392
    %v5908 = vpop.permute.xlu0 %5907
    %5911 = vset.pattern.permute.xlu0 0
    %5912 = vperm.xlu0 %5911, %v5393
    %v5913 = vpop.permute.xlu0 %5912
    %5916 = vset.pattern.permute.xlu0 0
    %5917 = vperm.xlu0 %5916, %v5394
    %v5918 = vpop.permute.xlu0 %5917
    %5921 = vset.pattern.permute.xlu0 0
    %5922 = vperm.xlu0 %5921, %v5395
    %v5923 = vpop.permute.xlu0 %5922
    %5926 = vset.pattern.permute.xlu0 0
    %5927 = vperm.xlu0 %5926, %v5396
    %v5928 = vpop.permute.xlu0 %5927
    %5931 = vset.pattern.permute.xlu0 0
    %5932 = vperm.xlu0 %5931, %v5397
    %v5933 = vpop.permute.xlu0 %5932
    %5936 = vset.pattern.permute.xlu0 0
    %5937 = vperm.xlu0 %5936, %v5398
    %v5938 = vpop.permute.xlu0 %5937
    %5941 = vset.pattern.permute.xlu0 0
    %5942 = vperm.xlu0 %5941, %v5399
    %v5943 = vpop.permute.xlu0 %5942
    %v5945 = vmul.f32 %v5288, %v5908
    %v5946 = vmul.f32 %v5289, %v5908
    %v5947 = vmul.f32 %v5290, %v5913
    %v5948 = vmul.f32 %v5291, %v5913
    %v5949 = vmul.f32 %v5292, %v5918
    %v5950 = vmul.f32 %v5293, %v5918
    %v5951 = vmul.f32 %v5294, %v5923
    %v5952 = vmul.f32 %v5295, %v5923
    %v5953 = vmul.f32 %v5296, %v5928
    %v5954 = vmul.f32 %v5297, %v5928
    %v5955 = vmul.f32 %v5298, %v5933
    %v5956 = vmul.f32 %v5299, %v5933
    %v5957 = vmul.f32 %v5300, %v5938
    %v5958 = vmul.f32 %v5301, %v5938
    %v5959 = vmul.f32 %v5302, %v5943
    %v5960 = vmul.f32 %v5303, %v5943
    %v5961 = vmul.f32 %v5304, %v5908
    %v5962 = vmul.f32 %v5305, %v5908
    %v5963 = vmul.f32 %v5306, %v5913
    %v5964 = vmul.f32 %v5307, %v5913
    %v5965 = vmul.f32 %v5308, %v5918
    %v5966 = vmul.f32 %v5309, %v5918
    %v5967 = vmul.f32 %v5310, %v5923
    %v5968 = vmul.f32 %v5311, %v5923
    %v5969 = vmul.f32 %v5312, %v5928
    %v5970 = vmul.f32 %v5313, %v5928
    %v5971 = vmul.f32 %v5314, %v5933
    %v5972 = vmul.f32 %v5315, %v5933
    %v5973 = vmul.f32 %v5316, %v5938
    %v5974 = vmul.f32 %v5317, %v5938
    %v5975 = vmul.f32 %v5318, %v5943
    %v5976 = vmul.f32 %v5319, %v5943
    %6009 = vrot.lane.b32.xlu0 %v5945, 127
    %v6010 = vpop.permute.xlu0 %6009
    %6011 = vrot.lane.b32.xlu0 %v5946, 127
    %v6012 = vpop.permute.xlu0 %6011
    %6013 = vrot.lane.b32.xlu0 %v5947, 127
    %v6014 = vpop.permute.xlu0 %6013
    %6015 = vrot.lane.b32.xlu0 %v5948, 127
    %v6016 = vpop.permute.xlu0 %6015
    %6017 = vrot.lane.b32.xlu0 %v5949, 127
    %v6018 = vpop.permute.xlu0 %6017
    %6019 = vrot.lane.b32.xlu0 %v5950, 127
    %v6020 = vpop.permute.xlu0 %6019
    %6021 = vrot.lane.b32.xlu0 %v5951, 127
    %v6022 = vpop.permute.xlu0 %6021
    %6023 = vrot.lane.b32.xlu0 %v5952, 127
    %v6024 = vpop.permute.xlu0 %6023
    %6025 = vrot.lane.b32.xlu0 %v5953, 127
    %v6026 = vpop.permute.xlu0 %6025
    %6027 = vrot.lane.b32.xlu0 %v5954, 127
    %v6028 = vpop.permute.xlu0 %6027
    %6029 = vrot.lane.b32.xlu0 %v5955, 127
    %v6030 = vpop.permute.xlu0 %6029
    %6031 = vrot.lane.b32.xlu0 %v5956, 127
    %v6032 = vpop.permute.xlu0 %6031
    %6033 = vrot.lane.b32.xlu0 %v5957, 127
    %v6034 = vpop.permute.xlu0 %6033
    %6035 = vrot.lane.b32.xlu0 %v5958, 127
    %v6036 = vpop.permute.xlu0 %6035
    %6037 = vrot.lane.b32.xlu0 %v5959, 127
    %v6038 = vpop.permute.xlu0 %6037
    %6039 = vrot.lane.b32.xlu0 %v5960, 127
    %v6040 = vpop.permute.xlu0 %6039
    %6041 = vrot.lane.b32.xlu0 %v5961, 127
    %v6042 = vpop.permute.xlu0 %6041
    %6043 = vrot.lane.b32.xlu0 %v5962, 127
    %v6044 = vpop.permute.xlu0 %6043
    %6045 = vrot.lane.b32.xlu0 %v5963, 127
    %v6046 = vpop.permute.xlu0 %6045
    %6047 = vrot.lane.b32.xlu0 %v5964, 127
    %v6048 = vpop.permute.xlu0 %6047
    %6049 = vrot.lane.b32.xlu0 %v5965, 127
    %v6050 = vpop.permute.xlu0 %6049
    %6051 = vrot.lane.b32.xlu0 %v5966, 127
    %v6052 = vpop.permute.xlu0 %6051
    %6053 = vrot.lane.b32.xlu0 %v5967, 127
    %v6054 = vpop.permute.xlu0 %6053
    %6055 = vrot.lane.b32.xlu0 %v5968, 127
    %v6056 = vpop.permute.xlu0 %6055
    %6057 = vrot.lane.b32.xlu0 %v5969, 127
    %v6058 = vpop.permute.xlu0 %6057
    %6059 = vrot.lane.b32.xlu0 %v5970, 127
    %v6060 = vpop.permute.xlu0 %6059
    %6061 = vrot.lane.b32.xlu0 %v5971, 127
    %v6062 = vpop.permute.xlu0 %6061
    %6063 = vrot.lane.b32.xlu0 %v5972, 127
    %v6064 = vpop.permute.xlu0 %6063
    %6065 = vrot.lane.b32.xlu0 %v5973, 127
    %v6066 = vpop.permute.xlu0 %6065
    %6067 = vrot.lane.b32.xlu0 %v5974, 127
    %v6068 = vpop.permute.xlu0 %6067
    %6069 = vrot.lane.b32.xlu0 %v5975, 127
    %v6070 = vpop.permute.xlu0 %6069
    %6071 = vrot.lane.b32.xlu0 %v5976, 127
    %v6072 = vpop.permute.xlu0 %6071
    %v6073 = vsel %vm5824, %v6010, %v6012
    %v6074 = vsel %vm5824, %v6014, %v6016
    %v6075 = vsel %vm5824, %v6018, %v6020
    %v6076 = vsel %vm5824, %v6022, %v6024
    %v6077 = vsel %vm5824, %v6026, %v6028
    %v6078 = vsel %vm5824, %v6030, %v6032
    %v6079 = vsel %vm5824, %v6034, %v6036
    %v6080 = vsel %vm5824, %v6038, %v6040
    %v6081 = vsel %vm5824, %v6042, %v6044
    %v6082 = vsel %vm5824, %v6046, %v6048
    %v6083 = vsel %vm5824, %v6050, %v6052
    %v6084 = vsel %vm5824, %v6054, %v6056
    %v6085 = vsel %vm5824, %v6058, %v6060
    %v6086 = vsel %vm5824, %v6062, %v6064
    %v6087 = vsel %vm5824, %v6066, %v6068
    %v6088 = vsel %vm5824, %v6070, %v6072
    %v6121 = vadd.f32 %v5873, %v6073
    %v6122 = vadd.f32 %v5874, %v6012
    %v6123 = vadd.f32 %v5875, %v6074
    %v6124 = vadd.f32 %v5876, %v6016
    %v6125 = vadd.f32 %v5877, %v6075
    %v6126 = vadd.f32 %v5878, %v6020
    %v6127 = vadd.f32 %v5879, %v6076
    %v6128 = vadd.f32 %v5880, %v6024
    %v6129 = vadd.f32 %v5881, %v6077
    %v6130 = vadd.f32 %v5882, %v6028
    %v6131 = vadd.f32 %v5883, %v6078
    %v6132 = vadd.f32 %v5884, %v6032
    %v6133 = vadd.f32 %v5885, %v6079
    %v6134 = vadd.f32 %v5886, %v6036
    %v6135 = vadd.f32 %v5887, %v6080
    %v6136 = vadd.f32 %v5888, %v6040
    %v6137 = vadd.f32 %v5889, %v6081
    %v6138 = vadd.f32 %v5890, %v6044
    %v6139 = vadd.f32 %v5891, %v6082
    %v6140 = vadd.f32 %v5892, %v6048
    %v6141 = vadd.f32 %v5893, %v6083
    %v6142 = vadd.f32 %v5894, %v6052
    %v6143 = vadd.f32 %v5895, %v6084
    %v6144 = vadd.f32 %v5896, %v6056
    %v6145 = vadd.f32 %v5897, %v6085
    %v6146 = vadd.f32 %v5898, %v6060
    %v6147 = vadd.f32 %v5899, %v6086
    %v6148 = vadd.f32 %v5900, %v6064
    %v6149 = vadd.f32 %v5901, %v6087
    %v6150 = vadd.f32 %v5902, %v6068
    %v6151 = vadd.f32 %v5903, %v6088
    %v6152 = vadd.f32 %v5904, %v6072
    %6154 = vset.pattern.permute.xlu0 0
    %6155 = vperm.xlu0 %6154, %v5336
    %v6156 = vpop.permute.xlu0 %6155
    %6159 = vset.pattern.permute.xlu0 0
    %6160 = vperm.xlu0 %6159, %v5337
    %v6161 = vpop.permute.xlu0 %6160
    %6164 = vset.pattern.permute.xlu0 0
    %6165 = vperm.xlu0 %6164, %v5338
    %v6166 = vpop.permute.xlu0 %6165
    %6169 = vset.pattern.permute.xlu0 0
    %6170 = vperm.xlu0 %6169, %v5339
    %v6171 = vpop.permute.xlu0 %6170
    %6174 = vset.pattern.permute.xlu0 0
    %6175 = vperm.xlu0 %6174, %v5340
    %v6176 = vpop.permute.xlu0 %6175
    %6179 = vset.pattern.permute.xlu0 0
    %6180 = vperm.xlu0 %6179, %v5341
    %v6181 = vpop.permute.xlu0 %6180
    %6184 = vset.pattern.permute.xlu0 0
    %6185 = vperm.xlu0 %6184, %v5342
    %v6186 = vpop.permute.xlu0 %6185
    %6189 = vset.pattern.permute.xlu0 0
    %6190 = vperm.xlu0 %6189, %v5343
    %v6191 = vpop.permute.xlu0 %6190
    %v6193 = vmul.f32 %v5224, %v6156
    %v6194 = vmul.f32 %v5225, %v6156
    %v6195 = vmul.f32 %v5226, %v6161
    %v6196 = vmul.f32 %v5227, %v6161
    %v6197 = vmul.f32 %v5228, %v6166
    %v6198 = vmul.f32 %v5229, %v6166
    %v6199 = vmul.f32 %v5230, %v6171
    %v6200 = vmul.f32 %v5231, %v6171
    %v6201 = vmul.f32 %v5232, %v6176
    %v6202 = vmul.f32 %v5233, %v6176
    %v6203 = vmul.f32 %v5234, %v6181
    %v6204 = vmul.f32 %v5235, %v6181
    %v6205 = vmul.f32 %v5236, %v6186
    %v6206 = vmul.f32 %v5237, %v6186
    %v6207 = vmul.f32 %v5238, %v6191
    %v6208 = vmul.f32 %v5239, %v6191
    %v6209 = vmul.f32 %v5240, %v6156
    %v6210 = vmul.f32 %v5241, %v6156
    %v6211 = vmul.f32 %v5242, %v6161
    %v6212 = vmul.f32 %v5243, %v6161
    %v6213 = vmul.f32 %v5244, %v6166
    %v6214 = vmul.f32 %v5245, %v6166
    %v6215 = vmul.f32 %v5246, %v6171
    %v6216 = vmul.f32 %v5247, %v6171
    %v6217 = vmul.f32 %v5248, %v6176
    %v6218 = vmul.f32 %v5249, %v6176
    %v6219 = vmul.f32 %v5250, %v6181
    %v6220 = vmul.f32 %v5251, %v6181
    %v6221 = vmul.f32 %v5252, %v6186
    %v6222 = vmul.f32 %v5253, %v6186
    %v6223 = vmul.f32 %v5254, %v6191
    %v6224 = vmul.f32 %v5255, %v6191
    %6257 = vrot.lane.b32.xlu0 %v6193, 126
    %v6258 = vpop.permute.xlu0 %6257
    %6259 = vrot.lane.b32.xlu0 %v6194, 126
    %v6260 = vpop.permute.xlu0 %6259
    %6261 = vrot.lane.b32.xlu0 %v6195, 126
    %v6262 = vpop.permute.xlu0 %6261
    %6263 = vrot.lane.b32.xlu0 %v6196, 126
    %v6264 = vpop.permute.xlu0 %6263
    %6265 = vrot.lane.b32.xlu0 %v6197, 126
    %v6266 = vpop.permute.xlu0 %6265
    %6267 = vrot.lane.b32.xlu0 %v6198, 126
    %v6268 = vpop.permute.xlu0 %6267
    %6269 = vrot.lane.b32.xlu0 %v6199, 126
    %v6270 = vpop.permute.xlu0 %6269
    %6271 = vrot.lane.b32.xlu0 %v6200, 126
    %v6272 = vpop.permute.xlu0 %6271
    %6273 = vrot.lane.b32.xlu0 %v6201, 126
    %v6274 = vpop.permute.xlu0 %6273
    %6275 = vrot.lane.b32.xlu0 %v6202, 126
    %v6276 = vpop.permute.xlu0 %6275
    %6277 = vrot.lane.b32.xlu0 %v6203, 126
    %v6278 = vpop.permute.xlu0 %6277
    %6279 = vrot.lane.b32.xlu0 %v6204, 126
    %v6280 = vpop.permute.xlu0 %6279
    %6281 = vrot.lane.b32.xlu0 %v6205, 126
    %v6282 = vpop.permute.xlu0 %6281
    %6283 = vrot.lane.b32.xlu0 %v6206, 126
    %v6284 = vpop.permute.xlu0 %6283
    %6285 = vrot.lane.b32.xlu0 %v6207, 126
    %v6286 = vpop.permute.xlu0 %6285
    %6287 = vrot.lane.b32.xlu0 %v6208, 126
    %v6288 = vpop.permute.xlu0 %6287
    %6289 = vrot.lane.b32.xlu0 %v6209, 126
    %v6290 = vpop.permute.xlu0 %6289
    %6291 = vrot.lane.b32.xlu0 %v6210, 126
    %v6292 = vpop.permute.xlu0 %6291
    %6293 = vrot.lane.b32.xlu0 %v6211, 126
    %v6294 = vpop.permute.xlu0 %6293
    %6295 = vrot.lane.b32.xlu0 %v6212, 126
    %v6296 = vpop.permute.xlu0 %6295
    %6297 = vrot.lane.b32.xlu0 %v6213, 126
    %v6298 = vpop.permute.xlu0 %6297
    %6299 = vrot.lane.b32.xlu0 %v6214, 126
    %v6300 = vpop.permute.xlu0 %6299
    %6301 = vrot.lane.b32.xlu0 %v6215, 126
    %v6302 = vpop.permute.xlu0 %6301
    %6303 = vrot.lane.b32.xlu0 %v6216, 126
    %v6304 = vpop.permute.xlu0 %6303
    %6305 = vrot.lane.b32.xlu0 %v6217, 126
    %v6306 = vpop.permute.xlu0 %6305
    %6307 = vrot.lane.b32.xlu0 %v6218, 126
    %v6308 = vpop.permute.xlu0 %6307
    %6309 = vrot.lane.b32.xlu0 %v6219, 126
    %v6310 = vpop.permute.xlu0 %6309
    %6311 = vrot.lane.b32.xlu0 %v6220, 126
    %v6312 = vpop.permute.xlu0 %6311
    %6313 = vrot.lane.b32.xlu0 %v6221, 126
    %v6314 = vpop.permute.xlu0 %6313
    %6315 = vrot.lane.b32.xlu0 %v6222, 126
    %v6316 = vpop.permute.xlu0 %6315
    %6317 = vrot.lane.b32.xlu0 %v6223, 126
    %v6318 = vpop.permute.xlu0 %6317
    %6319 = vrot.lane.b32.xlu0 %v6224, 126
    %v6320 = vpop.permute.xlu0 %6319
    %vm6321 = vcmask 1031168
    %v6322 = vsel %vm6321, %v6258, %v6260
    %v6323 = vsel %vm6321, %v6262, %v6264
    %v6324 = vsel %vm6321, %v6266, %v6268
    %v6325 = vsel %vm6321, %v6270, %v6272
    %v6326 = vsel %vm6321, %v6274, %v6276
    %v6327 = vsel %vm6321, %v6278, %v6280
    %v6328 = vsel %vm6321, %v6282, %v6284
    %v6329 = vsel %vm6321, %v6286, %v6288
    %v6330 = vsel %vm6321, %v6290, %v6292
    %v6331 = vsel %vm6321, %v6294, %v6296
    %v6332 = vsel %vm6321, %v6298, %v6300
    %v6333 = vsel %vm6321, %v6302, %v6304
    %v6334 = vsel %vm6321, %v6306, %v6308
    %v6335 = vsel %vm6321, %v6310, %v6312
    %v6336 = vsel %vm6321, %v6314, %v6316
    %v6337 = vsel %vm6321, %v6318, %v6320
    %v6370 = vadd.f32 %v6121, %v6322
    %v6371 = vadd.f32 %v6122, %v6260
    %v6372 = vadd.f32 %v6123, %v6323
    %v6373 = vadd.f32 %v6124, %v6264
    %v6374 = vadd.f32 %v6125, %v6324
    %v6375 = vadd.f32 %v6126, %v6268
    %v6376 = vadd.f32 %v6127, %v6325
    %v6377 = vadd.f32 %v6128, %v6272
    %v6378 = vadd.f32 %v6129, %v6326
    %v6379 = vadd.f32 %v6130, %v6276
    %v6380 = vadd.f32 %v6131, %v6327
    %v6381 = vadd.f32 %v6132, %v6280
    %v6382 = vadd.f32 %v6133, %v6328
    %v6383 = vadd.f32 %v6134, %v6284
    %v6384 = vadd.f32 %v6135, %v6329
    %v6385 = vadd.f32 %v6136, %v6288
    %v6386 = vadd.f32 %v6137, %v6330
    %v6387 = vadd.f32 %v6138, %v6292
    %v6388 = vadd.f32 %v6139, %v6331
    %v6389 = vadd.f32 %v6140, %v6296
    %v6390 = vadd.f32 %v6141, %v6332
    %v6391 = vadd.f32 %v6142, %v6300
    %v6392 = vadd.f32 %v6143, %v6333
    %v6393 = vadd.f32 %v6144, %v6304
    %v6394 = vadd.f32 %v6145, %v6334
    %v6395 = vadd.f32 %v6146, %v6308
    %v6396 = vadd.f32 %v6147, %v6335
    %v6397 = vadd.f32 %v6148, %v6312
    %v6398 = vadd.f32 %v6149, %v6336
    %v6399 = vadd.f32 %v6150, %v6316
    %v6400 = vadd.f32 %v6151, %v6337
    %v6401 = vadd.f32 %v6152, %v6320
    %6403 = vset.pattern.permute.xlu0 0
    %6404 = vperm.xlu0 %6403, %v5400
    %v6405 = vpop.permute.xlu0 %6404
    %6408 = vset.pattern.permute.xlu0 0
    %6409 = vperm.xlu0 %6408, %v5401
    %v6410 = vpop.permute.xlu0 %6409
    %6413 = vset.pattern.permute.xlu0 0
    %6414 = vperm.xlu0 %6413, %v5402
    %v6415 = vpop.permute.xlu0 %6414
    %6418 = vset.pattern.permute.xlu0 0
    %6419 = vperm.xlu0 %6418, %v5403
    %v6420 = vpop.permute.xlu0 %6419
    %6423 = vset.pattern.permute.xlu0 0
    %6424 = vperm.xlu0 %6423, %v5404
    %v6425 = vpop.permute.xlu0 %6424
    %6428 = vset.pattern.permute.xlu0 0
    %6429 = vperm.xlu0 %6428, %v5405
    %v6430 = vpop.permute.xlu0 %6429
    %6433 = vset.pattern.permute.xlu0 0
    %6434 = vperm.xlu0 %6433, %v5406
    %v6435 = vpop.permute.xlu0 %6434
    %6438 = vset.pattern.permute.xlu0 0
    %6439 = vperm.xlu0 %6438, %v5407
    %v6440 = vpop.permute.xlu0 %6439
    %v6442 = vmul.f32 %v5288, %v6405
    %v6443 = vmul.f32 %v5289, %v6405
    %v6444 = vmul.f32 %v5290, %v6410
    %v6445 = vmul.f32 %v5291, %v6410
    %v6446 = vmul.f32 %v5292, %v6415
    %v6447 = vmul.f32 %v5293, %v6415
    %v6448 = vmul.f32 %v5294, %v6420
    %v6449 = vmul.f32 %v5295, %v6420
    %v6450 = vmul.f32 %v5296, %v6425
    %v6451 = vmul.f32 %v5297, %v6425
    %v6452 = vmul.f32 %v5298, %v6430
    %v6453 = vmul.f32 %v5299, %v6430
    %v6454 = vmul.f32 %v5300, %v6435
    %v6455 = vmul.f32 %v5301, %v6435
    %v6456 = vmul.f32 %v5302, %v6440
    %v6457 = vmul.f32 %v5303, %v6440
    %v6458 = vmul.f32 %v5304, %v6405
    %v6459 = vmul.f32 %v5305, %v6405
    %v6460 = vmul.f32 %v5306, %v6410
    %v6461 = vmul.f32 %v5307, %v6410
    %v6462 = vmul.f32 %v5308, %v6415
    %v6463 = vmul.f32 %v5309, %v6415
    %v6464 = vmul.f32 %v5310, %v6420
    %v6465 = vmul.f32 %v5311, %v6420
    %v6466 = vmul.f32 %v5312, %v6425
    %v6467 = vmul.f32 %v5313, %v6425
    %v6468 = vmul.f32 %v5314, %v6430
    %v6469 = vmul.f32 %v5315, %v6430
    %v6470 = vmul.f32 %v5316, %v6435
    %v6471 = vmul.f32 %v5317, %v6435
    %v6472 = vmul.f32 %v5318, %v6440
    %v6473 = vmul.f32 %v5319, %v6440
    %6506 = vrot.lane.b32.xlu0 %v6442, 126
    %v6507 = vpop.permute.xlu0 %6506
    %6508 = vrot.lane.b32.xlu0 %v6443, 126
    %v6509 = vpop.permute.xlu0 %6508
    %6510 = vrot.lane.b32.xlu0 %v6444, 126
    %v6511 = vpop.permute.xlu0 %6510
    %6512 = vrot.lane.b32.xlu0 %v6445, 126
    %v6513 = vpop.permute.xlu0 %6512
    %6514 = vrot.lane.b32.xlu0 %v6446, 126
    %v6515 = vpop.permute.xlu0 %6514
    %6516 = vrot.lane.b32.xlu0 %v6447, 126
    %v6517 = vpop.permute.xlu0 %6516
    %6518 = vrot.lane.b32.xlu0 %v6448, 126
    %v6519 = vpop.permute.xlu0 %6518
    %6520 = vrot.lane.b32.xlu0 %v6449, 126
    %v6521 = vpop.permute.xlu0 %6520
    %6522 = vrot.lane.b32.xlu0 %v6450, 126
    %v6523 = vpop.permute.xlu0 %6522
    %6524 = vrot.lane.b32.xlu0 %v6451, 126
    %v6525 = vpop.permute.xlu0 %6524
    %6526 = vrot.lane.b32.xlu0 %v6452, 126
    %v6527 = vpop.permute.xlu0 %6526
    %6528 = vrot.lane.b32.xlu0 %v6453, 126
    %v6529 = vpop.permute.xlu0 %6528
    %6530 = vrot.lane.b32.xlu0 %v6454, 126
    %v6531 = vpop.permute.xlu0 %6530
    %6532 = vrot.lane.b32.xlu0 %v6455, 126
    %v6533 = vpop.permute.xlu0 %6532
    %6534 = vrot.lane.b32.xlu0 %v6456, 126
    %v6535 = vpop.permute.xlu0 %6534
    %6536 = vrot.lane.b32.xlu0 %v6457, 126
    %v6537 = vpop.permute.xlu0 %6536
    %6538 = vrot.lane.b32.xlu0 %v6458, 126
    %v6539 = vpop.permute.xlu0 %6538
    %6540 = vrot.lane.b32.xlu0 %v6459, 126
    %v6541 = vpop.permute.xlu0 %6540
    %6542 = vrot.lane.b32.xlu0 %v6460, 126
    %v6543 = vpop.permute.xlu0 %6542
    %6544 = vrot.lane.b32.xlu0 %v6461, 126
    %v6545 = vpop.permute.xlu0 %6544
    %6546 = vrot.lane.b32.xlu0 %v6462, 126
    %v6547 = vpop.permute.xlu0 %6546
    %6548 = vrot.lane.b32.xlu0 %v6463, 126
    %v6549 = vpop.permute.xlu0 %6548
    %6550 = vrot.lane.b32.xlu0 %v6464, 126
    %v6551 = vpop.permute.xlu0 %6550
    %6552 = vrot.lane.b32.xlu0 %v6465, 126
    %v6553 = vpop.permute.xlu0 %6552
    %6554 = vrot.lane.b32.xlu0 %v6466, 126
    %v6555 = vpop.permute.xlu0 %6554
    %6556 = vrot.lane.b32.xlu0 %v6467, 126
    %v6557 = vpop.permute.xlu0 %6556
    %6558 = vrot.lane.b32.xlu0 %v6468, 126
    %v6559 = vpop.permute.xlu0 %6558
    %6560 = vrot.lane.b32.xlu0 %v6469, 126
    %v6561 = vpop.permute.xlu0 %6560
    %6562 = vrot.lane.b32.xlu0 %v6470, 126
    %v6563 = vpop.permute.xlu0 %6562
    %6564 = vrot.lane.b32.xlu0 %v6471, 126
    %v6565 = vpop.permute.xlu0 %6564
    %6566 = vrot.lane.b32.xlu0 %v6472, 126
    %v6567 = vpop.permute.xlu0 %6566
    %6568 = vrot.lane.b32.xlu0 %v6473, 126
    %v6569 = vpop.permute.xlu0 %6568
    %v6570 = vsel %vm6321, %v6507, %v6509
    %v6571 = vsel %vm6321, %v6511, %v6513
    %v6572 = vsel %vm6321, %v6515, %v6517
    %v6573 = vsel %vm6321, %v6519, %v6521
    %v6574 = vsel %vm6321, %v6523, %v6525
    %v6575 = vsel %vm6321, %v6527, %v6529
    %v6576 = vsel %vm6321, %v6531, %v6533
    %v6577 = vsel %vm6321, %v6535, %v6537
    %v6578 = vsel %vm6321, %v6539, %v6541
    %v6579 = vsel %vm6321, %v6543, %v6545
    %v6580 = vsel %vm6321, %v6547, %v6549
    %v6581 = vsel %vm6321, %v6551, %v6553
    %v6582 = vsel %vm6321, %v6555, %v6557
    %v6583 = vsel %vm6321, %v6559, %v6561
    %v6584 = vsel %vm6321, %v6563, %v6565
    %v6585 = vsel %vm6321, %v6567, %v6569
    %v6618 = vadd.f32 %v6370, %v6570
    %v6619 = vadd.f32 %v6371, %v6509
    %v6620 = vadd.f32 %v6372, %v6571
    %v6621 = vadd.f32 %v6373, %v6513
    %v6622 = vadd.f32 %v6374, %v6572
    %v6623 = vadd.f32 %v6375, %v6517
    %v6624 = vadd.f32 %v6376, %v6573
    %v6625 = vadd.f32 %v6377, %v6521
    %v6626 = vadd.f32 %v6378, %v6574
    %v6627 = vadd.f32 %v6379, %v6525
    %v6628 = vadd.f32 %v6380, %v6575
    %v6629 = vadd.f32 %v6381, %v6529
    %v6630 = vadd.f32 %v6382, %v6576
    %v6631 = vadd.f32 %v6383, %v6533
    %v6632 = vadd.f32 %v6384, %v6577
    %v6633 = vadd.f32 %v6385, %v6537
    %v6634 = vadd.f32 %v6386, %v6578
    %v6635 = vadd.f32 %v6387, %v6541
    %v6636 = vadd.f32 %v6388, %v6579
    %v6637 = vadd.f32 %v6389, %v6545
    %v6638 = vadd.f32 %v6390, %v6580
    %v6639 = vadd.f32 %v6391, %v6549
    %v6640 = vadd.f32 %v6392, %v6581
    %v6641 = vadd.f32 %v6393, %v6553
    %v6642 = vadd.f32 %v6394, %v6582
    %v6643 = vadd.f32 %v6395, %v6557
    %v6644 = vadd.f32 %v6396, %v6583
    %v6645 = vadd.f32 %v6397, %v6561
    %v6646 = vadd.f32 %v6398, %v6584
    %v6647 = vadd.f32 %v6399, %v6565
    %v6648 = vadd.f32 %v6400, %v6585
    %v6649 = vadd.f32 %v6401, %v6569
    %6651 = vset.pattern.permute.xlu0 0
    %6652 = vperm.xlu0 %6651, %v5344
    %v6653 = vpop.permute.xlu0 %6652
    %6656 = vset.pattern.permute.xlu0 0
    %6657 = vperm.xlu0 %6656, %v5345
    %v6658 = vpop.permute.xlu0 %6657
    %6661 = vset.pattern.permute.xlu0 0
    %6662 = vperm.xlu0 %6661, %v5346
    %v6663 = vpop.permute.xlu0 %6662
    %6666 = vset.pattern.permute.xlu0 0
    %6667 = vperm.xlu0 %6666, %v5347
    %v6668 = vpop.permute.xlu0 %6667
    %6671 = vset.pattern.permute.xlu0 0
    %6672 = vperm.xlu0 %6671, %v5348
    %v6673 = vpop.permute.xlu0 %6672
    %6676 = vset.pattern.permute.xlu0 0
    %6677 = vperm.xlu0 %6676, %v5349
    %v6678 = vpop.permute.xlu0 %6677
    %6681 = vset.pattern.permute.xlu0 0
    %6682 = vperm.xlu0 %6681, %v5350
    %v6683 = vpop.permute.xlu0 %6682
    %6686 = vset.pattern.permute.xlu0 0
    %6687 = vperm.xlu0 %6686, %v5351
    %v6688 = vpop.permute.xlu0 %6687
    %v6690 = vmul.f32 %v5224, %v6653
    %v6691 = vmul.f32 %v5225, %v6653
    %v6692 = vmul.f32 %v5226, %v6658
    %v6693 = vmul.f32 %v5227, %v6658
    %v6694 = vmul.f32 %v5228, %v6663
    %v6695 = vmul.f32 %v5229, %v6663
    %v6696 = vmul.f32 %v5230, %v6668
    %v6697 = vmul.f32 %v5231, %v6668
    %v6698 = vmul.f32 %v5232, %v6673
    %v6699 = vmul.f32 %v5233, %v6673
    %v6700 = vmul.f32 %v5234, %v6678
    %v6701 = vmul.f32 %v5235, %v6678
    %v6702 = vmul.f32 %v5236, %v6683
    %v6703 = vmul.f32 %v5237, %v6683
    %v6704 = vmul.f32 %v5238, %v6688
    %v6705 = vmul.f32 %v5239, %v6688
    %v6706 = vmul.f32 %v5240, %v6653
    %v6707 = vmul.f32 %v5241, %v6653
    %v6708 = vmul.f32 %v5242, %v6658
    %v6709 = vmul.f32 %v5243, %v6658
    %v6710 = vmul.f32 %v5244, %v6663
    %v6711 = vmul.f32 %v5245, %v6663
    %v6712 = vmul.f32 %v5246, %v6668
    %v6713 = vmul.f32 %v5247, %v6668
    %v6714 = vmul.f32 %v5248, %v6673
    %v6715 = vmul.f32 %v5249, %v6673
    %v6716 = vmul.f32 %v5250, %v6678
    %v6717 = vmul.f32 %v5251, %v6678
    %v6718 = vmul.f32 %v5252, %v6683
    %v6719 = vmul.f32 %v5253, %v6683
    %v6720 = vmul.f32 %v5254, %v6688
    %v6721 = vmul.f32 %v5255, %v6688
    %6754 = vrot.lane.b32.xlu0 %v6690, 125
    %v6755 = vpop.permute.xlu0 %6754
    %6756 = vrot.lane.b32.xlu0 %v6691, 125
    %v6757 = vpop.permute.xlu0 %6756
    %6758 = vrot.lane.b32.xlu0 %v6692, 125
    %v6759 = vpop.permute.xlu0 %6758
    %6760 = vrot.lane.b32.xlu0 %v6693, 125
    %v6761 = vpop.permute.xlu0 %6760
    %6762 = vrot.lane.b32.xlu0 %v6694, 125
    %v6763 = vpop.permute.xlu0 %6762
    %6764 = vrot.lane.b32.xlu0 %v6695, 125
    %v6765 = vpop.permute.xlu0 %6764
    %6766 = vrot.lane.b32.xlu0 %v6696, 125
    %v6767 = vpop.permute.xlu0 %6766
    %6768 = vrot.lane.b32.xlu0 %v6697, 125
    %v6769 = vpop.permute.xlu0 %6768
    %6770 = vrot.lane.b32.xlu0 %v6698, 125
    %v6771 = vpop.permute.xlu0 %6770
    %6772 = vrot.lane.b32.xlu0 %v6699, 125
    %v6773 = vpop.permute.xlu0 %6772
    %6774 = vrot.lane.b32.xlu0 %v6700, 125
    %v6775 = vpop.permute.xlu0 %6774
    %6776 = vrot.lane.b32.xlu0 %v6701, 125
    %v6777 = vpop.permute.xlu0 %6776
    %6778 = vrot.lane.b32.xlu0 %v6702, 125
    %v6779 = vpop.permute.xlu0 %6778
    %6780 = vrot.lane.b32.xlu0 %v6703, 125
    %v6781 = vpop.permute.xlu0 %6780
    %6782 = vrot.lane.b32.xlu0 %v6704, 125
    %v6783 = vpop.permute.xlu0 %6782
    %6784 = vrot.lane.b32.xlu0 %v6705, 125
    %v6785 = vpop.permute.xlu0 %6784
    %6786 = vrot.lane.b32.xlu0 %v6706, 125
    %v6787 = vpop.permute.xlu0 %6786
    %6788 = vrot.lane.b32.xlu0 %v6707, 125
    %v6789 = vpop.permute.xlu0 %6788
    %6790 = vrot.lane.b32.xlu0 %v6708, 125
    %v6791 = vpop.permute.xlu0 %6790
    %6792 = vrot.lane.b32.xlu0 %v6709, 125
    %v6793 = vpop.permute.xlu0 %6792
    %6794 = vrot.lane.b32.xlu0 %v6710, 125
    %v6795 = vpop.permute.xlu0 %6794
    %6796 = vrot.lane.b32.xlu0 %v6711, 125
    %v6797 = vpop.permute.xlu0 %6796
    %6798 = vrot.lane.b32.xlu0 %v6712, 125
    %v6799 = vpop.permute.xlu0 %6798
    %6800 = vrot.lane.b32.xlu0 %v6713, 125
    %v6801 = vpop.permute.xlu0 %6800
    %6802 = vrot.lane.b32.xlu0 %v6714, 125
    %v6803 = vpop.permute.xlu0 %6802
    %6804 = vrot.lane.b32.xlu0 %v6715, 125
    %v6805 = vpop.permute.xlu0 %6804
    %6806 = vrot.lane.b32.xlu0 %v6716, 125
    %v6807 = vpop.permute.xlu0 %6806
    %6808 = vrot.lane.b32.xlu0 %v6717, 125
    %v6809 = vpop.permute.xlu0 %6808
    %6810 = vrot.lane.b32.xlu0 %v6718, 125
    %v6811 = vpop.permute.xlu0 %6810
    %6812 = vrot.lane.b32.xlu0 %v6719, 125
    %v6813 = vpop.permute.xlu0 %6812
    %6814 = vrot.lane.b32.xlu0 %v6720, 125
    %v6815 = vpop.permute.xlu0 %6814
    %6816 = vrot.lane.b32.xlu0 %v6721, 125
    %v6817 = vpop.permute.xlu0 %6816
    %vm6818 = vcmask 1022976
    %v6819 = vsel %vm6818, %v6755, %v6757
    %v6820 = vsel %vm6818, %v6759, %v6761
    %v6821 = vsel %vm6818, %v6763, %v6765
    %v6822 = vsel %vm6818, %v6767, %v6769
    %v6823 = vsel %vm6818, %v6771, %v6773
    %v6824 = vsel %vm6818, %v6775, %v6777
    %v6825 = vsel %vm6818, %v6779, %v6781
    %v6826 = vsel %vm6818, %v6783, %v6785
    %v6827 = vsel %vm6818, %v6787, %v6789
    %v6828 = vsel %vm6818, %v6791, %v6793
    %v6829 = vsel %vm6818, %v6795, %v6797
    %v6830 = vsel %vm6818, %v6799, %v6801
    %v6831 = vsel %vm6818, %v6803, %v6805
    %v6832 = vsel %vm6818, %v6807, %v6809
    %v6833 = vsel %vm6818, %v6811, %v6813
    %v6834 = vsel %vm6818, %v6815, %v6817
    %v6867 = vadd.f32 %v6618, %v6819
    %v6868 = vadd.f32 %v6619, %v6757
    %v6869 = vadd.f32 %v6620, %v6820
    %v6870 = vadd.f32 %v6621, %v6761
    %v6871 = vadd.f32 %v6622, %v6821
    %v6872 = vadd.f32 %v6623, %v6765
    %v6873 = vadd.f32 %v6624, %v6822
    %v6874 = vadd.f32 %v6625, %v6769
    %v6875 = vadd.f32 %v6626, %v6823
    %v6876 = vadd.f32 %v6627, %v6773
    %v6877 = vadd.f32 %v6628, %v6824
    %v6878 = vadd.f32 %v6629, %v6777
    %v6879 = vadd.f32 %v6630, %v6825
    %v6880 = vadd.f32 %v6631, %v6781
    %v6881 = vadd.f32 %v6632, %v6826
    %v6882 = vadd.f32 %v6633, %v6785
    %v6883 = vadd.f32 %v6634, %v6827
    %v6884 = vadd.f32 %v6635, %v6789
    %v6885 = vadd.f32 %v6636, %v6828
    %v6886 = vadd.f32 %v6637, %v6793
    %v6887 = vadd.f32 %v6638, %v6829
    %v6888 = vadd.f32 %v6639, %v6797
    %v6889 = vadd.f32 %v6640, %v6830
    %v6890 = vadd.f32 %v6641, %v6801
    %v6891 = vadd.f32 %v6642, %v6831
    %v6892 = vadd.f32 %v6643, %v6805
    %v6893 = vadd.f32 %v6644, %v6832
    %v6894 = vadd.f32 %v6645, %v6809
    %v6895 = vadd.f32 %v6646, %v6833
    %v6896 = vadd.f32 %v6647, %v6813
    %v6897 = vadd.f32 %v6648, %v6834
    %v6898 = vadd.f32 %v6649, %v6817
    %6900 = vset.pattern.permute.xlu0 0
    %6901 = vperm.xlu0 %6900, %v5408
    %v6902 = vpop.permute.xlu0 %6901
    %6905 = vset.pattern.permute.xlu0 0
    %6906 = vperm.xlu0 %6905, %v5409
    %v6907 = vpop.permute.xlu0 %6906
    %6910 = vset.pattern.permute.xlu0 0
    %6911 = vperm.xlu0 %6910, %v5410
    %v6912 = vpop.permute.xlu0 %6911
    %6915 = vset.pattern.permute.xlu0 0
    %6916 = vperm.xlu0 %6915, %v5411
    %v6917 = vpop.permute.xlu0 %6916
    %6920 = vset.pattern.permute.xlu0 0
    %6921 = vperm.xlu0 %6920, %v5412
    %v6922 = vpop.permute.xlu0 %6921
    %6925 = vset.pattern.permute.xlu0 0
    %6926 = vperm.xlu0 %6925, %v5413
    %v6927 = vpop.permute.xlu0 %6926
    %6930 = vset.pattern.permute.xlu0 0
    %6931 = vperm.xlu0 %6930, %v5414
    %v6932 = vpop.permute.xlu0 %6931
    %6935 = vset.pattern.permute.xlu0 0
    %6936 = vperm.xlu0 %6935, %v5415
    %v6937 = vpop.permute.xlu0 %6936
    %v6939 = vmul.f32 %v5288, %v6902
    %v6940 = vmul.f32 %v5289, %v6902
    %v6941 = vmul.f32 %v5290, %v6907
    %v6942 = vmul.f32 %v5291, %v6907
    %v6943 = vmul.f32 %v5292, %v6912
    %v6944 = vmul.f32 %v5293, %v6912
    %v6945 = vmul.f32 %v5294, %v6917
    %v6946 = vmul.f32 %v5295, %v6917
    %v6947 = vmul.f32 %v5296, %v6922
    %v6948 = vmul.f32 %v5297, %v6922
    %v6949 = vmul.f32 %v5298, %v6927
    %v6950 = vmul.f32 %v5299, %v6927
    %v6951 = vmul.f32 %v5300, %v6932
    %v6952 = vmul.f32 %v5301, %v6932
    %v6953 = vmul.f32 %v5302, %v6937
    %v6954 = vmul.f32 %v5303, %v6937
    %v6955 = vmul.f32 %v5304, %v6902
    %v6956 = vmul.f32 %v5305, %v6902
    %v6957 = vmul.f32 %v5306, %v6907
    %v6958 = vmul.f32 %v5307, %v6907
    %v6959 = vmul.f32 %v5308, %v6912
    %v6960 = vmul.f32 %v5309, %v6912
    %v6961 = vmul.f32 %v5310, %v6917
    %v6962 = vmul.f32 %v5311, %v6917
    %v6963 = vmul.f32 %v5312, %v6922
    %v6964 = vmul.f32 %v5313, %v6922
    %v6965 = vmul.f32 %v5314, %v6927
    %v6966 = vmul.f32 %v5315, %v6927
    %v6967 = vmul.f32 %v5316, %v6932
    %v6968 = vmul.f32 %v5317, %v6932
    %v6969 = vmul.f32 %v5318, %v6937
    %v6970 = vmul.f32 %v5319, %v6937
    %7003 = vrot.lane.b32.xlu0 %v6939, 125
    %v7004 = vpop.permute.xlu0 %7003
    %7005 = vrot.lane.b32.xlu0 %v6940, 125
    %v7006 = vpop.permute.xlu0 %7005
    %7007 = vrot.lane.b32.xlu0 %v6941, 125
    %v7008 = vpop.permute.xlu0 %7007
    %7009 = vrot.lane.b32.xlu0 %v6942, 125
    %v7010 = vpop.permute.xlu0 %7009
    %7011 = vrot.lane.b32.xlu0 %v6943, 125
    %v7012 = vpop.permute.xlu0 %7011
    %7013 = vrot.lane.b32.xlu0 %v6944, 125
    %v7014 = vpop.permute.xlu0 %7013
    %7015 = vrot.lane.b32.xlu0 %v6945, 125
    %v7016 = vpop.permute.xlu0 %7015
    %7017 = vrot.lane.b32.xlu0 %v6946, 125
    %v7018 = vpop.permute.xlu0 %7017
    %7019 = vrot.lane.b32.xlu0 %v6947, 125
    %v7020 = vpop.permute.xlu0 %7019
    %7021 = vrot.lane.b32.xlu0 %v6948, 125
    %v7022 = vpop.permute.xlu0 %7021
    %7023 = vrot.lane.b32.xlu0 %v6949, 125
    %v7024 = vpop.permute.xlu0 %7023
    %7025 = vrot.lane.b32.xlu0 %v6950, 125
    %v7026 = vpop.permute.xlu0 %7025
    %7027 = vrot.lane.b32.xlu0 %v6951, 125
    %v7028 = vpop.permute.xlu0 %7027
    %7029 = vrot.lane.b32.xlu0 %v6952, 125
    %v7030 = vpop.permute.xlu0 %7029
    %7031 = vrot.lane.b32.xlu0 %v6953, 125
    %v7032 = vpop.permute.xlu0 %7031
    %7033 = vrot.lane.b32.xlu0 %v6954, 125
    %v7034 = vpop.permute.xlu0 %7033
    %7035 = vrot.lane.b32.xlu0 %v6955, 125
    %v7036 = vpop.permute.xlu0 %7035
    %7037 = vrot.lane.b32.xlu0 %v6956, 125
    %v7038 = vpop.permute.xlu0 %7037
    %7039 = vrot.lane.b32.xlu0 %v6957, 125
    %v7040 = vpop.permute.xlu0 %7039
    %7041 = vrot.lane.b32.xlu0 %v6958, 125
    %v7042 = vpop.permute.xlu0 %7041
    %7043 = vrot.lane.b32.xlu0 %v6959, 125
    %v7044 = vpop.permute.xlu0 %7043
    %7045 = vrot.lane.b32.xlu0 %v6960, 125
    %v7046 = vpop.permute.xlu0 %7045
    %7047 = vrot.lane.b32.xlu0 %v6961, 125
    %v7048 = vpop.permute.xlu0 %7047
    %7049 = vrot.lane.b32.xlu0 %v6962, 125
    %v7050 = vpop.permute.xlu0 %7049
    %7051 = vrot.lane.b32.xlu0 %v6963, 125
    %v7052 = vpop.permute.xlu0 %7051
    %7053 = vrot.lane.b32.xlu0 %v6964, 125
    %v7054 = vpop.permute.xlu0 %7053
    %7055 = vrot.lane.b32.xlu0 %v6965, 125
    %v7056 = vpop.permute.xlu0 %7055
    %7057 = vrot.lane.b32.xlu0 %v6966, 125
    %v7058 = vpop.permute.xlu0 %7057
    %7059 = vrot.lane.b32.xlu0 %v6967, 125
    %v7060 = vpop.permute.xlu0 %7059
    %7061 = vrot.lane.b32.xlu0 %v6968, 125
    %v7062 = vpop.permute.xlu0 %7061
    %7063 = vrot.lane.b32.xlu0 %v6969, 125
    %v7064 = vpop.permute.xlu0 %7063
    %7065 = vrot.lane.b32.xlu0 %v6970, 125
    %v7066 = vpop.permute.xlu0 %7065
    %v7067 = vsel %vm6818, %v7004, %v7006
    %v7068 = vsel %vm6818, %v7008, %v7010
    %v7069 = vsel %vm6818, %v7012, %v7014
    %v7070 = vsel %vm6818, %v7016, %v7018
    %v7071 = vsel %vm6818, %v7020, %v7022
    %v7072 = vsel %vm6818, %v7024, %v7026
    %v7073 = vsel %vm6818, %v7028, %v7030
    %v7074 = vsel %vm6818, %v7032, %v7034
    %v7075 = vsel %vm6818, %v7036, %v7038
    %v7076 = vsel %vm6818, %v7040, %v7042
    %v7077 = vsel %vm6818, %v7044, %v7046
    %v7078 = vsel %vm6818, %v7048, %v7050
    %v7079 = vsel %vm6818, %v7052, %v7054
    %v7080 = vsel %vm6818, %v7056, %v7058
    %v7081 = vsel %vm6818, %v7060, %v7062
    %v7082 = vsel %vm6818, %v7064, %v7066
    %v7115 = vadd.f32 %v6867, %v7067
    %v7116 = vadd.f32 %v6868, %v7006
    %v7117 = vadd.f32 %v6869, %v7068
    %v7118 = vadd.f32 %v6870, %v7010
    %v7119 = vadd.f32 %v6871, %v7069
    %v7120 = vadd.f32 %v6872, %v7014
    %v7121 = vadd.f32 %v6873, %v7070
    %v7122 = vadd.f32 %v6874, %v7018
    %v7123 = vadd.f32 %v6875, %v7071
    %v7124 = vadd.f32 %v6876, %v7022
    %v7125 = vadd.f32 %v6877, %v7072
    %v7126 = vadd.f32 %v6878, %v7026
    %v7127 = vadd.f32 %v6879, %v7073
    %v7128 = vadd.f32 %v6880, %v7030
    %v7129 = vadd.f32 %v6881, %v7074
    %v7130 = vadd.f32 %v6882, %v7034
    %v7131 = vadd.f32 %v6883, %v7075
    %v7132 = vadd.f32 %v6884, %v7038
    %v7133 = vadd.f32 %v6885, %v7076
    %v7134 = vadd.f32 %v6886, %v7042
    %v7135 = vadd.f32 %v6887, %v7077
    %v7136 = vadd.f32 %v6888, %v7046
    %v7137 = vadd.f32 %v6889, %v7078
    %v7138 = vadd.f32 %v6890, %v7050
    %v7139 = vadd.f32 %v6891, %v7079
    %v7140 = vadd.f32 %v6892, %v7054
    %v7141 = vadd.f32 %v6893, %v7080
    %v7142 = vadd.f32 %v6894, %v7058
    %v7143 = vadd.f32 %v6895, %v7081
    %v7144 = vadd.f32 %v6896, %v7062
    %v7145 = vadd.f32 %v6897, %v7082
    %v7146 = vadd.f32 %v6898, %v7066
    %7148 = vset.pattern.permute.xlu0 0
    %7149 = vperm.xlu0 %7148, %v5352
    %v7150 = vpop.permute.xlu0 %7149
    %7153 = vset.pattern.permute.xlu0 0
    %7154 = vperm.xlu0 %7153, %v5353
    %v7155 = vpop.permute.xlu0 %7154
    %7158 = vset.pattern.permute.xlu0 0
    %7159 = vperm.xlu0 %7158, %v5354
    %v7160 = vpop.permute.xlu0 %7159
    %7163 = vset.pattern.permute.xlu0 0
    %7164 = vperm.xlu0 %7163, %v5355
    %v7165 = vpop.permute.xlu0 %7164
    %7168 = vset.pattern.permute.xlu0 0
    %7169 = vperm.xlu0 %7168, %v5356
    %v7170 = vpop.permute.xlu0 %7169
    %7173 = vset.pattern.permute.xlu0 0
    %7174 = vperm.xlu0 %7173, %v5357
    %v7175 = vpop.permute.xlu0 %7174
    %7178 = vset.pattern.permute.xlu0 0
    %7179 = vperm.xlu0 %7178, %v5358
    %v7180 = vpop.permute.xlu0 %7179
    %7183 = vset.pattern.permute.xlu0 0
    %7184 = vperm.xlu0 %7183, %v5359
    %v7185 = vpop.permute.xlu0 %7184
    %v7187 = vmul.f32 %v5224, %v7150
    %v7188 = vmul.f32 %v5225, %v7150
    %v7189 = vmul.f32 %v5226, %v7155
    %v7190 = vmul.f32 %v5227, %v7155
    %v7191 = vmul.f32 %v5228, %v7160
    %v7192 = vmul.f32 %v5229, %v7160
    %v7193 = vmul.f32 %v5230, %v7165
    %v7194 = vmul.f32 %v5231, %v7165
    %v7195 = vmul.f32 %v5232, %v7170
    %v7196 = vmul.f32 %v5233, %v7170
    %v7197 = vmul.f32 %v5234, %v7175
    %v7198 = vmul.f32 %v5235, %v7175
    %v7199 = vmul.f32 %v5236, %v7180
    %v7200 = vmul.f32 %v5237, %v7180
    %v7201 = vmul.f32 %v5238, %v7185
    %v7202 = vmul.f32 %v5239, %v7185
    %v7203 = vmul.f32 %v5240, %v7150
    %v7204 = vmul.f32 %v5241, %v7150
    %v7205 = vmul.f32 %v5242, %v7155
    %v7206 = vmul.f32 %v5243, %v7155
    %v7207 = vmul.f32 %v5244, %v7160
    %v7208 = vmul.f32 %v5245, %v7160
    %v7209 = vmul.f32 %v5246, %v7165
    %v7210 = vmul.f32 %v5247, %v7165
    %v7211 = vmul.f32 %v5248, %v7170
    %v7212 = vmul.f32 %v5249, %v7170
    %v7213 = vmul.f32 %v5250, %v7175
    %v7214 = vmul.f32 %v5251, %v7175
    %v7215 = vmul.f32 %v5252, %v7180
    %v7216 = vmul.f32 %v5253, %v7180
    %v7217 = vmul.f32 %v5254, %v7185
    %v7218 = vmul.f32 %v5255, %v7185
    %7251 = vrot.lane.b32.xlu0 %v7187, 124
    %v7252 = vpop.permute.xlu0 %7251
    %7253 = vrot.lane.b32.xlu0 %v7188, 124
    %v7254 = vpop.permute.xlu0 %7253
    %7255 = vrot.lane.b32.xlu0 %v7189, 124
    %v7256 = vpop.permute.xlu0 %7255
    %7257 = vrot.lane.b32.xlu0 %v7190, 124
    %v7258 = vpop.permute.xlu0 %7257
    %7259 = vrot.lane.b32.xlu0 %v7191, 124
    %v7260 = vpop.permute.xlu0 %7259
    %7261 = vrot.lane.b32.xlu0 %v7192, 124
    %v7262 = vpop.permute.xlu0 %7261
    %7263 = vrot.lane.b32.xlu0 %v7193, 124
    %v7264 = vpop.permute.xlu0 %7263
    %7265 = vrot.lane.b32.xlu0 %v7194, 124
    %v7266 = vpop.permute.xlu0 %7265
    %7267 = vrot.lane.b32.xlu0 %v7195, 124
    %v7268 = vpop.permute.xlu0 %7267
    %7269 = vrot.lane.b32.xlu0 %v7196, 124
    %v7270 = vpop.permute.xlu0 %7269
    %7271 = vrot.lane.b32.xlu0 %v7197, 124
    %v7272 = vpop.permute.xlu0 %7271
    %7273 = vrot.lane.b32.xlu0 %v7198, 124
    %v7274 = vpop.permute.xlu0 %7273
    %7275 = vrot.lane.b32.xlu0 %v7199, 124
    %v7276 = vpop.permute.xlu0 %7275
    %7277 = vrot.lane.b32.xlu0 %v7200, 124
    %v7278 = vpop.permute.xlu0 %7277
    %7279 = vrot.lane.b32.xlu0 %v7201, 124
    %v7280 = vpop.permute.xlu0 %7279
    %7281 = vrot.lane.b32.xlu0 %v7202, 124
    %v7282 = vpop.permute.xlu0 %7281
    %7283 = vrot.lane.b32.xlu0 %v7203, 124
    %v7284 = vpop.permute.xlu0 %7283
    %7285 = vrot.lane.b32.xlu0 %v7204, 124
    %v7286 = vpop.permute.xlu0 %7285
    %7287 = vrot.lane.b32.xlu0 %v7205, 124
    %v7288 = vpop.permute.xlu0 %7287
    %7289 = vrot.lane.b32.xlu0 %v7206, 124
    %v7290 = vpop.permute.xlu0 %7289
    %7291 = vrot.lane.b32.xlu0 %v7207, 124
    %v7292 = vpop.permute.xlu0 %7291
    %7293 = vrot.lane.b32.xlu0 %v7208, 124
    %v7294 = vpop.permute.xlu0 %7293
    %7295 = vrot.lane.b32.xlu0 %v7209, 124
    %v7296 = vpop.permute.xlu0 %7295
    %7297 = vrot.lane.b32.xlu0 %v7210, 124
    %v7298 = vpop.permute.xlu0 %7297
    %7299 = vrot.lane.b32.xlu0 %v7211, 124
    %v7300 = vpop.permute.xlu0 %7299
    %7301 = vrot.lane.b32.xlu0 %v7212, 124
    %v7302 = vpop.permute.xlu0 %7301
    %7303 = vrot.lane.b32.xlu0 %v7213, 124
    %v7304 = vpop.permute.xlu0 %7303
    %7305 = vrot.lane.b32.xlu0 %v7214, 124
    %v7306 = vpop.permute.xlu0 %7305
    %7307 = vrot.lane.b32.xlu0 %v7215, 124
    %v7308 = vpop.permute.xlu0 %7307
    %7309 = vrot.lane.b32.xlu0 %v7216, 124
    %v7310 = vpop.permute.xlu0 %7309
    %7311 = vrot.lane.b32.xlu0 %v7217, 124
    %v7312 = vpop.permute.xlu0 %7311
    %7313 = vrot.lane.b32.xlu0 %v7218, 124
    %v7314 = vpop.permute.xlu0 %7313
    %vm7315 = vcmask 1014784
    %v7316 = vsel %vm7315, %v7252, %v7254
    %v7317 = vsel %vm7315, %v7256, %v7258
    %v7318 = vsel %vm7315, %v7260, %v7262
    %v7319 = vsel %vm7315, %v7264, %v7266
    %v7320 = vsel %vm7315, %v7268, %v7270
    %v7321 = vsel %vm7315, %v7272, %v7274
    %v7322 = vsel %vm7315, %v7276, %v7278
    %v7323 = vsel %vm7315, %v7280, %v7282
    %v7324 = vsel %vm7315, %v7284, %v7286
    %v7325 = vsel %vm7315, %v7288, %v7290
    %v7326 = vsel %vm7315, %v7292, %v7294
    %v7327 = vsel %vm7315, %v7296, %v7298
    %v7328 = vsel %vm7315, %v7300, %v7302
    %v7329 = vsel %vm7315, %v7304, %v7306
    %v7330 = vsel %vm7315, %v7308, %v7310
    %v7331 = vsel %vm7315, %v7312, %v7314
    %v7364 = vadd.f32 %v7115, %v7316
    %v7365 = vadd.f32 %v7116, %v7254
    %v7366 = vadd.f32 %v7117, %v7317
    %v7367 = vadd.f32 %v7118, %v7258
    %v7368 = vadd.f32 %v7119, %v7318
    %v7369 = vadd.f32 %v7120, %v7262
    %v7370 = vadd.f32 %v7121, %v7319
    %v7371 = vadd.f32 %v7122, %v7266
    %v7372 = vadd.f32 %v7123, %v7320
    %v7373 = vadd.f32 %v7124, %v7270
    %v7374 = vadd.f32 %v7125, %v7321
    %v7375 = vadd.f32 %v7126, %v7274
    %v7376 = vadd.f32 %v7127, %v7322
    %v7377 = vadd.f32 %v7128, %v7278
    %v7378 = vadd.f32 %v7129, %v7323
    %v7379 = vadd.f32 %v7130, %v7282
    %v7380 = vadd.f32 %v7131, %v7324
    %v7381 = vadd.f32 %v7132, %v7286
    %v7382 = vadd.f32 %v7133, %v7325
    %v7383 = vadd.f32 %v7134, %v7290
    %v7384 = vadd.f32 %v7135, %v7326
    %v7385 = vadd.f32 %v7136, %v7294
    %v7386 = vadd.f32 %v7137, %v7327
    %v7387 = vadd.f32 %v7138, %v7298
    %v7388 = vadd.f32 %v7139, %v7328
    %v7389 = vadd.f32 %v7140, %v7302
    %v7390 = vadd.f32 %v7141, %v7329
    %v7391 = vadd.f32 %v7142, %v7306
    %v7392 = vadd.f32 %v7143, %v7330
    %v7393 = vadd.f32 %v7144, %v7310
    %v7394 = vadd.f32 %v7145, %v7331
    %v7395 = vadd.f32 %v7146, %v7314
    %7397 = vset.pattern.permute.xlu0 0
    %7398 = vperm.xlu0 %7397, %v5416
    %v7399 = vpop.permute.xlu0 %7398
    %7402 = vset.pattern.permute.xlu0 0
    %7403 = vperm.xlu0 %7402, %v5417
    %v7404 = vpop.permute.xlu0 %7403
    %7407 = vset.pattern.permute.xlu0 0
    %7408 = vperm.xlu0 %7407, %v5418
    %v7409 = vpop.permute.xlu0 %7408
    %7412 = vset.pattern.permute.xlu0 0
    %7413 = vperm.xlu0 %7412, %v5419
    %v7414 = vpop.permute.xlu0 %7413
    %7417 = vset.pattern.permute.xlu0 0
    %7418 = vperm.xlu0 %7417, %v5420
    %v7419 = vpop.permute.xlu0 %7418
    %7422 = vset.pattern.permute.xlu0 0
    %7423 = vperm.xlu0 %7422, %v5421
    %v7424 = vpop.permute.xlu0 %7423
    %7427 = vset.pattern.permute.xlu0 0
    %7428 = vperm.xlu0 %7427, %v5422
    %v7429 = vpop.permute.xlu0 %7428
    %7432 = vset.pattern.permute.xlu0 0
    %7433 = vperm.xlu0 %7432, %v5423
    %v7434 = vpop.permute.xlu0 %7433
    %v7436 = vmul.f32 %v5288, %v7399
    %v7437 = vmul.f32 %v5289, %v7399
    %v7438 = vmul.f32 %v5290, %v7404
    %v7439 = vmul.f32 %v5291, %v7404
    %v7440 = vmul.f32 %v5292, %v7409
    %v7441 = vmul.f32 %v5293, %v7409
    %v7442 = vmul.f32 %v5294, %v7414
    %v7443 = vmul.f32 %v5295, %v7414
    %v7444 = vmul.f32 %v5296, %v7419
    %v7445 = vmul.f32 %v5297, %v7419
    %v7446 = vmul.f32 %v5298, %v7424
    %v7447 = vmul.f32 %v5299, %v7424
    %v7448 = vmul.f32 %v5300, %v7429
    %v7449 = vmul.f32 %v5301, %v7429
    %v7450 = vmul.f32 %v5302, %v7434
    %v7451 = vmul.f32 %v5303, %v7434
    %v7452 = vmul.f32 %v5304, %v7399
    %v7453 = vmul.f32 %v5305, %v7399
    %v7454 = vmul.f32 %v5306, %v7404
    %v7455 = vmul.f32 %v5307, %v7404
    %v7456 = vmul.f32 %v5308, %v7409
    %v7457 = vmul.f32 %v5309, %v7409
    %v7458 = vmul.f32 %v5310, %v7414
    %v7459 = vmul.f32 %v5311, %v7414
    %v7460 = vmul.f32 %v5312, %v7419
    %v7461 = vmul.f32 %v5313, %v7419
    %v7462 = vmul.f32 %v5314, %v7424
    %v7463 = vmul.f32 %v5315, %v7424
    %v7464 = vmul.f32 %v5316, %v7429
    %v7465 = vmul.f32 %v5317, %v7429
    %v7466 = vmul.f32 %v5318, %v7434
    %v7467 = vmul.f32 %v5319, %v7434
    %7500 = vrot.lane.b32.xlu0 %v7436, 124
    %v7501 = vpop.permute.xlu0 %7500
    %7502 = vrot.lane.b32.xlu0 %v7437, 124
    %v7503 = vpop.permute.xlu0 %7502
    %7504 = vrot.lane.b32.xlu0 %v7438, 124
    %v7505 = vpop.permute.xlu0 %7504
    %7506 = vrot.lane.b32.xlu0 %v7439, 124
    %v7507 = vpop.permute.xlu0 %7506
    %7508 = vrot.lane.b32.xlu0 %v7440, 124
    %v7509 = vpop.permute.xlu0 %7508
    %7510 = vrot.lane.b32.xlu0 %v7441, 124
    %v7511 = vpop.permute.xlu0 %7510
    %7512 = vrot.lane.b32.xlu0 %v7442, 124
    %v7513 = vpop.permute.xlu0 %7512
    %7514 = vrot.lane.b32.xlu0 %v7443, 124
    %v7515 = vpop.permute.xlu0 %7514
    %7516 = vrot.lane.b32.xlu0 %v7444, 124
    %v7517 = vpop.permute.xlu0 %7516
    %7518 = vrot.lane.b32.xlu0 %v7445, 124
    %v7519 = vpop.permute.xlu0 %7518
    %7520 = vrot.lane.b32.xlu0 %v7446, 124
    %v7521 = vpop.permute.xlu0 %7520
    %7522 = vrot.lane.b32.xlu0 %v7447, 124
    %v7523 = vpop.permute.xlu0 %7522
    %7524 = vrot.lane.b32.xlu0 %v7448, 124
    %v7525 = vpop.permute.xlu0 %7524
    %7526 = vrot.lane.b32.xlu0 %v7449, 124
    %v7527 = vpop.permute.xlu0 %7526
    %7528 = vrot.lane.b32.xlu0 %v7450, 124
    %v7529 = vpop.permute.xlu0 %7528
    %7530 = vrot.lane.b32.xlu0 %v7451, 124
    %v7531 = vpop.permute.xlu0 %7530
    %7532 = vrot.lane.b32.xlu0 %v7452, 124
    %v7533 = vpop.permute.xlu0 %7532
    %7534 = vrot.lane.b32.xlu0 %v7453, 124
    %v7535 = vpop.permute.xlu0 %7534
    %7536 = vrot.lane.b32.xlu0 %v7454, 124
    %v7537 = vpop.permute.xlu0 %7536
    %7538 = vrot.lane.b32.xlu0 %v7455, 124
    %v7539 = vpop.permute.xlu0 %7538
    %7540 = vrot.lane.b32.xlu0 %v7456, 124
    %v7541 = vpop.permute.xlu0 %7540
    %7542 = vrot.lane.b32.xlu0 %v7457, 124
    %v7543 = vpop.permute.xlu0 %7542
    %7544 = vrot.lane.b32.xlu0 %v7458, 124
    %v7545 = vpop.permute.xlu0 %7544
    %7546 = vrot.lane.b32.xlu0 %v7459, 124
    %v7547 = vpop.permute.xlu0 %7546
    %7548 = vrot.lane.b32.xlu0 %v7460, 124
    %v7549 = vpop.permute.xlu0 %7548
    %7550 = vrot.lane.b32.xlu0 %v7461, 124
    %v7551 = vpop.permute.xlu0 %7550
    %7552 = vrot.lane.b32.xlu0 %v7462, 124
    %v7553 = vpop.permute.xlu0 %7552
    %7554 = vrot.lane.b32.xlu0 %v7463, 124
    %v7555 = vpop.permute.xlu0 %7554
    %7556 = vrot.lane.b32.xlu0 %v7464, 124
    %v7557 = vpop.permute.xlu0 %7556
    %7558 = vrot.lane.b32.xlu0 %v7465, 124
    %v7559 = vpop.permute.xlu0 %7558
    %7560 = vrot.lane.b32.xlu0 %v7466, 124
    %v7561 = vpop.permute.xlu0 %7560
    %7562 = vrot.lane.b32.xlu0 %v7467, 124
    %v7563 = vpop.permute.xlu0 %7562
    %v7564 = vsel %vm7315, %v7501, %v7503
    %v7565 = vsel %vm7315, %v7505, %v7507
    %v7566 = vsel %vm7315, %v7509, %v7511
    %v7567 = vsel %vm7315, %v7513, %v7515
    %v7568 = vsel %vm7315, %v7517, %v7519
    %v7569 = vsel %vm7315, %v7521, %v7523
    %v7570 = vsel %vm7315, %v7525, %v7527
    %v7571 = vsel %vm7315, %v7529, %v7531
    %v7572 = vsel %vm7315, %v7533, %v7535
    %v7573 = vsel %vm7315, %v7537, %v7539
    %v7574 = vsel %vm7315, %v7541, %v7543
    %v7575 = vsel %vm7315, %v7545, %v7547
    %v7576 = vsel %vm7315, %v7549, %v7551
    %v7577 = vsel %vm7315, %v7553, %v7555
    %v7578 = vsel %vm7315, %v7557, %v7559
    %v7579 = vsel %vm7315, %v7561, %v7563
    %v7612 = vadd.f32 %v7364, %v7564
    %v7613 = vadd.f32 %v7365, %v7503
    %v7614 = vadd.f32 %v7366, %v7565
    %v7615 = vadd.f32 %v7367, %v7507
    %v7616 = vadd.f32 %v7368, %v7566
    %v7617 = vadd.f32 %v7369, %v7511
    %v7618 = vadd.f32 %v7370, %v7567
    %v7619 = vadd.f32 %v7371, %v7515
    %v7620 = vadd.f32 %v7372, %v7568
    %v7621 = vadd.f32 %v7373, %v7519
    %v7622 = vadd.f32 %v7374, %v7569
    %v7623 = vadd.f32 %v7375, %v7523
    %v7624 = vadd.f32 %v7376, %v7570
    %v7625 = vadd.f32 %v7377, %v7527
    %v7626 = vadd.f32 %v7378, %v7571
    %v7627 = vadd.f32 %v7379, %v7531
    %v7628 = vadd.f32 %v7380, %v7572
    %v7629 = vadd.f32 %v7381, %v7535
    %v7630 = vadd.f32 %v7382, %v7573
    %v7631 = vadd.f32 %v7383, %v7539
    %v7632 = vadd.f32 %v7384, %v7574
    %v7633 = vadd.f32 %v7385, %v7543
    %v7634 = vadd.f32 %v7386, %v7575
    %v7635 = vadd.f32 %v7387, %v7547
    %v7636 = vadd.f32 %v7388, %v7576
    %v7637 = vadd.f32 %v7389, %v7551
    %v7638 = vadd.f32 %v7390, %v7577
    %v7639 = vadd.f32 %v7391, %v7555
    %v7640 = vadd.f32 %v7392, %v7578
    %v7641 = vadd.f32 %v7393, %v7559
    %v7642 = vadd.f32 %v7394, %v7579
    %v7643 = vadd.f32 %v7395, %v7563
    %7645 = vset.pattern.permute.xlu0 0
    %7646 = vperm.xlu0 %7645, %v5360
    %v7647 = vpop.permute.xlu0 %7646
    %7650 = vset.pattern.permute.xlu0 0
    %7651 = vperm.xlu0 %7650, %v5361
    %v7652 = vpop.permute.xlu0 %7651
    %7655 = vset.pattern.permute.xlu0 0
    %7656 = vperm.xlu0 %7655, %v5362
    %v7657 = vpop.permute.xlu0 %7656
    %7660 = vset.pattern.permute.xlu0 0
    %7661 = vperm.xlu0 %7660, %v5363
    %v7662 = vpop.permute.xlu0 %7661
    %7665 = vset.pattern.permute.xlu0 0
    %7666 = vperm.xlu0 %7665, %v5364
    %v7667 = vpop.permute.xlu0 %7666
    %7670 = vset.pattern.permute.xlu0 0
    %7671 = vperm.xlu0 %7670, %v5365
    %v7672 = vpop.permute.xlu0 %7671
    %7675 = vset.pattern.permute.xlu0 0
    %7676 = vperm.xlu0 %7675, %v5366
    %v7677 = vpop.permute.xlu0 %7676
    %7680 = vset.pattern.permute.xlu0 0
    %7681 = vperm.xlu0 %7680, %v5367
    %v7682 = vpop.permute.xlu0 %7681
    %v7684 = vmul.f32 %v5224, %v7647
    %v7685 = vmul.f32 %v5225, %v7647
    %v7686 = vmul.f32 %v5226, %v7652
    %v7687 = vmul.f32 %v5227, %v7652
    %v7688 = vmul.f32 %v5228, %v7657
    %v7689 = vmul.f32 %v5229, %v7657
    %v7690 = vmul.f32 %v5230, %v7662
    %v7691 = vmul.f32 %v5231, %v7662
    %v7692 = vmul.f32 %v5232, %v7667
    %v7693 = vmul.f32 %v5233, %v7667
    %v7694 = vmul.f32 %v5234, %v7672
    %v7695 = vmul.f32 %v5235, %v7672
    %v7696 = vmul.f32 %v5236, %v7677
    %v7697 = vmul.f32 %v5237, %v7677
    %v7698 = vmul.f32 %v5238, %v7682
    %v7699 = vmul.f32 %v5239, %v7682
    %v7700 = vmul.f32 %v5240, %v7647
    %v7701 = vmul.f32 %v5241, %v7647
    %v7702 = vmul.f32 %v5242, %v7652
    %v7703 = vmul.f32 %v5243, %v7652
    %v7704 = vmul.f32 %v5244, %v7657
    %v7705 = vmul.f32 %v5245, %v7657
    %v7706 = vmul.f32 %v5246, %v7662
    %v7707 = vmul.f32 %v5247, %v7662
    %v7708 = vmul.f32 %v5248, %v7667
    %v7709 = vmul.f32 %v5249, %v7667
    %v7710 = vmul.f32 %v5250, %v7672
    %v7711 = vmul.f32 %v5251, %v7672
    %v7712 = vmul.f32 %v5252, %v7677
    %v7713 = vmul.f32 %v5253, %v7677
    %v7714 = vmul.f32 %v5254, %v7682
    %v7715 = vmul.f32 %v5255, %v7682
    %7748 = vrot.lane.b32.xlu0 %v7684, 123
    %v7749 = vpop.permute.xlu0 %7748
    %7750 = vrot.lane.b32.xlu0 %v7685, 123
    %v7751 = vpop.permute.xlu0 %7750
    %7752 = vrot.lane.b32.xlu0 %v7686, 123
    %v7753 = vpop.permute.xlu0 %7752
    %7754 = vrot.lane.b32.xlu0 %v7687, 123
    %v7755 = vpop.permute.xlu0 %7754
    %7756 = vrot.lane.b32.xlu0 %v7688, 123
    %v7757 = vpop.permute.xlu0 %7756
    %7758 = vrot.lane.b32.xlu0 %v7689, 123
    %v7759 = vpop.permute.xlu0 %7758
    %7760 = vrot.lane.b32.xlu0 %v7690, 123
    %v7761 = vpop.permute.xlu0 %7760
    %7762 = vrot.lane.b32.xlu0 %v7691, 123
    %v7763 = vpop.permute.xlu0 %7762
    %7764 = vrot.lane.b32.xlu0 %v7692, 123
    %v7765 = vpop.permute.xlu0 %7764
    %7766 = vrot.lane.b32.xlu0 %v7693, 123
    %v7767 = vpop.permute.xlu0 %7766
    %7768 = vrot.lane.b32.xlu0 %v7694, 123
    %v7769 = vpop.permute.xlu0 %7768
    %7770 = vrot.lane.b32.xlu0 %v7695, 123
    %v7771 = vpop.permute.xlu0 %7770
    %7772 = vrot.lane.b32.xlu0 %v7696, 123
    %v7773 = vpop.permute.xlu0 %7772
    %7774 = vrot.lane.b32.xlu0 %v7697, 123
    %v7775 = vpop.permute.xlu0 %7774
    %7776 = vrot.lane.b32.xlu0 %v7698, 123
    %v7777 = vpop.permute.xlu0 %7776
    %7778 = vrot.lane.b32.xlu0 %v7699, 123
    %v7779 = vpop.permute.xlu0 %7778
    %7780 = vrot.lane.b32.xlu0 %v7700, 123
    %v7781 = vpop.permute.xlu0 %7780
    %7782 = vrot.lane.b32.xlu0 %v7701, 123
    %v7783 = vpop.permute.xlu0 %7782
    %7784 = vrot.lane.b32.xlu0 %v7702, 123
    %v7785 = vpop.permute.xlu0 %7784
    %7786 = vrot.lane.b32.xlu0 %v7703, 123
    %v7787 = vpop.permute.xlu0 %7786
    %7788 = vrot.lane.b32.xlu0 %v7704, 123
    %v7789 = vpop.permute.xlu0 %7788
    %7790 = vrot.lane.b32.xlu0 %v7705, 123
    %v7791 = vpop.permute.xlu0 %7790
    %7792 = vrot.lane.b32.xlu0 %v7706, 123
    %v7793 = vpop.permute.xlu0 %7792
    %7794 = vrot.lane.b32.xlu0 %v7707, 123
    %v7795 = vpop.permute.xlu0 %7794
    %7796 = vrot.lane.b32.xlu0 %v7708, 123
    %v7797 = vpop.permute.xlu0 %7796
    %7798 = vrot.lane.b32.xlu0 %v7709, 123
    %v7799 = vpop.permute.xlu0 %7798
    %7800 = vrot.lane.b32.xlu0 %v7710, 123
    %v7801 = vpop.permute.xlu0 %7800
    %7802 = vrot.lane.b32.xlu0 %v7711, 123
    %v7803 = vpop.permute.xlu0 %7802
    %7804 = vrot.lane.b32.xlu0 %v7712, 123
    %v7805 = vpop.permute.xlu0 %7804
    %7806 = vrot.lane.b32.xlu0 %v7713, 123
    %v7807 = vpop.permute.xlu0 %7806
    %7808 = vrot.lane.b32.xlu0 %v7714, 123
    %v7809 = vpop.permute.xlu0 %7808
    %7810 = vrot.lane.b32.xlu0 %v7715, 123
    %v7811 = vpop.permute.xlu0 %7810
    %vm7812 = vcmask 1006592
    %v7813 = vsel %vm7812, %v7749, %v7751
    %v7814 = vsel %vm7812, %v7753, %v7755
    %v7815 = vsel %vm7812, %v7757, %v7759
    %v7816 = vsel %vm7812, %v7761, %v7763
    %v7817 = vsel %vm7812, %v7765, %v7767
    %v7818 = vsel %vm7812, %v7769, %v7771
    %v7819 = vsel %vm7812, %v7773, %v7775
    %v7820 = vsel %vm7812, %v7777, %v7779
    %v7821 = vsel %vm7812, %v7781, %v7783
    %v7822 = vsel %vm7812, %v7785, %v7787
    %v7823 = vsel %vm7812, %v7789, %v7791
    %v7824 = vsel %vm7812, %v7793, %v7795
    %v7825 = vsel %vm7812, %v7797, %v7799
    %v7826 = vsel %vm7812, %v7801, %v7803
    %v7827 = vsel %vm7812, %v7805, %v7807
    %v7828 = vsel %vm7812, %v7809, %v7811
    %v7861 = vadd.f32 %v7612, %v7813
    %v7862 = vadd.f32 %v7613, %v7751
    %v7863 = vadd.f32 %v7614, %v7814
    %v7864 = vadd.f32 %v7615, %v7755
    %v7865 = vadd.f32 %v7616, %v7815
    %v7866 = vadd.f32 %v7617, %v7759
    %v7867 = vadd.f32 %v7618, %v7816
    %v7868 = vadd.f32 %v7619, %v7763
    %v7869 = vadd.f32 %v7620, %v7817
    %v7870 = vadd.f32 %v7621, %v7767
    %v7871 = vadd.f32 %v7622, %v7818
    %v7872 = vadd.f32 %v7623, %v7771
    %v7873 = vadd.f32 %v7624, %v7819
    %v7874 = vadd.f32 %v7625, %v7775
    %v7875 = vadd.f32 %v7626, %v7820
    %v7876 = vadd.f32 %v7627, %v7779
    %v7877 = vadd.f32 %v7628, %v7821
    %v7878 = vadd.f32 %v7629, %v7783
    %v7879 = vadd.f32 %v7630, %v7822
    %v7880 = vadd.f32 %v7631, %v7787
    %v7881 = vadd.f32 %v7632, %v7823
    %v7882 = vadd.f32 %v7633, %v7791
    %v7883 = vadd.f32 %v7634, %v7824
    %v7884 = vadd.f32 %v7635, %v7795
    %v7885 = vadd.f32 %v7636, %v7825
    %v7886 = vadd.f32 %v7637, %v7799
    %v7887 = vadd.f32 %v7638, %v7826
    %v7888 = vadd.f32 %v7639, %v7803
    %v7889 = vadd.f32 %v7640, %v7827
    %v7890 = vadd.f32 %v7641, %v7807
    %v7891 = vadd.f32 %v7642, %v7828
    %v7892 = vadd.f32 %v7643, %v7811
    %7894 = vset.pattern.permute.xlu0 0
    %7895 = vperm.xlu0 %7894, %v5424
    %v7896 = vpop.permute.xlu0 %7895
    %7899 = vset.pattern.permute.xlu0 0
    %7900 = vperm.xlu0 %7899, %v5425
    %v7901 = vpop.permute.xlu0 %7900
    %7904 = vset.pattern.permute.xlu0 0
    %7905 = vperm.xlu0 %7904, %v5426
    %v7906 = vpop.permute.xlu0 %7905
    %7909 = vset.pattern.permute.xlu0 0
    %7910 = vperm.xlu0 %7909, %v5427
    %v7911 = vpop.permute.xlu0 %7910
    %7914 = vset.pattern.permute.xlu0 0
    %7915 = vperm.xlu0 %7914, %v5428
    %v7916 = vpop.permute.xlu0 %7915
    %7919 = vset.pattern.permute.xlu0 0
    %7920 = vperm.xlu0 %7919, %v5429
    %v7921 = vpop.permute.xlu0 %7920
    %7924 = vset.pattern.permute.xlu0 0
    %7925 = vperm.xlu0 %7924, %v5430
    %v7926 = vpop.permute.xlu0 %7925
    %7929 = vset.pattern.permute.xlu0 0
    %7930 = vperm.xlu0 %7929, %v5431
    %v7931 = vpop.permute.xlu0 %7930
    %v7933 = vmul.f32 %v5288, %v7896
    %v7934 = vmul.f32 %v5289, %v7896
    %v7935 = vmul.f32 %v5290, %v7901
    %v7936 = vmul.f32 %v5291, %v7901
    %v7937 = vmul.f32 %v5292, %v7906
    %v7938 = vmul.f32 %v5293, %v7906
    %v7939 = vmul.f32 %v5294, %v7911
    %v7940 = vmul.f32 %v5295, %v7911
    %v7941 = vmul.f32 %v5296, %v7916
    %v7942 = vmul.f32 %v5297, %v7916
    %v7943 = vmul.f32 %v5298, %v7921
    %v7944 = vmul.f32 %v5299, %v7921
    %v7945 = vmul.f32 %v5300, %v7926
    %v7946 = vmul.f32 %v5301, %v7926
    %v7947 = vmul.f32 %v5302, %v7931
    %v7948 = vmul.f32 %v5303, %v7931
    %v7949 = vmul.f32 %v5304, %v7896
    %v7950 = vmul.f32 %v5305, %v7896
    %v7951 = vmul.f32 %v5306, %v7901
    %v7952 = vmul.f32 %v5307, %v7901
    %v7953 = vmul.f32 %v5308, %v7906
    %v7954 = vmul.f32 %v5309, %v7906
    %v7955 = vmul.f32 %v5310, %v7911
    %v7956 = vmul.f32 %v5311, %v7911
    %v7957 = vmul.f32 %v5312, %v7916
    %v7958 = vmul.f32 %v5313, %v7916
    %v7959 = vmul.f32 %v5314, %v7921
    %v7960 = vmul.f32 %v5315, %v7921
    %v7961 = vmul.f32 %v5316, %v7926
    %v7962 = vmul.f32 %v5317, %v7926
    %v7963 = vmul.f32 %v5318, %v7931
    %v7964 = vmul.f32 %v5319, %v7931
    %7997 = vrot.lane.b32.xlu0 %v7933, 123
    %v7998 = vpop.permute.xlu0 %7997
    %7999 = vrot.lane.b32.xlu0 %v7934, 123
    %v8000 = vpop.permute.xlu0 %7999
    %8001 = vrot.lane.b32.xlu0 %v7935, 123
    %v8002 = vpop.permute.xlu0 %8001
    %8003 = vrot.lane.b32.xlu0 %v7936, 123
    %v8004 = vpop.permute.xlu0 %8003
    %8005 = vrot.lane.b32.xlu0 %v7937, 123
    %v8006 = vpop.permute.xlu0 %8005
    %8007 = vrot.lane.b32.xlu0 %v7938, 123
    %v8008 = vpop.permute.xlu0 %8007
    %8009 = vrot.lane.b32.xlu0 %v7939, 123
    %v8010 = vpop.permute.xlu0 %8009
    %8011 = vrot.lane.b32.xlu0 %v7940, 123
    %v8012 = vpop.permute.xlu0 %8011
    %8013 = vrot.lane.b32.xlu0 %v7941, 123
    %v8014 = vpop.permute.xlu0 %8013
    %8015 = vrot.lane.b32.xlu0 %v7942, 123
    %v8016 = vpop.permute.xlu0 %8015
    %8017 = vrot.lane.b32.xlu0 %v7943, 123
    %v8018 = vpop.permute.xlu0 %8017
    %8019 = vrot.lane.b32.xlu0 %v7944, 123
    %v8020 = vpop.permute.xlu0 %8019
    %8021 = vrot.lane.b32.xlu0 %v7945, 123
    %v8022 = vpop.permute.xlu0 %8021
    %8023 = vrot.lane.b32.xlu0 %v7946, 123
    %v8024 = vpop.permute.xlu0 %8023
    %8025 = vrot.lane.b32.xlu0 %v7947, 123
    %v8026 = vpop.permute.xlu0 %8025
    %8027 = vrot.lane.b32.xlu0 %v7948, 123
    %v8028 = vpop.permute.xlu0 %8027
    %8029 = vrot.lane.b32.xlu0 %v7949, 123
    %v8030 = vpop.permute.xlu0 %8029
    %8031 = vrot.lane.b32.xlu0 %v7950, 123
    %v8032 = vpop.permute.xlu0 %8031
    %8033 = vrot.lane.b32.xlu0 %v7951, 123
    %v8034 = vpop.permute.xlu0 %8033
    %8035 = vrot.lane.b32.xlu0 %v7952, 123
    %v8036 = vpop.permute.xlu0 %8035
    %8037 = vrot.lane.b32.xlu0 %v7953, 123
    %v8038 = vpop.permute.xlu0 %8037
    %8039 = vrot.lane.b32.xlu0 %v7954, 123
    %v8040 = vpop.permute.xlu0 %8039
    %8041 = vrot.lane.b32.xlu0 %v7955, 123
    %v8042 = vpop.permute.xlu0 %8041
    %8043 = vrot.lane.b32.xlu0 %v7956, 123
    %v8044 = vpop.permute.xlu0 %8043
    %8045 = vrot.lane.b32.xlu0 %v7957, 123
    %v8046 = vpop.permute.xlu0 %8045
    %8047 = vrot.lane.b32.xlu0 %v7958, 123
    %v8048 = vpop.permute.xlu0 %8047
    %8049 = vrot.lane.b32.xlu0 %v7959, 123
    %v8050 = vpop.permute.xlu0 %8049
    %8051 = vrot.lane.b32.xlu0 %v7960, 123
    %v8052 = vpop.permute.xlu0 %8051
    %8053 = vrot.lane.b32.xlu0 %v7961, 123
    %v8054 = vpop.permute.xlu0 %8053
    %8055 = vrot.lane.b32.xlu0 %v7962, 123
    %v8056 = vpop.permute.xlu0 %8055
    %8057 = vrot.lane.b32.xlu0 %v7963, 123
    %v8058 = vpop.permute.xlu0 %8057
    %8059 = vrot.lane.b32.xlu0 %v7964, 123
    %v8060 = vpop.permute.xlu0 %8059
    %v8061 = vsel %vm7812, %v7998, %v8000
    %v8062 = vsel %vm7812, %v8002, %v8004
    %v8063 = vsel %vm7812, %v8006, %v8008
    %v8064 = vsel %vm7812, %v8010, %v8012
    %v8065 = vsel %vm7812, %v8014, %v8016
    %v8066 = vsel %vm7812, %v8018, %v8020
    %v8067 = vsel %vm7812, %v8022, %v8024
    %v8068 = vsel %vm7812, %v8026, %v8028
    %v8069 = vsel %vm7812, %v8030, %v8032
    %v8070 = vsel %vm7812, %v8034, %v8036
    %v8071 = vsel %vm7812, %v8038, %v8040
    %v8072 = vsel %vm7812, %v8042, %v8044
    %v8073 = vsel %vm7812, %v8046, %v8048
    %v8074 = vsel %vm7812, %v8050, %v8052
    %v8075 = vsel %vm7812, %v8054, %v8056
    %v8076 = vsel %vm7812, %v8058, %v8060
    %v8109 = vadd.f32 %v7861, %v8061
    %v8110 = vadd.f32 %v7862, %v8000
    %v8111 = vadd.f32 %v7863, %v8062
    %v8112 = vadd.f32 %v7864, %v8004
    %v8113 = vadd.f32 %v7865, %v8063
    %v8114 = vadd.f32 %v7866, %v8008
    %v8115 = vadd.f32 %v7867, %v8064
    %v8116 = vadd.f32 %v7868, %v8012
    %v8117 = vadd.f32 %v7869, %v8065
    %v8118 = vadd.f32 %v7870, %v8016
    %v8119 = vadd.f32 %v7871, %v8066
    %v8120 = vadd.f32 %v7872, %v8020
    %v8121 = vadd.f32 %v7873, %v8067
    %v8122 = vadd.f32 %v7874, %v8024
    %v8123 = vadd.f32 %v7875, %v8068
    %v8124 = vadd.f32 %v7876, %v8028
    %v8125 = vadd.f32 %v7877, %v8069
    %v8126 = vadd.f32 %v7878, %v8032
    %v8127 = vadd.f32 %v7879, %v8070
    %v8128 = vadd.f32 %v7880, %v8036
    %v8129 = vadd.f32 %v7881, %v8071
    %v8130 = vadd.f32 %v7882, %v8040
    %v8131 = vadd.f32 %v7883, %v8072
    %v8132 = vadd.f32 %v7884, %v8044
    %v8133 = vadd.f32 %v7885, %v8073
    %v8134 = vadd.f32 %v7886, %v8048
    %v8135 = vadd.f32 %v7887, %v8074
    %v8136 = vadd.f32 %v7888, %v8052
    %v8137 = vadd.f32 %v7889, %v8075
    %v8138 = vadd.f32 %v7890, %v8056
    %v8139 = vadd.f32 %v7891, %v8076
    %v8140 = vadd.f32 %v7892, %v8060
    %8142 = vset.pattern.permute.xlu0 0
    %8143 = vperm.xlu0 %8142, %v5368
    %v8144 = vpop.permute.xlu0 %8143
    %8147 = vset.pattern.permute.xlu0 0
    %8148 = vperm.xlu0 %8147, %v5369
    %v8149 = vpop.permute.xlu0 %8148
    %8152 = vset.pattern.permute.xlu0 0
    %8153 = vperm.xlu0 %8152, %v5370
    %v8154 = vpop.permute.xlu0 %8153
    %8157 = vset.pattern.permute.xlu0 0
    %8158 = vperm.xlu0 %8157, %v5371
    %v8159 = vpop.permute.xlu0 %8158
    %8162 = vset.pattern.permute.xlu0 0
    %8163 = vperm.xlu0 %8162, %v5372
    %v8164 = vpop.permute.xlu0 %8163
    %8167 = vset.pattern.permute.xlu0 0
    %8168 = vperm.xlu0 %8167, %v5373
    %v8169 = vpop.permute.xlu0 %8168
    %8172 = vset.pattern.permute.xlu0 0
    %8173 = vperm.xlu0 %8172, %v5374
    %v8174 = vpop.permute.xlu0 %8173
    %8177 = vset.pattern.permute.xlu0 0
    %8178 = vperm.xlu0 %8177, %v5375
    %v8179 = vpop.permute.xlu0 %8178
    %v8181 = vmul.f32 %v5224, %v8144
    %v8182 = vmul.f32 %v5225, %v8144
    %v8183 = vmul.f32 %v5226, %v8149
    %v8184 = vmul.f32 %v5227, %v8149
    %v8185 = vmul.f32 %v5228, %v8154
    %v8186 = vmul.f32 %v5229, %v8154
    %v8187 = vmul.f32 %v5230, %v8159
    %v8188 = vmul.f32 %v5231, %v8159
    %v8189 = vmul.f32 %v5232, %v8164
    %v8190 = vmul.f32 %v5233, %v8164
    %v8191 = vmul.f32 %v5234, %v8169
    %v8192 = vmul.f32 %v5235, %v8169
    %v8193 = vmul.f32 %v5236, %v8174
    %v8194 = vmul.f32 %v5237, %v8174
    %v8195 = vmul.f32 %v5238, %v8179
    %v8196 = vmul.f32 %v5239, %v8179
    %v8197 = vmul.f32 %v5240, %v8144
    %v8198 = vmul.f32 %v5241, %v8144
    %v8199 = vmul.f32 %v5242, %v8149
    %v8200 = vmul.f32 %v5243, %v8149
    %v8201 = vmul.f32 %v5244, %v8154
    %v8202 = vmul.f32 %v5245, %v8154
    %v8203 = vmul.f32 %v5246, %v8159
    %v8204 = vmul.f32 %v5247, %v8159
    %v8205 = vmul.f32 %v5248, %v8164
    %v8206 = vmul.f32 %v5249, %v8164
    %v8207 = vmul.f32 %v5250, %v8169
    %v8208 = vmul.f32 %v5251, %v8169
    %v8209 = vmul.f32 %v5252, %v8174
    %v8210 = vmul.f32 %v5253, %v8174
    %v8211 = vmul.f32 %v5254, %v8179
    %v8212 = vmul.f32 %v5255, %v8179
    %8245 = vrot.lane.b32.xlu0 %v8181, 122
    %v8246 = vpop.permute.xlu0 %8245
    %8247 = vrot.lane.b32.xlu0 %v8182, 122
    %v8248 = vpop.permute.xlu0 %8247
    %8249 = vrot.lane.b32.xlu0 %v8183, 122
    %v8250 = vpop.permute.xlu0 %8249
    %8251 = vrot.lane.b32.xlu0 %v8184, 122
    %v8252 = vpop.permute.xlu0 %8251
    %8253 = vrot.lane.b32.xlu0 %v8185, 122
    %v8254 = vpop.permute.xlu0 %8253
    %8255 = vrot.lane.b32.xlu0 %v8186, 122
    %v8256 = vpop.permute.xlu0 %8255
    %8257 = vrot.lane.b32.xlu0 %v8187, 122
    %v8258 = vpop.permute.xlu0 %8257
    %8259 = vrot.lane.b32.xlu0 %v8188, 122
    %v8260 = vpop.permute.xlu0 %8259
    %8261 = vrot.lane.b32.xlu0 %v8189, 122
    %v8262 = vpop.permute.xlu0 %8261
    %8263 = vrot.lane.b32.xlu0 %v8190, 122
    %v8264 = vpop.permute.xlu0 %8263
    %8265 = vrot.lane.b32.xlu0 %v8191, 122
    %v8266 = vpop.permute.xlu0 %8265
    %8267 = vrot.lane.b32.xlu0 %v8192, 122
    %v8268 = vpop.permute.xlu0 %8267
    %8269 = vrot.lane.b32.xlu0 %v8193, 122
    %v8270 = vpop.permute.xlu0 %8269
    %8271 = vrot.lane.b32.xlu0 %v8194, 122
    %v8272 = vpop.permute.xlu0 %8271
    %8273 = vrot.lane.b32.xlu0 %v8195, 122
    %v8274 = vpop.permute.xlu0 %8273
    %8275 = vrot.lane.b32.xlu0 %v8196, 122
    %v8276 = vpop.permute.xlu0 %8275
    %8277 = vrot.lane.b32.xlu0 %v8197, 122
    %v8278 = vpop.permute.xlu0 %8277
    %8279 = vrot.lane.b32.xlu0 %v8198, 122
    %v8280 = vpop.permute.xlu0 %8279
    %8281 = vrot.lane.b32.xlu0 %v8199, 122
    %v8282 = vpop.permute.xlu0 %8281
    %8283 = vrot.lane.b32.xlu0 %v8200, 122
    %v8284 = vpop.permute.xlu0 %8283
    %8285 = vrot.lane.b32.xlu0 %v8201, 122
    %v8286 = vpop.permute.xlu0 %8285
    %8287 = vrot.lane.b32.xlu0 %v8202, 122
    %v8288 = vpop.permute.xlu0 %8287
    %8289 = vrot.lane.b32.xlu0 %v8203, 122
    %v8290 = vpop.permute.xlu0 %8289
    %8291 = vrot.lane.b32.xlu0 %v8204, 122
    %v8292 = vpop.permute.xlu0 %8291
    %8293 = vrot.lane.b32.xlu0 %v8205, 122
    %v8294 = vpop.permute.xlu0 %8293
    %8295 = vrot.lane.b32.xlu0 %v8206, 122
    %v8296 = vpop.permute.xlu0 %8295
    %8297 = vrot.lane.b32.xlu0 %v8207, 122
    %v8298 = vpop.permute.xlu0 %8297
    %8299 = vrot.lane.b32.xlu0 %v8208, 122
    %v8300 = vpop.permute.xlu0 %8299
    %8301 = vrot.lane.b32.xlu0 %v8209, 122
    %v8302 = vpop.permute.xlu0 %8301
    %8303 = vrot.lane.b32.xlu0 %v8210, 122
    %v8304 = vpop.permute.xlu0 %8303
    %8305 = vrot.lane.b32.xlu0 %v8211, 122
    %v8306 = vpop.permute.xlu0 %8305
    %8307 = vrot.lane.b32.xlu0 %v8212, 122
    %v8308 = vpop.permute.xlu0 %8307
    %vm8309 = vcmask 998400
    %v8310 = vsel %vm8309, %v8246, %v8248
    %v8311 = vsel %vm8309, %v8250, %v8252
    %v8312 = vsel %vm8309, %v8254, %v8256
    %v8313 = vsel %vm8309, %v8258, %v8260
    %v8314 = vsel %vm8309, %v8262, %v8264
    %v8315 = vsel %vm8309, %v8266, %v8268
    %v8316 = vsel %vm8309, %v8270, %v8272
    %v8317 = vsel %vm8309, %v8274, %v8276
    %v8318 = vsel %vm8309, %v8278, %v8280
    %v8319 = vsel %vm8309, %v8282, %v8284
    %v8320 = vsel %vm8309, %v8286, %v8288
    %v8321 = vsel %vm8309, %v8290, %v8292
    %v8322 = vsel %vm8309, %v8294, %v8296
    %v8323 = vsel %vm8309, %v8298, %v8300
    %v8324 = vsel %vm8309, %v8302, %v8304
    %v8325 = vsel %vm8309, %v8306, %v8308
    %v8358 = vadd.f32 %v8109, %v8310
    %v8359 = vadd.f32 %v8110, %v8248
    %v8360 = vadd.f32 %v8111, %v8311
    %v8361 = vadd.f32 %v8112, %v8252
    %v8362 = vadd.f32 %v8113, %v8312
    %v8363 = vadd.f32 %v8114, %v8256
    %v8364 = vadd.f32 %v8115, %v8313
    %v8365 = vadd.f32 %v8116, %v8260
    %v8366 = vadd.f32 %v8117, %v8314
    %v8367 = vadd.f32 %v8118, %v8264
    %v8368 = vadd.f32 %v8119, %v8315
    %v8369 = vadd.f32 %v8120, %v8268
    %v8370 = vadd.f32 %v8121, %v8316
    %v8371 = vadd.f32 %v8122, %v8272
    %v8372 = vadd.f32 %v8123, %v8317
    %v8373 = vadd.f32 %v8124, %v8276
    %v8374 = vadd.f32 %v8125, %v8318
    %v8375 = vadd.f32 %v8126, %v8280
    %v8376 = vadd.f32 %v8127, %v8319
    %v8377 = vadd.f32 %v8128, %v8284
    %v8378 = vadd.f32 %v8129, %v8320
    %v8379 = vadd.f32 %v8130, %v8288
    %v8380 = vadd.f32 %v8131, %v8321
    %v8381 = vadd.f32 %v8132, %v8292
    %v8382 = vadd.f32 %v8133, %v8322
    %v8383 = vadd.f32 %v8134, %v8296
    %v8384 = vadd.f32 %v8135, %v8323
    %v8385 = vadd.f32 %v8136, %v8300
    %v8386 = vadd.f32 %v8137, %v8324
    %v8387 = vadd.f32 %v8138, %v8304
    %v8388 = vadd.f32 %v8139, %v8325
    %v8389 = vadd.f32 %v8140, %v8308
    %8391 = vset.pattern.permute.xlu0 0
    %8392 = vperm.xlu0 %8391, %v5432
    %v8393 = vpop.permute.xlu0 %8392
    %8396 = vset.pattern.permute.xlu0 0
    %8397 = vperm.xlu0 %8396, %v5433
    %v8398 = vpop.permute.xlu0 %8397
    %8401 = vset.pattern.permute.xlu0 0
    %8402 = vperm.xlu0 %8401, %v5434
    %v8403 = vpop.permute.xlu0 %8402
    %8406 = vset.pattern.permute.xlu0 0
    %8407 = vperm.xlu0 %8406, %v5435
    %v8408 = vpop.permute.xlu0 %8407
    %8411 = vset.pattern.permute.xlu0 0
    %8412 = vperm.xlu0 %8411, %v5436
    %v8413 = vpop.permute.xlu0 %8412
    %8416 = vset.pattern.permute.xlu0 0
    %8417 = vperm.xlu0 %8416, %v5437
    %v8418 = vpop.permute.xlu0 %8417
    %8421 = vset.pattern.permute.xlu0 0
    %8422 = vperm.xlu0 %8421, %v5438
    %v8423 = vpop.permute.xlu0 %8422
    %8426 = vset.pattern.permute.xlu0 0
    %8427 = vperm.xlu0 %8426, %v5439
    %v8428 = vpop.permute.xlu0 %8427
    %v8430 = vmul.f32 %v5288, %v8393
    %v8431 = vmul.f32 %v5289, %v8393
    %v8432 = vmul.f32 %v5290, %v8398
    %v8433 = vmul.f32 %v5291, %v8398
    %v8434 = vmul.f32 %v5292, %v8403
    %v8435 = vmul.f32 %v5293, %v8403
    %v8436 = vmul.f32 %v5294, %v8408
    %v8437 = vmul.f32 %v5295, %v8408
    %v8438 = vmul.f32 %v5296, %v8413
    %v8439 = vmul.f32 %v5297, %v8413
    %v8440 = vmul.f32 %v5298, %v8418
    %v8441 = vmul.f32 %v5299, %v8418
    %v8442 = vmul.f32 %v5300, %v8423
    %v8443 = vmul.f32 %v5301, %v8423
    %v8444 = vmul.f32 %v5302, %v8428
    %v8445 = vmul.f32 %v5303, %v8428
    %v8446 = vmul.f32 %v5304, %v8393
    %v8447 = vmul.f32 %v5305, %v8393
    %v8448 = vmul.f32 %v5306, %v8398
    %v8449 = vmul.f32 %v5307, %v8398
    %v8450 = vmul.f32 %v5308, %v8403
    %v8451 = vmul.f32 %v5309, %v8403
    %v8452 = vmul.f32 %v5310, %v8408
    %v8453 = vmul.f32 %v5311, %v8408
    %v8454 = vmul.f32 %v5312, %v8413
    %v8455 = vmul.f32 %v5313, %v8413
    %v8456 = vmul.f32 %v5314, %v8418
    %v8457 = vmul.f32 %v5315, %v8418
    %v8458 = vmul.f32 %v5316, %v8423
    %v8459 = vmul.f32 %v5317, %v8423
    %v8460 = vmul.f32 %v5318, %v8428
    %v8461 = vmul.f32 %v5319, %v8428
    %8494 = vrot.lane.b32.xlu0 %v8430, 122
    %v8495 = vpop.permute.xlu0 %8494
    %8496 = vrot.lane.b32.xlu0 %v8431, 122
    %v8497 = vpop.permute.xlu0 %8496
    %8498 = vrot.lane.b32.xlu0 %v8432, 122
    %v8499 = vpop.permute.xlu0 %8498
    %8500 = vrot.lane.b32.xlu0 %v8433, 122
    %v8501 = vpop.permute.xlu0 %8500
    %8502 = vrot.lane.b32.xlu0 %v8434, 122
    %v8503 = vpop.permute.xlu0 %8502
    %8504 = vrot.lane.b32.xlu0 %v8435, 122
    %v8505 = vpop.permute.xlu0 %8504
    %8506 = vrot.lane.b32.xlu0 %v8436, 122
    %v8507 = vpop.permute.xlu0 %8506
    %8508 = vrot.lane.b32.xlu0 %v8437, 122
    %v8509 = vpop.permute.xlu0 %8508
    %8510 = vrot.lane.b32.xlu0 %v8438, 122
    %v8511 = vpop.permute.xlu0 %8510
    %8512 = vrot.lane.b32.xlu0 %v8439, 122
    %v8513 = vpop.permute.xlu0 %8512
    %8514 = vrot.lane.b32.xlu0 %v8440, 122
    %v8515 = vpop.permute.xlu0 %8514
    %8516 = vrot.lane.b32.xlu0 %v8441, 122
    %v8517 = vpop.permute.xlu0 %8516
    %8518 = vrot.lane.b32.xlu0 %v8442, 122
    %v8519 = vpop.permute.xlu0 %8518
    %8520 = vrot.lane.b32.xlu0 %v8443, 122
    %v8521 = vpop.permute.xlu0 %8520
    %8522 = vrot.lane.b32.xlu0 %v8444, 122
    %v8523 = vpop.permute.xlu0 %8522
    %8524 = vrot.lane.b32.xlu0 %v8445, 122
    %v8525 = vpop.permute.xlu0 %8524
    %8526 = vrot.lane.b32.xlu0 %v8446, 122
    %v8527 = vpop.permute.xlu0 %8526
    %8528 = vrot.lane.b32.xlu0 %v8447, 122
    %v8529 = vpop.permute.xlu0 %8528
    %8530 = vrot.lane.b32.xlu0 %v8448, 122
    %v8531 = vpop.permute.xlu0 %8530
    %8532 = vrot.lane.b32.xlu0 %v8449, 122
    %v8533 = vpop.permute.xlu0 %8532
    %8534 = vrot.lane.b32.xlu0 %v8450, 122
    %v8535 = vpop.permute.xlu0 %8534
    %8536 = vrot.lane.b32.xlu0 %v8451, 122
    %v8537 = vpop.permute.xlu0 %8536
    %8538 = vrot.lane.b32.xlu0 %v8452, 122
    %v8539 = vpop.permute.xlu0 %8538
    %8540 = vrot.lane.b32.xlu0 %v8453, 122
    %v8541 = vpop.permute.xlu0 %8540
    %8542 = vrot.lane.b32.xlu0 %v8454, 122
    %v8543 = vpop.permute.xlu0 %8542
    %8544 = vrot.lane.b32.xlu0 %v8455, 122
    %v8545 = vpop.permute.xlu0 %8544
    %8546 = vrot.lane.b32.xlu0 %v8456, 122
    %v8547 = vpop.permute.xlu0 %8546
    %8548 = vrot.lane.b32.xlu0 %v8457, 122
    %v8549 = vpop.permute.xlu0 %8548
    %8550 = vrot.lane.b32.xlu0 %v8458, 122
    %v8551 = vpop.permute.xlu0 %8550
    %8552 = vrot.lane.b32.xlu0 %v8459, 122
    %v8553 = vpop.permute.xlu0 %8552
    %8554 = vrot.lane.b32.xlu0 %v8460, 122
    %v8555 = vpop.permute.xlu0 %8554
    %8556 = vrot.lane.b32.xlu0 %v8461, 122
    %v8557 = vpop.permute.xlu0 %8556
    %v8558 = vsel %vm8309, %v8495, %v8497
    %v8559 = vsel %vm8309, %v8499, %v8501
    %v8560 = vsel %vm8309, %v8503, %v8505
    %v8561 = vsel %vm8309, %v8507, %v8509
    %v8562 = vsel %vm8309, %v8511, %v8513
    %v8563 = vsel %vm8309, %v8515, %v8517
    %v8564 = vsel %vm8309, %v8519, %v8521
    %v8565 = vsel %vm8309, %v8523, %v8525
    %v8566 = vsel %vm8309, %v8527, %v8529
    %v8567 = vsel %vm8309, %v8531, %v8533
    %v8568 = vsel %vm8309, %v8535, %v8537
    %v8569 = vsel %vm8309, %v8539, %v8541
    %v8570 = vsel %vm8309, %v8543, %v8545
    %v8571 = vsel %vm8309, %v8547, %v8549
    %v8572 = vsel %vm8309, %v8551, %v8553
    %v8573 = vsel %vm8309, %v8555, %v8557
    %v8606 = vadd.f32 %v8358, %v8558
    %v8607 = vadd.f32 %v8359, %v8497
    %v8608 = vadd.f32 %v8360, %v8559
    %v8609 = vadd.f32 %v8361, %v8501
    %v8610 = vadd.f32 %v8362, %v8560
    %v8611 = vadd.f32 %v8363, %v8505
    %v8612 = vadd.f32 %v8364, %v8561
    %v8613 = vadd.f32 %v8365, %v8509
    %v8614 = vadd.f32 %v8366, %v8562
    %v8615 = vadd.f32 %v8367, %v8513
    %v8616 = vadd.f32 %v8368, %v8563
    %v8617 = vadd.f32 %v8369, %v8517
    %v8618 = vadd.f32 %v8370, %v8564
    %v8619 = vadd.f32 %v8371, %v8521
    %v8620 = vadd.f32 %v8372, %v8565
    %v8621 = vadd.f32 %v8373, %v8525
    %v8622 = vadd.f32 %v8374, %v8566
    %v8623 = vadd.f32 %v8375, %v8529
    %v8624 = vadd.f32 %v8376, %v8567
    %v8625 = vadd.f32 %v8377, %v8533
    %v8626 = vadd.f32 %v8378, %v8568
    %v8627 = vadd.f32 %v8379, %v8537
    %v8628 = vadd.f32 %v8380, %v8569
    %v8629 = vadd.f32 %v8381, %v8541
    %v8630 = vadd.f32 %v8382, %v8570
    %v8631 = vadd.f32 %v8383, %v8545
    %v8632 = vadd.f32 %v8384, %v8571
    %v8633 = vadd.f32 %v8385, %v8549
    %v8634 = vadd.f32 %v8386, %v8572
    %v8635 = vadd.f32 %v8387, %v8553
    %v8636 = vadd.f32 %v8388, %v8573
    %v8637 = vadd.f32 %v8389, %v8557
    %8639 = vset.pattern.permute.xlu0 0
    %8640 = vperm.xlu0 %8639, %v5376
    %v8641 = vpop.permute.xlu0 %8640
    %8644 = vset.pattern.permute.xlu0 0
    %8645 = vperm.xlu0 %8644, %v5377
    %v8646 = vpop.permute.xlu0 %8645
    %8649 = vset.pattern.permute.xlu0 0
    %8650 = vperm.xlu0 %8649, %v5378
    %v8651 = vpop.permute.xlu0 %8650
    %8654 = vset.pattern.permute.xlu0 0
    %8655 = vperm.xlu0 %8654, %v5379
    %v8656 = vpop.permute.xlu0 %8655
    %8659 = vset.pattern.permute.xlu0 0
    %8660 = vperm.xlu0 %8659, %v5380
    %v8661 = vpop.permute.xlu0 %8660
    %8664 = vset.pattern.permute.xlu0 0
    %8665 = vperm.xlu0 %8664, %v5381
    %v8666 = vpop.permute.xlu0 %8665
    %8669 = vset.pattern.permute.xlu0 0
    %8670 = vperm.xlu0 %8669, %v5382
    %v8671 = vpop.permute.xlu0 %8670
    %8674 = vset.pattern.permute.xlu0 0
    %8675 = vperm.xlu0 %8674, %v5383
    %v8676 = vpop.permute.xlu0 %8675
    %v8678 = vmul.f32 %v5224, %v8641
    %v8679 = vmul.f32 %v5225, %v8641
    %v8680 = vmul.f32 %v5226, %v8646
    %v8681 = vmul.f32 %v5227, %v8646
    %v8682 = vmul.f32 %v5228, %v8651
    %v8683 = vmul.f32 %v5229, %v8651
    %v8684 = vmul.f32 %v5230, %v8656
    %v8685 = vmul.f32 %v5231, %v8656
    %v8686 = vmul.f32 %v5232, %v8661
    %v8687 = vmul.f32 %v5233, %v8661
    %v8688 = vmul.f32 %v5234, %v8666
    %v8689 = vmul.f32 %v5235, %v8666
    %v8690 = vmul.f32 %v5236, %v8671
    %v8691 = vmul.f32 %v5237, %v8671
    %v8692 = vmul.f32 %v5238, %v8676
    %v8693 = vmul.f32 %v5239, %v8676
    %v8694 = vmul.f32 %v5240, %v8641
    %v8695 = vmul.f32 %v5241, %v8641
    %v8696 = vmul.f32 %v5242, %v8646
    %v8697 = vmul.f32 %v5243, %v8646
    %v8698 = vmul.f32 %v5244, %v8651
    %v8699 = vmul.f32 %v5245, %v8651
    %v8700 = vmul.f32 %v5246, %v8656
    %v8701 = vmul.f32 %v5247, %v8656
    %v8702 = vmul.f32 %v5248, %v8661
    %v8703 = vmul.f32 %v5249, %v8661
    %v8704 = vmul.f32 %v5250, %v8666
    %v8705 = vmul.f32 %v5251, %v8666
    %v8706 = vmul.f32 %v5252, %v8671
    %v8707 = vmul.f32 %v5253, %v8671
    %v8708 = vmul.f32 %v5254, %v8676
    %v8709 = vmul.f32 %v5255, %v8676
    %8742 = vrot.lane.b32.xlu0 %v8678, 121
    %v8743 = vpop.permute.xlu0 %8742
    %8744 = vrot.lane.b32.xlu0 %v8679, 121
    %v8745 = vpop.permute.xlu0 %8744
    %8746 = vrot.lane.b32.xlu0 %v8680, 121
    %v8747 = vpop.permute.xlu0 %8746
    %8748 = vrot.lane.b32.xlu0 %v8681, 121
    %v8749 = vpop.permute.xlu0 %8748
    %8750 = vrot.lane.b32.xlu0 %v8682, 121
    %v8751 = vpop.permute.xlu0 %8750
    %8752 = vrot.lane.b32.xlu0 %v8683, 121
    %v8753 = vpop.permute.xlu0 %8752
    %8754 = vrot.lane.b32.xlu0 %v8684, 121
    %v8755 = vpop.permute.xlu0 %8754
    %8756 = vrot.lane.b32.xlu0 %v8685, 121
    %v8757 = vpop.permute.xlu0 %8756
    %8758 = vrot.lane.b32.xlu0 %v8686, 121
    %v8759 = vpop.permute.xlu0 %8758
    %8760 = vrot.lane.b32.xlu0 %v8687, 121
    %v8761 = vpop.permute.xlu0 %8760
    %8762 = vrot.lane.b32.xlu0 %v8688, 121
    %v8763 = vpop.permute.xlu0 %8762
    %8764 = vrot.lane.b32.xlu0 %v8689, 121
    %v8765 = vpop.permute.xlu0 %8764
    %8766 = vrot.lane.b32.xlu0 %v8690, 121
    %v8767 = vpop.permute.xlu0 %8766
    %8768 = vrot.lane.b32.xlu0 %v8691, 121
    %v8769 = vpop.permute.xlu0 %8768
    %8770 = vrot.lane.b32.xlu0 %v8692, 121
    %v8771 = vpop.permute.xlu0 %8770
    %8772 = vrot.lane.b32.xlu0 %v8693, 121
    %v8773 = vpop.permute.xlu0 %8772
    %8774 = vrot.lane.b32.xlu0 %v8694, 121
    %v8775 = vpop.permute.xlu0 %8774
    %8776 = vrot.lane.b32.xlu0 %v8695, 121
    %v8777 = vpop.permute.xlu0 %8776
    %8778 = vrot.lane.b32.xlu0 %v8696, 121
    %v8779 = vpop.permute.xlu0 %8778
    %8780 = vrot.lane.b32.xlu0 %v8697, 121
    %v8781 = vpop.permute.xlu0 %8780
    %8782 = vrot.lane.b32.xlu0 %v8698, 121
    %v8783 = vpop.permute.xlu0 %8782
    %8784 = vrot.lane.b32.xlu0 %v8699, 121
    %v8785 = vpop.permute.xlu0 %8784
    %8786 = vrot.lane.b32.xlu0 %v8700, 121
    %v8787 = vpop.permute.xlu0 %8786
    %8788 = vrot.lane.b32.xlu0 %v8701, 121
    %v8789 = vpop.permute.xlu0 %8788
    %8790 = vrot.lane.b32.xlu0 %v8702, 121
    %v8791 = vpop.permute.xlu0 %8790
    %8792 = vrot.lane.b32.xlu0 %v8703, 121
    %v8793 = vpop.permute.xlu0 %8792
    %8794 = vrot.lane.b32.xlu0 %v8704, 121
    %v8795 = vpop.permute.xlu0 %8794
    %8796 = vrot.lane.b32.xlu0 %v8705, 121
    %v8797 = vpop.permute.xlu0 %8796
    %8798 = vrot.lane.b32.xlu0 %v8706, 121
    %v8799 = vpop.permute.xlu0 %8798
    %8800 = vrot.lane.b32.xlu0 %v8707, 121
    %v8801 = vpop.permute.xlu0 %8800
    %8802 = vrot.lane.b32.xlu0 %v8708, 121
    %v8803 = vpop.permute.xlu0 %8802
    %8804 = vrot.lane.b32.xlu0 %v8709, 121
    %v8805 = vpop.permute.xlu0 %8804
    %vm8806 = vcmask 990208
    %v8807 = vsel %vm8806, %v8743, %v8745
    %v8808 = vsel %vm8806, %v8747, %v8749
    %v8809 = vsel %vm8806, %v8751, %v8753
    %v8810 = vsel %vm8806, %v8755, %v8757
    %v8811 = vsel %vm8806, %v8759, %v8761
    %v8812 = vsel %vm8806, %v8763, %v8765
    %v8813 = vsel %vm8806, %v8767, %v8769
    %v8814 = vsel %vm8806, %v8771, %v8773
    %v8815 = vsel %vm8806, %v8775, %v8777
    %v8816 = vsel %vm8806, %v8779, %v8781
    %v8817 = vsel %vm8806, %v8783, %v8785
    %v8818 = vsel %vm8806, %v8787, %v8789
    %v8819 = vsel %vm8806, %v8791, %v8793
    %v8820 = vsel %vm8806, %v8795, %v8797
    %v8821 = vsel %vm8806, %v8799, %v8801
    %v8822 = vsel %vm8806, %v8803, %v8805
    %v8855 = vadd.f32 %v8606, %v8807
    %v8856 = vadd.f32 %v8607, %v8745
    %v8857 = vadd.f32 %v8608, %v8808
    %v8858 = vadd.f32 %v8609, %v8749
    %v8859 = vadd.f32 %v8610, %v8809
    %v8860 = vadd.f32 %v8611, %v8753
    %v8861 = vadd.f32 %v8612, %v8810
    %v8862 = vadd.f32 %v8613, %v8757
    %v8863 = vadd.f32 %v8614, %v8811
    %v8864 = vadd.f32 %v8615, %v8761
    %v8865 = vadd.f32 %v8616, %v8812
    %v8866 = vadd.f32 %v8617, %v8765
    %v8867 = vadd.f32 %v8618, %v8813
    %v8868 = vadd.f32 %v8619, %v8769
    %v8869 = vadd.f32 %v8620, %v8814
    %v8870 = vadd.f32 %v8621, %v8773
    %v8871 = vadd.f32 %v8622, %v8815
    %v8872 = vadd.f32 %v8623, %v8777
    %v8873 = vadd.f32 %v8624, %v8816
    %v8874 = vadd.f32 %v8625, %v8781
    %v8875 = vadd.f32 %v8626, %v8817
    %v8876 = vadd.f32 %v8627, %v8785
    %v8877 = vadd.f32 %v8628, %v8818
    %v8878 = vadd.f32 %v8629, %v8789
    %v8879 = vadd.f32 %v8630, %v8819
    %v8880 = vadd.f32 %v8631, %v8793
    %v8881 = vadd.f32 %v8632, %v8820
    %v8882 = vadd.f32 %v8633, %v8797
    %v8883 = vadd.f32 %v8634, %v8821
    %v8884 = vadd.f32 %v8635, %v8801
    %v8885 = vadd.f32 %v8636, %v8822
    %v8886 = vadd.f32 %v8637, %v8805
    %8888 = vset.pattern.permute.xlu0 0
    %8889 = vperm.xlu0 %8888, %v5440
    %v8890 = vpop.permute.xlu0 %8889
    %8893 = vset.pattern.permute.xlu0 0
    %8894 = vperm.xlu0 %8893, %v5441
    %v8895 = vpop.permute.xlu0 %8894
    %8898 = vset.pattern.permute.xlu0 0
    %8899 = vperm.xlu0 %8898, %v5442
    %v8900 = vpop.permute.xlu0 %8899
    %8903 = vset.pattern.permute.xlu0 0
    %8904 = vperm.xlu0 %8903, %v5443
    %v8905 = vpop.permute.xlu0 %8904
    %8908 = vset.pattern.permute.xlu0 0
    %8909 = vperm.xlu0 %8908, %v5444
    %v8910 = vpop.permute.xlu0 %8909
    %8913 = vset.pattern.permute.xlu0 0
    %8914 = vperm.xlu0 %8913, %v5445
    %v8915 = vpop.permute.xlu0 %8914
    %8918 = vset.pattern.permute.xlu0 0
    %8919 = vperm.xlu0 %8918, %v5446
    %v8920 = vpop.permute.xlu0 %8919
    %8923 = vset.pattern.permute.xlu0 0
    %8924 = vperm.xlu0 %8923, %v5447
    %v8925 = vpop.permute.xlu0 %8924
    %v8927 = vmul.f32 %v5288, %v8890
    %v8928 = vmul.f32 %v5289, %v8890
    %v8929 = vmul.f32 %v5290, %v8895
    %v8930 = vmul.f32 %v5291, %v8895
    %v8931 = vmul.f32 %v5292, %v8900
    %v8932 = vmul.f32 %v5293, %v8900
    %v8933 = vmul.f32 %v5294, %v8905
    %v8934 = vmul.f32 %v5295, %v8905
    %v8935 = vmul.f32 %v5296, %v8910
    %v8936 = vmul.f32 %v5297, %v8910
    %v8937 = vmul.f32 %v5298, %v8915
    %v8938 = vmul.f32 %v5299, %v8915
    %v8939 = vmul.f32 %v5300, %v8920
    %v8940 = vmul.f32 %v5301, %v8920
    %v8941 = vmul.f32 %v5302, %v8925
    %v8942 = vmul.f32 %v5303, %v8925
    %v8943 = vmul.f32 %v5304, %v8890
    %v8944 = vmul.f32 %v5305, %v8890
    %v8945 = vmul.f32 %v5306, %v8895
    %v8946 = vmul.f32 %v5307, %v8895
    %v8947 = vmul.f32 %v5308, %v8900
    %v8948 = vmul.f32 %v5309, %v8900
    %v8949 = vmul.f32 %v5310, %v8905
    %v8950 = vmul.f32 %v5311, %v8905
    %v8951 = vmul.f32 %v5312, %v8910
    %v8952 = vmul.f32 %v5313, %v8910
    %v8953 = vmul.f32 %v5314, %v8915
    %v8954 = vmul.f32 %v5315, %v8915
    %v8955 = vmul.f32 %v5316, %v8920
    %v8956 = vmul.f32 %v5317, %v8920
    %v8957 = vmul.f32 %v5318, %v8925
    %v8958 = vmul.f32 %v5319, %v8925
    %8991 = vrot.lane.b32.xlu0 %v8927, 121
    %v8992 = vpop.permute.xlu0 %8991
    %8993 = vrot.lane.b32.xlu0 %v8928, 121
    %v8994 = vpop.permute.xlu0 %8993
    %8995 = vrot.lane.b32.xlu0 %v8929, 121
    %v8996 = vpop.permute.xlu0 %8995
    %8997 = vrot.lane.b32.xlu0 %v8930, 121
    %v8998 = vpop.permute.xlu0 %8997
    %8999 = vrot.lane.b32.xlu0 %v8931, 121
    %v9000 = vpop.permute.xlu0 %8999
    %9001 = vrot.lane.b32.xlu0 %v8932, 121
    %v9002 = vpop.permute.xlu0 %9001
    %9003 = vrot.lane.b32.xlu0 %v8933, 121
    %v9004 = vpop.permute.xlu0 %9003
    %9005 = vrot.lane.b32.xlu0 %v8934, 121
    %v9006 = vpop.permute.xlu0 %9005
    %9007 = vrot.lane.b32.xlu0 %v8935, 121
    %v9008 = vpop.permute.xlu0 %9007
    %9009 = vrot.lane.b32.xlu0 %v8936, 121
    %v9010 = vpop.permute.xlu0 %9009
    %9011 = vrot.lane.b32.xlu0 %v8937, 121
    %v9012 = vpop.permute.xlu0 %9011
    %9013 = vrot.lane.b32.xlu0 %v8938, 121
    %v9014 = vpop.permute.xlu0 %9013
    %9015 = vrot.lane.b32.xlu0 %v8939, 121
    %v9016 = vpop.permute.xlu0 %9015
    %9017 = vrot.lane.b32.xlu0 %v8940, 121
    %v9018 = vpop.permute.xlu0 %9017
    %9019 = vrot.lane.b32.xlu0 %v8941, 121
    %v9020 = vpop.permute.xlu0 %9019
    %9021 = vrot.lane.b32.xlu0 %v8942, 121
    %v9022 = vpop.permute.xlu0 %9021
    %9023 = vrot.lane.b32.xlu0 %v8943, 121
    %v9024 = vpop.permute.xlu0 %9023
    %9025 = vrot.lane.b32.xlu0 %v8944, 121
    %v9026 = vpop.permute.xlu0 %9025
    %9027 = vrot.lane.b32.xlu0 %v8945, 121
    %v9028 = vpop.permute.xlu0 %9027
    %9029 = vrot.lane.b32.xlu0 %v8946, 121
    %v9030 = vpop.permute.xlu0 %9029
    %9031 = vrot.lane.b32.xlu0 %v8947, 121
    %v9032 = vpop.permute.xlu0 %9031
    %9033 = vrot.lane.b32.xlu0 %v8948, 121
    %v9034 = vpop.permute.xlu0 %9033
    %9035 = vrot.lane.b32.xlu0 %v8949, 121
    %v9036 = vpop.permute.xlu0 %9035
    %9037 = vrot.lane.b32.xlu0 %v8950, 121
    %v9038 = vpop.permute.xlu0 %9037
    %9039 = vrot.lane.b32.xlu0 %v8951, 121
    %v9040 = vpop.permute.xlu0 %9039
    %9041 = vrot.lane.b32.xlu0 %v8952, 121
    %v9042 = vpop.permute.xlu0 %9041
    %9043 = vrot.lane.b32.xlu0 %v8953, 121
    %v9044 = vpop.permute.xlu0 %9043
    %9045 = vrot.lane.b32.xlu0 %v8954, 121
    %v9046 = vpop.permute.xlu0 %9045
    %9047 = vrot.lane.b32.xlu0 %v8955, 121
    %v9048 = vpop.permute.xlu0 %9047
    %9049 = vrot.lane.b32.xlu0 %v8956, 121
    %v9050 = vpop.permute.xlu0 %9049
    %9051 = vrot.lane.b32.xlu0 %v8957, 121
    %v9052 = vpop.permute.xlu0 %9051
    %9053 = vrot.lane.b32.xlu0 %v8958, 121
    %v9054 = vpop.permute.xlu0 %9053
    %v9055 = vsel %vm8806, %v8992, %v8994
    %v9056 = vsel %vm8806, %v8996, %v8998
    %v9057 = vsel %vm8806, %v9000, %v9002
    %v9058 = vsel %vm8806, %v9004, %v9006
    %v9059 = vsel %vm8806, %v9008, %v9010
    %v9060 = vsel %vm8806, %v9012, %v9014
    %v9061 = vsel %vm8806, %v9016, %v9018
    %v9062 = vsel %vm8806, %v9020, %v9022
    %v9063 = vsel %vm8806, %v9024, %v9026
    %v9064 = vsel %vm8806, %v9028, %v9030
    %v9065 = vsel %vm8806, %v9032, %v9034
    %v9066 = vsel %vm8806, %v9036, %v9038
    %v9067 = vsel %vm8806, %v9040, %v9042
    %v9068 = vsel %vm8806, %v9044, %v9046
    %v9069 = vsel %vm8806, %v9048, %v9050
    %v9070 = vsel %vm8806, %v9052, %v9054
    %v9103 = vadd.f32 %v8855, %v9055
    %v9104 = vadd.f32 %v8856, %v8994
    %v9105 = vadd.f32 %v8857, %v9056
    %v9106 = vadd.f32 %v8858, %v8998
    %v9107 = vadd.f32 %v8859, %v9057
    %v9108 = vadd.f32 %v8860, %v9002
    %v9109 = vadd.f32 %v8861, %v9058
    %v9110 = vadd.f32 %v8862, %v9006
    %v9111 = vadd.f32 %v8863, %v9059
    %v9112 = vadd.f32 %v8864, %v9010
    %v9113 = vadd.f32 %v8865, %v9060
    %v9114 = vadd.f32 %v8866, %v9014
    %v9115 = vadd.f32 %v8867, %v9061
    %v9116 = vadd.f32 %v8868, %v9018
    %v9117 = vadd.f32 %v8869, %v9062
    %v9118 = vadd.f32 %v8870, %v9022
    %v9119 = vadd.f32 %v8871, %v9063
    %v9120 = vadd.f32 %v8872, %v9026
    %v9121 = vadd.f32 %v8873, %v9064
    %v9122 = vadd.f32 %v8874, %v9030
    %v9123 = vadd.f32 %v8875, %v9065
    %v9124 = vadd.f32 %v8876, %v9034
    %v9125 = vadd.f32 %v8877, %v9066
    %v9126 = vadd.f32 %v8878, %v9038
    %v9127 = vadd.f32 %v8879, %v9067
    %v9128 = vadd.f32 %v8880, %v9042
    %v9129 = vadd.f32 %v8881, %v9068
    %v9130 = vadd.f32 %v8882, %v9046
    %v9131 = vadd.f32 %v8883, %v9069
    %v9132 = vadd.f32 %v8884, %v9050
    %v9133 = vadd.f32 %v8885, %v9070
    %v9134 = vadd.f32 %v8886, %v9054
    %v9135 = vadd.f32 %v9103, %v9105
    %v9136 = vadd.f32 %v9135, %v9107
    %v9137 = vadd.f32 %v9136, %v9109
    %v9138 = vadd.f32 %v9137, %v9111
    %v9139 = vadd.f32 %v9138, %v9113
    %v9140 = vadd.f32 %v9139, %v9115
    %v9141 = vadd.f32 %v9140, %v9117
    %v9142 = vrot.slane %v9141, 4
    %v9143 = vadd.f32 %v9141, %v9142
    %v9144 = vrot.slane %v9143, 2
    %v9145 = vadd.f32 %v9143, %v9144
    %v9146 = vrot.slane %v9145, 1
    %v9147 = vadd.f32 %v9145, %v9146
    %vm9148 = vcmask 261120
    %v9149 = vsel %vm9148, %v9104, 0.0
    %v9150 = vsel %vm9148, %v9106, 0.0
    %v9151 = vadd.f32 %v9149, %v9150
    %v9152 = vsel %vm9148, %v9108, 0.0
    %v9153 = vadd.f32 %v9151, %v9152
    %v9154 = vsel %vm9148, %v9110, 0.0
    %v9155 = vadd.f32 %v9153, %v9154
    %v9156 = vsel %vm9148, %v9112, 0.0
    %v9157 = vadd.f32 %v9155, %v9156
    %v9158 = vsel %vm9148, %v9114, 0.0
    %v9159 = vadd.f32 %v9157, %v9158
    %v9160 = vsel %vm9148, %v9116, 0.0
    %v9161 = vadd.f32 %v9159, %v9160
    %v9162 = vsel %vm9148, %v9118, 0.0
    %v9163 = vadd.f32 %v9161, %v9162
    %v9164 = vrot.slane %v9163, 4
    %v9165 = vadd.f32 %v9163, %v9164
    %v9166 = vrot.slane %v9165, 2
    %v9167 = vadd.f32 %v9165, %v9166
    %v9168 = vrot.slane %v9167, 1
    %v9169 = vadd.f32 %v9167, %v9168
    %v9170 = vadd.f32 %v9119, %v9121
    %v9171 = vadd.f32 %v9170, %v9123
    %v9172 = vadd.f32 %v9171, %v9125
    %v9173 = vadd.f32 %v9172, %v9127
    %v9174 = vadd.f32 %v9173, %v9129
    %v9175 = vadd.f32 %v9174, %v9131
    %v9176 = vadd.f32 %v9175, %v9133
    %v9177 = vrot.slane %v9176, 4
    %v9178 = vadd.f32 %v9176, %v9177
    %v9179 = vrot.slane %v9178, 2
    %v9180 = vadd.f32 %v9178, %v9179
    %v9181 = vrot.slane %v9180, 1
    %v9182 = vadd.f32 %v9180, %v9181
    %v9183 = vsel %vm9148, %v9120, 0.0
    %v9184 = vsel %vm9148, %v9122, 0.0
    %v9185 = vadd.f32 %v9183, %v9184
    %v9186 = vsel %vm9148, %v9124, 0.0
    %v9187 = vadd.f32 %v9185, %v9186
    %v9188 = vsel %vm9148, %v9126, 0.0
    %v9189 = vadd.f32 %v9187, %v9188
    %v9190 = vsel %vm9148, %v9128, 0.0
    %v9191 = vadd.f32 %v9189, %v9190
    %v9192 = vsel %vm9148, %v9130, 0.0
    %v9193 = vadd.f32 %v9191, %v9192
    %v9194 = vsel %vm9148, %v9132, 0.0
    %v9195 = vadd.f32 %v9193, %v9194
    %v9196 = vsel %vm9148, %v9134, 0.0
    %v9197 = vadd.f32 %v9195, %v9196
    %v9198 = vrot.slane %v9197, 4
    %v9199 = vadd.f32 %v9197, %v9198
    %v9200 = vrot.slane %v9199, 2
    %v9201 = vadd.f32 %v9199, %v9200
    %v9202 = vrot.slane %v9201, 1
    %v9203 = vadd.f32 %v9201, %v9202
    %v9204 = vld [vmem:[#allocation2] sm:$0x1]
    %9206 = vset.pattern.permute.xlu0 0
    %9207 = vperm.xlu0 %9206, %v9204
    %v9208 = vpop.permute.xlu0 %9207
    %v9210 = vlaneseq
    %v9211 = vshrl.u32 %v9210, 7
    %v9212 = vsub.s32 0, %v9211
    %v9213 = vrot.slane %v9208, %v9212
    %v9214 = vadd.f32 %v9147, %v9213
    %v9215 = vadd.f32 %v9169, %v9213
    %v9216 = vadd.f32 %v9182, %v9213
    %v9217 = vadd.f32 %v9203, %v9213
    %v9218 = vld [vmem:[%s12] sm:$0xff]
    %v9219 = vld [vmem:[%s12 + $0x8] sm:$0x3]
    %v9220 = vld [vmem:[%s13] sm:$0x1]
    %v9221 = vadd.f32 %v9220, 0.0
    %vm9222 = vcmask 130048
    %v9223 = vsel %vm9222, %v9214, -inf
    %9224 = vmax.xlane.f32.xlu0 %v9223
    %v9225 = vpop.xlane.xlu0 %9224
    %v9226 = vsel %vm9222, %v9216, -inf
    %9227 = vmax.xlane.f32.xlu0 %v9226
    %v9228 = vpop.xlane.xlu0 %9227
    %v9229 = vand.u32 2147483647, %v9225
    %v9230 = vand.u32 2147483647, %v9228
    %v9231 = vmul.f32 %v9229, %v9218
    %v9232 = vmul.f32 %v9230, %v9218
    %v9233 = vadd.f32 %v9221, %v9231
    %v9234 = vadd.f32 %v9221, %v9232
    %vm9235 = vcmask 261248
    %v9236 = vsel %vm9235, %v9214, -inf
    %9237 = vmax.xlane.f32.xlu0 %v9236
    %v9238 = vpop.xlane.xlu0 %9237
    %v9239 = vsel %vm9235, %v9216, -inf
    %9240 = vmax.xlane.f32.xlu0 %v9239
    %v9241 = vpop.xlane.xlu0 %9240
    %v9242 = vand.u32 2147483647, %v9238
    %v9243 = vand.u32 2147483647, %v9241
    %v9244 = vmul.f32 %v9242, %v9218
    %v9245 = vmul.f32 %v9243, %v9218
    %v9249 = vunpack.c.l.s4 1966171168
    %v9250 = vunpack.c.0.s8 %v9249
    %v9251 = vlaneseq
    %v9252 = vshrl.u32 %v9251, 7
    %v9253 = vsub.s32 %v9250, %v9252
    %v9254 = vrot.slane %v9244, %v9253
    %v9255 = vcombine.high %v9254, %v9254
    %v9257 = vunpack.c.l.s4 1966171168
    %v9258 = vunpack.c.0.s8 %v9257
    %v9259 = vlaneseq
    %v9260 = vshrl.u32 %v9259, 7
    %v9261 = vsub.s32 %v9258, %v9260
    %v9262 = vrot.slane %v9255, %v9261
    %v9264 = vunpack.c.l.s4 1966171168
    %v9265 = vunpack.c.0.s8 %v9264
    %v9266 = vlaneseq
    %v9267 = vshrl.u32 %v9266, 7
    %v9268 = vsub.s32 %v9265, %v9267
    %v9269 = vrot.slane %v9245, %v9268
    %v9270 = vcombine.high %v9269, %v9269
    %v9272 = vunpack.c.l.s4 1966171168
    %v9273 = vunpack.c.0.s8 %v9272
    %v9274 = vlaneseq
    %v9275 = vshrl.u32 %v9274, 7
    %v9276 = vsub.s32 %v9273, %v9275
    %v9277 = vrot.slane %v9270, %v9276
    %v9280 = vadd.f32 %v9233, %v9262
    %v9281 = vadd.f32 %v9234, %v9277
    %vm9282 = vcmask 392448
    %v9283 = vsel %vm9282, %v9214, -inf
    %9284 = vmax.xlane.f32.xlu0 %v9283
    %v9285 = vpop.xlane.xlu0 %9284
    %v9286 = vsel %vm9282, %v9216, -inf
    %9287 = vmax.xlane.f32.xlu0 %v9286
    %v9288 = vpop.xlane.xlu0 %9287
    %v9289 = vand.u32 2147483647, %v9285
    %v9290 = vand.u32 2147483647, %v9288
    %v9291 = vmul.f32 %v9289, %v9218
    %v9292 = vmul.f32 %v9290, %v9218
    %v9296 = vunpack.c.l.s4 1966171168
    %v9297 = vunpack.c.0.s8 %v9296
    %v9298 = vlaneseq
    %v9299 = vshrl.u32 %v9298, 7
    %v9300 = vsub.s32 %v9297, %v9299
    %v9301 = vrot.slane %v9291, %v9300
    %v9303 = vunpack.c.l.s4 1966171168
    %v9304 = vunpack.c.0.s8 %v9303
    %v9305 = vlaneseq
    %v9306 = vshrl.u32 %v9305, 7
    %v9307 = vsub.s32 %v9304, %v9306
    %v9308 = vrot.slane %v9301, %v9307
    %v9309 = vcombine.high %v9308, %v9308
    %v9311 = vunpack.c.l.s4 1966171168
    %v9312 = vunpack.c.0.s8 %v9311
    %v9313 = vlaneseq
    %v9314 = vshrl.u32 %v9313, 7
    %v9315 = vsub.s32 %v9312, %v9314
    %v9316 = vrot.slane %v9292, %v9315
    %v9318 = vunpack.c.l.s4 1966171168
    %v9319 = vunpack.c.0.s8 %v9318
    %v9320 = vlaneseq
    %v9321 = vshrl.u32 %v9320, 7
    %v9322 = vsub.s32 %v9319, %v9321
    %v9323 = vrot.slane %v9316, %v9322
    %v9324 = vcombine.high %v9323, %v9323
    %v9327 = vadd.f32 %v9280, %v9309
    %v9328 = vadd.f32 %v9281, %v9324
    %vm9329 = vcmask 523648
    %v9330 = vsel %vm9329, %v9214, -inf
    %9331 = vmax.xlane.f32.xlu0 %v9330
    %v9332 = vpop.xlane.xlu0 %9331
    %v9333 = vsel %vm9329, %v9216, -inf
    %9334 = vmax.xlane.f32.xlu0 %v9333
    %v9335 = vpop.xlane.xlu0 %9334
    %v9336 = vand.u32 2147483647, %v9332
    %v9337 = vand.u32 2147483647, %v9335
    %v9338 = vmul.f32 %v9336, %v9218
    %v9339 = vmul.f32 %v9337, %v9218
    %v9343 = vunpack.c.l.s4 1966171168
    %v9344 = vunpack.c.0.s8 %v9343
    %v9345 = vlaneseq
    %v9346 = vshrl.u32 %v9345, 7
    %v9347 = vsub.s32 %v9344, %v9346
    %v9348 = vrot.slane %v9338, %v9347
    %v9349 = vcombine.high %v9348, %v9348
    %v9351 = vunpack.c.l.s4 1966171168
    %v9352 = vunpack.c.0.s8 %v9351
    %v9353 = vlaneseq
    %v9354 = vshrl.u32 %v9353, 7
    %v9355 = vsub.s32 %v9352, %v9354
    %v9356 = vrot.slane %v9349, %v9355
    %v9357 = vcombine.high %v9356, %v9356
    %v9359 = vunpack.c.l.s4 1966171168
    %v9360 = vunpack.c.0.s8 %v9359
    %v9361 = vlaneseq
    %v9362 = vshrl.u32 %v9361, 7
    %v9363 = vsub.s32 %v9360, %v9362
    %v9364 = vrot.slane %v9339, %v9363
    %v9365 = vcombine.high %v9364, %v9364
    %v9367 = vunpack.c.l.s4 1966171168
    %v9368 = vunpack.c.0.s8 %v9367
    %v9369 = vlaneseq
    %v9370 = vshrl.u32 %v9369, 7
    %v9371 = vsub.s32 %v9368, %v9370
    %v9372 = vrot.slane %v9365, %v9371
    %v9373 = vcombine.high %v9372, %v9372
    %v9376 = vadd.f32 %v9327, %v9357
    %v9377 = vadd.f32 %v9328, %v9373
    %vm9378 = vcmask 654848
    %v9379 = vsel %vm9378, %v9214, -inf
    %9380 = vmax.xlane.f32.xlu0 %v9379
    %v9381 = vpop.xlane.xlu0 %9380
    %v9382 = vsel %vm9378, %v9216, -inf
    %9383 = vmax.xlane.f32.xlu0 %v9382
    %v9384 = vpop.xlane.xlu0 %9383
    %v9385 = vand.u32 2147483647, %v9381
    %v9386 = vand.u32 2147483647, %v9384
    %v9387 = vmul.f32 %v9385, %v9218
    %v9388 = vmul.f32 %v9386, %v9218
    %v9391 = vcombine.high %v9387, %v9387
    %v9393 = vunpack.c.l.s4 1966171168
    %v9394 = vunpack.c.0.s8 %v9393
    %v9395 = vlaneseq
    %v9396 = vshrl.u32 %v9395, 7
    %v9397 = vsub.s32 %v9394, %v9396
    %v9398 = vrot.slane %v9391, %v9397
    %v9400 = vunpack.c.l.s4 1966171168
    %v9401 = vunpack.c.0.s8 %v9400
    %v9402 = vlaneseq
    %v9403 = vshrl.u32 %v9402, 7
    %v9404 = vsub.s32 %v9401, %v9403
    %v9405 = vrot.slane %v9398, %v9404
    %v9406 = vcombine.high %v9388, %v9388
    %v9408 = vunpack.c.l.s4 1966171168
    %v9409 = vunpack.c.0.s8 %v9408
    %v9410 = vlaneseq
    %v9411 = vshrl.u32 %v9410, 7
    %v9412 = vsub.s32 %v9409, %v9411
    %v9413 = vrot.slane %v9406, %v9412
    %v9415 = vunpack.c.l.s4 1966171168
    %v9416 = vunpack.c.0.s8 %v9415
    %v9417 = vlaneseq
    %v9418 = vshrl.u32 %v9417, 7
    %v9419 = vsub.s32 %v9416, %v9418
    %v9420 = vrot.slane %v9413, %v9419
    %v9423 = vadd.f32 %v9376, %v9405
    %v9424 = vadd.f32 %v9377, %v9420
    %vm9425 = vcmask 786048
    %v9426 = vsel %vm9425, %v9214, -inf
    %9427 = vmax.xlane.f32.xlu0 %v9426
    %v9428 = vpop.xlane.xlu0 %9427
    %v9429 = vsel %vm9425, %v9216, -inf
    %9430 = vmax.xlane.f32.xlu0 %v9429
    %v9431 = vpop.xlane.xlu0 %9430
    %v9432 = vand.u32 2147483647, %v9428
    %v9433 = vand.u32 2147483647, %v9431
    %v9434 = vmul.f32 %v9432, %v9218
    %v9435 = vmul.f32 %v9433, %v9218
    %v9438 = vcombine.high %v9434, %v9434
    %v9440 = vunpack.c.l.s4 1966171168
    %v9441 = vunpack.c.0.s8 %v9440
    %v9442 = vlaneseq
    %v9443 = vshrl.u32 %v9442, 7
    %v9444 = vsub.s32 %v9441, %v9443
    %v9445 = vrot.slane %v9438, %v9444
    %v9446 = vcombine.high %v9445, %v9445
    %v9448 = vunpack.c.l.s4 1966171168
    %v9449 = vunpack.c.0.s8 %v9448
    %v9450 = vlaneseq
    %v9451 = vshrl.u32 %v9450, 7
    %v9452 = vsub.s32 %v9449, %v9451
    %v9453 = vrot.slane %v9446, %v9452
    %v9454 = vcombine.high %v9435, %v9435
    %v9456 = vunpack.c.l.s4 1966171168
    %v9457 = vunpack.c.0.s8 %v9456
    %v9458 = vlaneseq
    %v9459 = vshrl.u32 %v9458, 7
    %v9460 = vsub.s32 %v9457, %v9459
    %v9461 = vrot.slane %v9454, %v9460
    %v9462 = vcombine.high %v9461, %v9461
    %v9464 = vunpack.c.l.s4 1966171168
    %v9465 = vunpack.c.0.s8 %v9464
    %v9466 = vlaneseq
    %v9467 = vshrl.u32 %v9466, 7
    %v9468 = vsub.s32 %v9465, %v9467
    %v9469 = vrot.slane %v9462, %v9468
    %v9472 = vadd.f32 %v9423, %v9453
    %v9473 = vadd.f32 %v9424, %v9469
    %vm9474 = vcmask 917248
    %v9475 = vsel %vm9474, %v9214, -inf
    %9476 = vmax.xlane.f32.xlu0 %v9475
    %v9477 = vpop.xlane.xlu0 %9476
    %v9478 = vsel %vm9474, %v9216, -inf
    %9479 = vmax.xlane.f32.xlu0 %v9478
    %v9480 = vpop.xlane.xlu0 %9479
    %v9481 = vand.u32 2147483647, %v9477
    %v9482 = vand.u32 2147483647, %v9480
    %v9483 = vmul.f32 %v9481, %v9218
    %v9484 = vmul.f32 %v9482, %v9218
    %v9487 = vcombine.high %v9483, %v9483
    %v9489 = vunpack.c.l.s4 1966171168
    %v9490 = vunpack.c.0.s8 %v9489
    %v9491 = vlaneseq
    %v9492 = vshrl.u32 %v9491, 7
    %v9493 = vsub.s32 %v9490, %v9492
    %v9494 = vrot.slane %v9487, %v9493
    %v9496 = vunpack.c.l.s4 1966171168
    %v9497 = vunpack.c.0.s8 %v9496
    %v9498 = vlaneseq
    %v9499 = vshrl.u32 %v9498, 7
    %v9500 = vsub.s32 %v9497, %v9499
    %v9501 = vrot.slane %v9494, %v9500
    %v9502 = vcombine.high %v9501, %v9501
    %v9503 = vcombine.high %v9484, %v9484
    %v9505 = vunpack.c.l.s4 1966171168
    %v9506 = vunpack.c.0.s8 %v9505
    %v9507 = vlaneseq
    %v9508 = vshrl.u32 %v9507, 7
    %v9509 = vsub.s32 %v9506, %v9508
    %v9510 = vrot.slane %v9503, %v9509
    %v9512 = vunpack.c.l.s4 1966171168
    %v9513 = vunpack.c.0.s8 %v9512
    %v9514 = vlaneseq
    %v9515 = vshrl.u32 %v9514, 7
    %v9516 = vsub.s32 %v9513, %v9515
    %v9517 = vrot.slane %v9510, %v9516
    %v9518 = vcombine.high %v9517, %v9517
    %v9521 = vadd.f32 %v9472, %v9502
    %v9522 = vadd.f32 %v9473, %v9518
    %vm9523 = vcmask 1048448
    %v9524 = vsel %vm9523, %v9214, -inf
    %9525 = vmax.xlane.f32.xlu0 %v9524
    %v9526 = vpop.xlane.xlu0 %9525
    %v9527 = vsel %vm9523, %v9216, -inf
    %9528 = vmax.xlane.f32.xlu0 %v9527
    %v9529 = vpop.xlane.xlu0 %9528
    %v9530 = vand.u32 2147483647, %v9526
    %v9531 = vand.u32 2147483647, %v9529
    %v9532 = vmul.f32 %v9530, %v9218
    %v9533 = vmul.f32 %v9531, %v9218
    %v9536 = vcombine.high %v9532, %v9532
    %v9538 = vunpack.c.l.s4 1966171168
    %v9539 = vunpack.c.0.s8 %v9538
    %v9540 = vlaneseq
    %v9541 = vshrl.u32 %v9540, 7
    %v9542 = vsub.s32 %v9539, %v9541
    %v9543 = vrot.slane %v9536, %v9542
    %v9544 = vcombine.high %v9543, %v9543
    %v9546 = vunpack.c.l.s4 1966171168
    %v9547 = vunpack.c.0.s8 %v9546
    %v9548 = vlaneseq
    %v9549 = vshrl.u32 %v9548, 7
    %v9550 = vsub.s32 %v9547, %v9549
    %v9551 = vrot.slane %v9544, %v9550
    %v9552 = vcombine.high %v9551, %v9551
    %v9553 = vcombine.high %v9533, %v9533
    %v9555 = vunpack.c.l.s4 1966171168
    %v9556 = vunpack.c.0.s8 %v9555
    %v9557 = vlaneseq
    %v9558 = vshrl.u32 %v9557, 7
    %v9559 = vsub.s32 %v9556, %v9558
    %v9560 = vrot.slane %v9553, %v9559
    %v9561 = vcombine.high %v9560, %v9560
    %v9563 = vunpack.c.l.s4 1966171168
    %v9564 = vunpack.c.0.s8 %v9563
    %v9565 = vlaneseq
    %v9566 = vshrl.u32 %v9565, 7
    %v9567 = vsub.s32 %v9564, %v9566
    %v9568 = vrot.slane %v9561, %v9567
    %v9569 = vcombine.high %v9568, %v9568
    %v9572 = vadd.f32 %v9521, %v9552
    %v9573 = vadd.f32 %v9522, %v9569
    %v9574 = vsel %vm9222, %v9215, -inf
    %9575 = vmax.xlane.f32.xlu0 %v9574
    %v9576 = vpop.xlane.xlu0 %9575
    %v9577 = vsel %vm9222, %v9217, -inf
    %9578 = vmax.xlane.f32.xlu0 %v9577
    %v9579 = vpop.xlane.xlu0 %9578
    %v9580 = vand.u32 2147483647, %v9576
    %v9581 = vand.u32 2147483647, %v9579
    %v9582 = vmul.f32 %v9580, %v9219
    %v9583 = vmul.f32 %v9581, %v9219
    %v9584 = vadd.f32 %v9572, %v9582
    %v9585 = vadd.f32 %v9573, %v9583
    %v9586 = vsel %vm9235, %v9215, -inf
    %9587 = vmax.xlane.f32.xlu0 %v9586
    %v9588 = vpop.xlane.xlu0 %9587
    %v9589 = vsel %vm9235, %v9217, -inf
    %9590 = vmax.xlane.f32.xlu0 %v9589
    %v9591 = vpop.xlane.xlu0 %9590
    %v9592 = vand.u32 2147483647, %v9588
    %v9593 = vand.u32 2147483647, %v9591
    %v9594 = vmul.f32 %v9592, %v9219
    %v9595 = vmul.f32 %v9593, %v9219
    %v9599 = vunpack.c.l.s4 1966171168
    %v9600 = vunpack.c.0.s8 %v9599
    %v9601 = vlaneseq
    %v9602 = vshrl.u32 %v9601, 7
    %v9603 = vsub.s32 %v9600, %v9602
    %v9604 = vrot.slane %v9594, %v9603
    %v9605 = vcombine.high %v9604, %v9604
    %v9607 = vunpack.c.l.s4 1966171168
    %v9608 = vunpack.c.0.s8 %v9607
    %v9609 = vlaneseq
    %v9610 = vshrl.u32 %v9609, 7
    %v9611 = vsub.s32 %v9608, %v9610
    %v9612 = vrot.slane %v9605, %v9611
    %v9614 = vunpack.c.l.s4 1966171168
    %v9615 = vunpack.c.0.s8 %v9614
    %v9616 = vlaneseq
    %v9617 = vshrl.u32 %v9616, 7
    %v9618 = vsub.s32 %v9615, %v9617
    %v9619 = vrot.slane %v9595, %v9618
    %v9620 = vcombine.high %v9619, %v9619
    %v9622 = vunpack.c.l.s4 1966171168
    %v9623 = vunpack.c.0.s8 %v9622
    %v9624 = vlaneseq
    %v9625 = vshrl.u32 %v9624, 7
    %v9626 = vsub.s32 %v9623, %v9625
    %v9627 = vrot.slane %v9620, %v9626
    %v9630 = vadd.f32 %v9584, %v9612
    %v9631 = vadd.f32 %v9585, %v9627
    %v9632 = vsub.f32 0.0, %v9630
    %v9633 = vsub.f32 0.0, %v9631
    %v9634 = vmul.f32 %v9632, 1.442695
    %v9635 = vpow.pop %v9634
    %v9636 = vmul.f32 %v9633, 1.442695
    %v9637 = vpow.pop %v9636
    %v9638 = vadd.f32 %v9635, 1.0
    %v9639 = vadd.f32 %v9637, 1.0
    %v9640 = vrcp.pop %v9638
    %v9641 = vmul.f32 1.0, %v9640
    %v9642 = vrcp.pop %v9639
    %v9643 = vmul.f32 1.0, %v9642
    %vm9644 = vcmask 8192
    %9645 = vst.msk [vmem:[#allocation3] sm:$0x1] %vm9644, %v9641
    %9646 = vst.msk [vmem:[#allocation3 + $0x1] sm:$0x1] %vm9644, %v9643
    // Predicated region
    $region58: #{spectrum_cls_forward.1} parent=1 // pred_check
      _
    $region59: #{spectrum_cls_forward.1} parent=1 // pred_check_branch
      %9648 = sbr.rel (0) target = $region61
    $region60: #{spectrum_cls_forward.1} parent=1 // pred_region
      %s9650 = ssub.s32 32, 32
      %9651 = vsyncadd [#allocation4], %s9650
      %s9652 = sshll.u32 [#allocation3], 4
      %s9653 = int_to_ptr.vmem [resolvable:$true] %s9652
      %9658 = dma.vmem_to_hbm [thread:$0]  %s9653, 32, %s14, [#allocation4], 16, 16, 1
    $region61: #{spectrum_cls_forward.1} parent=1 // pred_fallthru
      _
    // Predicated region
    $region62: #{spectrum_cls_forward.1} parent=1 // pred_check
      _
    $region63: #{spectrum_cls_forward.1} parent=1 // pred_check_branch
      %9660 = sbr.rel (0) target = $region65
    $region64: #{spectrum_cls_forward.1} parent=1 // pred_region
      %9661 = dma.done [#allocation4], 32
    $region65: #{spectrum_cls_forward.1} parent=1 // pred_fallthru
      _
    %9662 = vsyncpa [#allocation4], 1

</llo_original>
